<compile_context>
chip_gen: v7x
topology: tpu7x:2x2x1
jax: 0.10.0
libtpu: 0.0.40
codegen_flags: <defaults>
</compile_context>

<pallas_src>
import functools

import numpy as np
import jax
import jax.numpy as jnp
from jax.experimental import pallas as pl
from jax.experimental.pallas import tpu as pltpu


# ----------------------------------------------------------------------------
# Fused recurrent decoder kernel:
#   LSTMCell (recurrent half) + SoftDotAttention + vocab projection,
#   T_BLOCK timesteps per grid step, h/c carried in vregs inside the step loop
#   and in VMEM scratch across time blocks; ctx / mask / all weights stay
#   VMEM-resident for the whole sequence.
# grid = (batch_blocks [parallel], time_blocks [arbitrary, sequential]).
# ----------------------------------------------------------------------------
def _decoder_kernel(gx_ref, ctx_ref, mbias_ref, h0_ref, c0_ref,
                    whh_t_ref, win_t_ref, woutw_t_ref, wouth_t_ref,
                    wproj_t_ref, bproj_ref,
                    logits_ref, hfin_ref, cfin_ref,
                    h_scr, c_scr, *, seq_len):
    t_blk = pl.program_id(1)
    n_t = pl.num_programs(1)
    t_block = gx_ref.shape[0]
    H = h_scr.shape[-1]

    @pl.when(t_blk == 0)
    def _():
        h_scr[...] = h0_ref[...]
        c_scr[...] = c0_ref[...]

    # Sequence-resident operands (constant-index BlockSpecs).
    ctx = ctx_ref[...]          # (Bb, A, H)
    mbias = mbias_ref[...]      # (Bb, A) additive mask bias (0 / -1e30)
    whh_t = whh_t_ref[...]      # (H, 4H)
    win_t = win_t_ref[...]      # (H, H)
    woutw_t = woutw_t_ref[...]  # (H, H)   acts on weighted context
    wouth_t = wouth_t_ref[...]  # (H, H)   acts on h1
    wproj_t = wproj_t_ref[...]  # (H, V)
    bproj = bproj_ref[...]      # (1, V)

    def step(i, carry):
        h, c = carry
        t = t_blk * t_block + i
        # LSTMCell: the input projection was folded into the embedding table,
        # so only the recurrent matmul remains on the critical path.
        gates = gx_ref[i] + jnp.dot(h, whh_t,
                                    preferred_element_type=jnp.float32)
        i_g = jax.nn.sigmoid(gates[:, 0 * H:1 * H])
        f_g = jax.nn.sigmoid(gates[:, 1 * H:2 * H])
        g_g = jnp.tanh(gates[:, 2 * H:3 * H])
        o_g = jax.nn.sigmoid(gates[:, 3 * H:4 * H])
        c_new = f_g * c + i_g * g_g
        h1 = o_g * jnp.tanh(c_new)

        # SoftDotAttention(h1, ctx, mask=ctx_mask).  A is tiny (lane-sparse),
        # so the VPU-broadcast + XLU-reduce form is fine; recompose as batched
        # dot_general / pad A to a lane multiple only if A grows toward 128+.
        target = jnp.dot(h1, win_t, preferred_element_type=jnp.float32)
        logit = jnp.sum(ctx * target[:, None, :], axis=-1) + mbias   # (Bb, A)
        m = jnp.max(logit, axis=-1, keepdims=True)
        e = jnp.exp(logit - m)
        # Exact normalization (approx EUP reciprocal compounds through the
        # recurrence and fails the reference check).
        attn = e / jnp.sum(e, axis=-1, keepdims=True)
        weighted = jnp.sum(attn[:, :, None] * ctx, axis=1)            # (Bb, H)
        h_tilde = jnp.tanh(
            jnp.dot(weighted, woutw_t, preferred_element_type=jnp.float32)
            + jnp.dot(h1, wouth_t, preferred_element_type=jnp.float32))

        # Fused vocab projection; lane-dense (Bb, V) store directly into the
        # (B, L, V) output layout.
        logit_t = (jnp.dot(h_tilde, wproj_t,
                           preferred_element_type=jnp.float32) + bproj)
        logits_ref[:, pl.ds(i, 1), :] = logit_t[:, None, :]

        # Masked carry so zero-padded timesteps (only in a padded last time
        # block) do not disturb the final hidden/cell state.
        valid = t < seq_len
        h = jnp.where(valid, h_tilde, h)
        c = jnp.where(valid, c_new, c)
        return h, c

    h_last, c_last = jax.lax.fori_loop(
        0, t_block, step, (h_scr[...], c_scr[...]), unroll=True)

    # One scratch write per time block (carry to the next block).
    h_scr[...] = h_last
    c_scr[...] = c_last

    @pl.when(t_blk == n_t - 1)
    def _():
        hfin_ref[...] = h_last
        cfin_ref[...] = c_last


# ----------------------------------------------------------------------------
# Parameter prep (one-time, hoisted out of the per-call path).
# ----------------------------------------------------------------------------
def prepare_pallas_params(params):
    emb = params["embedding"]
    w_ih, w_hh, b_ih, b_hh = params["lstm"]
    w_in, w_out = params["attn"]
    w_proj, b_proj = params["proj"]
    H = w_hh.shape[1]
    V = w_proj.shape[0]
    return {
        # Folded embedding + LSTM input projection: gx = gx_table[token].
        "gx_table": emb @ jnp.transpose(w_ih) + (b_ih + b_hh),   # (Vocab, 4H)
        "w_hh_t": jnp.transpose(w_hh),             # (H, 4H)
        "w_in_t": jnp.transpose(w_in),             # (H, H)
        "w_out_w_t": jnp.transpose(w_out[:, :H]),  # (H, H) acts on weighted ctx
        "w_out_h_t": jnp.transpose(w_out[:, H:]),  # (H, H) acts on h1
        "w_proj_t": jnp.transpose(w_proj),         # (H, V)
        "b_proj_row": b_proj.reshape(1, V),        # (1, V)
    }


# ----------------------------------------------------------------------------
# Forward pass (Pallas)
# ----------------------------------------------------------------------------
def feedforward_speaker_decoder_forward(pp, words, ctx, ctx_mask, h0, c0,
                                        *, t_block=None, b_block=None):
    B, L = words.shape
    A = ctx.shape[1]
    H = h0.shape[-1]
    V = pp["w_proj_t"].shape[1]

    # Full per-core batch by default; only split (on v7x, 2 TCs) when each
    # half still keeps the MXU rows reasonably fed.
    b_block = B if b_block is None else b_block
    assert B % b_block == 0
    if b_block != B:
        assert b_block % 8 == 0, "sub-batch blocks must be sublane aligned"

    # Collapse the time grid for short sequences (pay the per-grid-step
    # overhead once); otherwise block time in sublane-aligned chunks.
    if t_block is None or t_block >= L:
        t_block = L
    n_t = pl.cdiv(L, t_block)
    l_pad = n_t * t_block
    if n_t > 1:
        assert t_block % 8 == 0, "t_block must be a multiple of 8 when blocked"

    # words.t() + embedding + (folded) input projection == one gather.
    # TODO(synk): the token gather stays in XLA; a Pallas gather over this
    # table buys nothing.
    gx = pp["gx_table"][jnp.transpose(words)]                  # (L, B, 4H)
    if l_pad != L:
        gx = jnp.pad(gx, ((0, l_pad - L), (0, 0), (0, 0)))

    # masked_fill_(mask, -inf) as an additive bias (finite to stay NaN-free).
    mbias = jnp.where(ctx_mask, jnp.float32(-1e30), jnp.float32(0.0))

    kernel = functools.partial(_decoder_kernel, seq_len=L)
    logits, h_fin, c_fin = pl.pallas_call(
        kernel,
        out_shape=(jax.ShapeDtypeStruct((B, l_pad, V), jnp.float32),
                   jax.ShapeDtypeStruct((B, H), jnp.float32),
                   jax.ShapeDtypeStruct((B, H), jnp.float32)),
        grid=(B // b_block, n_t),
        in_specs=[
            pl.BlockSpec((t_block, b_block, 4 * H), lambda b, t: (t, b, 0)),
            # Sequence-resident (constant block index along the time axis):
            pl.BlockSpec((b_block, A, H), lambda b, t: (b, 0, 0)),
            pl.BlockSpec((b_block, A), lambda b, t: (b, 0)),
            pl.BlockSpec((b_block, H), lambda b, t: (b, 0)),
            pl.BlockSpec((b_block, H), lambda b, t: (b, 0)),
            pl.BlockSpec((H, 4 * H), lambda b, t: (0, 0)),
            pl.BlockSpec((H, H), lambda b, t: (0, 0)),
            pl.BlockSpec((H, H), lambda b, t: (0, 0)),
            pl.BlockSpec((H, H), lambda b, t: (0, 0)),
            pl.BlockSpec((H, V), lambda b, t: (0, 0)),
            pl.BlockSpec((1, V), lambda b, t: (0, 0)),
        ],
        out_specs=(
            pl.BlockSpec((b_block, t_block, V), lambda b, t: (b, t, 0)),
            pl.BlockSpec((b_block, H), lambda b, t: (b, 0)),
            pl.BlockSpec((b_block, H), lambda b, t: (b, 0)),
        ),
        scratch_shapes=[pltpu.VMEM((b_block, H), jnp.float32),
                        pltpu.VMEM((b_block, H), jnp.float32)],
        # Batch axis is "parallel" (it only buys a second TensorCore on v7x
        # and only when b_block < B); time is the sequential recurrence and
        # must stay the innermost "arbitrary" axis for the h/c scratch carry.
        compiler_params=pltpu.CompilerParams(
            dimension_semantics=("parallel", "arbitrary")),
    )(gx, ctx, mbias, h0, c0,
      pp["w_hh_t"], pp["w_in_t"], pp["w_out_w_t"], pp["w_out_h_t"],
      pp["w_proj_t"], pp["b_proj_row"])

    return logits[:, :L], h_fin[None], c_fin[None]


# ----------------------------------------------------------------------------
# Pure-JAX reference (matches the PyTorch forward, eval mode)
# ----------------------------------------------------------------------------
def feedforward_speaker_decoder_reference(params, words, ctx, ctx_mask, h0, c0):
    emb_tbl = params["embedding"]
    w_ih, w_hh, b_ih, b_hh = params["lstm"]
    w_in, w_out = params["attn"]
    w_proj, b_proj = params["proj"]
    mbias = jnp.where(ctx_mask, jnp.float32(-1e30), jnp.float32(0.0))
    emb = emb_tbl[jnp.transpose(words)]                        # (L, B, E)

    def step(carry, x_t):
        h, c = carry
        gates = x_t @ w_ih.T + h @ w_hh.T + b_ih + b_hh
        i, f, g, o = jnp.split(gates, 4, axis=-1)
        c1 = jax.nn.sigmoid(f) * c + jax.nn.sigmoid(i) * jnp.tanh(g)
        h1 = jax.nn.sigmoid(o) * jnp.tanh(c1)
        target = h1 @ w_in.T
        logit = jnp.einsum("bah,bh->ba", ctx, target) + mbias
        attn = jax.nn.softmax(logit, axis=-1)
        weighted = jnp.einsum("ba,bah->bh", attn, ctx)
        h_tilde = jnp.tanh(jnp.concatenate([weighted, h1], axis=-1) @ w_out.T)
        logits_t = h_tilde @ w_proj.T + b_proj
        return (h_tilde, c1), logits_t

    (h_fin, c_fin), logits = jax.lax.scan(step, (h0, c0), emb)
    return jnp.transpose(logits, (1, 0, 2)), h_fin[None], c_fin[None]


# ----------------------------------------------------------------------------
# Deterministic synthetic parameters (PyTorch layer shapes)
# ----------------------------------------------------------------------------
def init_params(key, vocab_size, embedding_size, padding_idx, hidden_size):
    E, H, V = embedding_size, hidden_size, vocab_size
    ks = jax.random.split(key, 9)
    rn = lambda k, s: 0.1 * jax.random.normal(k, s, jnp.float32)
    emb = rn(ks[0], (V, E)).at[padding_idx].set(0.0)
    return {
        "embedding": emb,
        # nn.LSTMCell(E, H): w_ih (4H, E), w_hh (4H, H), biases (4H,)
        "lstm": (rn(ks[1], (4 * H, E)), rn(ks[2], (4 * H, H)),
                 rn(ks[3], (4 * H,)), rn(ks[4], (4 * H,))),
        # SoftDotAttention(H, H): linear_in (H, H), linear_out (H, 2H), no bias
        "attn": (rn(ks[5], (H, H)), rn(ks[6], (H, 2 * H))),
        # projection: nn.Linear(H, V)
        "proj": (rn(ks[7], (V, H)), rn(ks[8], (V,))),
    }


if __name__ == "__main__":
    B, L, A = 8, 10, 6              # batch, inst_len, act_len
    E, H, V = 64, 128, 256          # embedding, hidden (lane-dense), vocab
    PAD_IDX = 0

    key = jax.random.PRNGKey(0)
    k0, k1, k2, k3, k4, k5 = jax.random.split(key, 6)

    words = jax.random.randint(k0, (B, L), 0, V, dtype=jnp.int32)
    ctx = jax.random.normal(k1, (B, A, H), jnp.float32)
    act_lens = jax.random.randint(k2, (B,), 3, A + 1)
    ctx_mask = jnp.arange(A)[None, :] >= act_lens[:, None]     # True = masked
    h0 = 0.1 * jax.random.normal(k3, (B, H), jnp.float32)
    c0 = 0.1 * jax.random.normal(k4, (B, H), jnp.float32)

    params = init_params(k5, V, E, PAD_IDX, H)
    pp = prepare_pallas_params(params)

    logits, h_n, c_n = feedforward_speaker_decoder_forward(
        pp, words, ctx, ctx_mask, h0, c0)
    logits = jax.block_until_ready(logits)
    assert logits.shape == (B, L, V)
    assert h_n.shape == (1, B, H) and c_n.shape == (1, B, H)

    ref_logits, ref_h, ref_c = jax.block_until_ready(
        feedforward_speaker_decoder_reference(params, words, ctx, ctx_mask,
                                              h0, c0))
    np.testing.assert_allclose(np.asarray(logits), np.asarray(ref_logits),
                               rtol=2e-3, atol=2e-3)
    np.testing.assert_allclose(np.asarray(h_n), np.asarray(ref_h),
                               rtol=2e-3, atol=2e-3)
    np.testing.assert_allclose(np.asarray(c_n), np.asarray(ref_c),
                               rtol=2e-3, atol=2e-3)
    print("KERNEL_OK")
</pallas_src>

<mosaic_0001>
module attributes {stable_mosaic.version = 11 : i64} {
  func.func @_decoder_kernel(%arg0: i32, %arg1: i32, %arg2: memref<10x8x512xf32, #tpu.memory_space<vmem>>, %arg3: memref<8x6x128xf32, #tpu.memory_space<vmem>>, %arg4: memref<8x6xf32, #tpu.memory_space<vmem>>, %arg5: memref<8x128xf32, #tpu.memory_space<vmem>>, %arg6: memref<8x128xf32, #tpu.memory_space<vmem>>, %arg7: memref<128x512xf32, #tpu.memory_space<vmem>>, %arg8: memref<128x128xf32, #tpu.memory_space<vmem>>, %arg9: memref<128x128xf32, #tpu.memory_space<vmem>>, %arg10: memref<128x128xf32, #tpu.memory_space<vmem>>, %arg11: memref<128x256xf32, #tpu.memory_space<vmem>>, %arg12: memref<1x256xf32, #tpu.memory_space<vmem>>, %arg13: memref<8x10x256xf32, #tpu.memory_space<vmem>>, %arg14: memref<8x128xf32, #tpu.memory_space<vmem>>, %arg15: memref<8x128xf32, #tpu.memory_space<vmem>>, %arg16: memref<8x128xf32, #tpu.memory_space<vmem>>, %arg17: memref<8x128xf32, #tpu.memory_space<vmem>>) attributes {dimension_semantics = [#tpu.dimension_semantics<parallel>, #tpu.dimension_semantics<arbitrary>], iteration_bounds = array<i64: 1, 1>, scalar_prefetch = 0 : i64, scratch_operands = 2 : i64, tpu.core_type = #tpu.core_type<tc>, window_params = [{transform_indices = @transform_0, window_bounds = array<i64: 10, 8, 512>}, {transform_indices = @transform_1, window_bounds = array<i64: 8, 6, 128>}, {transform_indices = @transform_2, window_bounds = array<i64: 8, 6>}, {transform_indices = @transform_3, window_bounds = array<i64: 8, 128>}, {transform_indices = @transform_4, window_bounds = array<i64: 8, 128>}, {pipeline_mode = #tpu.pipeline_mode<synchronous>, transform_indices = @transform_5, window_bounds = array<i64: 128, 512>}, {pipeline_mode = #tpu.pipeline_mode<synchronous>, transform_indices = @transform_6, window_bounds = array<i64: 128, 128>}, {pipeline_mode = #tpu.pipeline_mode<synchronous>, transform_indices = @transform_7, window_bounds = array<i64: 128, 128>}, {pipeline_mode = #tpu.pipeline_mode<synchronous>, transform_indices = @transform_8, window_bounds = array<i64: 128, 128>}, {pipeline_mode = #tpu.pipeline_mode<synchronous>, transform_indices = @transform_9, window_bounds = array<i64: 128, 256>}, {pipeline_mode = #tpu.pipeline_mode<synchronous>, transform_indices = @transform_10, window_bounds = array<i64: 1, 256>}, {transform_indices = @transform_11, window_bounds = array<i64: 8, 10, 256>}, {transform_indices = @transform_12, window_bounds = array<i64: 8, 128>}, {transform_indices = @transform_13, window_bounds = array<i64: 8, 128>}]} {
    %c0_i32 = arith.constant 0 : i32
    %0 = arith.cmpi eq, %arg1, %c0_i32 : i32
    %1 = arith.extui %0 : i1 to i32
    %c0_i32_0 = arith.constant 0 : i32
    %2 = arith.cmpi ne, %1, %c0_i32_0 : i32
    scf.if %2 {
      %c0_207 = arith.constant 0 : index
      %c0_208 = arith.constant 0 : index
      %658 = vector.load %arg5[%c0_207, %c0_208] : memref<8x128xf32, #tpu.memory_space<vmem>>, vector<8x128xf32>
      %c0_209 = arith.constant 0 : index
      %c0_210 = arith.constant 0 : index
      %659 = vector.load %arg16[%c0_209, %c0_210] : memref<8x128xf32, #tpu.memory_space<vmem>>, vector<8x128xf32>
      tpu.vector_store %arg16[%c0_209, %c0_210], %658 {strides = array<i32>} : memref<8x128xf32, #tpu.memory_space<vmem>>, vector<8x128xf32>,
      %c0_211 = arith.constant 0 : index
      %c0_212 = arith.constant 0 : index
      %660 = vector.load %arg6[%c0_211, %c0_212] : memref<8x128xf32, #tpu.memory_space<vmem>>, vector<8x128xf32>
      %c0_213 = arith.constant 0 : index
      %c0_214 = arith.constant 0 : index
      %661 = vector.load %arg17[%c0_213, %c0_214] : memref<8x128xf32, #tpu.memory_space<vmem>>, vector<8x128xf32>
      tpu.vector_store %arg17[%c0_213, %c0_214], %660 {strides = array<i32>} : memref<8x128xf32, #tpu.memory_space<vmem>>, vector<8x128xf32>,
    } else {
    }
    %c0 = arith.constant 0 : index
    %c0_1 = arith.constant 0 : index
    %c0_2 = arith.constant 0 : index
    %3 = vector.load %arg3[%c0, %c0_1, %c0_2] : memref<8x6x128xf32, #tpu.memory_space<vmem>>, vector<8x6x128xf32>
    %c0_3 = arith.constant 0 : index
    %c0_4 = arith.constant 0 : index
    %4 = vector.load %arg4[%c0_3, %c0_4] : memref<8x6xf32, #tpu.memory_space<vmem>>, vector<8x6xf32>
    %c0_5 = arith.constant 0 : index
    %c0_6 = arith.constant 0 : index
    %5 = vector.load %arg7[%c0_5, %c0_6] : memref<128x512xf32, #tpu.memory_space<vmem>>, vector<128x512xf32>
    %c0_7 = arith.constant 0 : index
    %c0_8 = arith.constant 0 : index
    %6 = vector.load %arg8[%c0_7, %c0_8] : memref<128x128xf32, #tpu.memory_space<vmem>>, vector<128x128xf32>
    %c0_9 = arith.constant 0 : index
    %c0_10 = arith.constant 0 : index
    %7 = vector.load %arg9[%c0_9, %c0_10] : memref<128x128xf32, #tpu.memory_space<vmem>>, vector<128x128xf32>
    %c0_11 = arith.constant 0 : index
    %c0_12 = arith.constant 0 : index
    %8 = vector.load %arg10[%c0_11, %c0_12] : memref<128x128xf32, #tpu.memory_space<vmem>>, vector<128x128xf32>
    %c0_13 = arith.constant 0 : index
    %c0_14 = arith.constant 0 : index
    %9 = vector.load %arg11[%c0_13, %c0_14] : memref<128x256xf32, #tpu.memory_space<vmem>>, vector<128x256xf32>
    %c0_15 = arith.constant 0 : index
    %c0_16 = arith.constant 0 : index
    %10 = vector.load %arg12[%c0_15, %c0_16] : memref<1x256xf32, #tpu.memory_space<vmem>>, vector<1x256xf32>
    %c0_17 = arith.constant 0 : index
    %c0_18 = arith.constant 0 : index
    %11 = vector.load %arg16[%c0_17, %c0_18] : memref<8x128xf32, #tpu.memory_space<vmem>>, vector<8x128xf32>
    %c0_19 = arith.constant 0 : index
    %c0_20 = arith.constant 0 : index
    %12 = vector.load %arg17[%c0_19, %c0_20] : memref<8x128xf32, #tpu.memory_space<vmem>>, vector<8x128xf32>
    %c0_i32_21 = arith.constant 0 : i32
    %c10_i32 = arith.constant 10 : i32
    %13 = arith.muli %arg1, %c10_i32 : i32
    %14 = arith.addi %13, %c0_i32_21 : i32
    %15 = arith.index_cast %c0_i32_21 : i32 to index
    %c0_22 = arith.constant 0 : index
    %c0_23 = arith.constant 0 : index
    %16 = vector.load %arg2[%15, %c0_22, %c0_23] : memref<10x8x512xf32, #tpu.memory_space<vmem>>, vector<1x8x512xf32>
    %17 = vector.shape_cast %16 : vector<1x8x512xf32> to vector<8x512xf32>
    %cst = arith.constant dense<0.000000e+00> : vector<8x512xf32>
    %18 = tpu.matmul %11, %5, %cst {dimension_numbers = #tpu.dot_dimension_numbers<[1], [0], [0], [1], [0, 0, 1, 1], [], []>} : vector<8x128xf32>, vector<128x512xf32>, vector<8x512xf32> -> vector<8x512xf32>
    %19 = arith.addf %17, %18 : vector<8x512xf32>
    %20 = vector.extract_strided_slice %19 {offsets = [0, 0], sizes = [8, 128], strides = [1, 1]} : vector<8x512xf32> to vector<8x128xf32>
    %21 = arith.negf %20 : vector<8x128xf32>
    %22 = math.exp %21 : vector<8x128xf32>
    %cst_24 = arith.constant 1.000000e+00 : f32
    %23 = vector.broadcast %cst_24 : f32 to vector<8x128xf32>
    %24 = arith.addf %23, %22 : vector<8x128xf32>
    %25 = arith.divf %23, %24 : vector<8x128xf32>
    %26 = vector.extract_strided_slice %19 {offsets = [0, 128], sizes = [8, 128], strides = [1, 1]} : vector<8x512xf32> to vector<8x128xf32>
    %27 = arith.negf %26 : vector<8x128xf32>
    %28 = math.exp %27 : vector<8x128xf32>
    %cst_25 = arith.constant 1.000000e+00 : f32
    %29 = vector.broadcast %cst_25 : f32 to vector<8x128xf32>
    %30 = arith.addf %29, %28 : vector<8x128xf32>
    %31 = arith.divf %29, %30 : vector<8x128xf32>
    %32 = vector.extract_strided_slice %19 {offsets = [0, 256], sizes = [8, 128], strides = [1, 1]} : vector<8x512xf32> to vector<8x128xf32>
    %33 = math.tanh %32 : vector<8x128xf32>
    %34 = vector.extract_strided_slice %19 {offsets = [0, 384], sizes = [8, 128], strides = [1, 1]} : vector<8x512xf32> to vector<8x128xf32>
    %35 = arith.negf %34 : vector<8x128xf32>
    %36 = math.exp %35 : vector<8x128xf32>
    %cst_26 = arith.constant 1.000000e+00 : f32
    %37 = vector.broadcast %cst_26 : f32 to vector<8x128xf32>
    %38 = arith.addf %37, %36 : vector<8x128xf32>
    %39 = arith.divf %37, %38 : vector<8x128xf32>
    %40 = arith.mulf %31, %12 : vector<8x128xf32>
    %41 = arith.mulf %25, %33 : vector<8x128xf32>
    %42 = arith.addf %40, %41 : vector<8x128xf32>
    %43 = math.tanh %42 : vector<8x128xf32>
    %44 = arith.mulf %39, %43 : vector<8x128xf32>
    %cst_27 = arith.constant dense<0.000000e+00> : vector<8x128xf32>
    %45 = tpu.matmul %44, %6, %cst_27 {dimension_numbers = #tpu.dot_dimension_numbers<[1], [0], [0], [1], [0, 0, 1, 1], [], []>} : vector<8x128xf32>, vector<128x128xf32>, vector<8x128xf32> -> vector<8x128xf32>
    %46 = vector.shape_cast %45 : vector<8x128xf32> to vector<8x1x128xf32>
    %47 = vector.broadcast %46 : vector<8x1x128xf32> to vector<8x6x128xf32>
    %48 = arith.mulf %3, %47 : vector<8x6x128xf32>
    %cst_28 = arith.constant dense<0.000000e+00> : vector<8x6xf32>
    %49 = vector.multi_reduction <add>, %48, %cst_28 [2] : vector<8x6x128xf32> to vector<8x6xf32>
    %50 = arith.addf %49, %4 : vector<8x6xf32>
    %cst_29 = arith.constant dense<0xFF800000> : vector<8xf32>
    %51 = vector.multi_reduction <maximumf>, %50, %cst_29 [1] : vector<8x6xf32> to vector<8xf32>
    %52 = vector.shape_cast %51 : vector<8xf32> to vector<8x1xf32>
    %53 = vector.broadcast %52 : vector<8x1xf32> to vector<8x6xf32>
    %54 = arith.subf %50, %53 : vector<8x6xf32>
    %55 = math.exp %54 : vector<8x6xf32>
    %cst_30 = arith.constant dense<0.000000e+00> : vector<8xf32>
    %56 = vector.multi_reduction <add>, %55, %cst_30 [1] : vector<8x6xf32> to vector<8xf32>
    %57 = vector.shape_cast %56 : vector<8xf32> to vector<8x1xf32>
    %58 = vector.broadcast %57 : vector<8x1xf32> to vector<8x6xf32>
    %59 = arith.divf %55, %58 : vector<8x6xf32>
    %60 = vector.shape_cast %59 : vector<8x6xf32> to vector<8x6x1xf32>
    %61 = vector.broadcast %60 : vector<8x6x1xf32> to vector<8x6x128xf32>
    %62 = arith.mulf %61, %3 : vector<8x6x128xf32>
    %cst_31 = arith.constant dense<0.000000e+00> : vector<8x128xf32>
    %63 = vector.multi_reduction <add>, %62, %cst_31 [1] : vector<8x6x128xf32> to vector<8x128xf32>
    %cst_32 = arith.constant dense<0.000000e+00> : vector<8x128xf32>
    %64 = tpu.matmul %63, %7, %cst_32 {dimension_numbers = #tpu.dot_dimension_numbers<[1], [0], [0], [1], [0, 0, 1, 1], [], []>} : vector<8x128xf32>, vector<128x128xf32>, vector<8x128xf32> -> vector<8x128xf32>
    %cst_33 = arith.constant dense<0.000000e+00> : vector<8x128xf32>
    %65 = tpu.matmul %44, %8, %cst_33 {dimension_numbers = #tpu.dot_dimension_numbers<[1], [0], [0], [1], [0, 0, 1, 1], [], []>} : vector<8x128xf32>, vector<128x128xf32>, vector<8x128xf32> -> vector<8x128xf32>
    %66 = arith.addf %64, %65 : vector<8x128xf32>
    %67 = math.tanh %66 : vector<8x128xf32>
    %cst_34 = arith.constant dense<0.000000e+00> : vector<8x256xf32>
    %68 = tpu.matmul %67, %9, %cst_34 {dimension_numbers = #tpu.dot_dimension_numbers<[1], [0], [0], [1], [0, 0, 1, 1], [], []>} : vector<8x128xf32>, vector<128x256xf32>, vector<8x256xf32> -> vector<8x256xf32>
    %69 = vector.broadcast %10 : vector<1x256xf32> to vector<8x256xf32>
    %70 = arith.addf %68, %69 : vector<8x256xf32>
    %71 = vector.shape_cast %70 : vector<8x256xf32> to vector<8x1x256xf32>
    %c0_35 = arith.constant 0 : index
    %72 = arith.index_cast %c0_i32_21 : i32 to index
    %c0_36 = arith.constant 0 : index
    %73 = vector.load %arg13[%c0_35, %72, %c0_36] : memref<8x10x256xf32, #tpu.memory_space<vmem>>, vector<8x1x256xf32>
    tpu.vector_store %arg13[%c0_35, %72, %c0_36], %71 {strides = array<i32>} : memref<8x10x256xf32, #tpu.memory_space<vmem>>, vector<8x1x256xf32>,
    %c10_i32_37 = arith.constant 10 : i32
    %74 = arith.cmpi slt, %14, %c10_i32_37 : i32
    %75 = arith.select %74, %67, %11 : vector<8x128xf32>
    %76 = arith.select %74, %42, %12 : vector<8x128xf32>
    %c1_i32 = arith.constant 1 : i32
    %c10_i32_38 = arith.constant 10 : i32
    %77 = arith.muli %arg1, %c10_i32_38 : i32
    %78 = arith.addi %77, %c1_i32 : i32
    %79 = arith.index_cast %c1_i32 : i32 to index
    %c0_39 = arith.constant 0 : index
    %c0_40 = arith.constant 0 : index
    %80 = vector.load %arg2[%79, %c0_39, %c0_40] : memref<10x8x512xf32, #tpu.memory_space<vmem>>, vector<1x8x512xf32>
    %81 = vector.shape_cast %80 : vector<1x8x512xf32> to vector<8x512xf32>
    %cst_41 = arith.constant dense<0.000000e+00> : vector<8x512xf32>
    %82 = tpu.matmul %75, %5, %cst_41 {dimension_numbers = #tpu.dot_dimension_numbers<[1], [0], [0], [1], [0, 0, 1, 1], [], []>} : vector<8x128xf32>, vector<128x512xf32>, vector<8x512xf32> -> vector<8x512xf32>
    %83 = arith.addf %81, %82 : vector<8x512xf32>
    %84 = vector.extract_strided_slice %83 {offsets = [0, 0], sizes = [8, 128], strides = [1, 1]} : vector<8x512xf32> to vector<8x128xf32>
    %85 = arith.negf %84 : vector<8x128xf32>
    %86 = math.exp %85 : vector<8x128xf32>
    %cst_42 = arith.constant 1.000000e+00 : f32
    %87 = vector.broadcast %cst_42 : f32 to vector<8x128xf32>
    %88 = arith.addf %87, %86 : vector<8x128xf32>
    %89 = arith.divf %87, %88 : vector<8x128xf32>
    %90 = vector.extract_strided_slice %83 {offsets = [0, 128], sizes = [8, 128], strides = [1, 1]} : vector<8x512xf32> to vector<8x128xf32>
    %91 = arith.negf %90 : vector<8x128xf32>
    %92 = math.exp %91 : vector<8x128xf32>
    %cst_43 = arith.constant 1.000000e+00 : f32
    %93 = vector.broadcast %cst_43 : f32 to vector<8x128xf32>
    %94 = arith.addf %93, %92 : vector<8x128xf32>
    %95 = arith.divf %93, %94 : vector<8x128xf32>
    %96 = vector.extract_strided_slice %83 {offsets = [0, 256], sizes = [8, 128], strides = [1, 1]} : vector<8x512xf32> to vector<8x128xf32>
    %97 = math.tanh %96 : vector<8x128xf32>
    %98 = vector.extract_strided_slice %83 {offsets = [0, 384], sizes = [8, 128], strides = [1, 1]} : vector<8x512xf32> to vector<8x128xf32>
    %99 = arith.negf %98 : vector<8x128xf32>
    %100 = math.exp %99 : vector<8x128xf32>
    %cst_44 = arith.constant 1.000000e+00 : f32
    %101 = vector.broadcast %cst_44 : f32 to vector<8x128xf32>
    %102 = arith.addf %101, %100 : vector<8x128xf32>
    %103 = arith.divf %101, %102 : vector<8x128xf32>
    %104 = arith.mulf %95, %76 : vector<8x128xf32>
    %105 = arith.mulf %89, %97 : vector<8x128xf32>
    %106 = arith.addf %104, %105 : vector<8x128xf32>
    %107 = math.tanh %106 : vector<8x128xf32>
    %108 = arith.mulf %103, %107 : vector<8x128xf32>
    %cst_45 = arith.constant dense<0.000000e+00> : vector<8x128xf32>
    %109 = tpu.matmul %108, %6, %cst_45 {dimension_numbers = #tpu.dot_dimension_numbers<[1], [0], [0], [1], [0, 0, 1, 1], [], []>} : vector<8x128xf32>, vector<128x128xf32>, vector<8x128xf32> -> vector<8x128xf32>
    %110 = vector.shape_cast %109 : vector<8x128xf32> to vector<8x1x128xf32>
    %111 = vector.broadcast %110 : vector<8x1x128xf32> to vector<8x6x128xf32>
    %112 = arith.mulf %3, %111 : vector<8x6x128xf32>
    %cst_46 = arith.constant dense<0.000000e+00> : vector<8x6xf32>
    %113 = vector.multi_reduction <add>, %112, %cst_46 [2] : vector<8x6x128xf32> to vector<8x6xf32>
    %114 = arith.addf %113, %4 : vector<8x6xf32>
    %cst_47 = arith.constant dense<0xFF800000> : vector<8xf32>
    %115 = vector.multi_reduction <maximumf>, %114, %cst_47 [1] : vector<8x6xf32> to vector<8xf32>
    %116 = vector.shape_cast %115 : vector<8xf32> to vector<8x1xf32>
    %117 = vector.broadcast %116 : vector<8x1xf32> to vector<8x6xf32>
    %118 = arith.subf %114, %117 : vector<8x6xf32>
    %119 = math.exp %118 : vector<8x6xf32>
    %cst_48 = arith.constant dense<0.000000e+00> : vector<8xf32>
    %120 = vector.multi_reduction <add>, %119, %cst_48 [1] : vector<8x6xf32> to vector<8xf32>
    %121 = vector.shape_cast %120 : vector<8xf32> to vector<8x1xf32>
    %122 = vector.broadcast %121 : vector<8x1xf32> to vector<8x6xf32>
    %123 = arith.divf %119, %122 : vector<8x6xf32>
    %124 = vector.shape_cast %123 : vector<8x6xf32> to vector<8x6x1xf32>
    %125 = vector.broadcast %124 : vector<8x6x1xf32> to vector<8x6x128xf32>
    %126 = arith.mulf %125, %3 : vector<8x6x128xf32>
    %cst_49 = arith.constant dense<0.000000e+00> : vector<8x128xf32>
    %127 = vector.multi_reduction <add>, %126, %cst_49 [1] : vector<8x6x128xf32> to vector<8x128xf32>
    %cst_50 = arith.constant dense<0.000000e+00> : vector<8x128xf32>
    %128 = tpu.matmul %127, %7, %cst_50 {dimension_numbers = #tpu.dot_dimension_numbers<[1], [0], [0], [1], [0, 0, 1, 1], [], []>} : vector<8x128xf32>, vector<128x128xf32>, vector<8x128xf32> -> vector<8x128xf32>
    %cst_51 = arith.constant dense<0.000000e+00> : vector<8x128xf32>
    %129 = tpu.matmul %108, %8, %cst_51 {dimension_numbers = #tpu.dot_dimension_numbers<[1], [0], [0], [1], [0, 0, 1, 1], [], []>} : vector<8x128xf32>, vector<128x128xf32>, vector<8x128xf32> -> vector<8x128xf32>
    %130 = arith.addf %128, %129 : vector<8x128xf32>
    %131 = math.tanh %130 : vector<8x128xf32>
    %cst_52 = arith.constant dense<0.000000e+00> : vector<8x256xf32>
    %132 = tpu.matmul %131, %9, %cst_52 {dimension_numbers = #tpu.dot_dimension_numbers<[1], [0], [0], [1], [0, 0, 1, 1], [], []>} : vector<8x128xf32>, vector<128x256xf32>, vector<8x256xf32> -> vector<8x256xf32>
    %133 = vector.broadcast %10 : vector<1x256xf32> to vector<8x256xf32>
    %134 = arith.addf %132, %133 : vector<8x256xf32>
    %135 = vector.shape_cast %134 : vector<8x256xf32> to vector<8x1x256xf32>
    %c0_53 = arith.constant 0 : index
    %136 = arith.index_cast %c1_i32 : i32 to index
    %c0_54 = arith.constant 0 : index
    %137 = vector.load %arg13[%c0_53, %136, %c0_54] : memref<8x10x256xf32, #tpu.memory_space<vmem>>, vector<8x1x256xf32>
    tpu.vector_store %arg13[%c0_53, %136, %c0_54], %135 {strides = array<i32>} : memref<8x10x256xf32, #tpu.memory_space<vmem>>, vector<8x1x256xf32>,
    %c10_i32_55 = arith.constant 10 : i32
    %138 = arith.cmpi slt, %78, %c10_i32_55 : i32
    %139 = arith.select %138, %131, %75 : vector<8x128xf32>
    %140 = arith.select %138, %106, %76 : vector<8x128xf32>
    %c2_i32 = arith.constant 2 : i32
    %c10_i32_56 = arith.constant 10 : i32
    %141 = arith.muli %arg1, %c10_i32_56 : i32
    %142 = arith.addi %141, %c2_i32 : i32
    %143 = arith.index_cast %c2_i32 : i32 to index
    %c0_57 = arith.constant 0 : index
    %c0_58 = arith.constant 0 : index
    %144 = vector.load %arg2[%143, %c0_57, %c0_58] : memref<10x8x512xf32, #tpu.memory_space<vmem>>, vector<1x8x512xf32>
    %145 = vector.shape_cast %144 : vector<1x8x512xf32> to vector<8x512xf32>
    %cst_59 = arith.constant dense<0.000000e+00> : vector<8x512xf32>
    %146 = tpu.matmul %139, %5, %cst_59 {dimension_numbers = #tpu.dot_dimension_numbers<[1], [0], [0], [1], [0, 0, 1, 1], [], []>} : vector<8x128xf32>, vector<128x512xf32>, vector<8x512xf32> -> vector<8x512xf32>
    %147 = arith.addf %145, %146 : vector<8x512xf32>
    %148 = vector.extract_strided_slice %147 {offsets = [0, 0], sizes = [8, 128], strides = [1, 1]} : vector<8x512xf32> to vector<8x128xf32>
    %149 = arith.negf %148 : vector<8x128xf32>
    %150 = math.exp %149 : vector<8x128xf32>
    %cst_60 = arith.constant 1.000000e+00 : f32
    %151 = vector.broadcast %cst_60 : f32 to vector<8x128xf32>
    %152 = arith.addf %151, %150 : vector<8x128xf32>
    %153 = arith.divf %151, %152 : vector<8x128xf32>
    %154 = vector.extract_strided_slice %147 {offsets = [0, 128], sizes = [8, 128], strides = [1, 1]} : vector<8x512xf32> to vector<8x128xf32>
    %155 = arith.negf %154 : vector<8x128xf32>
    %156 = math.exp %155 : vector<8x128xf32>
    %cst_61 = arith.constant 1.000000e+00 : f32
    %157 = vector.broadcast %cst_61 : f32 to vector<8x128xf32>
    %158 = arith.addf %157, %156 : vector<8x128xf32>
    %159 = arith.divf %157, %158 : vector<8x128xf32>
    %160 = vector.extract_strided_slice %147 {offsets = [0, 256], sizes = [8, 128], strides = [1, 1]} : vector<8x512xf32> to vector<8x128xf32>
    %161 = math.tanh %160 : vector<8x128xf32>
    %162 = vector.extract_strided_slice %147 {offsets = [0, 384], sizes = [8, 128], strides = [1, 1]} : vector<8x512xf32> to vector<8x128xf32>
    %163 = arith.negf %162 : vector<8x128xf32>
    %164 = math.exp %163 : vector<8x128xf32>
    %cst_62 = arith.constant 1.000000e+00 : f32
    %165 = vector.broadcast %cst_62 : f32 to vector<8x128xf32>
    %166 = arith.addf %165, %164 : vector<8x128xf32>
    %167 = arith.divf %165, %166 : vector<8x128xf32>
    %168 = arith.mulf %159, %140 : vector<8x128xf32>
    %169 = arith.mulf %153, %161 : vector<8x128xf32>
    %170 = arith.addf %168, %169 : vector<8x128xf32>
    %171 = math.tanh %170 : vector<8x128xf32>
    %172 = arith.mulf %167, %171 : vector<8x128xf32>
    %cst_63 = arith.constant dense<0.000000e+00> : vector<8x128xf32>
    %173 = tpu.matmul %172, %6, %cst_63 {dimension_numbers = #tpu.dot_dimension_numbers<[1], [0], [0], [1], [0, 0, 1, 1], [], []>} : vector<8x128xf32>, vector<128x128xf32>, vector<8x128xf32> -> vector<8x128xf32>
    %174 = vector.shape_cast %173 : vector<8x128xf32> to vector<8x1x128xf32>
    %175 = vector.broadcast %174 : vector<8x1x128xf32> to vector<8x6x128xf32>
    %176 = arith.mulf %3, %175 : vector<8x6x128xf32>
    %cst_64 = arith.constant dense<0.000000e+00> : vector<8x6xf32>
    %177 = vector.multi_reduction <add>, %176, %cst_64 [2] : vector<8x6x128xf32> to vector<8x6xf32>
    %178 = arith.addf %177, %4 : vector<8x6xf32>
    %cst_65 = arith.constant dense<0xFF800000> : vector<8xf32>
    %179 = vector.multi_reduction <maximumf>, %178, %cst_65 [1] : vector<8x6xf32> to vector<8xf32>
    %180 = vector.shape_cast %179 : vector<8xf32> to vector<8x1xf32>
    %181 = vector.broadcast %180 : vector<8x1xf32> to vector<8x6xf32>
    %182 = arith.subf %178, %181 : vector<8x6xf32>
    %183 = math.exp %182 : vector<8x6xf32>
    %cst_66 = arith.constant dense<0.000000e+00> : vector<8xf32>
    %184 = vector.multi_reduction <add>, %183, %cst_66 [1] : vector<8x6xf32> to vector<8xf32>
    %185 = vector.shape_cast %184 : vector<8xf32> to vector<8x1xf32>
    %186 = vector.broadcast %185 : vector<8x1xf32> to vector<8x6xf32>
    %187 = arith.divf %183, %186 : vector<8x6xf32>
    %188 = vector.shape_cast %187 : vector<8x6xf32> to vector<8x6x1xf32>
    %189 = vector.broadcast %188 : vector<8x6x1xf32> to vector<8x6x128xf32>
    %190 = arith.mulf %189, %3 : vector<8x6x128xf32>
    %cst_67 = arith.constant dense<0.000000e+00> : vector<8x128xf32>
    %191 = vector.multi_reduction <add>, %190, %cst_67 [1] : vector<8x6x128xf32> to vector<8x128xf32>
    %cst_68 = arith.constant dense<0.000000e+00> : vector<8x128xf32>
    %192 = tpu.matmul %191, %7, %cst_68 {dimension_numbers = #tpu.dot_dimension_numbers<[1], [0], [0], [1], [0, 0, 1, 1], [], []>} : vector<8x128xf32>, vector<128x128xf32>, vector<8x128xf32> -> vector<8x128xf32>
    %cst_69 = arith.constant dense<0.000000e+00> : vector<8x128xf32>
    %193 = tpu.matmul %172, %8, %cst_69 {dimension_numbers = #tpu.dot_dimension_numbers<[1], [0], [0], [1], [0, 0, 1, 1], [], []>} : vector<8x128xf32>, vector<128x128xf32>, vector<8x128xf32> -> vector<8x128xf32>
    %194 = arith.addf %192, %193 : vector<8x128xf32>
    %195 = math.tanh %194 : vector<8x128xf32>
    %cst_70 = arith.constant dense<0.000000e+00> : vector<8x256xf32>
    %196 = tpu.matmul %195, %9, %cst_70 {dimension_numbers = #tpu.dot_dimension_numbers<[1], [0], [0], [1], [0, 0, 1, 1], [], []>} : vector<8x128xf32>, vector<128x256xf32>, vector<8x256xf32> -> vector<8x256xf32>
    %197 = vector.broadcast %10 : vector<1x256xf32> to vector<8x256xf32>
    %198 = arith.addf %196, %197 : vector<8x256xf32>
    %199 = vector.shape_cast %198 : vector<8x256xf32> to vector<8x1x256xf32>
    %c0_71 = arith.constant 0 : index
    %200 = arith.index_cast %c2_i32 : i32 to index
    %c0_72 = arith.constant 0 : index
    %201 = vector.load %arg13[%c0_71, %200, %c0_72] : memref<8x10x256xf32, #tpu.memory_space<vmem>>, vector<8x1x256xf32>
    tpu.vector_store %arg13[%c0_71, %200, %c0_72], %199 {strides = array<i32>} : memref<8x10x256xf32, #tpu.memory_space<vmem>>, vector<8x1x256xf32>,
    %c10_i32_73 = arith.constant 10 : i32
    %202 = arith.cmpi slt, %142, %c10_i32_73 : i32
    %203 = arith.select %202, %195, %139 : vector<8x128xf32>
    %204 = arith.select %202, %170, %140 : vector<8x128xf32>
    %c3_i32 = arith.constant 3 : i32
    %c10_i32_74 = arith.constant 10 : i32
    %205 = arith.muli %arg1, %c10_i32_74 : i32
    %206 = arith.addi %205, %c3_i32 : i32
    %207 = arith.index_cast %c3_i32 : i32 to index
    %c0_75 = arith.constant 0 : index
    %c0_76 = arith.constant 0 : index
    %208 = vector.load %arg2[%207, %c0_75, %c0_76] : memref<10x8x512xf32, #tpu.memory_space<vmem>>, vector<1x8x512xf32>
    %209 = vector.shape_cast %208 : vector<1x8x512xf32> to vector<8x512xf32>
    %cst_77 = arith.constant dense<0.000000e+00> : vector<8x512xf32>
    %210 = tpu.matmul %203, %5, %cst_77 {dimension_numbers = #tpu.dot_dimension_numbers<[1], [0], [0], [1], [0, 0, 1, 1], [], []>} : vector<8x128xf32>, vector<128x512xf32>, vector<8x512xf32> -> vector<8x512xf32>
    %211 = arith.addf %209, %210 : vector<8x512xf32>
    %212 = vector.extract_strided_slice %211 {offsets = [0, 0], sizes = [8, 128], strides = [1, 1]} : vector<8x512xf32> to vector<8x128xf32>
    %213 = arith.negf %212 : vector<8x128xf32>
    %214 = math.exp %213 : vector<8x128xf32>
    %cst_78 = arith.constant 1.000000e+00 : f32
    %215 = vector.broadcast %cst_78 : f32 to vector<8x128xf32>
    %216 = arith.addf %215, %214 : vector<8x128xf32>
    %217 = arith.divf %215, %216 : vector<8x128xf32>
    %218 = vector.extract_strided_slice %211 {offsets = [0, 128], sizes = [8, 128], strides = [1, 1]} : vector<8x512xf32> to vector<8x128xf32>
    %219 = arith.negf %218 : vector<8x128xf32>
    %220 = math.exp %219 : vector<8x128xf32>
    %cst_79 = arith.constant 1.000000e+00 : f32
    %221 = vector.broadcast %cst_79 : f32 to vector<8x128xf32>
    %222 = arith.addf %221, %220 : vector<8x128xf32>
    %223 = arith.divf %221, %222 : vector<8x128xf32>
    %224 = vector.extract_strided_slice %211 {offsets = [0, 256], sizes = [8, 128], strides = [1, 1]} : vector<8x512xf32> to vector<8x128xf32>
    %225 = math.tanh %224 : vector<8x128xf32>
    %226 = vector.extract_strided_slice %211 {offsets = [0, 384], sizes = [8, 128], strides = [1, 1]} : vector<8x512xf32> to vector<8x128xf32>
    %227 = arith.negf %226 : vector<8x128xf32>
    %228 = math.exp %227 : vector<8x128xf32>
    %cst_80 = arith.constant 1.000000e+00 : f32
    %229 = vector.broadcast %cst_80 : f32 to vector<8x128xf32>
    %230 = arith.addf %229, %228 : vector<8x128xf32>
    %231 = arith.divf %229, %230 : vector<8x128xf32>
    %232 = arith.mulf %223, %204 : vector<8x128xf32>
    %233 = arith.mulf %217, %225 : vector<8x128xf32>
    %234 = arith.addf %232, %233 : vector<8x128xf32>
    %235 = math.tanh %234 : vector<8x128xf32>
    %236 = arith.mulf %231, %235 : vector<8x128xf32>
    %cst_81 = arith.constant dense<0.000000e+00> : vector<8x128xf32>
    %237 = tpu.matmul %236, %6, %cst_81 {dimension_numbers = #tpu.dot_dimension_numbers<[1], [0], [0], [1], [0, 0, 1, 1], [], []>} : vector<8x128xf32>, vector<128x128xf32>, vector<8x128xf32> -> vector<8x128xf32>
    %238 = vector.shape_cast %237 : vector<8x128xf32> to vector<8x1x128xf32>
    %239 = vector.broadcast %238 : vector<8x1x128xf32> to vector<8x6x128xf32>
    %240 = arith.mulf %3, %239 : vector<8x6x128xf32>
    %cst_82 = arith.constant dense<0.000000e+00> : vector<8x6xf32>
    %241 = vector.multi_reduction <add>, %240, %cst_82 [2] : vector<8x6x128xf32> to vector<8x6xf32>
    %242 = arith.addf %241, %4 : vector<8x6xf32>
    %cst_83 = arith.constant dense<0xFF800000> : vector<8xf32>
    %243 = vector.multi_reduction <maximumf>, %242, %cst_83 [1] : vector<8x6xf32> to vector<8xf32>
    %244 = vector.shape_cast %243 : vector<8xf32> to vector<8x1xf32>
    %245 = vector.broadcast %244 : vector<8x1xf32> to vector<8x6xf32>
    %246 = arith.subf %242, %245 : vector<8x6xf32>
    %247 = math.exp %246 : vector<8x6xf32>
    %cst_84 = arith.constant dense<0.000000e+00> : vector<8xf32>
    %248 = vector.multi_reduction <add>, %247, %cst_84 [1] : vector<8x6xf32> to vector<8xf32>
    %249 = vector.shape_cast %248 : vector<8xf32> to vector<8x1xf32>
    %250 = vector.broadcast %249 : vector<8x1xf32> to vector<8x6xf32>
    %251 = arith.divf %247, %250 : vector<8x6xf32>
    %252 = vector.shape_cast %251 : vector<8x6xf32> to vector<8x6x1xf32>
    %253 = vector.broadcast %252 : vector<8x6x1xf32> to vector<8x6x128xf32>
    %254 = arith.mulf %253, %3 : vector<8x6x128xf32>
    %cst_85 = arith.constant dense<0.000000e+00> : vector<8x128xf32>
    %255 = vector.multi_reduction <add>, %254, %cst_85 [1] : vector<8x6x128xf32> to vector<8x128xf32>
    %cst_86 = arith.constant dense<0.000000e+00> : vector<8x128xf32>
    %256 = tpu.matmul %255, %7, %cst_86 {dimension_numbers = #tpu.dot_dimension_numbers<[1], [0], [0], [1], [0, 0, 1, 1], [], []>} : vector<8x128xf32>, vector<128x128xf32>, vector<8x128xf32> -> vector<8x128xf32>
    %cst_87 = arith.constant dense<0.000000e+00> : vector<8x128xf32>
    %257 = tpu.matmul %236, %8, %cst_87 {dimension_numbers = #tpu.dot_dimension_numbers<[1], [0], [0], [1], [0, 0, 1, 1], [], []>} : vector<8x128xf32>, vector<128x128xf32>, vector<8x128xf32> -> vector<8x128xf32>
    %258 = arith.addf %256, %257 : vector<8x128xf32>
    %259 = math.tanh %258 : vector<8x128xf32>
    %cst_88 = arith.constant dense<0.000000e+00> : vector<8x256xf32>
    %260 = tpu.matmul %259, %9, %cst_88 {dimension_numbers = #tpu.dot_dimension_numbers<[1], [0], [0], [1], [0, 0, 1, 1], [], []>} : vector<8x128xf32>, vector<128x256xf32>, vector<8x256xf32> -> vector<8x256xf32>
    %261 = vector.broadcast %10 : vector<1x256xf32> to vector<8x256xf32>
    %262 = arith.addf %260, %261 : vector<8x256xf32>
    %263 = vector.shape_cast %262 : vector<8x256xf32> to vector<8x1x256xf32>
    %c0_89 = arith.constant 0 : index
    %264 = arith.index_cast %c3_i32 : i32 to index
    %c0_90 = arith.constant 0 : index
    %265 = vector.load %arg13[%c0_89, %264, %c0_90] : memref<8x10x256xf32, #tpu.memory_space<vmem>>, vector<8x1x256xf32>
    tpu.vector_store %arg13[%c0_89, %264, %c0_90], %263 {strides = array<i32>} : memref<8x10x256xf32, #tpu.memory_space<vmem>>, vector<8x1x256xf32>,
    %c10_i32_91 = arith.constant 10 : i32
    %266 = arith.cmpi slt, %206, %c10_i32_91 : i32
    %267 = arith.select %266, %259, %203 : vector<8x128xf32>
    %268 = arith.select %266, %234, %204 : vector<8x128xf32>
    %c4_i32 = arith.constant 4 : i32
    %c10_i32_92 = arith.constant 10 : i32
    %269 = arith.muli %arg1, %c10_i32_92 : i32
    %270 = arith.addi %269, %c4_i32 : i32
    %271 = arith.index_cast %c4_i32 : i32 to index
    %c0_93 = arith.constant 0 : index
    %c0_94 = arith.constant 0 : index
    %272 = vector.load %arg2[%271, %c0_93, %c0_94] : memref<10x8x512xf32, #tpu.memory_space<vmem>>, vector<1x8x512xf32>
    %273 = vector.shape_cast %272 : vector<1x8x512xf32> to vector<8x512xf32>
    %cst_95 = arith.constant dense<0.000000e+00> : vector<8x512xf32>
    %274 = tpu.matmul %267, %5, %cst_95 {dimension_numbers = #tpu.dot_dimension_numbers<[1], [0], [0], [1], [0, 0, 1, 1], [], []>} : vector<8x128xf32>, vector<128x512xf32>, vector<8x512xf32> -> vector<8x512xf32>
    %275 = arith.addf %273, %274 : vector<8x512xf32>
    %276 = vector.extract_strided_slice %275 {offsets = [0, 0], sizes = [8, 128], strides = [1, 1]} : vector<8x512xf32> to vector<8x128xf32>
    %277 = arith.negf %276 : vector<8x128xf32>
    %278 = math.exp %277 : vector<8x128xf32>
    %cst_96 = arith.constant 1.000000e+00 : f32
    %279 = vector.broadcast %cst_96 : f32 to vector<8x128xf32>
    %280 = arith.addf %279, %278 : vector<8x128xf32>
    %281 = arith.divf %279, %280 : vector<8x128xf32>
    %282 = vector.extract_strided_slice %275 {offsets = [0, 128], sizes = [8, 128], strides = [1, 1]} : vector<8x512xf32> to vector<8x128xf32>
    %283 = arith.negf %282 : vector<8x128xf32>
    %284 = math.exp %283 : vector<8x128xf32>
    %cst_97 = arith.constant 1.000000e+00 : f32
    %285 = vector.broadcast %cst_97 : f32 to vector<8x128xf32>
    %286 = arith.addf %285, %284 : vector<8x128xf32>
    %287 = arith.divf %285, %286 : vector<8x128xf32>
    %288 = vector.extract_strided_slice %275 {offsets = [0, 256], sizes = [8, 128], strides = [1, 1]} : vector<8x512xf32> to vector<8x128xf32>
    %289 = math.tanh %288 : vector<8x128xf32>
    %290 = vector.extract_strided_slice %275 {offsets = [0, 384], sizes = [8, 128], strides = [1, 1]} : vector<8x512xf32> to vector<8x128xf32>
    %291 = arith.negf %290 : vector<8x128xf32>
    %292 = math.exp %291 : vector<8x128xf32>
    %cst_98 = arith.constant 1.000000e+00 : f32
    %293 = vector.broadcast %cst_98 : f32 to vector<8x128xf32>
    %294 = arith.addf %293, %292 : vector<8x128xf32>
    %295 = arith.divf %293, %294 : vector<8x128xf32>
    %296 = arith.mulf %287, %268 : vector<8x128xf32>
    %297 = arith.mulf %281, %289 : vector<8x128xf32>
    %298 = arith.addf %296, %297 : vector<8x128xf32>
    %299 = math.tanh %298 : vector<8x128xf32>
    %300 = arith.mulf %295, %299 : vector<8x128xf32>
    %cst_99 = arith.constant dense<0.000000e+00> : vector<8x128xf32>
    %301 = tpu.matmul %300, %6, %cst_99 {dimension_numbers = #tpu.dot_dimension_numbers<[1], [0], [0], [1], [0, 0, 1, 1], [], []>} : vector<8x128xf32>, vector<128x128xf32>, vector<8x128xf32> -> vector<8x128xf32>
    %302 = vector.shape_cast %301 : vector<8x128xf32> to vector<8x1x128xf32>
    %303 = vector.broadcast %302 : vector<8x1x128xf32> to vector<8x6x128xf32>
    %304 = arith.mulf %3, %303 : vector<8x6x128xf32>
    %cst_100 = arith.constant dense<0.000000e+00> : vector<8x6xf32>
    %305 = vector.multi_reduction <add>, %304, %cst_100 [2] : vector<8x6x128xf32> to vector<8x6xf32>
    %306 = arith.addf %305, %4 : vector<8x6xf32>
    %cst_101 = arith.constant dense<0xFF800000> : vector<8xf32>
    %307 = vector.multi_reduction <maximumf>, %306, %cst_101 [1] : vector<8x6xf32> to vector<8xf32>
    %308 = vector.shape_cast %307 : vector<8xf32> to vector<8x1xf32>
    %309 = vector.broadcast %308 : vector<8x1xf32> to vector<8x6xf32>
    %310 = arith.subf %306, %309 : vector<8x6xf32>
    %311 = math.exp %310 : vector<8x6xf32>
    %cst_102 = arith.constant dense<0.000000e+00> : vector<8xf32>
    %312 = vector.multi_reduction <add>, %311, %cst_102 [1] : vector<8x6xf32> to vector<8xf32>
    %313 = vector.shape_cast %312 : vector<8xf32> to vector<8x1xf32>
    %314 = vector.broadcast %313 : vector<8x1xf32> to vector<8x6xf32>
    %315 = arith.divf %311, %314 : vector<8x6xf32>
    %316 = vector.shape_cast %315 : vector<8x6xf32> to vector<8x6x1xf32>
    %317 = vector.broadcast %316 : vector<8x6x1xf32> to vector<8x6x128xf32>
    %318 = arith.mulf %317, %3 : vector<8x6x128xf32>
    %cst_103 = arith.constant dense<0.000000e+00> : vector<8x128xf32>
    %319 = vector.multi_reduction <add>, %318, %cst_103 [1] : vector<8x6x128xf32> to vector<8x128xf32>
    %cst_104 = arith.constant dense<0.000000e+00> : vector<8x128xf32>
    %320 = tpu.matmul %319, %7, %cst_104 {dimension_numbers = #tpu.dot_dimension_numbers<[1], [0], [0], [1], [0, 0, 1, 1], [], []>} : vector<8x128xf32>, vector<128x128xf32>, vector<8x128xf32> -> vector<8x128xf32>
    %cst_105 = arith.constant dense<0.000000e+00> : vector<8x128xf32>
    %321 = tpu.matmul %300, %8, %cst_105 {dimension_numbers = #tpu.dot_dimension_numbers<[1], [0], [0], [1], [0, 0, 1, 1], [], []>} : vector<8x128xf32>, vector<128x128xf32>, vector<8x128xf32> -> vector<8x128xf32>
    %322 = arith.addf %320, %321 : vector<8x128xf32>
    %323 = math.tanh %322 : vector<8x128xf32>
    %cst_106 = arith.constant dense<0.000000e+00> : vector<8x256xf32>
    %324 = tpu.matmul %323, %9, %cst_106 {dimension_numbers = #tpu.dot_dimension_numbers<[1], [0], [0], [1], [0, 0, 1, 1], [], []>} : vector<8x128xf32>, vector<128x256xf32>, vector<8x256xf32> -> vector<8x256xf32>
    %325 = vector.broadcast %10 : vector<1x256xf32> to vector<8x256xf32>
    %326 = arith.addf %324, %325 : vector<8x256xf32>
    %327 = vector.shape_cast %326 : vector<8x256xf32> to vector<8x1x256xf32>
    %c0_107 = arith.constant 0 : index
    %328 = arith.index_cast %c4_i32 : i32 to index
    %c0_108 = arith.constant 0 : index
    %329 = vector.load %arg13[%c0_107, %328, %c0_108] : memref<8x10x256xf32, #tpu.memory_space<vmem>>, vector<8x1x256xf32>
    tpu.vector_store %arg13[%c0_107, %328, %c0_108], %327 {strides = array<i32>} : memref<8x10x256xf32, #tpu.memory_space<vmem>>, vector<8x1x256xf32>,
    %c10_i32_109 = arith.constant 10 : i32
    %330 = arith.cmpi slt, %270, %c10_i32_109 : i32
    %331 = arith.select %330, %323, %267 : vector<8x128xf32>
    %332 = arith.select %330, %298, %268 : vector<8x128xf32>
    %c5_i32 = arith.constant 5 : i32
    %c10_i32_110 = arith.constant 10 : i32
    %333 = arith.muli %arg1, %c10_i32_110 : i32
    %334 = arith.addi %333, %c5_i32 : i32
    %335 = arith.index_cast %c5_i32 : i32 to index
    %c0_111 = arith.constant 0 : index
    %c0_112 = arith.constant 0 : index
    %336 = vector.load %arg2[%335, %c0_111, %c0_112] : memref<10x8x512xf32, #tpu.memory_space<vmem>>, vector<1x8x512xf32>
    %337 = vector.shape_cast %336 : vector<1x8x512xf32> to vector<8x512xf32>
    %cst_113 = arith.constant dense<0.000000e+00> : vector<8x512xf32>
    %338 = tpu.matmul %331, %5, %cst_113 {dimension_numbers = #tpu.dot_dimension_numbers<[1], [0], [0], [1], [0, 0, 1, 1], [], []>} : vector<8x128xf32>, vector<128x512xf32>, vector<8x512xf32> -> vector<8x512xf32>
    %339 = arith.addf %337, %338 : vector<8x512xf32>
    %340 = vector.extract_strided_slice %339 {offsets = [0, 0], sizes = [8, 128], strides = [1, 1]} : vector<8x512xf32> to vector<8x128xf32>
    %341 = arith.negf %340 : vector<8x128xf32>
    %342 = math.exp %341 : vector<8x128xf32>
    %cst_114 = arith.constant 1.000000e+00 : f32
    %343 = vector.broadcast %cst_114 : f32 to vector<8x128xf32>
    %344 = arith.addf %343, %342 : vector<8x128xf32>
    %345 = arith.divf %343, %344 : vector<8x128xf32>
    %346 = vector.extract_strided_slice %339 {offsets = [0, 128], sizes = [8, 128], strides = [1, 1]} : vector<8x512xf32> to vector<8x128xf32>
    %347 = arith.negf %346 : vector<8x128xf32>
    %348 = math.exp %347 : vector<8x128xf32>
    %cst_115 = arith.constant 1.000000e+00 : f32
    %349 = vector.broadcast %cst_115 : f32 to vector<8x128xf32>
    %350 = arith.addf %349, %348 : vector<8x128xf32>
    %351 = arith.divf %349, %350 : vector<8x128xf32>
    %352 = vector.extract_strided_slice %339 {offsets = [0, 256], sizes = [8, 128], strides = [1, 1]} : vector<8x512xf32> to vector<8x128xf32>
    %353 = math.tanh %352 : vector<8x128xf32>
    %354 = vector.extract_strided_slice %339 {offsets = [0, 384], sizes = [8, 128], strides = [1, 1]} : vector<8x512xf32> to vector<8x128xf32>
    %355 = arith.negf %354 : vector<8x128xf32>
    %356 = math.exp %355 : vector<8x128xf32>
    %cst_116 = arith.constant 1.000000e+00 : f32
    %357 = vector.broadcast %cst_116 : f32 to vector<8x128xf32>
    %358 = arith.addf %357, %356 : vector<8x128xf32>
    %359 = arith.divf %357, %358 : vector<8x128xf32>
    %360 = arith.mulf %351, %332 : vector<8x128xf32>
    %361 = arith.mulf %345, %353 : vector<8x128xf32>
    %362 = arith.addf %360, %361 : vector<8x128xf32>
    %363 = math.tanh %362 : vector<8x128xf32>
    %364 = arith.mulf %359, %363 : vector<8x128xf32>
    %cst_117 = arith.constant dense<0.000000e+00> : vector<8x128xf32>
    %365 = tpu.matmul %364, %6, %cst_117 {dimension_numbers = #tpu.dot_dimension_numbers<[1], [0], [0], [1], [0, 0, 1, 1], [], []>} : vector<8x128xf32>, vector<128x128xf32>, vector<8x128xf32> -> vector<8x128xf32>
    %366 = vector.shape_cast %365 : vector<8x128xf32> to vector<8x1x128xf32>
    %367 = vector.broadcast %366 : vector<8x1x128xf32> to vector<8x6x128xf32>
    %368 = arith.mulf %3, %367 : vector<8x6x128xf32>
    %cst_118 = arith.constant dense<0.000000e+00> : vector<8x6xf32>
    %369 = vector.multi_reduction <add>, %368, %cst_118 [2] : vector<8x6x128xf32> to vector<8x6xf32>
    %370 = arith.addf %369, %4 : vector<8x6xf32>
    %cst_119 = arith.constant dense<0xFF800000> : vector<8xf32>
    %371 = vector.multi_reduction <maximumf>, %370, %cst_119 [1] : vector<8x6xf32> to vector<8xf32>
    %372 = vector.shape_cast %371 : vector<8xf32> to vector<8x1xf32>
    %373 = vector.broadcast %372 : vector<8x1xf32> to vector<8x6xf32>
    %374 = arith.subf %370, %373 : vector<8x6xf32>
    %375 = math.exp %374 : vector<8x6xf32>
    %cst_120 = arith.constant dense<0.000000e+00> : vector<8xf32>
    %376 = vector.multi_reduction <add>, %375, %cst_120 [1] : vector<8x6xf32> to vector<8xf32>
    %377 = vector.shape_cast %376 : vector<8xf32> to vector<8x1xf32>
    %378 = vector.broadcast %377 : vector<8x1xf32> to vector<8x6xf32>
    %379 = arith.divf %375, %378 : vector<8x6xf32>
    %380 = vector.shape_cast %379 : vector<8x6xf32> to vector<8x6x1xf32>
    %381 = vector.broadcast %380 : vector<8x6x1xf32> to vector<8x6x128xf32>
    %382 = arith.mulf %381, %3 : vector<8x6x128xf32>
    %cst_121 = arith.constant dense<0.000000e+00> : vector<8x128xf32>
    %383 = vector.multi_reduction <add>, %382, %cst_121 [1] : vector<8x6x128xf32> to vector<8x128xf32>
    %cst_122 = arith.constant dense<0.000000e+00> : vector<8x128xf32>
    %384 = tpu.matmul %383, %7, %cst_122 {dimension_numbers = #tpu.dot_dimension_numbers<[1], [0], [0], [1], [0, 0, 1, 1], [], []>} : vector<8x128xf32>, vector<128x128xf32>, vector<8x128xf32> -> vector<8x128xf32>
    %cst_123 = arith.constant dense<0.000000e+00> : vector<8x128xf32>
    %385 = tpu.matmul %364, %8, %cst_123 {dimension_numbers = #tpu.dot_dimension_numbers<[1], [0], [0], [1], [0, 0, 1, 1], [], []>} : vector<8x128xf32>, vector<128x128xf32>, vector<8x128xf32> -> vector<8x128xf32>
    %386 = arith.addf %384, %385 : vector<8x128xf32>
    %387 = math.tanh %386 : vector<8x128xf32>
    %cst_124 = arith.constant dense<0.000000e+00> : vector<8x256xf32>
    %388 = tpu.matmul %387, %9, %cst_124 {dimension_numbers = #tpu.dot_dimension_numbers<[1], [0], [0], [1], [0, 0, 1, 1], [], []>} : vector<8x128xf32>, vector<128x256xf32>, vector<8x256xf32> -> vector<8x256xf32>
    %389 = vector.broadcast %10 : vector<1x256xf32> to vector<8x256xf32>
    %390 = arith.addf %388, %389 : vector<8x256xf32>
    %391 = vector.shape_cast %390 : vector<8x256xf32> to vector<8x1x256xf32>
    %c0_125 = arith.constant 0 : index
    %392 = arith.index_cast %c5_i32 : i32 to index
    %c0_126 = arith.constant 0 : index
    %393 = vector.load %arg13[%c0_125, %392, %c0_126] : memref<8x10x256xf32, #tpu.memory_space<vmem>>, vector<8x1x256xf32>
    tpu.vector_store %arg13[%c0_125, %392, %c0_126], %391 {strides = array<i32>} : memref<8x10x256xf32, #tpu.memory_space<vmem>>, vector<8x1x256xf32>,
    %c10_i32_127 = arith.constant 10 : i32
    %394 = arith.cmpi slt, %334, %c10_i32_127 : i32
    %395 = arith.select %394, %387, %331 : vector<8x128xf32>
    %396 = arith.select %394, %362, %332 : vector<8x128xf32>
    %c6_i32 = arith.constant 6 : i32
    %c10_i32_128 = arith.constant 10 : i32
    %397 = arith.muli %arg1, %c10_i32_128 : i32
    %398 = arith.addi %397, %c6_i32 : i32
    %399 = arith.index_cast %c6_i32 : i32 to index
    %c0_129 = arith.constant 0 : index
    %c0_130 = arith.constant 0 : index
    %400 = vector.load %arg2[%399, %c0_129, %c0_130] : memref<10x8x512xf32, #tpu.memory_space<vmem>>, vector<1x8x512xf32>
    %401 = vector.shape_cast %400 : vector<1x8x512xf32> to vector<8x512xf32>
    %cst_131 = arith.constant dense<0.000000e+00> : vector<8x512xf32>
    %402 = tpu.matmul %395, %5, %cst_131 {dimension_numbers = #tpu.dot_dimension_numbers<[1], [0], [0], [1], [0, 0, 1, 1], [], []>} : vector<8x128xf32>, vector<128x512xf32>, vector<8x512xf32> -> vector<8x512xf32>
    %403 = arith.addf %401, %402 : vector<8x512xf32>
    %404 = vector.extract_strided_slice %403 {offsets = [0, 0], sizes = [8, 128], strides = [1, 1]} : vector<8x512xf32> to vector<8x128xf32>
    %405 = arith.negf %404 : vector<8x128xf32>
    %406 = math.exp %405 : vector<8x128xf32>
    %cst_132 = arith.constant 1.000000e+00 : f32
    %407 = vector.broadcast %cst_132 : f32 to vector<8x128xf32>
    %408 = arith.addf %407, %406 : vector<8x128xf32>
    %409 = arith.divf %407, %408 : vector<8x128xf32>
    %410 = vector.extract_strided_slice %403 {offsets = [0, 128], sizes = [8, 128], strides = [1, 1]} : vector<8x512xf32> to vector<8x128xf32>
    %411 = arith.negf %410 : vector<8x128xf32>
    %412 = math.exp %411 : vector<8x128xf32>
    %cst_133 = arith.constant 1.000000e+00 : f32
    %413 = vector.broadcast %cst_133 : f32 to vector<8x128xf32>
    %414 = arith.addf %413, %412 : vector<8x128xf32>
    %415 = arith.divf %413, %414 : vector<8x128xf32>
    %416 = vector.extract_strided_slice %403 {offsets = [0, 256], sizes = [8, 128], strides = [1, 1]} : vector<8x512xf32> to vector<8x128xf32>
    %417 = math.tanh %416 : vector<8x128xf32>
    %418 = vector.extract_strided_slice %403 {offsets = [0, 384], sizes = [8, 128], strides = [1, 1]} : vector<8x512xf32> to vector<8x128xf32>
    %419 = arith.negf %418 : vector<8x128xf32>
    %420 = math.exp %419 : vector<8x128xf32>
    %cst_134 = arith.constant 1.000000e+00 : f32
    %421 = vector.broadcast %cst_134 : f32 to vector<8x128xf32>
    %422 = arith.addf %421, %420 : vector<8x128xf32>
    %423 = arith.divf %421, %422 : vector<8x128xf32>
    %424 = arith.mulf %415, %396 : vector<8x128xf32>
    %425 = arith.mulf %409, %417 : vector<8x128xf32>
    %426 = arith.addf %424, %425 : vector<8x128xf32>
    %427 = math.tanh %426 : vector<8x128xf32>
    %428 = arith.mulf %423, %427 : vector<8x128xf32>
    %cst_135 = arith.constant dense<0.000000e+00> : vector<8x128xf32>
    %429 = tpu.matmul %428, %6, %cst_135 {dimension_numbers = #tpu.dot_dimension_numbers<[1], [0], [0], [1], [0, 0, 1, 1], [], []>} : vector<8x128xf32>, vector<128x128xf32>, vector<8x128xf32> -> vector<8x128xf32>
    %430 = vector.shape_cast %429 : vector<8x128xf32> to vector<8x1x128xf32>
    %431 = vector.broadcast %430 : vector<8x1x128xf32> to vector<8x6x128xf32>
    %432 = arith.mulf %3, %431 : vector<8x6x128xf32>
    %cst_136 = arith.constant dense<0.000000e+00> : vector<8x6xf32>
    %433 = vector.multi_reduction <add>, %432, %cst_136 [2] : vector<8x6x128xf32> to vector<8x6xf32>
    %434 = arith.addf %433, %4 : vector<8x6xf32>
    %cst_137 = arith.constant dense<0xFF800000> : vector<8xf32>
    %435 = vector.multi_reduction <maximumf>, %434, %cst_137 [1] : vector<8x6xf32> to vector<8xf32>
    %436 = vector.shape_cast %435 : vector<8xf32> to vector<8x1xf32>
    %437 = vector.broadcast %436 : vector<8x1xf32> to vector<8x6xf32>
    %438 = arith.subf %434, %437 : vector<8x6xf32>
    %439 = math.exp %438 : vector<8x6xf32>
    %cst_138 = arith.constant dense<0.000000e+00> : vector<8xf32>
    %440 = vector.multi_reduction <add>, %439, %cst_138 [1] : vector<8x6xf32> to vector<8xf32>
    %441 = vector.shape_cast %440 : vector<8xf32> to vector<8x1xf32>
    %442 = vector.broadcast %441 : vector<8x1xf32> to vector<8x6xf32>
    %443 = arith.divf %439, %442 : vector<8x6xf32>
    %444 = vector.shape_cast %443 : vector<8x6xf32> to vector<8x6x1xf32>
    %445 = vector.broadcast %444 : vector<8x6x1xf32> to vector<8x6x128xf32>
    %446 = arith.mulf %445, %3 : vector<8x6x128xf32>
    %cst_139 = arith.constant dense<0.000000e+00> : vector<8x128xf32>
    %447 = vector.multi_reduction <add>, %446, %cst_139 [1] : vector<8x6x128xf32> to vector<8x128xf32>
    %cst_140 = arith.constant dense<0.000000e+00> : vector<8x128xf32>
    %448 = tpu.matmul %447, %7, %cst_140 {dimension_numbers = #tpu.dot_dimension_numbers<[1], [0], [0], [1], [0, 0, 1, 1], [], []>} : vector<8x128xf32>, vector<128x128xf32>, vector<8x128xf32> -> vector<8x128xf32>
    %cst_141 = arith.constant dense<0.000000e+00> : vector<8x128xf32>
    %449 = tpu.matmul %428, %8, %cst_141 {dimension_numbers = #tpu.dot_dimension_numbers<[1], [0], [0], [1], [0, 0, 1, 1], [], []>} : vector<8x128xf32>, vector<128x128xf32>, vector<8x128xf32> -> vector<8x128xf32>
    %450 = arith.addf %448, %449 : vector<8x128xf32>
    %451 = math.tanh %450 : vector<8x128xf32>
    %cst_142 = arith.constant dense<0.000000e+00> : vector<8x256xf32>
    %452 = tpu.matmul %451, %9, %cst_142 {dimension_numbers = #tpu.dot_dimension_numbers<[1], [0], [0], [1], [0, 0, 1, 1], [], []>} : vector<8x128xf32>, vector<128x256xf32>, vector<8x256xf32> -> vector<8x256xf32>
    %453 = vector.broadcast %10 : vector<1x256xf32> to vector<8x256xf32>
    %454 = arith.addf %452, %453 : vector<8x256xf32>
    %455 = vector.shape_cast %454 : vector<8x256xf32> to vector<8x1x256xf32>
    %c0_143 = arith.constant 0 : index
    %456 = arith.index_cast %c6_i32 : i32 to index
    %c0_144 = arith.constant 0 : index
    %457 = vector.load %arg13[%c0_143, %456, %c0_144] : memref<8x10x256xf32, #tpu.memory_space<vmem>>, vector<8x1x256xf32>
    tpu.vector_store %arg13[%c0_143, %456, %c0_144], %455 {strides = array<i32>} : memref<8x10x256xf32, #tpu.memory_space<vmem>>, vector<8x1x256xf32>,
    %c10_i32_145 = arith.constant 10 : i32
    %458 = arith.cmpi slt, %398, %c10_i32_145 : i32
    %459 = arith.select %458, %451, %395 : vector<8x128xf32>
    %460 = arith.select %458, %426, %396 : vector<8x128xf32>
    %c7_i32 = arith.constant 7 : i32
    %c10_i32_146 = arith.constant 10 : i32
    %461 = arith.muli %arg1, %c10_i32_146 : i32
    %462 = arith.addi %461, %c7_i32 : i32
    %463 = arith.index_cast %c7_i32 : i32 to index
    %c0_147 = arith.constant 0 : index
    %c0_148 = arith.constant 0 : index
    %464 = vector.load %arg2[%463, %c0_147, %c0_148] : memref<10x8x512xf32, #tpu.memory_space<vmem>>, vector<1x8x512xf32>
    %465 = vector.shape_cast %464 : vector<1x8x512xf32> to vector<8x512xf32>
    %cst_149 = arith.constant dense<0.000000e+00> : vector<8x512xf32>
    %466 = tpu.matmul %459, %5, %cst_149 {dimension_numbers = #tpu.dot_dimension_numbers<[1], [0], [0], [1], [0, 0, 1, 1], [], []>} : vector<8x128xf32>, vector<128x512xf32>, vector<8x512xf32> -> vector<8x512xf32>
    %467 = arith.addf %465, %466 : vector<8x512xf32>
    %468 = vector.extract_strided_slice %467 {offsets = [0, 0], sizes = [8, 128], strides = [1, 1]} : vector<8x512xf32> to vector<8x128xf32>
    %469 = arith.negf %468 : vector<8x128xf32>
    %470 = math.exp %469 : vector<8x128xf32>
    %cst_150 = arith.constant 1.000000e+00 : f32
    %471 = vector.broadcast %cst_150 : f32 to vector<8x128xf32>
    %472 = arith.addf %471, %470 : vector<8x128xf32>
    %473 = arith.divf %471, %472 : vector<8x128xf32>
    %474 = vector.extract_strided_slice %467 {offsets = [0, 128], sizes = [8, 128], strides = [1, 1]} : vector<8x512xf32> to vector<8x128xf32>
    %475 = arith.negf %474 : vector<8x128xf32>
    %476 = math.exp %475 : vector<8x128xf32>
    %cst_151 = arith.constant 1.000000e+00 : f32
    %477 = vector.broadcast %cst_151 : f32 to vector<8x128xf32>
    %478 = arith.addf %477, %476 : vector<8x128xf32>
    %479 = arith.divf %477, %478 : vector<8x128xf32>
    %480 = vector.extract_strided_slice %467 {offsets = [0, 256], sizes = [8, 128], strides = [1, 1]} : vector<8x512xf32> to vector<8x128xf32>
    %481 = math.tanh %480 : vector<8x128xf32>
    %482 = vector.extract_strided_slice %467 {offsets = [0, 384], sizes = [8, 128], strides = [1, 1]} : vector<8x512xf32> to vector<8x128xf32>
    %483 = arith.negf %482 : vector<8x128xf32>
    %484 = math.exp %483 : vector<8x128xf32>
    %cst_152 = arith.constant 1.000000e+00 : f32
    %485 = vector.broadcast %cst_152 : f32 to vector<8x128xf32>
    %486 = arith.addf %485, %484 : vector<8x128xf32>
    %487 = arith.divf %485, %486 : vector<8x128xf32>
    %488 = arith.mulf %479, %460 : vector<8x128xf32>
    %489 = arith.mulf %473, %481 : vector<8x128xf32>
    %490 = arith.addf %488, %489 : vector<8x128xf32>
    %491 = math.tanh %490 : vector<8x128xf32>
    %492 = arith.mulf %487, %491 : vector<8x128xf32>
    %cst_153 = arith.constant dense<0.000000e+00> : vector<8x128xf32>
    %493 = tpu.matmul %492, %6, %cst_153 {dimension_numbers = #tpu.dot_dimension_numbers<[1], [0], [0], [1], [0, 0, 1, 1], [], []>} : vector<8x128xf32>, vector<128x128xf32>, vector<8x128xf32> -> vector<8x128xf32>
    %494 = vector.shape_cast %493 : vector<8x128xf32> to vector<8x1x128xf32>
    %495 = vector.broadcast %494 : vector<8x1x128xf32> to vector<8x6x128xf32>
    %496 = arith.mulf %3, %495 : vector<8x6x128xf32>
    %cst_154 = arith.constant dense<0.000000e+00> : vector<8x6xf32>
    %497 = vector.multi_reduction <add>, %496, %cst_154 [2] : vector<8x6x128xf32> to vector<8x6xf32>
    %498 = arith.addf %497, %4 : vector<8x6xf32>
    %cst_155 = arith.constant dense<0xFF800000> : vector<8xf32>
    %499 = vector.multi_reduction <maximumf>, %498, %cst_155 [1] : vector<8x6xf32> to vector<8xf32>
    %500 = vector.shape_cast %499 : vector<8xf32> to vector<8x1xf32>
    %501 = vector.broadcast %500 : vector<8x1xf32> to vector<8x6xf32>
    %502 = arith.subf %498, %501 : vector<8x6xf32>
    %503 = math.exp %502 : vector<8x6xf32>
    %cst_156 = arith.constant dense<0.000000e+00> : vector<8xf32>
    %504 = vector.multi_reduction <add>, %503, %cst_156 [1] : vector<8x6xf32> to vector<8xf32>
    %505 = vector.shape_cast %504 : vector<8xf32> to vector<8x1xf32>
    %506 = vector.broadcast %505 : vector<8x1xf32> to vector<8x6xf32>
    %507 = arith.divf %503, %506 : vector<8x6xf32>
    %508 = vector.shape_cast %507 : vector<8x6xf32> to vector<8x6x1xf32>
    %509 = vector.broadcast %508 : vector<8x6x1xf32> to vector<8x6x128xf32>
    %510 = arith.mulf %509, %3 : vector<8x6x128xf32>
    %cst_157 = arith.constant dense<0.000000e+00> : vector<8x128xf32>
    %511 = vector.multi_reduction <add>, %510, %cst_157 [1] : vector<8x6x128xf32> to vector<8x128xf32>
    %cst_158 = arith.constant dense<0.000000e+00> : vector<8x128xf32>
    %512 = tpu.matmul %511, %7, %cst_158 {dimension_numbers = #tpu.dot_dimension_numbers<[1], [0], [0], [1], [0, 0, 1, 1], [], []>} : vector<8x128xf32>, vector<128x128xf32>, vector<8x128xf32> -> vector<8x128xf32>
    %cst_159 = arith.constant dense<0.000000e+00> : vector<8x128xf32>
    %513 = tpu.matmul %492, %8, %cst_159 {dimension_numbers = #tpu.dot_dimension_numbers<[1], [0], [0], [1], [0, 0, 1, 1], [], []>} : vector<8x128xf32>, vector<128x128xf32>, vector<8x128xf32> -> vector<8x128xf32>
    %514 = arith.addf %512, %513 : vector<8x128xf32>
    %515 = math.tanh %514 : vector<8x128xf32>
    %cst_160 = arith.constant dense<0.000000e+00> : vector<8x256xf32>
    %516 = tpu.matmul %515, %9, %cst_160 {dimension_numbers = #tpu.dot_dimension_numbers<[1], [0], [0], [1], [0, 0, 1, 1], [], []>} : vector<8x128xf32>, vector<128x256xf32>, vector<8x256xf32> -> vector<8x256xf32>
    %517 = vector.broadcast %10 : vector<1x256xf32> to vector<8x256xf32>
    %518 = arith.addf %516, %517 : vector<8x256xf32>
    %519 = vector.shape_cast %518 : vector<8x256xf32> to vector<8x1x256xf32>
    %c0_161 = arith.constant 0 : index
    %520 = arith.index_cast %c7_i32 : i32 to index
    %c0_162 = arith.constant 0 : index
    %521 = vector.load %arg13[%c0_161, %520, %c0_162] : memref<8x10x256xf32, #tpu.memory_space<vmem>>, vector<8x1x256xf32>
    tpu.vector_store %arg13[%c0_161, %520, %c0_162], %519 {strides = array<i32>} : memref<8x10x256xf32, #tpu.memory_space<vmem>>, vector<8x1x256xf32>,
    %c10_i32_163 = arith.constant 10 : i32
    %522 = arith.cmpi slt, %462, %c10_i32_163 : i32
    %523 = arith.select %522, %515, %459 : vector<8x128xf32>
    %524 = arith.select %522, %490, %460 : vector<8x128xf32>
    %c8_i32 = arith.constant 8 : i32
    %c10_i32_164 = arith.constant 10 : i32
    %525 = arith.muli %arg1, %c10_i32_164 : i32
    %526 = arith.addi %525, %c8_i32 : i32
    %527 = arith.index_cast %c8_i32 : i32 to index
    %c0_165 = arith.constant 0 : index
    %c0_166 = arith.constant 0 : index
    %528 = vector.load %arg2[%527, %c0_165, %c0_166] : memref<10x8x512xf32, #tpu.memory_space<vmem>>, vector<1x8x512xf32>
    %529 = vector.shape_cast %528 : vector<1x8x512xf32> to vector<8x512xf32>
    %cst_167 = arith.constant dense<0.000000e+00> : vector<8x512xf32>
    %530 = tpu.matmul %523, %5, %cst_167 {dimension_numbers = #tpu.dot_dimension_numbers<[1], [0], [0], [1], [0, 0, 1, 1], [], []>} : vector<8x128xf32>, vector<128x512xf32>, vector<8x512xf32> -> vector<8x512xf32>
    %531 = arith.addf %529, %530 : vector<8x512xf32>
    %532 = vector.extract_strided_slice %531 {offsets = [0, 0], sizes = [8, 128], strides = [1, 1]} : vector<8x512xf32> to vector<8x128xf32>
    %533 = arith.negf %532 : vector<8x128xf32>
    %534 = math.exp %533 : vector<8x128xf32>
    %cst_168 = arith.constant 1.000000e+00 : f32
    %535 = vector.broadcast %cst_168 : f32 to vector<8x128xf32>
    %536 = arith.addf %535, %534 : vector<8x128xf32>
    %537 = arith.divf %535, %536 : vector<8x128xf32>
    %538 = vector.extract_strided_slice %531 {offsets = [0, 128], sizes = [8, 128], strides = [1, 1]} : vector<8x512xf32> to vector<8x128xf32>
    %539 = arith.negf %538 : vector<8x128xf32>
    %540 = math.exp %539 : vector<8x128xf32>
    %cst_169 = arith.constant 1.000000e+00 : f32
    %541 = vector.broadcast %cst_169 : f32 to vector<8x128xf32>
    %542 = arith.addf %541, %540 : vector<8x128xf32>
    %543 = arith.divf %541, %542 : vector<8x128xf32>
    %544 = vector.extract_strided_slice %531 {offsets = [0, 256], sizes = [8, 128], strides = [1, 1]} : vector<8x512xf32> to vector<8x128xf32>
    %545 = math.tanh %544 : vector<8x128xf32>
    %546 = vector.extract_strided_slice %531 {offsets = [0, 384], sizes = [8, 128], strides = [1, 1]} : vector<8x512xf32> to vector<8x128xf32>
    %547 = arith.negf %546 : vector<8x128xf32>
    %548 = math.exp %547 : vector<8x128xf32>
    %cst_170 = arith.constant 1.000000e+00 : f32
    %549 = vector.broadcast %cst_170 : f32 to vector<8x128xf32>
    %550 = arith.addf %549, %548 : vector<8x128xf32>
    %551 = arith.divf %549, %550 : vector<8x128xf32>
    %552 = arith.mulf %543, %524 : vector<8x128xf32>
    %553 = arith.mulf %537, %545 : vector<8x128xf32>
    %554 = arith.addf %552, %553 : vector<8x128xf32>
    %555 = math.tanh %554 : vector<8x128xf32>
    %556 = arith.mulf %551, %555 : vector<8x128xf32>
    %cst_171 = arith.constant dense<0.000000e+00> : vector<8x128xf32>
    %557 = tpu.matmul %556, %6, %cst_171 {dimension_numbers = #tpu.dot_dimension_numbers<[1], [0], [0], [1], [0, 0, 1, 1], [], []>} : vector<8x128xf32>, vector<128x128xf32>, vector<8x128xf32> -> vector<8x128xf32>
    %558 = vector.shape_cast %557 : vector<8x128xf32> to vector<8x1x128xf32>
    %559 = vector.broadcast %558 : vector<8x1x128xf32> to vector<8x6x128xf32>
    %560 = arith.mulf %3, %559 : vector<8x6x128xf32>
    %cst_172 = arith.constant dense<0.000000e+00> : vector<8x6xf32>
    %561 = vector.multi_reduction <add>, %560, %cst_172 [2] : vector<8x6x128xf32> to vector<8x6xf32>
    %562 = arith.addf %561, %4 : vector<8x6xf32>
    %cst_173 = arith.constant dense<0xFF800000> : vector<8xf32>
    %563 = vector.multi_reduction <maximumf>, %562, %cst_173 [1] : vector<8x6xf32> to vector<8xf32>
    %564 = vector.shape_cast %563 : vector<8xf32> to vector<8x1xf32>
    %565 = vector.broadcast %564 : vector<8x1xf32> to vector<8x6xf32>
    %566 = arith.subf %562, %565 : vector<8x6xf32>
    %567 = math.exp %566 : vector<8x6xf32>
    %cst_174 = arith.constant dense<0.000000e+00> : vector<8xf32>
    %568 = vector.multi_reduction <add>, %567, %cst_174 [1] : vector<8x6xf32> to vector<8xf32>
    %569 = vector.shape_cast %568 : vector<8xf32> to vector<8x1xf32>
    %570 = vector.broadcast %569 : vector<8x1xf32> to vector<8x6xf32>
    %571 = arith.divf %567, %570 : vector<8x6xf32>
    %572 = vector.shape_cast %571 : vector<8x6xf32> to vector<8x6x1xf32>
    %573 = vector.broadcast %572 : vector<8x6x1xf32> to vector<8x6x128xf32>
    %574 = arith.mulf %573, %3 : vector<8x6x128xf32>
    %cst_175 = arith.constant dense<0.000000e+00> : vector<8x128xf32>
    %575 = vector.multi_reduction <add>, %574, %cst_175 [1] : vector<8x6x128xf32> to vector<8x128xf32>
    %cst_176 = arith.constant dense<0.000000e+00> : vector<8x128xf32>
    %576 = tpu.matmul %575, %7, %cst_176 {dimension_numbers = #tpu.dot_dimension_numbers<[1], [0], [0], [1], [0, 0, 1, 1], [], []>} : vector<8x128xf32>, vector<128x128xf32>, vector<8x128xf32> -> vector<8x128xf32>
    %cst_177 = arith.constant dense<0.000000e+00> : vector<8x128xf32>
    %577 = tpu.matmul %556, %8, %cst_177 {dimension_numbers = #tpu.dot_dimension_numbers<[1], [0], [0], [1], [0, 0, 1, 1], [], []>} : vector<8x128xf32>, vector<128x128xf32>, vector<8x128xf32> -> vector<8x128xf32>
    %578 = arith.addf %576, %577 : vector<8x128xf32>
    %579 = math.tanh %578 : vector<8x128xf32>
    %cst_178 = arith.constant dense<0.000000e+00> : vector<8x256xf32>
    %580 = tpu.matmul %579, %9, %cst_178 {dimension_numbers = #tpu.dot_dimension_numbers<[1], [0], [0], [1], [0, 0, 1, 1], [], []>} : vector<8x128xf32>, vector<128x256xf32>, vector<8x256xf32> -> vector<8x256xf32>
    %581 = vector.broadcast %10 : vector<1x256xf32> to vector<8x256xf32>
    %582 = arith.addf %580, %581 : vector<8x256xf32>
    %583 = vector.shape_cast %582 : vector<8x256xf32> to vector<8x1x256xf32>
    %c0_179 = arith.constant 0 : index
    %584 = arith.index_cast %c8_i32 : i32 to index
    %c0_180 = arith.constant 0 : index
    %585 = vector.load %arg13[%c0_179, %584, %c0_180] : memref<8x10x256xf32, #tpu.memory_space<vmem>>, vector<8x1x256xf32>
    tpu.vector_store %arg13[%c0_179, %584, %c0_180], %583 {strides = array<i32>} : memref<8x10x256xf32, #tpu.memory_space<vmem>>, vector<8x1x256xf32>,
    %c10_i32_181 = arith.constant 10 : i32
    %586 = arith.cmpi slt, %526, %c10_i32_181 : i32
    %587 = arith.select %586, %579, %523 : vector<8x128xf32>
    %588 = arith.select %586, %554, %524 : vector<8x128xf32>
    %c9_i32 = arith.constant 9 : i32
    %c10_i32_182 = arith.constant 10 : i32
    %589 = arith.muli %arg1, %c10_i32_182 : i32
    %590 = arith.addi %589, %c9_i32 : i32
    %591 = arith.index_cast %c9_i32 : i32 to index
    %c0_183 = arith.constant 0 : index
    %c0_184 = arith.constant 0 : index
    %592 = vector.load %arg2[%591, %c0_183, %c0_184] : memref<10x8x512xf32, #tpu.memory_space<vmem>>, vector<1x8x512xf32>
    %593 = vector.shape_cast %592 : vector<1x8x512xf32> to vector<8x512xf32>
    %cst_185 = arith.constant dense<0.000000e+00> : vector<8x512xf32>
    %594 = tpu.matmul %587, %5, %cst_185 {dimension_numbers = #tpu.dot_dimension_numbers<[1], [0], [0], [1], [0, 0, 1, 1], [], []>} : vector<8x128xf32>, vector<128x512xf32>, vector<8x512xf32> -> vector<8x512xf32>
    %595 = arith.addf %593, %594 : vector<8x512xf32>
    %596 = vector.extract_strided_slice %595 {offsets = [0, 0], sizes = [8, 128], strides = [1, 1]} : vector<8x512xf32> to vector<8x128xf32>
    %597 = arith.negf %596 : vector<8x128xf32>
    %598 = math.exp %597 : vector<8x128xf32>
    %cst_186 = arith.constant 1.000000e+00 : f32
    %599 = vector.broadcast %cst_186 : f32 to vector<8x128xf32>
    %600 = arith.addf %599, %598 : vector<8x128xf32>
    %601 = arith.divf %599, %600 : vector<8x128xf32>
    %602 = vector.extract_strided_slice %595 {offsets = [0, 128], sizes = [8, 128], strides = [1, 1]} : vector<8x512xf32> to vector<8x128xf32>
    %603 = arith.negf %602 : vector<8x128xf32>
    %604 = math.exp %603 : vector<8x128xf32>
    %cst_187 = arith.constant 1.000000e+00 : f32
    %605 = vector.broadcast %cst_187 : f32 to vector<8x128xf32>
    %606 = arith.addf %605, %604 : vector<8x128xf32>
    %607 = arith.divf %605, %606 : vector<8x128xf32>
    %608 = vector.extract_strided_slice %595 {offsets = [0, 256], sizes = [8, 128], strides = [1, 1]} : vector<8x512xf32> to vector<8x128xf32>
    %609 = math.tanh %608 : vector<8x128xf32>
    %610 = vector.extract_strided_slice %595 {offsets = [0, 384], sizes = [8, 128], strides = [1, 1]} : vector<8x512xf32> to vector<8x128xf32>
    %611 = arith.negf %610 : vector<8x128xf32>
    %612 = math.exp %611 : vector<8x128xf32>
    %cst_188 = arith.constant 1.000000e+00 : f32
    %613 = vector.broadcast %cst_188 : f32 to vector<8x128xf32>
    %614 = arith.addf %613, %612 : vector<8x128xf32>
    %615 = arith.divf %613, %614 : vector<8x128xf32>
    %616 = arith.mulf %607, %588 : vector<8x128xf32>
    %617 = arith.mulf %601, %609 : vector<8x128xf32>
    %618 = arith.addf %616, %617 : vector<8x128xf32>
    %619 = math.tanh %618 : vector<8x128xf32>
    %620 = arith.mulf %615, %619 : vector<8x128xf32>
    %cst_189 = arith.constant dense<0.000000e+00> : vector<8x128xf32>
    %621 = tpu.matmul %620, %6, %cst_189 {dimension_numbers = #tpu.dot_dimension_numbers<[1], [0], [0], [1], [0, 0, 1, 1], [], []>} : vector<8x128xf32>, vector<128x128xf32>, vector<8x128xf32> -> vector<8x128xf32>
    %622 = vector.shape_cast %621 : vector<8x128xf32> to vector<8x1x128xf32>
    %623 = vector.broadcast %622 : vector<8x1x128xf32> to vector<8x6x128xf32>
    %624 = arith.mulf %3, %623 : vector<8x6x128xf32>
    %cst_190 = arith.constant dense<0.000000e+00> : vector<8x6xf32>
    %625 = vector.multi_reduction <add>, %624, %cst_190 [2] : vector<8x6x128xf32> to vector<8x6xf32>
    %626 = arith.addf %625, %4 : vector<8x6xf32>
    %cst_191 = arith.constant dense<0xFF800000> : vector<8xf32>
    %627 = vector.multi_reduction <maximumf>, %626, %cst_191 [1] : vector<8x6xf32> to vector<8xf32>
    %628 = vector.shape_cast %627 : vector<8xf32> to vector<8x1xf32>
    %629 = vector.broadcast %628 : vector<8x1xf32> to vector<8x6xf32>
    %630 = arith.subf %626, %629 : vector<8x6xf32>
    %631 = math.exp %630 : vector<8x6xf32>
    %cst_192 = arith.constant dense<0.000000e+00> : vector<8xf32>
    %632 = vector.multi_reduction <add>, %631, %cst_192 [1] : vector<8x6xf32> to vector<8xf32>
    %633 = vector.shape_cast %632 : vector<8xf32> to vector<8x1xf32>
    %634 = vector.broadcast %633 : vector<8x1xf32> to vector<8x6xf32>
    %635 = arith.divf %631, %634 : vector<8x6xf32>
    %636 = vector.shape_cast %635 : vector<8x6xf32> to vector<8x6x1xf32>
    %637 = vector.broadcast %636 : vector<8x6x1xf32> to vector<8x6x128xf32>
    %638 = arith.mulf %637, %3 : vector<8x6x128xf32>
    %cst_193 = arith.constant dense<0.000000e+00> : vector<8x128xf32>
    %639 = vector.multi_reduction <add>, %638, %cst_193 [1] : vector<8x6x128xf32> to vector<8x128xf32>
    %cst_194 = arith.constant dense<0.000000e+00> : vector<8x128xf32>
    %640 = tpu.matmul %639, %7, %cst_194 {dimension_numbers = #tpu.dot_dimension_numbers<[1], [0], [0], [1], [0, 0, 1, 1], [], []>} : vector<8x128xf32>, vector<128x128xf32>, vector<8x128xf32> -> vector<8x128xf32>
    %cst_195 = arith.constant dense<0.000000e+00> : vector<8x128xf32>
    %641 = tpu.matmul %620, %8, %cst_195 {dimension_numbers = #tpu.dot_dimension_numbers<[1], [0], [0], [1], [0, 0, 1, 1], [], []>} : vector<8x128xf32>, vector<128x128xf32>, vector<8x128xf32> -> vector<8x128xf32>
    %642 = arith.addf %640, %641 : vector<8x128xf32>
    %643 = math.tanh %642 : vector<8x128xf32>
    %cst_196 = arith.constant dense<0.000000e+00> : vector<8x256xf32>
    %644 = tpu.matmul %643, %9, %cst_196 {dimension_numbers = #tpu.dot_dimension_numbers<[1], [0], [0], [1], [0, 0, 1, 1], [], []>} : vector<8x128xf32>, vector<128x256xf32>, vector<8x256xf32> -> vector<8x256xf32>
    %645 = vector.broadcast %10 : vector<1x256xf32> to vector<8x256xf32>
    %646 = arith.addf %644, %645 : vector<8x256xf32>
    %647 = vector.shape_cast %646 : vector<8x256xf32> to vector<8x1x256xf32>
    %c0_197 = arith.constant 0 : index
    %648 = arith.index_cast %c9_i32 : i32 to index
    %c0_198 = arith.constant 0 : index
    %649 = vector.load %arg13[%c0_197, %648, %c0_198] : memref<8x10x256xf32, #tpu.memory_space<vmem>>, vector<8x1x256xf32>
    tpu.vector_store %arg13[%c0_197, %648, %c0_198], %647 {strides = array<i32>} : memref<8x10x256xf32, #tpu.memory_space<vmem>>, vector<8x1x256xf32>,
    %c10_i32_199 = arith.constant 10 : i32
    %650 = arith.cmpi slt, %590, %c10_i32_199 : i32
    %651 = arith.select %650, %643, %587 : vector<8x128xf32>
    %652 = arith.select %650, %618, %588 : vector<8x128xf32>
    %c10_i32_200 = arith.constant 10 : i32
    %c0_201 = arith.constant 0 : index
    %c0_202 = arith.constant 0 : index
    %653 = vector.load %arg16[%c0_201, %c0_202] : memref<8x128xf32, #tpu.memory_space<vmem>>, vector<8x128xf32>
    tpu.vector_store %arg16[%c0_201, %c0_202], %651 {strides = array<i32>} : memref<8x128xf32, #tpu.memory_space<vmem>>, vector<8x128xf32>,
    %c0_203 = arith.constant 0 : index
    %c0_204 = arith.constant 0 : index
    %654 = vector.load %arg17[%c0_203, %c0_204] : memref<8x128xf32, #tpu.memory_space<vmem>>, vector<8x128xf32>
    tpu.vector_store %arg17[%c0_203, %c0_204], %652 {strides = array<i32>} : memref<8x128xf32, #tpu.memory_space<vmem>>, vector<8x128xf32>,
    %c0_i32_205 = arith.constant 0 : i32
    %655 = arith.cmpi eq, %arg1, %c0_i32_205 : i32
    %656 = arith.extui %655 : i1 to i32
    %c0_i32_206 = arith.constant 0 : i32
    %657 = arith.cmpi ne, %656, %c0_i32_206 : i32
    scf.if %657 {
      %c0_207 = arith.constant 0 : index
      %c0_208 = arith.constant 0 : index
      %658 = vector.load %arg14[%c0_207, %c0_208] : memref<8x128xf32, #tpu.memory_space<vmem>>, vector<8x128xf32>
      tpu.vector_store %arg14[%c0_207, %c0_208], %651 {strides = array<i32>} : memref<8x128xf32, #tpu.memory_space<vmem>>, vector<8x128xf32>,
      %c0_209 = arith.constant 0 : index
      %c0_210 = arith.constant 0 : index
      %659 = vector.load %arg15[%c0_209, %c0_210] : memref<8x128xf32, #tpu.memory_space<vmem>>, vector<8x128xf32>
      tpu.vector_store %arg15[%c0_209, %c0_210], %652 {strides = array<i32>} : memref<8x128xf32, #tpu.memory_space<vmem>>, vector<8x128xf32>,
    } else {
    }
    return
  }
  func.func @transform_0(%arg0: i32, %arg1: i32) -> (i32, i32, i32) {
    %c0_i32 = arith.constant 0 : i32
    %c0_i32_0 = arith.constant 0 : i32
    return %arg1, %arg0, %c0_i32 : i32, i32, i32
  }
  func.func @transform_1(%arg0: i32, %arg1: i32) -> (i32, i32, i32) {
    %c0_i32 = arith.constant 0 : i32
    %c0_i32_0 = arith.constant 0 : i32
    %c0_i32_1 = arith.constant 0 : i32
    return %arg0, %c0_i32, %c0_i32_0 : i32, i32, i32
  }
  func.func @transform_2(%arg0: i32, %arg1: i32) -> (i32, i32) {
    %c0_i32 = arith.constant 0 : i32
    %c0_i32_0 = arith.constant 0 : i32
    return %arg0, %c0_i32 : i32, i32
  }
  func.func @transform_3(%arg0: i32, %arg1: i32) -> (i32, i32) {
    %c0_i32 = arith.constant 0 : i32
    %c0_i32_0 = arith.constant 0 : i32
    return %arg0, %c0_i32 : i32, i32
  }
  func.func @transform_4(%arg0: i32, %arg1: i32) -> (i32, i32) {
    %c0_i32 = arith.constant 0 : i32
    %c0_i32_0 = arith.constant 0 : i32
    return %arg0, %c0_i32 : i32, i32
  }
  func.func @transform_5(%arg0: i32, %arg1: i32) -> (i32, i32) {
    %c0_i32 = arith.constant 0 : i32
    %c0_i32_0 = arith.constant 0 : i32
    %c0_i32_1 = arith.constant 0 : i32
    return %c0_i32, %c0_i32_0 : i32, i32
  }
  func.func @transform_6(%arg0: i32, %arg1: i32) -> (i32, i32) {
    %c0_i32 = arith.constant 0 : i32
    %c0_i32_0 = arith.constant 0 : i32
    %c0_i32_1 = arith.constant 0 : i32
    return %c0_i32, %c0_i32_0 : i32, i32
  }
  func.func @transform_7(%arg0: i32, %arg1: i32) -> (i32, i32) {
    %c0_i32 = arith.constant 0 : i32
    %c0_i32_0 = arith.constant 0 : i32
    %c0_i32_1 = arith.constant 0 : i32
    return %c0_i32, %c0_i32_0 : i32, i32
  }
  func.func @transform_8(%arg0: i32, %arg1: i32) -> (i32, i32) {
    %c0_i32 = arith.constant 0 : i32
    %c0_i32_0 = arith.constant 0 : i32
    %c0_i32_1 = arith.constant 0 : i32
    return %c0_i32, %c0_i32_0 : i32, i32
  }
  func.func @transform_9(%arg0: i32, %arg1: i32) -> (i32, i32) {
    %c0_i32 = arith.constant 0 : i32
    %c0_i32_0 = arith.constant 0 : i32
    %c0_i32_1 = arith.constant 0 : i32
    return %c0_i32, %c0_i32_0 : i32, i32
  }
  func.func @transform_10(%arg0: i32, %arg1: i32) -> (i32, i32) {
    %c0_i32 = arith.constant 0 : i32
    %c0_i32_0 = arith.constant 0 : i32
    %c0_i32_1 = arith.constant 0 : i32
    return %c0_i32, %c0_i32_0 : i32, i32
  }
  func.func @transform_11(%arg0: i32, %arg1: i32) -> (i32, i32, i32) {
    %c0_i32 = arith.constant 0 : i32
    %c0_i32_0 = arith.constant 0 : i32
    return %arg0, %arg1, %c0_i32 : i32, i32, i32
  }
  func.func @transform_12(%arg0: i32, %arg1: i32) -> (i32, i32) {
    %c0_i32 = arith.constant 0 : i32
    %c0_i32_0 = arith.constant 0 : i32
    return %arg0, %c0_i32 : i32, i32
  }
  func.func @transform_13(%arg0: i32, %arg1: i32) -> (i32, i32) {
    %c0_i32 = arith.constant 0 : i32
    %c0_i32_0 = arith.constant 0 : i32
    return %arg0, %c0_i32 : i32, i32
  }
}

</mosaic_0001>

<llo_original>
// kernel: tpu_custom_call.1
$region0: #{tpu_custom_call.1}
  #allocation0 [shape = 'u32[]', space=smem, size = 0x4, offset = 0x4, fixed_abs, tag = 'smem constant byte address 0x4 - core index']
  #allocation1 [shape = 'u32[144,128]{1,0:T(1,128)}', space=vmem, size = 0x12000, scoped, tag = 'internal scratch']
  #allocation2 [shape = 'f32[8,128]{1,0:T(8,128)}', space=vmem, size = 0x1000, scoped, tag = 'scratch operand']
  #allocation3 [shape = 'f32[8,128]{1,0:T(8,128)}', space=vmem, size = 0x1000, scoped, tag = 'scratch operand']
  %s0 = inlined_call_operand.hbm [shape: f32[10,8,512], index: 0, kind: input, shape index: {}]
  %s1 = inlined_call_operand.vmem [shape: f32[8,6,128], index: 1, kind: input, shape index: {}]
  %s2 = inlined_call_operand.hbm [shape: f32[8,6], index: 2, kind: input, shape index: {}]
  %s3 = inlined_call_operand.hbm [shape: f32[8,128], index: 3, kind: input, shape index: {}]
  %s4 = inlined_call_operand.hbm [shape: f32[8,128], index: 4, kind: input, shape index: {}]
  %s5 = inlined_call_operand.hbm [shape: f32[128,512], index: 5, kind: input, shape index: {}]
  %s6 = inlined_call_operand.vmem [shape: f32[128,128], index: 6, kind: input, shape index: {}]
  %s7 = inlined_call_operand.hbm [shape: f32[128,128], index: 7, kind: input, shape index: {}]
  %s8 = inlined_call_operand.hbm [shape: f32[128,128], index: 8, kind: input, shape index: {}]
  %s9 = inlined_call_operand.hbm [shape: f32[128,256], index: 9, kind: input, shape index: {}]
  %s10 = inlined_call_operand.vmem [shape: f32[1,256], index: 10, kind: input, shape index: {}]
  %s11 = inlined_call_operand.vmem [shape: f32[8,10,256], index: 11, kind: output, shape index: {0}]
  %s12 = inlined_call_operand.hbm [shape: f32[8,128], index: 12, kind: output, shape index: {1}]
  %s13 = inlined_call_operand.hbm [shape: f32[8,128], index: 13, kind: output, shape index: {2}]
  %14 = xla_tuple %s11, %s12, %s13
  %s15 = sld [smem:[#allocation0]]
  $region110: #{tpu_custom_call.1} parent=0
    _
  %s17 = ssub.s32 1, %s15
  %s18 = scalar_select 0, %s17, %s15
  $region1: #{tpu_custom_call.1} parent=0
    #allocation4 [shape = 'u8[163840]{0}', space=vmem, size = 0x28000, scoped, tag = 'input window, operand 0, single buffered']
    #allocation5 [shape = 's32[1]{0}', space=sflag, size = 0x4, scoped, tag = 'scoped memory for tpu_custom_call.1']
    #allocation6 [shape = 's32[1]{0}', space=sflag, size = 0x4, scoped, tag = 'scoped memory for tpu_custom_call.1']
    #allocation7 [shape = 'u8[4096]{0}', space=vmem, size = 0x1000, scoped, tag = 'input window, operand 2, single buffered']
    #allocation8 [shape = 's32[1]{0}', space=sflag, size = 0x4, scoped, tag = 'scoped memory for tpu_custom_call.1']
    #allocation9 [shape = 'u8[4096]{0}', space=vmem, size = 0x1000, scoped, tag = 'input window, operand 3, single buffered']
    #allocation10 [shape = 'u8[4096]{0}', space=vmem, size = 0x1000, scoped, tag = 'input window, operand 4, single buffered']
    #allocation11 [shape = 's32[1]{0}', space=sflag, size = 0x4, scoped, tag = 'scoped memory for tpu_custom_call.1']
    #allocation12 [shape = 'u8[262144]{0}', space=vmem, size = 0x40000, scoped, tag = 'input window, operand 5, single buffered']
    #allocation13 [shape = 'u8[65536]{0}', space=vmem, size = 0x10000, scoped, tag = 'input window, operand 7, single buffered']
    #allocation14 [shape = 's32[1]{0}', space=sflag, size = 0x4, scoped, tag = 'scoped memory for tpu_custom_call.1']
    #allocation15 [shape = 'u8[65536]{0}', space=vmem, size = 0x10000, scoped, tag = 'input window, operand 8, single buffered']
    #allocation16 [shape = 'u8[131072]{0}', space=vmem, size = 0x20000, scoped, tag = 'input window, operand 9, single buffered']
    #allocation17 [shape = 's32[1]{0}', space=sflag, size = 0x4, scoped, tag = 'scoped memory for tpu_custom_call.1']
    #allocation18 [shape = 'u8[4096]{0}', space=vmem, size = 0x1000, scoped, tag = 'output window, operand 1, single buffered']
    #allocation19 [shape = 'u8[4096]{0}', space=vmem, size = 0x1000, scoped, tag = 'output window, operand 2, single buffered']
    #allocation20 [shape = 's32[1]{0}', space=sflag, size = 0x4, scoped, tag = 'scoped memory for tpu_custom_call.1']
    %19 = vsyncpa [#allocation5], 0
    %20 = vsyncpa [#allocation8], 0
    %21 = vsyncpa [#allocation11], 0
    %22 = vsyncpa [#allocation14], 0
    %23 = vsyncpa [#allocation17], 0
    %24 = vsyncpa [#allocation6], 0
    %25 = vsyncpa [#allocation20], 0
    // Predicated region
    $region2: #{tpu_custom_call.1} parent=1 // pred_check
      _
    $region3: #{tpu_custom_call.1} parent=1 // pred_check_branch
      %27 = sbr.rel (0) target = $region5
    $region4: #{tpu_custom_call.1} parent=1 // pred_region
      %s29 = ssub.s32 5120, 5120
      %30 = vsyncadd [#allocation5], %s29
      %s31 = sshll.u32 [#allocation4], 4
      %s32 = int_to_ptr.vmem [resolvable:$true] %s31
      %37 = dma.hbm_to_vmem [thread:$0]  %s0, 5120, %s32, [#allocation5], 512, 512, 32
    $region5: #{tpu_custom_call.1} parent=1 // pred_fallthru
      _
    // Predicated region
    $region6: #{tpu_custom_call.1} parent=1 // pred_check
      _
    $region7: #{tpu_custom_call.1} parent=1 // pred_check_branch
      %39 = sbr.rel (0) target = $region9
    $region8: #{tpu_custom_call.1} parent=1 // pred_region
      _
    $region9: #{tpu_custom_call.1} parent=1 // pred_fallthru
      _
    // Predicated region
    $region10: #{tpu_custom_call.1} parent=1 // pred_check
      _
    $region11: #{tpu_custom_call.1} parent=1 // pred_check_branch
      %41 = sbr.rel (0) target = $region13
    $region12: #{tpu_custom_call.1} parent=1 // pred_region
      %s43 = ssub.s32 128, 128
      %44 = vsyncadd [#allocation8], %s43
      %s46 = sshll.u32 [#allocation7], 4
      %s47 = int_to_ptr.vmem [resolvable:$true] %s46
      %49 = dma.hbm_to_vmem [thread:$0]  %s2, 128, %s47, [#allocation8]
    $region13: #{tpu_custom_call.1} parent=1 // pred_fallthru
      _
    // Predicated region
    $region14: #{tpu_custom_call.1} parent=1 // pred_check
      _
    $region15: #{tpu_custom_call.1} parent=1 // pred_check_branch
      %51 = sbr.rel (0) target = $region17
    $region16: #{tpu_custom_call.1} parent=1 // pred_region
      %s53 = ssub.s32 128, 128
      %54 = vsyncadd [#allocation8], %s53
      %s56 = sshll.u32 [#allocation9], 4
      %s57 = int_to_ptr.vmem [resolvable:$true] %s56
      %59 = dma.hbm_to_vmem [thread:$0]  %s3, 128, %s57, [#allocation8]
    $region17: #{tpu_custom_call.1} parent=1 // pred_fallthru
      _
    // Predicated region
    $region18: #{tpu_custom_call.1} parent=1 // pred_check
      _
    $region19: #{tpu_custom_call.1} parent=1 // pred_check_branch
      %61 = sbr.rel (0) target = $region21
    $region20: #{tpu_custom_call.1} parent=1 // pred_region
      %s63 = ssub.s32 128, 128
      %64 = vsyncadd [#allocation11], %s63
      %s66 = sshll.u32 [#allocation10], 4
      %s67 = int_to_ptr.vmem [resolvable:$true] %s66
      %69 = dma.hbm_to_vmem [thread:$0]  %s4, 128, %s67, [#allocation11]
    $region21: #{tpu_custom_call.1} parent=1 // pred_fallthru
      _
    // Predicated region
    $region22: #{tpu_custom_call.1} parent=1 // pred_check
      _
    $region23: #{tpu_custom_call.1} parent=1 // pred_check_branch
      %71 = sbr.rel (0) target = $region25
    $region24: #{tpu_custom_call.1} parent=1 // pred_region
      %s73 = ssub.s32 8192, 8192
      %74 = vsyncadd [#allocation11], %s73
      %s75 = sshll.u32 [#allocation12], 4
      %s76 = int_to_ptr.vmem [resolvable:$true] %s75
      %81 = dma.hbm_to_vmem [thread:$0]  %s5, 8192, %s76, [#allocation11], 512, 512, 32
    $region25: #{tpu_custom_call.1} parent=1 // pred_fallthru
      _
    // Predicated region
    $region26: #{tpu_custom_call.1} parent=1 // pred_check
      _
    $region27: #{tpu_custom_call.1} parent=1 // pred_check_branch
      %83 = sbr.rel (0) target = $region29
    $region28: #{tpu_custom_call.1} parent=1 // pred_region
      _
    $region29: #{tpu_custom_call.1} parent=1 // pred_fallthru
      _
    // Predicated region
    $region30: #{tpu_custom_call.1} parent=1 // pred_check
      _
    $region31: #{tpu_custom_call.1} parent=1 // pred_check_branch
      %85 = sbr.rel (0) target = $region33
    $region32: #{tpu_custom_call.1} parent=1 // pred_region
      %s87 = ssub.s32 2048, 2048
      %88 = vsyncadd [#allocation14], %s87
      %s89 = sshll.u32 [#allocation13], 4
      %s90 = int_to_ptr.vmem [resolvable:$true] %s89
      %95 = dma.hbm_to_vmem [thread:$0]  %s7, 2048, %s90, [#allocation14], 128, 128, 8
    $region33: #{tpu_custom_call.1} parent=1 // pred_fallthru
      _
    // Predicated region
    $region34: #{tpu_custom_call.1} parent=1 // pred_check
      _
    $region35: #{tpu_custom_call.1} parent=1 // pred_check_branch
      %97 = sbr.rel (0) target = $region37
    $region36: #{tpu_custom_call.1} parent=1 // pred_region
      %s99 = ssub.s32 2048, 2048
      %100 = vsyncadd [#allocation14], %s99
      %s101 = sshll.u32 [#allocation15], 4
      %s102 = int_to_ptr.vmem [resolvable:$true] %s101
      %107 = dma.hbm_to_vmem [thread:$0]  %s8, 2048, %s102, [#allocation14], 128, 128, 8
    $region37: #{tpu_custom_call.1} parent=1 // pred_fallthru
      _
    // Predicated region
    $region38: #{tpu_custom_call.1} parent=1 // pred_check
      _
    $region39: #{tpu_custom_call.1} parent=1 // pred_check_branch
      %109 = sbr.rel (0) target = $region41
    $region40: #{tpu_custom_call.1} parent=1 // pred_region
      %s111 = ssub.s32 4096, 4096
      %112 = vsyncadd [#allocation17], %s111
      %s113 = sshll.u32 [#allocation16], 4
      %s114 = int_to_ptr.vmem [resolvable:$true] %s113
      %119 = dma.hbm_to_vmem [thread:$0]  %s9, 4096, %s114, [#allocation17], 256, 256, 16
    $region41: #{tpu_custom_call.1} parent=1 // pred_fallthru
      _
    // Predicated region
    $region42: #{tpu_custom_call.1} parent=1 // pred_check
      _
    $region43: #{tpu_custom_call.1} parent=1 // pred_check_branch
      %121 = sbr.rel (0) target = $region45
    $region44: #{tpu_custom_call.1} parent=1 // pred_region
      _
    $region45: #{tpu_custom_call.1} parent=1 // pred_fallthru
      _
    // Predicated region
    $region46: #{tpu_custom_call.1} parent=1 // pred_check
      _
    $region47: #{tpu_custom_call.1} parent=1 // pred_check_branch
      %123 = sbr.rel (0) target = $region49
    $region48: #{tpu_custom_call.1} parent=1 // pred_region
      %124 = dma.done [#allocation5], 5120
    $region49: #{tpu_custom_call.1} parent=1 // pred_fallthru
      _
    // Predicated region
    $region50: #{tpu_custom_call.1} parent=1 // pred_check
      _
    $region51: #{tpu_custom_call.1} parent=1 // pred_check_branch
      %126 = sbr.rel (0) target = $region53
    $region52: #{tpu_custom_call.1} parent=1 // pred_region
      %127 = dma.done [#allocation8], 128
    $region53: #{tpu_custom_call.1} parent=1 // pred_fallthru
      _
    // Predicated region
    $region54: #{tpu_custom_call.1} parent=1 // pred_check
      _
    $region55: #{tpu_custom_call.1} parent=1 // pred_check_branch
      %129 = sbr.rel (0) target = $region57
    $region56: #{tpu_custom_call.1} parent=1 // pred_region
      %130 = dma.done [#allocation8], 128
    $region57: #{tpu_custom_call.1} parent=1 // pred_fallthru
      _
    // Predicated region
    $region58: #{tpu_custom_call.1} parent=1 // pred_check
      _
    $region59: #{tpu_custom_call.1} parent=1 // pred_check_branch
      %132 = sbr.rel (0) target = $region61
    $region60: #{tpu_custom_call.1} parent=1 // pred_region
      %133 = dma.done [#allocation11], 128
    $region61: #{tpu_custom_call.1} parent=1 // pred_fallthru
      _
    // Predicated region
    $region62: #{tpu_custom_call.1} parent=1 // pred_check
      _
    $region63: #{tpu_custom_call.1} parent=1 // pred_check_branch
      %135 = sbr.rel (0) target = $region65
    $region64: #{tpu_custom_call.1} parent=1 // pred_region
      %136 = dma.done [#allocation11], 8192
    $region65: #{tpu_custom_call.1} parent=1 // pred_fallthru
      _
    // Predicated region
    $region66: #{tpu_custom_call.1} parent=1 // pred_check
      _
    $region67: #{tpu_custom_call.1} parent=1 // pred_check_branch
      %138 = sbr.rel (0) target = $region69
    $region68: #{tpu_custom_call.1} parent=1 // pred_region
      %139 = dma.done [#allocation14], 2048
    $region69: #{tpu_custom_call.1} parent=1 // pred_fallthru
      _
    // Predicated region
    $region70: #{tpu_custom_call.1} parent=1 // pred_check
      _
    $region71: #{tpu_custom_call.1} parent=1 // pred_check_branch
      %141 = sbr.rel (0) target = $region73
    $region72: #{tpu_custom_call.1} parent=1 // pred_region
      %142 = dma.done [#allocation14], 2048
    $region73: #{tpu_custom_call.1} parent=1 // pred_fallthru
      _
    // Predicated region
    $region74: #{tpu_custom_call.1} parent=1 // pred_check
      _
    $region75: #{tpu_custom_call.1} parent=1 // pred_check_branch
      %144 = sbr.rel (0) target = $region77
    $region76: #{tpu_custom_call.1} parent=1 // pred_region
      %145 = dma.done [#allocation17], 4096
    $region77: #{tpu_custom_call.1} parent=1 // pred_fallthru
      _
    %p146 = scmp.eq.s32.totalorder 0, 0
    // Predicated region
    $region78: #{tpu_custom_call.1} parent=1 // pred_check
      %p147 = pneg %p146
    $region79: #{tpu_custom_call.1} parent=1 // pred_check_branch
      %149 = sbr.rel (%p147) target = $region81
    $region80: #{tpu_custom_call.1} parent=1 // pred_region
      %v150 = vld [vmem:[#allocation9] sm:$0xff]
      %151 = vst [vmem:[#allocation2] sm:$0xff] %v150
      %v152 = vld [vmem:[#allocation10] sm:$0xff]
      %153 = vst [vmem:[#allocation3] sm:$0xff] %v152
    $region81: #{tpu_custom_call.1} parent=1 // pred_fallthru
      _
    %v154 = vld [vmem:[%s1] sm:$0x3f]
    %v155 = vld [vmem:[%s1 + $0x8] sm:$0x3f]
    %v156 = vld [vmem:[%s1 + $0x10] sm:$0x3f]
    %v157 = vld [vmem:[%s1 + $0x18] sm:$0x3f]
    %v158 = vld [vmem:[%s1 + $0x20] sm:$0x3f]
    %v159 = vld [vmem:[%s1 + $0x28] sm:$0x3f]
    %v160 = vld [vmem:[%s1 + $0x30] sm:$0x3f]
    %v161 = vld [vmem:[%s1 + $0x38] sm:$0x3f]
    %v162 = vld [vmem:[#allocation7] sm:$0xff]
    %v163 = vld [vmem:[#allocation12] sm:$0xff]
    %v164 = vld [vmem:[#allocation12 + $0x8] sm:$0xff]
    %v165 = vld [vmem:[#allocation12 + $0x10] sm:$0xff]
    %v166 = vld [vmem:[#allocation12 + $0x18] sm:$0xff]
    %v167 = vld [vmem:[#allocation12 + $0x20] sm:$0xff]
    %v168 = vld [vmem:[#allocation12 + $0x28] sm:$0xff]
    %v169 = vld [vmem:[#allocation12 + $0x30] sm:$0xff]
    %v170 = vld [vmem:[#allocation12 + $0x38] sm:$0xff]
    %v171 = vld [vmem:[#allocation12 + $0x40] sm:$0xff]
    %v172 = vld [vmem:[#allocation12 + $0x48] sm:$0xff]
    %v173 = vld [vmem:[#allocation12 + $0x50] sm:$0xff]
    %v174 = vld [vmem:[#allocation12 + $0x58] sm:$0xff]
    %v175 = vld [vmem:[#allocation12 + $0x60] sm:$0xff]
    %v176 = vld [vmem:[#allocation12 + $0x68] sm:$0xff]
    %v177 = vld [vmem:[#allocation12 + $0x70] sm:$0xff]
    %v178 = vld [vmem:[#allocation12 + $0x78] sm:$0xff]
    %v179 = vld [vmem:[#allocation12 + $0x80] sm:$0xff]
    %v180 = vld [vmem:[#allocation12 + $0x88] sm:$0xff]
    %v181 = vld [vmem:[#allocation12 + $0x90] sm:$0xff]
    %v182 = vld [vmem:[#allocation12 + $0x98] sm:$0xff]
    %v183 = vld [vmem:[#allocation12 + $0xa0] sm:$0xff]
    %v184 = vld [vmem:[#allocation12 + $0xa8] sm:$0xff]
    %v185 = vld [vmem:[#allocation12 + $0xb0] sm:$0xff]
    %v186 = vld [vmem:[#allocation12 + $0xb8] sm:$0xff]
    %v187 = vld [vmem:[#allocation12 + $0xc0] sm:$0xff]
    %v188 = vld [vmem:[#allocation12 + $0xc8] sm:$0xff]
    %v189 = vld [vmem:[#allocation12 + $0xd0] sm:$0xff]
    %v190 = vld [vmem:[#allocation12 + $0xd8] sm:$0xff]
    %v191 = vld [vmem:[#allocation12 + $0xe0] sm:$0xff]
    %v192 = vld [vmem:[#allocation12 + $0xe8] sm:$0xff]
    %v193 = vld [vmem:[#allocation12 + $0xf0] sm:$0xff]
    %v194 = vld [vmem:[#allocation12 + $0xf8] sm:$0xff]
    %v195 = vld [vmem:[#allocation12 + $0x100] sm:$0xff]
    %v196 = vld [vmem:[#allocation12 + $0x108] sm:$0xff]
    %v197 = vld [vmem:[#allocation12 + $0x110] sm:$0xff]
    %v198 = vld [vmem:[#allocation12 + $0x118] sm:$0xff]
    %v199 = vld [vmem:[#allocation12 + $0x120] sm:$0xff]
    %v200 = vld [vmem:[#allocation12 + $0x128] sm:$0xff]
    %v201 = vld [vmem:[#allocation12 + $0x130] sm:$0xff]
    %v202 = vld [vmem:[#allocation12 + $0x138] sm:$0xff]
    %v203 = vld [vmem:[#allocation12 + $0x140] sm:$0xff]
    %v204 = vld [vmem:[#allocation12 + $0x148] sm:$0xff]
    %v205 = vld [vmem:[#allocation12 + $0x150] sm:$0xff]
    %v206 = vld [vmem:[#allocation12 + $0x158] sm:$0xff]
    %v207 = vld [vmem:[#allocation12 + $0x160] sm:$0xff]
    %v208 = vld [vmem:[#allocation12 + $0x168] sm:$0xff]
    %v209 = vld [vmem:[#allocation12 + $0x170] sm:$0xff]
    %v210 = vld [vmem:[#allocation12 + $0x178] sm:$0xff]
    %v211 = vld [vmem:[#allocation12 + $0x180] sm:$0xff]
    %v212 = vld [vmem:[#allocation12 + $0x188] sm:$0xff]
    %v213 = vld [vmem:[#allocation12 + $0x190] sm:$0xff]
    %v214 = vld [vmem:[#allocation12 + $0x198] sm:$0xff]
    %v215 = vld [vmem:[#allocation12 + $0x1a0] sm:$0xff]
    %v216 = vld [vmem:[#allocation12 + $0x1a8] sm:$0xff]
    %v217 = vld [vmem:[#allocation12 + $0x1b0] sm:$0xff]
    %v218 = vld [vmem:[#allocation12 + $0x1b8] sm:$0xff]
    %v219 = vld [vmem:[#allocation12 + $0x1c0] sm:$0xff]
    %v220 = vld [vmem:[#allocation12 + $0x1c8] sm:$0xff]
    %v221 = vld [vmem:[#allocation12 + $0x1d0] sm:$0xff]
    %v222 = vld [vmem:[#allocation12 + $0x1d8] sm:$0xff]
    %v223 = vld [vmem:[#allocation12 + $0x1e0] sm:$0xff]
    %v224 = vld [vmem:[#allocation12 + $0x1e8] sm:$0xff]
    %v225 = vld [vmem:[#allocation12 + $0x1f0] sm:$0xff]
    %v226 = vld [vmem:[#allocation12 + $0x1f8] sm:$0xff]
    %v227 = vld [vmem:[%s6] sm:$0xff]
    %v228 = vld [vmem:[%s6 + $0x8] sm:$0xff]
    %v229 = vld [vmem:[%s6 + $0x10] sm:$0xff]
    %v230 = vld [vmem:[%s6 + $0x18] sm:$0xff]
    %v231 = vld [vmem:[%s6 + $0x20] sm:$0xff]
    %v232 = vld [vmem:[%s6 + $0x28] sm:$0xff]
    %v233 = vld [vmem:[%s6 + $0x30] sm:$0xff]
    %v234 = vld [vmem:[%s6 + $0x38] sm:$0xff]
    %v235 = vld [vmem:[%s6 + $0x40] sm:$0xff]
    %v236 = vld [vmem:[%s6 + $0x48] sm:$0xff]
    %v237 = vld [vmem:[%s6 + $0x50] sm:$0xff]
    %v238 = vld [vmem:[%s6 + $0x58] sm:$0xff]
    %v239 = vld [vmem:[%s6 + $0x60] sm:$0xff]
    %v240 = vld [vmem:[%s6 + $0x68] sm:$0xff]
    %v241 = vld [vmem:[%s6 + $0x70] sm:$0xff]
    %v242 = vld [vmem:[%s6 + $0x78] sm:$0xff]
    %v243 = vld [vmem:[#allocation13] sm:$0xff]
    %v244 = vld [vmem:[#allocation13 + $0x8] sm:$0xff]
    %v245 = vld [vmem:[#allocation13 + $0x10] sm:$0xff]
    %v246 = vld [vmem:[#allocation13 + $0x18] sm:$0xff]
    %v247 = vld [vmem:[#allocation13 + $0x20] sm:$0xff]
    %v248 = vld [vmem:[#allocation13 + $0x28] sm:$0xff]
    %v249 = vld [vmem:[#allocation13 + $0x30] sm:$0xff]
    %v250 = vld [vmem:[#allocation13 + $0x38] sm:$0xff]
    %v251 = vld [vmem:[#allocation13 + $0x40] sm:$0xff]
    %v252 = vld [vmem:[#allocation13 + $0x48] sm:$0xff]
    %v253 = vld [vmem:[#allocation13 + $0x50] sm:$0xff]
    %v254 = vld [vmem:[#allocation13 + $0x58] sm:$0xff]
    %v255 = vld [vmem:[#allocation13 + $0x60] sm:$0xff]
    %v256 = vld [vmem:[#allocation13 + $0x68] sm:$0xff]
    %v257 = vld [vmem:[#allocation13 + $0x70] sm:$0xff]
    %v258 = vld [vmem:[#allocation13 + $0x78] sm:$0xff]
    %v259 = vld [vmem:[#allocation15] sm:$0xff]
    %v260 = vld [vmem:[#allocation15 + $0x8] sm:$0xff]
    %v261 = vld [vmem:[#allocation15 + $0x10] sm:$0xff]
    %v262 = vld [vmem:[#allocation15 + $0x18] sm:$0xff]
    %v263 = vld [vmem:[#allocation15 + $0x20] sm:$0xff]
    %v264 = vld [vmem:[#allocation15 + $0x28] sm:$0xff]
    %v265 = vld [vmem:[#allocation15 + $0x30] sm:$0xff]
    %v266 = vld [vmem:[#allocation15 + $0x38] sm:$0xff]
    %v267 = vld [vmem:[#allocation15 + $0x40] sm:$0xff]
    %v268 = vld [vmem:[#allocation15 + $0x48] sm:$0xff]
    %v269 = vld [vmem:[#allocation15 + $0x50] sm:$0xff]
    %v270 = vld [vmem:[#allocation15 + $0x58] sm:$0xff]
    %v271 = vld [vmem:[#allocation15 + $0x60] sm:$0xff]
    %v272 = vld [vmem:[#allocation15 + $0x68] sm:$0xff]
    %v273 = vld [vmem:[#allocation15 + $0x70] sm:$0xff]
    %v274 = vld [vmem:[#allocation15 + $0x78] sm:$0xff]
    %v275 = vld [vmem:[#allocation16] sm:$0xff]
    %v276 = vld [vmem:[#allocation16 + $0x8] sm:$0xff]
    %v277 = vld [vmem:[#allocation16 + $0x10] sm:$0xff]
    %v278 = vld [vmem:[#allocation16 + $0x18] sm:$0xff]
    %v279 = vld [vmem:[#allocation16 + $0x20] sm:$0xff]
    %v280 = vld [vmem:[#allocation16 + $0x28] sm:$0xff]
    %v281 = vld [vmem:[#allocation16 + $0x30] sm:$0xff]
    %v282 = vld [vmem:[#allocation16 + $0x38] sm:$0xff]
    %v283 = vld [vmem:[#allocation16 + $0x40] sm:$0xff]
    %v284 = vld [vmem:[#allocation16 + $0x48] sm:$0xff]
    %v285 = vld [vmem:[#allocation16 + $0x50] sm:$0xff]
    %v286 = vld [vmem:[#allocation16 + $0x58] sm:$0xff]
    %v287 = vld [vmem:[#allocation16 + $0x60] sm:$0xff]
    %v288 = vld [vmem:[#allocation16 + $0x68] sm:$0xff]
    %v289 = vld [vmem:[#allocation16 + $0x70] sm:$0xff]
    %v290 = vld [vmem:[#allocation16 + $0x78] sm:$0xff]
    %v291 = vld [vmem:[#allocation16 + $0x80] sm:$0xff]
    %v292 = vld [vmem:[#allocation16 + $0x88] sm:$0xff]
    %v293 = vld [vmem:[#allocation16 + $0x90] sm:$0xff]
    %v294 = vld [vmem:[#allocation16 + $0x98] sm:$0xff]
    %v295 = vld [vmem:[#allocation16 + $0xa0] sm:$0xff]
    %v296 = vld [vmem:[#allocation16 + $0xa8] sm:$0xff]
    %v297 = vld [vmem:[#allocation16 + $0xb0] sm:$0xff]
    %v298 = vld [vmem:[#allocation16 + $0xb8] sm:$0xff]
    %v299 = vld [vmem:[#allocation16 + $0xc0] sm:$0xff]
    %v300 = vld [vmem:[#allocation16 + $0xc8] sm:$0xff]
    %v301 = vld [vmem:[#allocation16 + $0xd0] sm:$0xff]
    %v302 = vld [vmem:[#allocation16 + $0xd8] sm:$0xff]
    %v303 = vld [vmem:[#allocation16 + $0xe0] sm:$0xff]
    %v304 = vld [vmem:[#allocation16 + $0xe8] sm:$0xff]
    %v305 = vld [vmem:[#allocation16 + $0xf0] sm:$0xff]
    %v306 = vld [vmem:[#allocation16 + $0xf8] sm:$0xff]
    %v307 = vld [vmem:[%s10] sm:$0x3]
    %v308 = vld [vmem:[#allocation2] sm:$0xff]
    %v309 = vld [vmem:[#allocation3] sm:$0xff]
    %s310 = smul.u32 0, 10
    %v311 = vld [vmem:[#allocation4] sm:$0xff]
    %v312 = vld [vmem:[#allocation4 + $0x8] sm:$0xff]
    %v313 = vld [vmem:[#allocation4 + $0x10] sm:$0xff]
    %v314 = vld [vmem:[#allocation4 + $0x18] sm:$0xff]
    %315 = vmatprep.subr.mxu0 %v164
    %316 = vmatpush1.msra.mxu0 %v163
    %317 = vmatprep.subr.mxu0 %v168
    %318 = vmatpush1.msra.mxu0 %v167
    %319 = vmatprep.subr.mxu0 %v172
    %320 = vmatpush1.msra.mxu0 %v171
    %321 = vmatprep.subr.mxu0 %v176
    %322 = vmatpush1.msra.mxu0 %v175
    %323 = vmatprep.subr.mxu0 %v180
    %324 = vmatpush1.msra.mxu0 %v179
    %325 = vmatprep.subr.mxu0 %v184
    %326 = vmatpush1.msra.mxu0 %v183
    %327 = vmatprep.subr.mxu0 %v188
    %328 = vmatpush1.msra.mxu0 %v187
    %329 = vmatprep.subr.mxu0 %v192
    %330 = vmatpush1.msra.mxu0 %v191
    %331 = vmatprep.subr.mxu0 %v196
    %332 = vmatpush1.msra.mxu0 %v195
    %333 = vmatprep.subr.mxu0 %v200
    %334 = vmatpush1.msra.mxu0 %v199
    %335 = vmatprep.subr.mxu0 %v204
    %336 = vmatpush1.msra.mxu0 %v203
    %337 = vmatprep.subr.mxu0 %v208
    %338 = vmatpush1.msra.mxu0 %v207
    %339 = vmatprep.subr.mxu0 %v212
    %340 = vmatpush1.msra.mxu0 %v211
    %341 = vmatprep.subr.mxu0 %v216
    %342 = vmatpush1.msra.mxu0 %v215
    %343 = vmatprep.subr.mxu0 %v220
    %344 = vmatpush1.msra.mxu0 %v219
    %345 = vmatprep.subr.mxu0 %v224
    %346 = vmatpush1.msra.mxu0 %v223
    %347 = vmatprep.subr.mxu0 0.0
    %348 = vmatpush1.msra.mxu0 0.0
    %349 = vmatprep.subr.mxu0 0.0
    %350 = vmatpush1.msra.mxu0 0.0
    %351 = vmatprep.subr.mxu0 0.0
    %352 = vmatpush1.msra.mxu0 0.0
    %353 = vmatprep.subr.mxu0 0.0
    %354 = vmatpush1.msra.mxu0 0.0
    %355 = vmatprep.subr.mxu0 0.0
    %356 = vmatpush1.msra.mxu0 0.0
    %357 = vmatprep.subr.mxu0 0.0
    %358 = vmatpush1.msra.mxu0 0.0
    %359 = vmatprep.subr.mxu0 0.0
    %360 = vmatpush1.msra.mxu0 0.0
    %361 = vmatprep.subr.mxu0 0.0
    %362 = vmatpush1.msra.mxu0 0.0
    %363 = vmatprep.subr.mxu0 0.0
    %364 = vmatpush1.msra.mxu0 0.0
    %365 = vmatprep.subr.mxu0 0.0
    %366 = vmatpush1.msra.mxu0 0.0
    %367 = vmatprep.subr.mxu0 0.0
    %368 = vmatpush1.msra.mxu0 0.0
    %369 = vmatprep.subr.mxu0 0.0
    %370 = vmatpush1.msra.mxu0 0.0
    %371 = vmatprep.subr.mxu0 0.0
    %372 = vmatpush1.msra.mxu0 0.0
    %373 = vmatprep.subr.mxu0 0.0
    %374 = vmatpush1.msra.mxu0 0.0
    %375 = vmatprep.subr.mxu0 0.0
    %376 = vmatpush1.msra.mxu0 0.0
    %377 = vmatprep.subr.mxu0 0.0
    %378 = vmatpush1.msra.mxu0 0.0
    %379 = vmatprep.mubr.f32.mxu0 0.0
    %380 = vmatmul.mubr.f32.gmra.mrb[0].mxu0 %v308
    %v381 = vpop.f32.mrb[0].mxu0
    %v382 = vadd.f32 0.0, %v381
    %v383 = vpop.f32.mrb[0].mxu0
    %v384 = vadd.f32 0.0, %v383
    %385 = vdwg.mxu0
    %386 = vmatprep.subr.mxu0 %v166
    %387 = vmatpush1.msra.mxu0 %v165
    %388 = vmatprep.subr.mxu0 %v170
    %389 = vmatpush1.msra.mxu0 %v169
    %390 = vmatprep.subr.mxu0 %v174
    %391 = vmatpush1.msra.mxu0 %v173
    %392 = vmatprep.subr.mxu0 %v178
    %393 = vmatpush1.msra.mxu0 %v177
    %394 = vmatprep.subr.mxu0 %v182
    %395 = vmatpush1.msra.mxu0 %v181
    %396 = vmatprep.subr.mxu0 %v186
    %397 = vmatpush1.msra.mxu0 %v185
    %398 = vmatprep.subr.mxu0 %v190
    %399 = vmatpush1.msra.mxu0 %v189
    %400 = vmatprep.subr.mxu0 %v194
    %401 = vmatpush1.msra.mxu0 %v193
    %402 = vmatprep.subr.mxu0 %v198
    %403 = vmatpush1.msra.mxu0 %v197
    %404 = vmatprep.subr.mxu0 %v202
    %405 = vmatpush1.msra.mxu0 %v201
    %406 = vmatprep.subr.mxu0 %v206
    %407 = vmatpush1.msra.mxu0 %v205
    %408 = vmatprep.subr.mxu0 %v210
    %409 = vmatpush1.msra.mxu0 %v209
    %410 = vmatprep.subr.mxu0 %v214
    %411 = vmatpush1.msra.mxu0 %v213
    %412 = vmatprep.subr.mxu0 %v218
    %413 = vmatpush1.msra.mxu0 %v217
    %414 = vmatprep.subr.mxu0 %v222
    %415 = vmatpush1.msra.mxu0 %v221
    %416 = vmatprep.subr.mxu0 %v226
    %417 = vmatpush1.msra.mxu0 %v225
    %418 = vmatprep.subr.mxu0 0.0
    %419 = vmatpush1.msra.mxu0 0.0
    %420 = vmatprep.subr.mxu0 0.0
    %421 = vmatpush1.msra.mxu0 0.0
    %422 = vmatprep.subr.mxu0 0.0
    %423 = vmatpush1.msra.mxu0 0.0
    %424 = vmatprep.subr.mxu0 0.0
    %425 = vmatpush1.msra.mxu0 0.0
    %426 = vmatprep.subr.mxu0 0.0
    %427 = vmatpush1.msra.mxu0 0.0
    %428 = vmatprep.subr.mxu0 0.0
    %429 = vmatpush1.msra.mxu0 0.0
    %430 = vmatprep.subr.mxu0 0.0
    %431 = vmatpush1.msra.mxu0 0.0
    %432 = vmatprep.subr.mxu0 0.0
    %433 = vmatpush1.msra.mxu0 0.0
    %434 = vmatprep.subr.mxu0 0.0
    %435 = vmatpush1.msra.mxu0 0.0
    %436 = vmatprep.subr.mxu0 0.0
    %437 = vmatpush1.msra.mxu0 0.0
    %438 = vmatprep.subr.mxu0 0.0
    %439 = vmatpush1.msra.mxu0 0.0
    %440 = vmatprep.subr.mxu0 0.0
    %441 = vmatpush1.msra.mxu0 0.0
    %442 = vmatprep.subr.mxu0 0.0
    %443 = vmatpush1.msra.mxu0 0.0
    %444 = vmatprep.subr.mxu0 0.0
    %445 = vmatpush1.msra.mxu0 0.0
    %446 = vmatprep.subr.mxu0 0.0
    %447 = vmatpush1.msra.mxu0 0.0
    %448 = vmatprep.subr.mxu0 0.0
    %449 = vmatpush1.msra.mxu0 0.0
    %450 = vmatprep.mubr.f32.mxu0 0.0
    %451 = vmatmul.mubr.f32.gmra.mrb[0].mxu0 %v308
    %v452 = vpop.f32.mrb[0].mxu0
    %v453 = vadd.f32 0.0, %v452
    %v454 = vpop.f32.mrb[0].mxu0
    %v455 = vadd.f32 0.0, %v454
    %456 = vdwg.mxu0
    %v457 = vadd.f32 %v311, %v382
    %v458 = vadd.f32 %v312, %v384
    %v459 = vadd.f32 %v313, %v453
    %v460 = vadd.f32 %v314, %v455
    %v461 = vxor.u32 %v457, 2147483648
    %v462 = vmul.f32 %v461, 1.442695
    %v463 = vpow.pop %v462
    %v464 = vadd.f32 %v463, 1.0
    %v465 = vrcp.pop %v464
    %v466 = vmul.f32 1.0, %v465
    %v467 = vxor.u32 %v458, 2147483648
    %v468 = vmul.f32 %v467, 1.442695
    %v469 = vpow.pop %v468
    %v470 = vadd.f32 %v469, 1.0
    %v471 = vrcp.pop %v470
    %v472 = vmul.f32 1.0, %v471
    %v473 = vtanh.pop %v459
    %v474 = vxor.u32 %v460, 2147483648
    %v475 = vmul.f32 %v474, 1.442695
    %v476 = vpow.pop %v475
    %v477 = vadd.f32 %v476, 1.0
    %v478 = vrcp.pop %v477
    %v479 = vmul.f32 1.0, %v478
    %v480 = vmul.f32 %v472, %v309
    %v481 = vmul.f32 %v466, %v473
    %v482 = vadd.f32 %v480, %v481
    %v483 = vtanh.pop %v482
    %v484 = vmul.f32 %v479, %v483
    %485 = vmatprep.subr.mxu0 0.0
    %486 = vmatpush1.msra.mxu0 %v227
    %487 = vmatprep.subr.mxu0 0.0
    %488 = vmatpush1.msra.mxu0 %v228
    %489 = vmatprep.subr.mxu0 0.0
    %490 = vmatpush1.msra.mxu0 %v229
    %491 = vmatprep.subr.mxu0 0.0
    %492 = vmatpush1.msra.mxu0 %v230
    %493 = vmatprep.subr.mxu0 0.0
    %494 = vmatpush1.msra.mxu0 %v231
    %495 = vmatprep.subr.mxu0 0.0
    %496 = vmatpush1.msra.mxu0 %v232
    %497 = vmatprep.subr.mxu0 0.0
    %498 = vmatpush1.msra.mxu0 %v233
    %499 = vmatprep.subr.mxu0 0.0
    %500 = vmatpush1.msra.mxu0 %v234
    %501 = vmatprep.subr.mxu0 0.0
    %502 = vmatpush1.msra.mxu0 %v235
    %503 = vmatprep.subr.mxu0 0.0
    %504 = vmatpush1.msra.mxu0 %v236
    %505 = vmatprep.subr.mxu0 0.0
    %506 = vmatpush1.msra.mxu0 %v237
    %507 = vmatprep.subr.mxu0 0.0
    %508 = vmatpush1.msra.mxu0 %v238
    %509 = vmatprep.subr.mxu0 0.0
    %510 = vmatpush1.msra.mxu0 %v239
    %511 = vmatprep.subr.mxu0 0.0
    %512 = vmatpush1.msra.mxu0 %v240
    %513 = vmatprep.subr.mxu0 0.0
    %514 = vmatpush1.msra.mxu0 %v241
    %515 = vmatprep.subr.mxu0 0.0
    %516 = vmatpush1.msra.mxu0 %v242
    %517 = vmatprep.subr.mxu0 0.0
    %518 = vmatpush1.msra.mxu0 0.0
    %519 = vmatprep.subr.mxu0 0.0
    %520 = vmatpush1.msra.mxu0 0.0
    %521 = vmatprep.subr.mxu0 0.0
    %522 = vmatpush1.msra.mxu0 0.0
    %523 = vmatprep.subr.mxu0 0.0
    %524 = vmatpush1.msra.mxu0 0.0
    %525 = vmatprep.subr.mxu0 0.0
    %526 = vmatpush1.msra.mxu0 0.0
    %527 = vmatprep.subr.mxu0 0.0
    %528 = vmatpush1.msra.mxu0 0.0
    %529 = vmatprep.subr.mxu0 0.0
    %530 = vmatpush1.msra.mxu0 0.0
    %531 = vmatprep.subr.mxu0 0.0
    %532 = vmatpush1.msra.mxu0 0.0
    %533 = vmatprep.subr.mxu0 0.0
    %534 = vmatpush1.msra.mxu0 0.0
    %535 = vmatprep.subr.mxu0 0.0
    %536 = vmatpush1.msra.mxu0 0.0
    %537 = vmatprep.subr.mxu0 0.0
    %538 = vmatpush1.msra.mxu0 0.0
    %539 = vmatprep.subr.mxu0 0.0
    %540 = vmatpush1.msra.mxu0 0.0
    %541 = vmatprep.subr.mxu0 0.0
    %542 = vmatpush1.msra.mxu0 0.0
    %543 = vmatprep.subr.mxu0 0.0
    %544 = vmatpush1.msra.mxu0 0.0
    %545 = vmatprep.subr.mxu0 0.0
    %546 = vmatpush1.msra.mxu0 0.0
    %547 = vmatprep.subr.mxu0 0.0
    %548 = vmatpush1.msra.mxu0 0.0
    %549 = vmatprep.mubr.f32.mxu0 0.0
    %550 = vmatmul.mubr.f32.gmra.mrb[0].mxu0 %v484
    %v551 = vpop.f32.mrb[0].mxu0
    %v552 = vadd.f32 0.0, %v551
    %v553 = vpop.f32.mrb[0].mxu0
    %554 = vdwg.mxu0
    %v556 = vcombine.high %v552, %v552
    %v558 = vunpack.c.l.s4 1966171168
    %v559 = vunpack.c.0.s8 %v558
    %v560 = vlaneseq
    %v561 = vshrl.u32 %v560, 7
    %v562 = vsub.s32 %v559, %v561
    %v563 = vrot.slane %v552, %v562
    %v565 = vunpack.c.l.s4 1966171168
    %v566 = vunpack.c.0.s8 %v565
    %v567 = vlaneseq
    %v568 = vshrl.u32 %v567, 7
    %v569 = vsub.s32 %v566, %v568
    %v570 = vrot.slane %v556, %v569
    %v571 = vcombine.high %v563, %v563
    %v572 = vcombine.high %v570, %v570
    %v574 = vunpack.c.l.s4 1966171168
    %v575 = vunpack.c.0.s8 %v574
    %v576 = vlaneseq
    %v577 = vshrl.u32 %v576, 7
    %v578 = vsub.s32 %v575, %v577
    %v579 = vrot.slane %v563, %v578
    %v581 = vunpack.c.l.s4 1966171168
    %v582 = vunpack.c.0.s8 %v581
    %v583 = vlaneseq
    %v584 = vshrl.u32 %v583, 7
    %v585 = vsub.s32 %v582, %v584
    %v586 = vrot.slane %v570, %v585
    %v588 = vunpack.c.l.s4 1966171168
    %v589 = vunpack.c.0.s8 %v588
    %v590 = vlaneseq
    %v591 = vshrl.u32 %v590, 7
    %v592 = vsub.s32 %v589, %v591
    %v593 = vrot.slane %v571, %v592
    %v595 = vunpack.c.l.s4 1966171168
    %v596 = vunpack.c.0.s8 %v595
    %v597 = vlaneseq
    %v598 = vshrl.u32 %v597, 7
    %v599 = vsub.s32 %v596, %v598
    %v600 = vrot.slane %v572, %v599
    %v601 = vcombine.high %v579, %v579
    %v602 = vcombine.high %v586, %v586
    %v603 = vcombine.high %v593, %v593
    %v604 = vcombine.high %v600, %v600
    %v605 = vlaneseq
    %v606 = vshrl.u32 %v605, 7
    %v607 = vsub.s32 0, %v606
    %v608 = vrot.slane %v579, %v607
    %v609 = vlaneseq
    %v610 = vshrl.u32 %v609, 7
    %v611 = vsub.s32 0, %v610
    %v612 = vrot.slane %v593, %v611
    %v613 = vlaneseq
    %v614 = vshrl.u32 %v613, 7
    %v615 = vsub.s32 0, %v614
    %v616 = vrot.slane %v601, %v615
    %v617 = vlaneseq
    %v618 = vshrl.u32 %v617, 7
    %v619 = vsub.s32 0, %v618
    %v620 = vrot.slane %v603, %v619
    %v621 = vlaneseq
    %v622 = vshrl.u32 %v621, 7
    %v623 = vsub.s32 0, %v622
    %v624 = vrot.slane %v586, %v623
    %v625 = vlaneseq
    %v626 = vshrl.u32 %v625, 7
    %v627 = vsub.s32 0, %v626
    %v628 = vrot.slane %v600, %v627
    %v629 = vlaneseq
    %v630 = vshrl.u32 %v629, 7
    %v631 = vsub.s32 0, %v630
    %v632 = vrot.slane %v602, %v631
    %v633 = vlaneseq
    %v634 = vshrl.u32 %v633, 7
    %v635 = vsub.s32 0, %v634
    %v636 = vrot.slane %v604, %v635
    %v645 = vmul.f32 %v154, %v608
    %v646 = vmul.f32 %v155, %v612
    %v647 = vmul.f32 %v156, %v616
    %v648 = vmul.f32 %v157, %v620
    %v649 = vmul.f32 %v158, %v624
    %v650 = vmul.f32 %v159, %v628
    %v651 = vmul.f32 %v160, %v632
    %v652 = vmul.f32 %v161, %v636
    %vm653 = vcmask 1045504
    %v654 = vsel %vm653, %v645, 0.0
    %655 = vadd.xlane.f32.xlu0 %v654
    %v656 = vpop.xlane.xlu0 %655
    %v657 = vsel %vm653, %v646, 0.0
    %658 = vadd.xlane.f32.xlu0 %v657
    %v659 = vpop.xlane.xlu0 %658
    %v660 = vsel %vm653, %v647, 0.0
    %661 = vadd.xlane.f32.xlu0 %v660
    %v662 = vpop.xlane.xlu0 %661
    %v663 = vsel %vm653, %v648, 0.0
    %664 = vadd.xlane.f32.xlu0 %v663
    %v665 = vpop.xlane.xlu0 %664
    %v666 = vsel %vm653, %v649, 0.0
    %667 = vadd.xlane.f32.xlu0 %v666
    %v668 = vpop.xlane.xlu0 %667
    %v669 = vsel %vm653, %v650, 0.0
    %670 = vadd.xlane.f32.xlu0 %v669
    %v671 = vpop.xlane.xlu0 %670
    %v672 = vsel %vm653, %v651, 0.0
    %673 = vadd.xlane.f32.xlu0 %v672
    %v674 = vpop.xlane.xlu0 %673
    %v675 = vsel %vm653, %v652, 0.0
    %676 = vadd.xlane.f32.xlu0 %v675
    %v677 = vpop.xlane.xlu0 %676
    %v679 = vlaneseq
    %v680 = vshrl.u32 %v679, 7
    %v681 = vsub.s32 0, %v680
    %v682 = vrot.slane %v162, %v681
    %684 = vbcast.lane.b32.xlu0 %v682, 256
    %v685 = vpop.permute.xlu0 %684
    %v686 = vlaneseq
    %v687 = vshrl.u32 %v686, 7
    %v688 = vsub.s32 1, %v687
    %v689 = vrot.slane %v162, %v688
    %691 = vbcast.lane.b32.xlu0 %v689, 256
    %v692 = vpop.permute.xlu0 %691
    %v693 = vlaneseq
    %v694 = vshrl.u32 %v693, 7
    %v695 = vsub.s32 2, %v694
    %v696 = vrot.slane %v162, %v695
    %698 = vbcast.lane.b32.xlu0 %v696, 256
    %v699 = vpop.permute.xlu0 %698
    %v700 = vlaneseq
    %v701 = vshrl.u32 %v700, 7
    %v702 = vsub.s32 3, %v701
    %v703 = vrot.slane %v162, %v702
    %705 = vbcast.lane.b32.xlu0 %v703, 256
    %v706 = vpop.permute.xlu0 %705
    %v707 = vlaneseq
    %v708 = vshrl.u32 %v707, 7
    %v709 = vsub.s32 4, %v708
    %v710 = vrot.slane %v162, %v709
    %712 = vbcast.lane.b32.xlu0 %v710, 256
    %v713 = vpop.permute.xlu0 %712
    %v714 = vlaneseq
    %v715 = vshrl.u32 %v714, 7
    %v716 = vsub.s32 5, %v715
    %v717 = vrot.slane %v162, %v716
    %719 = vbcast.lane.b32.xlu0 %v717, 256
    %v720 = vpop.permute.xlu0 %719
    %v721 = vlaneseq
    %v722 = vshrl.u32 %v721, 7
    %v723 = vsub.s32 6, %v722
    %v724 = vrot.slane %v162, %v723
    %726 = vbcast.lane.b32.xlu0 %v724, 256
    %v727 = vpop.permute.xlu0 %726
    %v728 = vlaneseq
    %v729 = vshrl.u32 %v728, 7
    %v730 = vsub.s32 7, %v729
    %v731 = vrot.slane %v162, %v730
    %733 = vbcast.lane.b32.xlu0 %v731, 256
    %v734 = vpop.permute.xlu0 %733
    %v743 = vadd.f32 %v656, %v685
    %v744 = vadd.f32 %v659, %v692
    %v745 = vadd.f32 %v662, %v699
    %v746 = vadd.f32 %v665, %v706
    %v747 = vadd.f32 %v668, %v713
    %v748 = vadd.f32 %v671, %v720
    %v749 = vadd.f32 %v674, %v727
    %v750 = vadd.f32 %v677, %v734
    %759 = vset.pattern.permute.xlu0 0
    %760 = vperm.xlu0 %759, %v743
    %v761 = vpop.permute.xlu0 %760
    %762 = vset.pattern.permute.xlu0 0
    %763 = vperm.xlu0 %762, %v744
    %v764 = vpop.permute.xlu0 %763
    %765 = vset.pattern.permute.xlu0 0
    %766 = vperm.xlu0 %765, %v745
    %v767 = vpop.permute.xlu0 %766
    %768 = vset.pattern.permute.xlu0 0
    %769 = vperm.xlu0 %768, %v746
    %v770 = vpop.permute.xlu0 %769
    %771 = vset.pattern.permute.xlu0 0
    %772 = vperm.xlu0 %771, %v747
    %v773 = vpop.permute.xlu0 %772
    %774 = vset.pattern.permute.xlu0 0
    %775 = vperm.xlu0 %774, %v748
    %v776 = vpop.permute.xlu0 %775
    %777 = vset.pattern.permute.xlu0 0
    %778 = vperm.xlu0 %777, %v749
    %v779 = vpop.permute.xlu0 %778
    %780 = vset.pattern.permute.xlu0 0
    %781 = vperm.xlu0 %780, %v750
    %v782 = vpop.permute.xlu0 %781
    %v783 = vlaneseq
    %v784 = vand.u32 %v783, 127
    %v785 = vlaneseq
    %v786 = vshrl.u32 %v785, 7
    %v787 = vsub.s32 %v784, %v786
    %v788 = vrot.slane %v761, %v787
    %v789 = vlaneseq
    %v790 = vshrl.u32 %v789, 7
    %v791 = vsub.s32 %v784, %v790
    %v792 = vrot.slane %v764, %v791
    %v793 = vlaneseq
    %v794 = vshrl.u32 %v793, 7
    %v795 = vsub.s32 %v784, %v794
    %v796 = vrot.slane %v767, %v795
    %v797 = vlaneseq
    %v798 = vshrl.u32 %v797, 7
    %v799 = vsub.s32 %v784, %v798
    %v800 = vrot.slane %v770, %v799
    %v801 = vlaneseq
    %v802 = vshrl.u32 %v801, 7
    %v803 = vsub.s32 %v784, %v802
    %v804 = vrot.slane %v773, %v803
    %v805 = vlaneseq
    %v806 = vshrl.u32 %v805, 7
    %v807 = vsub.s32 %v784, %v806
    %v808 = vrot.slane %v776, %v807
    %v809 = vlaneseq
    %v810 = vshrl.u32 %v809, 7
    %v811 = vsub.s32 %v784, %v810
    %v812 = vrot.slane %v779, %v811
    %v813 = vlaneseq
    %v814 = vshrl.u32 %v813, 7
    %v815 = vsub.s32 %v784, %v814
    %v816 = vrot.slane %v782, %v815
    %vm817 = vcmask 1041409
    %v818 = vsel %vm817, %v792, %v788
    %vm819 = vcmask 1042434
    %v820 = vsel %vm819, %v796, %v818
    %vm821 = vcmask 1043459
    %v822 = vsel %vm821, %v800, %v820
    %vm823 = vcmask 1044484
    %v824 = vsel %vm823, %v804, %v822
    %vm825 = vcmask 1045509
    %v826 = vsel %vm825, %v808, %v824
    %vm827 = vcmask 1046534
    %v828 = vsel %vm827, %v812, %v826
    %vm829 = vcmask 1047559
    %v830 = vsel %vm829, %v816, %v828
    %vm832 = vcmask 48128
    %v833 = vsel %vm832, %v830, -inf
    %834 = vmax.xlane.f32.xlu0 %v833
    %v835 = vpop.xlane.xlu0 %834
    %v837 = vlaneseq
    %v838 = vshrl.u32 %v837, 7
    %v839 = vsub.s32 0, %v838
    %v840 = vrot.slane %v835, %v839
    %v841 = vlaneseq
    %v842 = vshrl.u32 %v841, 7
    %v843 = vsub.s32 1, %v842
    %v844 = vrot.slane %v835, %v843
    %v845 = vlaneseq
    %v846 = vshrl.u32 %v845, 7
    %v847 = vsub.s32 2, %v846
    %v848 = vrot.slane %v835, %v847
    %v849 = vlaneseq
    %v850 = vshrl.u32 %v849, 7
    %v851 = vsub.s32 3, %v850
    %v852 = vrot.slane %v835, %v851
    %v853 = vlaneseq
    %v854 = vshrl.u32 %v853, 7
    %v855 = vsub.s32 4, %v854
    %v856 = vrot.slane %v835, %v855
    %v857 = vlaneseq
    %v858 = vshrl.u32 %v857, 7
    %v859 = vsub.s32 5, %v858
    %v860 = vrot.slane %v835, %v859
    %v861 = vlaneseq
    %v862 = vshrl.u32 %v861, 7
    %v863 = vsub.s32 6, %v862
    %v864 = vrot.slane %v835, %v863
    %v865 = vlaneseq
    %v866 = vshrl.u32 %v865, 7
    %v867 = vsub.s32 7, %v866
    %v868 = vrot.slane %v835, %v867
    %v877 = vsub.f32 %v743, %v840
    %v878 = vsub.f32 %v744, %v844
    %v879 = vsub.f32 %v745, %v848
    %v880 = vsub.f32 %v746, %v852
    %v881 = vsub.f32 %v747, %v856
    %v882 = vsub.f32 %v748, %v860
    %v883 = vsub.f32 %v749, %v864
    %v884 = vsub.f32 %v750, %v868
    %v885 = vmul.f32 %v877, 1.442695
    %v886 = vpow.pop %v885
    %v887 = vmul.f32 %v878, 1.442695
    %v888 = vpow.pop %v887
    %v889 = vmul.f32 %v879, 1.442695
    %v890 = vpow.pop %v889
    %v891 = vmul.f32 %v880, 1.442695
    %v892 = vpow.pop %v891
    %v893 = vmul.f32 %v881, 1.442695
    %v894 = vpow.pop %v893
    %v895 = vmul.f32 %v882, 1.442695
    %v896 = vpow.pop %v895
    %v897 = vmul.f32 %v883, 1.442695
    %v898 = vpow.pop %v897
    %v899 = vmul.f32 %v884, 1.442695
    %v900 = vpow.pop %v899
    %909 = vset.pattern.permute.xlu0 0
    %910 = vperm.xlu0 %909, %v886
    %v911 = vpop.permute.xlu0 %910
    %912 = vset.pattern.permute.xlu0 0
    %913 = vperm.xlu0 %912, %v888
    %v914 = vpop.permute.xlu0 %913
    %915 = vset.pattern.permute.xlu0 0
    %916 = vperm.xlu0 %915, %v890
    %v917 = vpop.permute.xlu0 %916
    %918 = vset.pattern.permute.xlu0 0
    %919 = vperm.xlu0 %918, %v892
    %v920 = vpop.permute.xlu0 %919
    %921 = vset.pattern.permute.xlu0 0
    %922 = vperm.xlu0 %921, %v894
    %v923 = vpop.permute.xlu0 %922
    %924 = vset.pattern.permute.xlu0 0
    %925 = vperm.xlu0 %924, %v896
    %v926 = vpop.permute.xlu0 %925
    %927 = vset.pattern.permute.xlu0 0
    %928 = vperm.xlu0 %927, %v898
    %v929 = vpop.permute.xlu0 %928
    %930 = vset.pattern.permute.xlu0 0
    %931 = vperm.xlu0 %930, %v900
    %v932 = vpop.permute.xlu0 %931
    %v933 = vlaneseq
    %v934 = vshrl.u32 %v933, 7
    %v935 = vsub.s32 %v784, %v934
    %v936 = vrot.slane %v911, %v935
    %v937 = vlaneseq
    %v938 = vshrl.u32 %v937, 7
    %v939 = vsub.s32 %v784, %v938
    %v940 = vrot.slane %v914, %v939
    %v941 = vlaneseq
    %v942 = vshrl.u32 %v941, 7
    %v943 = vsub.s32 %v784, %v942
    %v944 = vrot.slane %v917, %v943
    %v945 = vlaneseq
    %v946 = vshrl.u32 %v945, 7
    %v947 = vsub.s32 %v784, %v946
    %v948 = vrot.slane %v920, %v947
    %v949 = vlaneseq
    %v950 = vshrl.u32 %v949, 7
    %v951 = vsub.s32 %v784, %v950
    %v952 = vrot.slane %v923, %v951
    %v953 = vlaneseq
    %v954 = vshrl.u32 %v953, 7
    %v955 = vsub.s32 %v784, %v954
    %v956 = vrot.slane %v926, %v955
    %v957 = vlaneseq
    %v958 = vshrl.u32 %v957, 7
    %v959 = vsub.s32 %v784, %v958
    %v960 = vrot.slane %v929, %v959
    %v961 = vlaneseq
    %v962 = vshrl.u32 %v961, 7
    %v963 = vsub.s32 %v784, %v962
    %v964 = vrot.slane %v932, %v963
    %v965 = vsel %vm817, %v940, %v936
    %v966 = vsel %vm819, %v944, %v965
    %v967 = vsel %vm821, %v948, %v966
    %v968 = vsel %vm823, %v952, %v967
    %v969 = vsel %vm825, %v956, %v968
    %v970 = vsel %vm827, %v960, %v969
    %v971 = vsel %vm829, %v964, %v970
    %v973 = vsel %vm832, %v971, 0.0
    %974 = vadd.xlane.f32.xlu0 %v973
    %v975 = vpop.xlane.xlu0 %974
    %v977 = vlaneseq
    %v978 = vshrl.u32 %v977, 7
    %v979 = vsub.s32 0, %v978
    %v980 = vrot.slane %v975, %v979
    %v981 = vlaneseq
    %v982 = vshrl.u32 %v981, 7
    %v983 = vsub.s32 1, %v982
    %v984 = vrot.slane %v975, %v983
    %v985 = vlaneseq
    %v986 = vshrl.u32 %v985, 7
    %v987 = vsub.s32 2, %v986
    %v988 = vrot.slane %v975, %v987
    %v989 = vlaneseq
    %v990 = vshrl.u32 %v989, 7
    %v991 = vsub.s32 3, %v990
    %v992 = vrot.slane %v975, %v991
    %v993 = vlaneseq
    %v994 = vshrl.u32 %v993, 7
    %v995 = vsub.s32 4, %v994
    %v996 = vrot.slane %v975, %v995
    %v997 = vlaneseq
    %v998 = vshrl.u32 %v997, 7
    %v999 = vsub.s32 5, %v998
    %v1000 = vrot.slane %v975, %v999
    %v1001 = vlaneseq
    %v1002 = vshrl.u32 %v1001, 7
    %v1003 = vsub.s32 6, %v1002
    %v1004 = vrot.slane %v975, %v1003
    %v1005 = vlaneseq
    %v1006 = vshrl.u32 %v1005, 7
    %v1007 = vsub.s32 7, %v1006
    %v1008 = vrot.slane %v975, %v1007
    %v1017 = vrcp.pop %v980
    %v1018 = vmul.f32 %v886, %v1017
    %v1019 = vrcp.pop %v984
    %v1020 = vmul.f32 %v888, %v1019
    %v1021 = vrcp.pop %v988
    %v1022 = vmul.f32 %v890, %v1021
    %v1023 = vrcp.pop %v992
    %v1024 = vmul.f32 %v892, %v1023
    %v1025 = vrcp.pop %v996
    %v1026 = vmul.f32 %v894, %v1025
    %v1027 = vrcp.pop %v1000
    %v1028 = vmul.f32 %v896, %v1027
    %v1029 = vrcp.pop %v1004
    %v1030 = vmul.f32 %v898, %v1029
    %v1031 = vrcp.pop %v1008
    %v1032 = vmul.f32 %v900, %v1031
    %1034 = vset.pattern.permute.xlu0 0
    %1035 = vperm.xlu0 %1034, %v1018
    %v1036 = vpop.permute.xlu0 %1035
    %1039 = vset.pattern.permute.xlu0 0
    %1040 = vperm.xlu0 %1039, %v1020
    %v1041 = vpop.permute.xlu0 %1040
    %1044 = vset.pattern.permute.xlu0 0
    %1045 = vperm.xlu0 %1044, %v1022
    %v1046 = vpop.permute.xlu0 %1045
    %1049 = vset.pattern.permute.xlu0 0
    %1050 = vperm.xlu0 %1049, %v1024
    %v1051 = vpop.permute.xlu0 %1050
    %1054 = vset.pattern.permute.xlu0 0
    %1055 = vperm.xlu0 %1054, %v1026
    %v1056 = vpop.permute.xlu0 %1055
    %1059 = vset.pattern.permute.xlu0 0
    %1060 = vperm.xlu0 %1059, %v1028
    %v1061 = vpop.permute.xlu0 %1060
    %1064 = vset.pattern.permute.xlu0 0
    %1065 = vperm.xlu0 %1064, %v1030
    %v1066 = vpop.permute.xlu0 %1065
    %1069 = vset.pattern.permute.xlu0 0
    %1070 = vperm.xlu0 %1069, %v1032
    %v1071 = vpop.permute.xlu0 %1070
    %v1073 = vmul.f32 %v1036, %v154
    %v1074 = vmul.f32 %v1041, %v155
    %v1075 = vmul.f32 %v1046, %v156
    %v1076 = vmul.f32 %v1051, %v157
    %v1077 = vmul.f32 %v1056, %v158
    %v1078 = vmul.f32 %v1061, %v159
    %v1079 = vmul.f32 %v1066, %v160
    %v1080 = vmul.f32 %v1071, %v161
    %v1081 = vsel %vm653, %v1073, 0.0
    %v1082 = vrot.slane %v1081, 4
    %v1083 = vadd.f32 %v1081, %v1082
    %v1084 = vrot.slane %v1083, 2
    %v1085 = vadd.f32 %v1083, %v1084
    %v1086 = vrot.slane %v1085, 1
    %v1087 = vadd.f32 %v1085, %v1086
    %v1088 = vsel %vm653, %v1074, 0.0
    %v1089 = vrot.slane %v1088, 4
    %v1090 = vadd.f32 %v1088, %v1089
    %v1091 = vrot.slane %v1090, 2
    %v1092 = vadd.f32 %v1090, %v1091
    %v1093 = vrot.slane %v1092, 1
    %v1094 = vadd.f32 %v1092, %v1093
    %v1095 = vsel %vm653, %v1075, 0.0
    %v1096 = vrot.slane %v1095, 4
    %v1097 = vadd.f32 %v1095, %v1096
    %v1098 = vrot.slane %v1097, 2
    %v1099 = vadd.f32 %v1097, %v1098
    %v1100 = vrot.slane %v1099, 1
    %v1101 = vadd.f32 %v1099, %v1100
    %v1102 = vsel %vm653, %v1076, 0.0
    %v1103 = vrot.slane %v1102, 4
    %v1104 = vadd.f32 %v1102, %v1103
    %v1105 = vrot.slane %v1104, 2
    %v1106 = vadd.f32 %v1104, %v1105
    %v1107 = vrot.slane %v1106, 1
    %v1108 = vadd.f32 %v1106, %v1107
    %v1109 = vsel %vm653, %v1077, 0.0
    %v1110 = vrot.slane %v1109, 4
    %v1111 = vadd.f32 %v1109, %v1110
    %v1112 = vrot.slane %v1111, 2
    %v1113 = vadd.f32 %v1111, %v1112
    %v1114 = vrot.slane %v1113, 1
    %v1115 = vadd.f32 %v1113, %v1114
    %v1116 = vsel %vm653, %v1078, 0.0
    %v1117 = vrot.slane %v1116, 4
    %v1118 = vadd.f32 %v1116, %v1117
    %v1119 = vrot.slane %v1118, 2
    %v1120 = vadd.f32 %v1118, %v1119
    %v1121 = vrot.slane %v1120, 1
    %v1122 = vadd.f32 %v1120, %v1121
    %v1123 = vsel %vm653, %v1079, 0.0
    %v1124 = vrot.slane %v1123, 4
    %v1125 = vadd.f32 %v1123, %v1124
    %v1126 = vrot.slane %v1125, 2
    %v1127 = vadd.f32 %v1125, %v1126
    %v1128 = vrot.slane %v1127, 1
    %v1129 = vadd.f32 %v1127, %v1128
    %v1130 = vsel %vm653, %v1080, 0.0
    %v1131 = vrot.slane %v1130, 4
    %v1132 = vadd.f32 %v1130, %v1131
    %v1133 = vrot.slane %v1132, 2
    %v1134 = vadd.f32 %v1132, %v1133
    %v1135 = vrot.slane %v1134, 1
    %v1136 = vadd.f32 %v1134, %v1135
    %1137 = vmatprep.subr.mxu0 0.0
    %1138 = vmatpush1.msra.mxu0 %v259
    %1139 = vmatprep.subr.mxu0 0.0
    %1140 = vmatpush1.msra.mxu0 %v260
    %1141 = vmatprep.subr.mxu0 0.0
    %1142 = vmatpush1.msra.mxu0 %v261
    %1143 = vmatprep.subr.mxu0 0.0
    %1144 = vmatpush1.msra.mxu0 %v262
    %1145 = vmatprep.subr.mxu0 0.0
    %1146 = vmatpush1.msra.mxu0 %v263
    %1147 = vmatprep.subr.mxu0 0.0
    %1148 = vmatpush1.msra.mxu0 %v264
    %1149 = vmatprep.subr.mxu0 0.0
    %1150 = vmatpush1.msra.mxu0 %v265
    %1151 = vmatprep.subr.mxu0 0.0
    %1152 = vmatpush1.msra.mxu0 %v266
    %1153 = vmatprep.subr.mxu0 0.0
    %1154 = vmatpush1.msra.mxu0 %v267
    %1155 = vmatprep.subr.mxu0 0.0
    %1156 = vmatpush1.msra.mxu0 %v268
    %1157 = vmatprep.subr.mxu0 0.0
    %1158 = vmatpush1.msra.mxu0 %v269
    %1159 = vmatprep.subr.mxu0 0.0
    %1160 = vmatpush1.msra.mxu0 %v270
    %1161 = vmatprep.subr.mxu0 0.0
    %1162 = vmatpush1.msra.mxu0 %v271
    %1163 = vmatprep.subr.mxu0 0.0
    %1164 = vmatpush1.msra.mxu0 %v272
    %1165 = vmatprep.subr.mxu0 0.0
    %1166 = vmatpush1.msra.mxu0 %v273
    %1167 = vmatprep.subr.mxu0 0.0
    %1168 = vmatpush1.msra.mxu0 %v274
    %1169 = vmatprep.subr.mxu0 0.0
    %1170 = vmatpush1.msra.mxu0 0.0
    %1171 = vmatprep.subr.mxu0 0.0
    %1172 = vmatpush1.msra.mxu0 0.0
    %1173 = vmatprep.subr.mxu0 0.0
    %1174 = vmatpush1.msra.mxu0 0.0
    %1175 = vmatprep.subr.mxu0 0.0
    %1176 = vmatpush1.msra.mxu0 0.0
    %1177 = vmatprep.subr.mxu0 0.0
    %1178 = vmatpush1.msra.mxu0 0.0
    %1179 = vmatprep.subr.mxu0 0.0
    %1180 = vmatpush1.msra.mxu0 0.0
    %1181 = vmatprep.subr.mxu0 0.0
    %1182 = vmatpush1.msra.mxu0 0.0
    %1183 = vmatprep.subr.mxu0 0.0
    %1184 = vmatpush1.msra.mxu0 0.0
    %1185 = vmatprep.subr.mxu0 0.0
    %1186 = vmatpush1.msra.mxu0 0.0
    %1187 = vmatprep.subr.mxu0 0.0
    %1188 = vmatpush1.msra.mxu0 0.0
    %1189 = vmatprep.subr.mxu0 0.0
    %1190 = vmatpush1.msra.mxu0 0.0
    %1191 = vmatprep.subr.mxu0 0.0
    %1192 = vmatpush1.msra.mxu0 0.0
    %1193 = vmatprep.subr.mxu0 0.0
    %1194 = vmatpush1.msra.mxu0 0.0
    %1195 = vmatprep.subr.mxu0 0.0
    %1196 = vmatpush1.msra.mxu0 0.0
    %1197 = vmatprep.subr.mxu0 0.0
    %1198 = vmatpush1.msra.mxu0 0.0
    %1199 = vmatprep.subr.mxu0 0.0
    %1200 = vmatpush1.msra.mxu0 0.0
    %1201 = vmatprep.mubr.f32.mxu0 0.0
    %1202 = vmatmul.mubr.f32.gmra.mrb[0].mxu0 %v484
    %v1203 = vpop.f32.mrb[0].mxu0
    %v1204 = vadd.f32 0.0, %v1203
    %v1205 = vpop.f32.mrb[0].mxu0
    %1206 = vdwg.mxu0
    %v1215 = vsel %vm817, %v1094, %v1087
    %v1216 = vsel %vm819, %v1101, %v1215
    %v1217 = vsel %vm821, %v1108, %v1216
    %v1218 = vsel %vm823, %v1115, %v1217
    %v1219 = vsel %vm825, %v1122, %v1218
    %v1220 = vsel %vm827, %v1129, %v1219
    %v1221 = vsel %vm829, %v1136, %v1220
    %1223 = vmatprep.subr.mxu0 0.0
    %1224 = vmatpush1.msra.mxu0 %v243
    %1225 = vmatprep.subr.mxu0 0.0
    %1226 = vmatpush1.msra.mxu0 %v244
    %1227 = vmatprep.subr.mxu0 0.0
    %1228 = vmatpush1.msra.mxu0 %v245
    %1229 = vmatprep.subr.mxu0 0.0
    %1230 = vmatpush1.msra.mxu0 %v246
    %1231 = vmatprep.subr.mxu0 0.0
    %1232 = vmatpush1.msra.mxu0 %v247
    %1233 = vmatprep.subr.mxu0 0.0
    %1234 = vmatpush1.msra.mxu0 %v248
    %1235 = vmatprep.subr.mxu0 0.0
    %1236 = vmatpush1.msra.mxu0 %v249
    %1237 = vmatprep.subr.mxu0 0.0
    %1238 = vmatpush1.msra.mxu0 %v250
    %1239 = vmatprep.subr.mxu0 0.0
    %1240 = vmatpush1.msra.mxu0 %v251
    %1241 = vmatprep.subr.mxu0 0.0
    %1242 = vmatpush1.msra.mxu0 %v252
    %1243 = vmatprep.subr.mxu0 0.0
    %1244 = vmatpush1.msra.mxu0 %v253
    %1245 = vmatprep.subr.mxu0 0.0
    %1246 = vmatpush1.msra.mxu0 %v254
    %1247 = vmatprep.subr.mxu0 0.0
    %1248 = vmatpush1.msra.mxu0 %v255
    %1249 = vmatprep.subr.mxu0 0.0
    %1250 = vmatpush1.msra.mxu0 %v256
    %1251 = vmatprep.subr.mxu0 0.0
    %1252 = vmatpush1.msra.mxu0 %v257
    %1253 = vmatprep.subr.mxu0 0.0
    %1254 = vmatpush1.msra.mxu0 %v258
    %1255 = vmatprep.subr.mxu0 0.0
    %1256 = vmatpush1.msra.mxu0 0.0
    %1257 = vmatprep.subr.mxu0 0.0
    %1258 = vmatpush1.msra.mxu0 0.0
    %1259 = vmatprep.subr.mxu0 0.0
    %1260 = vmatpush1.msra.mxu0 0.0
    %1261 = vmatprep.subr.mxu0 0.0
    %1262 = vmatpush1.msra.mxu0 0.0
    %1263 = vmatprep.subr.mxu0 0.0
    %1264 = vmatpush1.msra.mxu0 0.0
    %1265 = vmatprep.subr.mxu0 0.0
    %1266 = vmatpush1.msra.mxu0 0.0
    %1267 = vmatprep.subr.mxu0 0.0
    %1268 = vmatpush1.msra.mxu0 0.0
    %1269 = vmatprep.subr.mxu0 0.0
    %1270 = vmatpush1.msra.mxu0 0.0
    %1271 = vmatprep.subr.mxu0 0.0
    %1272 = vmatpush1.msra.mxu0 0.0
    %1273 = vmatprep.subr.mxu0 0.0
    %1274 = vmatpush1.msra.mxu0 0.0
    %1275 = vmatprep.subr.mxu0 0.0
    %1276 = vmatpush1.msra.mxu0 0.0
    %1277 = vmatprep.subr.mxu0 0.0
    %1278 = vmatpush1.msra.mxu0 0.0
    %1279 = vmatprep.subr.mxu0 0.0
    %1280 = vmatpush1.msra.mxu0 0.0
    %1281 = vmatprep.subr.mxu0 0.0
    %1282 = vmatpush1.msra.mxu0 0.0
    %1283 = vmatprep.subr.mxu0 0.0
    %1284 = vmatpush1.msra.mxu0 0.0
    %1285 = vmatprep.subr.mxu0 0.0
    %1286 = vmatpush1.msra.mxu0 0.0
    %1287 = vmatprep.mubr.f32.mxu0 0.0
    %1288 = vmatmul.mubr.f32.gmra.mrb[0].mxu0 %v1221
    %v1289 = vpop.f32.mrb[0].mxu0
    %v1290 = vadd.f32 %v1204, %v1289
    %v1291 = vpop.f32.mrb[0].mxu0
    %1292 = vdwg.mxu0
    %v1293 = vtanh.pop %v1290
    %v1295 = vlaneseq
    %v1296 = vshrl.u32 %v1295, 7
    %v1297 = vsub.s32 0, %v1296
    %v1298 = vrot.slane %v307, %v1297
    %v1299 = vlaneseq
    %v1300 = vshrl.u32 %v1299, 7
    %v1301 = vsub.s32 1, %v1300
    %v1302 = vrot.slane %v307, %v1301
    %1305 = vmatprep.subr.mxu0 %v276
    %1306 = vmatpush1.msra.mxu0 %v275
    %1307 = vmatprep.subr.mxu0 %v278
    %1308 = vmatpush1.msra.mxu0 %v277
    %1309 = vmatprep.subr.mxu0 %v280
    %1310 = vmatpush1.msra.mxu0 %v279
    %1311 = vmatprep.subr.mxu0 %v282
    %1312 = vmatpush1.msra.mxu0 %v281
    %1313 = vmatprep.subr.mxu0 %v284
    %1314 = vmatpush1.msra.mxu0 %v283
    %1315 = vmatprep.subr.mxu0 %v286
    %1316 = vmatpush1.msra.mxu0 %v285
    %1317 = vmatprep.subr.mxu0 %v288
    %1318 = vmatpush1.msra.mxu0 %v287
    %1319 = vmatprep.subr.mxu0 %v290
    %1320 = vmatpush1.msra.mxu0 %v289
    %1321 = vmatprep.subr.mxu0 %v292
    %1322 = vmatpush1.msra.mxu0 %v291
    %1323 = vmatprep.subr.mxu0 %v294
    %1324 = vmatpush1.msra.mxu0 %v293
    %1325 = vmatprep.subr.mxu0 %v296
    %1326 = vmatpush1.msra.mxu0 %v295
    %1327 = vmatprep.subr.mxu0 %v298
    %1328 = vmatpush1.msra.mxu0 %v297
    %1329 = vmatprep.subr.mxu0 %v300
    %1330 = vmatpush1.msra.mxu0 %v299
    %1331 = vmatprep.subr.mxu0 %v302
    %1332 = vmatpush1.msra.mxu0 %v301
    %1333 = vmatprep.subr.mxu0 %v304
    %1334 = vmatpush1.msra.mxu0 %v303
    %1335 = vmatprep.subr.mxu0 %v306
    %1336 = vmatpush1.msra.mxu0 %v305
    %1337 = vmatprep.subr.mxu0 0.0
    %1338 = vmatpush1.msra.mxu0 0.0
    %1339 = vmatprep.subr.mxu0 0.0
    %1340 = vmatpush1.msra.mxu0 0.0
    %1341 = vmatprep.subr.mxu0 0.0
    %1342 = vmatpush1.msra.mxu0 0.0
    %1343 = vmatprep.subr.mxu0 0.0
    %1344 = vmatpush1.msra.mxu0 0.0
    %1345 = vmatprep.subr.mxu0 0.0
    %1346 = vmatpush1.msra.mxu0 0.0
    %1347 = vmatprep.subr.mxu0 0.0
    %1348 = vmatpush1.msra.mxu0 0.0
    %1349 = vmatprep.subr.mxu0 0.0
    %1350 = vmatpush1.msra.mxu0 0.0
    %1351 = vmatprep.subr.mxu0 0.0
    %1352 = vmatpush1.msra.mxu0 0.0
    %1353 = vmatprep.subr.mxu0 0.0
    %1354 = vmatpush1.msra.mxu0 0.0
    %1355 = vmatprep.subr.mxu0 0.0
    %1356 = vmatpush1.msra.mxu0 0.0
    %1357 = vmatprep.subr.mxu0 0.0
    %1358 = vmatpush1.msra.mxu0 0.0
    %1359 = vmatprep.subr.mxu0 0.0
    %1360 = vmatpush1.msra.mxu0 0.0
    %1361 = vmatprep.subr.mxu0 0.0
    %1362 = vmatpush1.msra.mxu0 0.0
    %1363 = vmatprep.subr.mxu0 0.0
    %1364 = vmatpush1.msra.mxu0 0.0
    %1365 = vmatprep.subr.mxu0 0.0
    %1366 = vmatpush1.msra.mxu0 0.0
    %1367 = vmatprep.subr.mxu0 0.0
    %1368 = vmatpush1.msra.mxu0 0.0
    %1369 = vmatprep.mubr.f32.mxu0 0.0
    %1370 = vmatmul.mubr.f32.gmra.mrb[0].mxu0 %v1293
    %v1371 = vpop.f32.mrb[0].mxu0
    %v1372 = vadd.f32 %v1298, %v1371
    %v1373 = vpop.f32.mrb[0].mxu0
    %v1374 = vadd.f32 %v1302, %v1373
    %1375 = vdwg.mxu0
    %v1378 = vcombine.low %v1372, %v1374
    %v1379 = vcombine.high %v1372, %v1374
    %v1381 = vunpack.c.l.s4 1966171168
    %v1382 = vunpack.c.0.s8 %v1381
    %v1383 = vlaneseq
    %v1384 = vshrl.u32 %v1383, 7
    %v1385 = vsub.s32 %v1382, %v1384
    %v1386 = vrot.slane %v1378, %v1385
    %v1388 = vunpack.c.l.s4 1966171168
    %v1389 = vunpack.c.0.s8 %v1388
    %v1390 = vlaneseq
    %v1391 = vshrl.u32 %v1390, 7
    %v1392 = vsub.s32 %v1389, %v1391
    %v1393 = vrot.slane %v1379, %v1392
    %v1394 = vcombine.high %v1386, %v1386
    %v1395 = vcombine.high %v1393, %v1393
    %v1397 = vunpack.c.l.s4 1966171168
    %v1398 = vunpack.c.0.s8 %v1397
    %v1399 = vlaneseq
    %v1400 = vshrl.u32 %v1399, 7
    %v1401 = vsub.s32 %v1398, %v1400
    %v1402 = vrot.slane %v1386, %v1401
    %v1404 = vunpack.c.l.s4 1966171168
    %v1405 = vunpack.c.0.s8 %v1404
    %v1406 = vlaneseq
    %v1407 = vshrl.u32 %v1406, 7
    %v1408 = vsub.s32 %v1405, %v1407
    %v1409 = vrot.slane %v1393, %v1408
    %v1411 = vunpack.c.l.s4 1966171168
    %v1412 = vunpack.c.0.s8 %v1411
    %v1413 = vlaneseq
    %v1414 = vshrl.u32 %v1413, 7
    %v1415 = vsub.s32 %v1412, %v1414
    %v1416 = vrot.slane %v1394, %v1415
    %v1418 = vunpack.c.l.s4 1966171168
    %v1419 = vunpack.c.0.s8 %v1418
    %v1420 = vlaneseq
    %v1421 = vshrl.u32 %v1420, 7
    %v1422 = vsub.s32 %v1419, %v1421
    %v1423 = vrot.slane %v1395, %v1422
    %v1424 = vcombine.high %v1402, %v1402
    %v1425 = vcombine.high %v1409, %v1409
    %v1426 = vcombine.high %v1416, %v1416
    %v1427 = vcombine.high %v1423, %v1423
    %v1436 = vlaneseq
    %vm1437 = vcmp.ge.s32.totalorder %v1436, 0
    %vm1438 = vcmp.lt.s32.totalorder %v1436, 256
    %vm1439 = vmand %vm1437, %vm1438
    %1440 = vst.msk [vmem:[%s11] ss:$8 sm:$0x3] %vm1439, %v1402
    %1441 = vst.msk [vmem:[%s11] ss:$8 sm:$0x0] %vm1439, %v1402
    %s1442 = scalar_lea.vmem %s11, 32
    %1443 = vst.msk [vmem:[%s1442] ss:$8 sm:$0x3] %vm1439, %v1416
    %1444 = vst.msk [vmem:[%s1442] ss:$8 sm:$0x0] %vm1439, %v1416
    %s1445 = scalar_lea.vmem %s11, 64
    %1446 = vst.msk [vmem:[%s1445] ss:$8 sm:$0x3] %vm1439, %v1424
    %1447 = vst.msk [vmem:[%s1445] ss:$8 sm:$0x0] %vm1439, %v1424
    %s1448 = scalar_lea.vmem %s11, 96
    %1449 = vst.msk [vmem:[%s1448] ss:$8 sm:$0x3] %vm1439, %v1426
    %1450 = vst.msk [vmem:[%s1448] ss:$8 sm:$0x0] %vm1439, %v1426
    %s1451 = scalar_lea.vmem %s11, 128
    %1452 = vst.msk [vmem:[%s1451] ss:$8 sm:$0x3] %vm1439, %v1409
    %1453 = vst.msk [vmem:[%s1451] ss:$8 sm:$0x0] %vm1439, %v1409
    %s1454 = scalar_lea.vmem %s11, 160
    %1455 = vst.msk [vmem:[%s1454] ss:$8 sm:$0x3] %vm1439, %v1423
    %1456 = vst.msk [vmem:[%s1454] ss:$8 sm:$0x0] %vm1439, %v1423
    %s1457 = scalar_lea.vmem %s11, 192
    %1458 = vst.msk [vmem:[%s1457] ss:$8 sm:$0x3] %vm1439, %v1425
    %1459 = vst.msk [vmem:[%s1457] ss:$8 sm:$0x0] %vm1439, %v1425
    %s1460 = scalar_lea.vmem %s11, 224
    %1461 = vst.msk [vmem:[%s1460] ss:$8 sm:$0x3] %vm1439, %v1427
    %1462 = vst.msk [vmem:[%s1460] ss:$8 sm:$0x0] %vm1439, %v1427
    %p1463 = scmp.lt.s32.totalorder %s310, 10
    %s1464 = scalar_select %p1463, 1, 0
    %v1465 = vstv %s1464
    %vm1466 = vcmp.eq.s32.totalorder %v1465, 1
    %v1467 = vsel %vm1466, %v1293, %v308
    %v1468 = vsel %vm1466, %v482, %v309
    %s1469 = sadd.s32 %s310, 1
    %s1470 = scalar_lea.vmem [#allocation4], 32
    %v1471 = vld [vmem:[%s1470] sm:$0xff]
    %v1472 = vld [vmem:[%s1470 + $0x8] sm:$0xff]
    %v1473 = vld [vmem:[%s1470 + $0x10] sm:$0xff]
    %v1474 = vld [vmem:[%s1470 + $0x18] sm:$0xff]
    %1475 = vmatprep.subr.mxu0 %v164
    %1476 = vmatpush1.msra.mxu0 %v163
    %1477 = vmatprep.subr.mxu0 %v168
    %1478 = vmatpush1.msra.mxu0 %v167
    %1479 = vmatprep.subr.mxu0 %v172
    %1480 = vmatpush1.msra.mxu0 %v171
    %1481 = vmatprep.subr.mxu0 %v176
    %1482 = vmatpush1.msra.mxu0 %v175
    %1483 = vmatprep.subr.mxu0 %v180
    %1484 = vmatpush1.msra.mxu0 %v179
    %1485 = vmatprep.subr.mxu0 %v184
    %1486 = vmatpush1.msra.mxu0 %v183
    %1487 = vmatprep.subr.mxu0 %v188
    %1488 = vmatpush1.msra.mxu0 %v187
    %1489 = vmatprep.subr.mxu0 %v192
    %1490 = vmatpush1.msra.mxu0 %v191
    %1491 = vmatprep.subr.mxu0 %v196
    %1492 = vmatpush1.msra.mxu0 %v195
    %1493 = vmatprep.subr.mxu0 %v200
    %1494 = vmatpush1.msra.mxu0 %v199
    %1495 = vmatprep.subr.mxu0 %v204
    %1496 = vmatpush1.msra.mxu0 %v203
    %1497 = vmatprep.subr.mxu0 %v208
    %1498 = vmatpush1.msra.mxu0 %v207
    %1499 = vmatprep.subr.mxu0 %v212
    %1500 = vmatpush1.msra.mxu0 %v211
    %1501 = vmatprep.subr.mxu0 %v216
    %1502 = vmatpush1.msra.mxu0 %v215
    %1503 = vmatprep.subr.mxu0 %v220
    %1504 = vmatpush1.msra.mxu0 %v219
    %1505 = vmatprep.subr.mxu0 %v224
    %1506 = vmatpush1.msra.mxu0 %v223
    %1507 = vmatprep.subr.mxu0 0.0
    %1508 = vmatpush1.msra.mxu0 0.0
    %1509 = vmatprep.subr.mxu0 0.0
    %1510 = vmatpush1.msra.mxu0 0.0
    %1511 = vmatprep.subr.mxu0 0.0
    %1512 = vmatpush1.msra.mxu0 0.0
    %1513 = vmatprep.subr.mxu0 0.0
    %1514 = vmatpush1.msra.mxu0 0.0
    %1515 = vmatprep.subr.mxu0 0.0
    %1516 = vmatpush1.msra.mxu0 0.0
    %1517 = vmatprep.subr.mxu0 0.0
    %1518 = vmatpush1.msra.mxu0 0.0
    %1519 = vmatprep.subr.mxu0 0.0
    %1520 = vmatpush1.msra.mxu0 0.0
    %1521 = vmatprep.subr.mxu0 0.0
    %1522 = vmatpush1.msra.mxu0 0.0
    %1523 = vmatprep.subr.mxu0 0.0
    %1524 = vmatpush1.msra.mxu0 0.0
    %1525 = vmatprep.subr.mxu0 0.0
    %1526 = vmatpush1.msra.mxu0 0.0
    %1527 = vmatprep.subr.mxu0 0.0
    %1528 = vmatpush1.msra.mxu0 0.0
    %1529 = vmatprep.subr.mxu0 0.0
    %1530 = vmatpush1.msra.mxu0 0.0
    %1531 = vmatprep.subr.mxu0 0.0
    %1532 = vmatpush1.msra.mxu0 0.0
    %1533 = vmatprep.subr.mxu0 0.0
    %1534 = vmatpush1.msra.mxu0 0.0
    %1535 = vmatprep.subr.mxu0 0.0
    %1536 = vmatpush1.msra.mxu0 0.0
    %1537 = vmatprep.subr.mxu0 0.0
    %1538 = vmatpush1.msra.mxu0 0.0
    %1539 = vmatprep.mubr.f32.mxu0 0.0
    %1540 = vmatmul.mubr.f32.gmra.mrb[0].mxu0 %v1467
    %v1541 = vpop.f32.mrb[0].mxu0
    %v1542 = vadd.f32 0.0, %v1541
    %v1543 = vpop.f32.mrb[0].mxu0
    %v1544 = vadd.f32 0.0, %v1543
    %1545 = vdwg.mxu0
    %1546 = vmatprep.subr.mxu0 %v166
    %1547 = vmatpush1.msra.mxu0 %v165
    %1548 = vmatprep.subr.mxu0 %v170
    %1549 = vmatpush1.msra.mxu0 %v169
    %1550 = vmatprep.subr.mxu0 %v174
    %1551 = vmatpush1.msra.mxu0 %v173
    %1552 = vmatprep.subr.mxu0 %v178
    %1553 = vmatpush1.msra.mxu0 %v177
    %1554 = vmatprep.subr.mxu0 %v182
    %1555 = vmatpush1.msra.mxu0 %v181
    %1556 = vmatprep.subr.mxu0 %v186
    %1557 = vmatpush1.msra.mxu0 %v185
    %1558 = vmatprep.subr.mxu0 %v190
    %1559 = vmatpush1.msra.mxu0 %v189
    %1560 = vmatprep.subr.mxu0 %v194
    %1561 = vmatpush1.msra.mxu0 %v193
    %1562 = vmatprep.subr.mxu0 %v198
    %1563 = vmatpush1.msra.mxu0 %v197
    %1564 = vmatprep.subr.mxu0 %v202
    %1565 = vmatpush1.msra.mxu0 %v201
    %1566 = vmatprep.subr.mxu0 %v206
    %1567 = vmatpush1.msra.mxu0 %v205
    %1568 = vmatprep.subr.mxu0 %v210
    %1569 = vmatpush1.msra.mxu0 %v209
    %1570 = vmatprep.subr.mxu0 %v214
    %1571 = vmatpush1.msra.mxu0 %v213
    %1572 = vmatprep.subr.mxu0 %v218
    %1573 = vmatpush1.msra.mxu0 %v217
    %1574 = vmatprep.subr.mxu0 %v222
    %1575 = vmatpush1.msra.mxu0 %v221
    %1576 = vmatprep.subr.mxu0 %v226
    %1577 = vmatpush1.msra.mxu0 %v225
    %1578 = vmatprep.subr.mxu0 0.0
    %1579 = vmatpush1.msra.mxu0 0.0
    %1580 = vmatprep.subr.mxu0 0.0
    %1581 = vmatpush1.msra.mxu0 0.0
    %1582 = vmatprep.subr.mxu0 0.0
    %1583 = vmatpush1.msra.mxu0 0.0
    %1584 = vmatprep.subr.mxu0 0.0
    %1585 = vmatpush1.msra.mxu0 0.0
    %1586 = vmatprep.subr.mxu0 0.0
    %1587 = vmatpush1.msra.mxu0 0.0
    %1588 = vmatprep.subr.mxu0 0.0
    %1589 = vmatpush1.msra.mxu0 0.0
    %1590 = vmatprep.subr.mxu0 0.0
    %1591 = vmatpush1.msra.mxu0 0.0
    %1592 = vmatprep.subr.mxu0 0.0
    %1593 = vmatpush1.msra.mxu0 0.0
    %1594 = vmatprep.subr.mxu0 0.0
    %1595 = vmatpush1.msra.mxu0 0.0
    %1596 = vmatprep.subr.mxu0 0.0
    %1597 = vmatpush1.msra.mxu0 0.0
    %1598 = vmatprep.subr.mxu0 0.0
    %1599 = vmatpush1.msra.mxu0 0.0
    %1600 = vmatprep.subr.mxu0 0.0
    %1601 = vmatpush1.msra.mxu0 0.0
    %1602 = vmatprep.subr.mxu0 0.0
    %1603 = vmatpush1.msra.mxu0 0.0
    %1604 = vmatprep.subr.mxu0 0.0
    %1605 = vmatpush1.msra.mxu0 0.0
    %1606 = vmatprep.subr.mxu0 0.0
    %1607 = vmatpush1.msra.mxu0 0.0
    %1608 = vmatprep.subr.mxu0 0.0
    %1609 = vmatpush1.msra.mxu0 0.0
    %1610 = vmatprep.mubr.f32.mxu0 0.0
    %1611 = vmatmul.mubr.f32.gmra.mrb[0].mxu0 %v1467
    %v1612 = vpop.f32.mrb[0].mxu0
    %v1613 = vadd.f32 0.0, %v1612
    %v1614 = vpop.f32.mrb[0].mxu0
    %v1615 = vadd.f32 0.0, %v1614
    %1616 = vdwg.mxu0
    %v1617 = vadd.f32 %v1471, %v1542
    %v1618 = vadd.f32 %v1472, %v1544
    %v1619 = vadd.f32 %v1473, %v1613
    %v1620 = vadd.f32 %v1474, %v1615
    %v1621 = vxor.u32 %v1617, 2147483648
    %v1622 = vmul.f32 %v1621, 1.442695
    %v1623 = vpow.pop %v1622
    %v1624 = vadd.f32 %v1623, 1.0
    %v1625 = vrcp.pop %v1624
    %v1626 = vmul.f32 1.0, %v1625
    %v1627 = vxor.u32 %v1618, 2147483648
    %v1628 = vmul.f32 %v1627, 1.442695
    %v1629 = vpow.pop %v1628
    %v1630 = vadd.f32 %v1629, 1.0
    %v1631 = vrcp.pop %v1630
    %v1632 = vmul.f32 1.0, %v1631
    %v1633 = vtanh.pop %v1619
    %v1634 = vxor.u32 %v1620, 2147483648
    %v1635 = vmul.f32 %v1634, 1.442695
    %v1636 = vpow.pop %v1635
    %v1637 = vadd.f32 %v1636, 1.0
    %v1638 = vrcp.pop %v1637
    %v1639 = vmul.f32 1.0, %v1638
    %v1640 = vmul.f32 %v1632, %v1468
    %v1641 = vmul.f32 %v1626, %v1633
    %v1642 = vadd.f32 %v1640, %v1641
    %v1643 = vtanh.pop %v1642
    %v1644 = vmul.f32 %v1639, %v1643
    %1645 = vmatprep.subr.mxu0 0.0
    %1646 = vmatpush1.msra.mxu0 %v227
    %1647 = vmatprep.subr.mxu0 0.0
    %1648 = vmatpush1.msra.mxu0 %v228
    %1649 = vmatprep.subr.mxu0 0.0
    %1650 = vmatpush1.msra.mxu0 %v229
    %1651 = vmatprep.subr.mxu0 0.0
    %1652 = vmatpush1.msra.mxu0 %v230
    %1653 = vmatprep.subr.mxu0 0.0
    %1654 = vmatpush1.msra.mxu0 %v231
    %1655 = vmatprep.subr.mxu0 0.0
    %1656 = vmatpush1.msra.mxu0 %v232
    %1657 = vmatprep.subr.mxu0 0.0
    %1658 = vmatpush1.msra.mxu0 %v233
    %1659 = vmatprep.subr.mxu0 0.0
    %1660 = vmatpush1.msra.mxu0 %v234
    %1661 = vmatprep.subr.mxu0 0.0
    %1662 = vmatpush1.msra.mxu0 %v235
    %1663 = vmatprep.subr.mxu0 0.0
    %1664 = vmatpush1.msra.mxu0 %v236
    %1665 = vmatprep.subr.mxu0 0.0
    %1666 = vmatpush1.msra.mxu0 %v237
    %1667 = vmatprep.subr.mxu0 0.0
    %1668 = vmatpush1.msra.mxu0 %v238
    %1669 = vmatprep.subr.mxu0 0.0
    %1670 = vmatpush1.msra.mxu0 %v239
    %1671 = vmatprep.subr.mxu0 0.0
    %1672 = vmatpush1.msra.mxu0 %v240
    %1673 = vmatprep.subr.mxu0 0.0
    %1674 = vmatpush1.msra.mxu0 %v241
    %1675 = vmatprep.subr.mxu0 0.0
    %1676 = vmatpush1.msra.mxu0 %v242
    %1677 = vmatprep.subr.mxu0 0.0
    %1678 = vmatpush1.msra.mxu0 0.0
    %1679 = vmatprep.subr.mxu0 0.0
    %1680 = vmatpush1.msra.mxu0 0.0
    %1681 = vmatprep.subr.mxu0 0.0
    %1682 = vmatpush1.msra.mxu0 0.0
    %1683 = vmatprep.subr.mxu0 0.0
    %1684 = vmatpush1.msra.mxu0 0.0
    %1685 = vmatprep.subr.mxu0 0.0
    %1686 = vmatpush1.msra.mxu0 0.0
    %1687 = vmatprep.subr.mxu0 0.0
    %1688 = vmatpush1.msra.mxu0 0.0
    %1689 = vmatprep.subr.mxu0 0.0
    %1690 = vmatpush1.msra.mxu0 0.0
    %1691 = vmatprep.subr.mxu0 0.0
    %1692 = vmatpush1.msra.mxu0 0.0
    %1693 = vmatprep.subr.mxu0 0.0
    %1694 = vmatpush1.msra.mxu0 0.0
    %1695 = vmatprep.subr.mxu0 0.0
    %1696 = vmatpush1.msra.mxu0 0.0
    %1697 = vmatprep.subr.mxu0 0.0
    %1698 = vmatpush1.msra.mxu0 0.0
    %1699 = vmatprep.subr.mxu0 0.0
    %1700 = vmatpush1.msra.mxu0 0.0
    %1701 = vmatprep.subr.mxu0 0.0
    %1702 = vmatpush1.msra.mxu0 0.0
    %1703 = vmatprep.subr.mxu0 0.0
    %1704 = vmatpush1.msra.mxu0 0.0
    %1705 = vmatprep.subr.mxu0 0.0
    %1706 = vmatpush1.msra.mxu0 0.0
    %1707 = vmatprep.subr.mxu0 0.0
    %1708 = vmatpush1.msra.mxu0 0.0
    %1709 = vmatprep.mubr.f32.mxu0 0.0
    %1710 = vmatmul.mubr.f32.gmra.mrb[0].mxu0 %v1644
    %v1711 = vpop.f32.mrb[0].mxu0
    %v1712 = vadd.f32 0.0, %v1711
    %v1713 = vpop.f32.mrb[0].mxu0
    %1714 = vdwg.mxu0
    %v1716 = vcombine.high %v1712, %v1712
    %v1718 = vunpack.c.l.s4 1966171168
    %v1719 = vunpack.c.0.s8 %v1718
    %v1720 = vlaneseq
    %v1721 = vshrl.u32 %v1720, 7
    %v1722 = vsub.s32 %v1719, %v1721
    %v1723 = vrot.slane %v1712, %v1722
    %v1725 = vunpack.c.l.s4 1966171168
    %v1726 = vunpack.c.0.s8 %v1725
    %v1727 = vlaneseq
    %v1728 = vshrl.u32 %v1727, 7
    %v1729 = vsub.s32 %v1726, %v1728
    %v1730 = vrot.slane %v1716, %v1729
    %v1731 = vcombine.high %v1723, %v1723
    %v1732 = vcombine.high %v1730, %v1730
    %v1734 = vunpack.c.l.s4 1966171168
    %v1735 = vunpack.c.0.s8 %v1734
    %v1736 = vlaneseq
    %v1737 = vshrl.u32 %v1736, 7
    %v1738 = vsub.s32 %v1735, %v1737
    %v1739 = vrot.slane %v1723, %v1738
    %v1741 = vunpack.c.l.s4 1966171168
    %v1742 = vunpack.c.0.s8 %v1741
    %v1743 = vlaneseq
    %v1744 = vshrl.u32 %v1743, 7
    %v1745 = vsub.s32 %v1742, %v1744
    %v1746 = vrot.slane %v1730, %v1745
    %v1748 = vunpack.c.l.s4 1966171168
    %v1749 = vunpack.c.0.s8 %v1748
    %v1750 = vlaneseq
    %v1751 = vshrl.u32 %v1750, 7
    %v1752 = vsub.s32 %v1749, %v1751
    %v1753 = vrot.slane %v1731, %v1752
    %v1755 = vunpack.c.l.s4 1966171168
    %v1756 = vunpack.c.0.s8 %v1755
    %v1757 = vlaneseq
    %v1758 = vshrl.u32 %v1757, 7
    %v1759 = vsub.s32 %v1756, %v1758
    %v1760 = vrot.slane %v1732, %v1759
    %v1761 = vcombine.high %v1739, %v1739
    %v1762 = vcombine.high %v1746, %v1746
    %v1763 = vcombine.high %v1753, %v1753
    %v1764 = vcombine.high %v1760, %v1760
    %v1765 = vlaneseq
    %v1766 = vshrl.u32 %v1765, 7
    %v1767 = vsub.s32 0, %v1766
    %v1768 = vrot.slane %v1739, %v1767
    %v1769 = vlaneseq
    %v1770 = vshrl.u32 %v1769, 7
    %v1771 = vsub.s32 0, %v1770
    %v1772 = vrot.slane %v1753, %v1771
    %v1773 = vlaneseq
    %v1774 = vshrl.u32 %v1773, 7
    %v1775 = vsub.s32 0, %v1774
    %v1776 = vrot.slane %v1761, %v1775
    %v1777 = vlaneseq
    %v1778 = vshrl.u32 %v1777, 7
    %v1779 = vsub.s32 0, %v1778
    %v1780 = vrot.slane %v1763, %v1779
    %v1781 = vlaneseq
    %v1782 = vshrl.u32 %v1781, 7
    %v1783 = vsub.s32 0, %v1782
    %v1784 = vrot.slane %v1746, %v1783
    %v1785 = vlaneseq
    %v1786 = vshrl.u32 %v1785, 7
    %v1787 = vsub.s32 0, %v1786
    %v1788 = vrot.slane %v1760, %v1787
    %v1789 = vlaneseq
    %v1790 = vshrl.u32 %v1789, 7
    %v1791 = vsub.s32 0, %v1790
    %v1792 = vrot.slane %v1762, %v1791
    %v1793 = vlaneseq
    %v1794 = vshrl.u32 %v1793, 7
    %v1795 = vsub.s32 0, %v1794
    %v1796 = vrot.slane %v1764, %v1795
    %v1805 = vmul.f32 %v154, %v1768
    %v1806 = vmul.f32 %v155, %v1772
    %v1807 = vmul.f32 %v156, %v1776
    %v1808 = vmul.f32 %v157, %v1780
    %v1809 = vmul.f32 %v158, %v1784
    %v1810 = vmul.f32 %v159, %v1788
    %v1811 = vmul.f32 %v160, %v1792
    %v1812 = vmul.f32 %v161, %v1796
    %v1813 = vsel %vm653, %v1805, 0.0
    %1814 = vadd.xlane.f32.xlu0 %v1813
    %v1815 = vpop.xlane.xlu0 %1814
    %v1816 = vsel %vm653, %v1806, 0.0
    %1817 = vadd.xlane.f32.xlu0 %v1816
    %v1818 = vpop.xlane.xlu0 %1817
    %v1819 = vsel %vm653, %v1807, 0.0
    %1820 = vadd.xlane.f32.xlu0 %v1819
    %v1821 = vpop.xlane.xlu0 %1820
    %v1822 = vsel %vm653, %v1808, 0.0
    %1823 = vadd.xlane.f32.xlu0 %v1822
    %v1824 = vpop.xlane.xlu0 %1823
    %v1825 = vsel %vm653, %v1809, 0.0
    %1826 = vadd.xlane.f32.xlu0 %v1825
    %v1827 = vpop.xlane.xlu0 %1826
    %v1828 = vsel %vm653, %v1810, 0.0
    %1829 = vadd.xlane.f32.xlu0 %v1828
    %v1830 = vpop.xlane.xlu0 %1829
    %v1831 = vsel %vm653, %v1811, 0.0
    %1832 = vadd.xlane.f32.xlu0 %v1831
    %v1833 = vpop.xlane.xlu0 %1832
    %v1834 = vsel %vm653, %v1812, 0.0
    %1835 = vadd.xlane.f32.xlu0 %v1834
    %v1836 = vpop.xlane.xlu0 %1835
    %v1837 = vadd.f32 %v1815, %v685
    %v1838 = vadd.f32 %v1818, %v692
    %v1839 = vadd.f32 %v1821, %v699
    %v1840 = vadd.f32 %v1824, %v706
    %v1841 = vadd.f32 %v1827, %v713
    %v1842 = vadd.f32 %v1830, %v720
    %v1843 = vadd.f32 %v1833, %v727
    %v1844 = vadd.f32 %v1836, %v734
    %1853 = vset.pattern.permute.xlu0 0
    %1854 = vperm.xlu0 %1853, %v1837
    %v1855 = vpop.permute.xlu0 %1854
    %1856 = vset.pattern.permute.xlu0 0
    %1857 = vperm.xlu0 %1856, %v1838
    %v1858 = vpop.permute.xlu0 %1857
    %1859 = vset.pattern.permute.xlu0 0
    %1860 = vperm.xlu0 %1859, %v1839
    %v1861 = vpop.permute.xlu0 %1860
    %1862 = vset.pattern.permute.xlu0 0
    %1863 = vperm.xlu0 %1862, %v1840
    %v1864 = vpop.permute.xlu0 %1863
    %1865 = vset.pattern.permute.xlu0 0
    %1866 = vperm.xlu0 %1865, %v1841
    %v1867 = vpop.permute.xlu0 %1866
    %1868 = vset.pattern.permute.xlu0 0
    %1869 = vperm.xlu0 %1868, %v1842
    %v1870 = vpop.permute.xlu0 %1869
    %1871 = vset.pattern.permute.xlu0 0
    %1872 = vperm.xlu0 %1871, %v1843
    %v1873 = vpop.permute.xlu0 %1872
    %1874 = vset.pattern.permute.xlu0 0
    %1875 = vperm.xlu0 %1874, %v1844
    %v1876 = vpop.permute.xlu0 %1875
    %v1877 = vlaneseq
    %v1878 = vshrl.u32 %v1877, 7
    %v1879 = vsub.s32 %v784, %v1878
    %v1880 = vrot.slane %v1855, %v1879
    %v1881 = vlaneseq
    %v1882 = vshrl.u32 %v1881, 7
    %v1883 = vsub.s32 %v784, %v1882
    %v1884 = vrot.slane %v1858, %v1883
    %v1885 = vlaneseq
    %v1886 = vshrl.u32 %v1885, 7
    %v1887 = vsub.s32 %v784, %v1886
    %v1888 = vrot.slane %v1861, %v1887
    %v1889 = vlaneseq
    %v1890 = vshrl.u32 %v1889, 7
    %v1891 = vsub.s32 %v784, %v1890
    %v1892 = vrot.slane %v1864, %v1891
    %v1893 = vlaneseq
    %v1894 = vshrl.u32 %v1893, 7
    %v1895 = vsub.s32 %v784, %v1894
    %v1896 = vrot.slane %v1867, %v1895
    %v1897 = vlaneseq
    %v1898 = vshrl.u32 %v1897, 7
    %v1899 = vsub.s32 %v784, %v1898
    %v1900 = vrot.slane %v1870, %v1899
    %v1901 = vlaneseq
    %v1902 = vshrl.u32 %v1901, 7
    %v1903 = vsub.s32 %v784, %v1902
    %v1904 = vrot.slane %v1873, %v1903
    %v1905 = vlaneseq
    %v1906 = vshrl.u32 %v1905, 7
    %v1907 = vsub.s32 %v784, %v1906
    %v1908 = vrot.slane %v1876, %v1907
    %v1909 = vsel %vm817, %v1884, %v1880
    %v1910 = vsel %vm819, %v1888, %v1909
    %v1911 = vsel %vm821, %v1892, %v1910
    %v1912 = vsel %vm823, %v1896, %v1911
    %v1913 = vsel %vm825, %v1900, %v1912
    %v1914 = vsel %vm827, %v1904, %v1913
    %v1915 = vsel %vm829, %v1908, %v1914
    %v1917 = vsel %vm832, %v1915, -inf
    %1918 = vmax.xlane.f32.xlu0 %v1917
    %v1919 = vpop.xlane.xlu0 %1918
    %v1921 = vlaneseq
    %v1922 = vshrl.u32 %v1921, 7
    %v1923 = vsub.s32 0, %v1922
    %v1924 = vrot.slane %v1919, %v1923
    %v1925 = vlaneseq
    %v1926 = vshrl.u32 %v1925, 7
    %v1927 = vsub.s32 1, %v1926
    %v1928 = vrot.slane %v1919, %v1927
    %v1929 = vlaneseq
    %v1930 = vshrl.u32 %v1929, 7
    %v1931 = vsub.s32 2, %v1930
    %v1932 = vrot.slane %v1919, %v1931
    %v1933 = vlaneseq
    %v1934 = vshrl.u32 %v1933, 7
    %v1935 = vsub.s32 3, %v1934
    %v1936 = vrot.slane %v1919, %v1935
    %v1937 = vlaneseq
    %v1938 = vshrl.u32 %v1937, 7
    %v1939 = vsub.s32 4, %v1938
    %v1940 = vrot.slane %v1919, %v1939
    %v1941 = vlaneseq
    %v1942 = vshrl.u32 %v1941, 7
    %v1943 = vsub.s32 5, %v1942
    %v1944 = vrot.slane %v1919, %v1943
    %v1945 = vlaneseq
    %v1946 = vshrl.u32 %v1945, 7
    %v1947 = vsub.s32 6, %v1946
    %v1948 = vrot.slane %v1919, %v1947
    %v1949 = vlaneseq
    %v1950 = vshrl.u32 %v1949, 7
    %v1951 = vsub.s32 7, %v1950
    %v1952 = vrot.slane %v1919, %v1951
    %v1961 = vsub.f32 %v1837, %v1924
    %v1962 = vsub.f32 %v1838, %v1928
    %v1963 = vsub.f32 %v1839, %v1932
    %v1964 = vsub.f32 %v1840, %v1936
    %v1965 = vsub.f32 %v1841, %v1940
    %v1966 = vsub.f32 %v1842, %v1944
    %v1967 = vsub.f32 %v1843, %v1948
    %v1968 = vsub.f32 %v1844, %v1952
    %v1969 = vmul.f32 %v1961, 1.442695
    %v1970 = vpow.pop %v1969
    %v1971 = vmul.f32 %v1962, 1.442695
    %v1972 = vpow.pop %v1971
    %v1973 = vmul.f32 %v1963, 1.442695
    %v1974 = vpow.pop %v1973
    %v1975 = vmul.f32 %v1964, 1.442695
    %v1976 = vpow.pop %v1975
    %v1977 = vmul.f32 %v1965, 1.442695
    %v1978 = vpow.pop %v1977
    %v1979 = vmul.f32 %v1966, 1.442695
    %v1980 = vpow.pop %v1979
    %v1981 = vmul.f32 %v1967, 1.442695
    %v1982 = vpow.pop %v1981
    %v1983 = vmul.f32 %v1968, 1.442695
    %v1984 = vpow.pop %v1983
    %1993 = vset.pattern.permute.xlu0 0
    %1994 = vperm.xlu0 %1993, %v1970
    %v1995 = vpop.permute.xlu0 %1994
    %1996 = vset.pattern.permute.xlu0 0
    %1997 = vperm.xlu0 %1996, %v1972
    %v1998 = vpop.permute.xlu0 %1997
    %1999 = vset.pattern.permute.xlu0 0
    %2000 = vperm.xlu0 %1999, %v1974
    %v2001 = vpop.permute.xlu0 %2000
    %2002 = vset.pattern.permute.xlu0 0
    %2003 = vperm.xlu0 %2002, %v1976
    %v2004 = vpop.permute.xlu0 %2003
    %2005 = vset.pattern.permute.xlu0 0
    %2006 = vperm.xlu0 %2005, %v1978
    %v2007 = vpop.permute.xlu0 %2006
    %2008 = vset.pattern.permute.xlu0 0
    %2009 = vperm.xlu0 %2008, %v1980
    %v2010 = vpop.permute.xlu0 %2009
    %2011 = vset.pattern.permute.xlu0 0
    %2012 = vperm.xlu0 %2011, %v1982
    %v2013 = vpop.permute.xlu0 %2012
    %2014 = vset.pattern.permute.xlu0 0
    %2015 = vperm.xlu0 %2014, %v1984
    %v2016 = vpop.permute.xlu0 %2015
    %v2017 = vlaneseq
    %v2018 = vshrl.u32 %v2017, 7
    %v2019 = vsub.s32 %v784, %v2018
    %v2020 = vrot.slane %v1995, %v2019
    %v2021 = vlaneseq
    %v2022 = vshrl.u32 %v2021, 7
    %v2023 = vsub.s32 %v784, %v2022
    %v2024 = vrot.slane %v1998, %v2023
    %v2025 = vlaneseq
    %v2026 = vshrl.u32 %v2025, 7
    %v2027 = vsub.s32 %v784, %v2026
    %v2028 = vrot.slane %v2001, %v2027
    %v2029 = vlaneseq
    %v2030 = vshrl.u32 %v2029, 7
    %v2031 = vsub.s32 %v784, %v2030
    %v2032 = vrot.slane %v2004, %v2031
    %v2033 = vlaneseq
    %v2034 = vshrl.u32 %v2033, 7
    %v2035 = vsub.s32 %v784, %v2034
    %v2036 = vrot.slane %v2007, %v2035
    %v2037 = vlaneseq
    %v2038 = vshrl.u32 %v2037, 7
    %v2039 = vsub.s32 %v784, %v2038
    %v2040 = vrot.slane %v2010, %v2039
    %v2041 = vlaneseq
    %v2042 = vshrl.u32 %v2041, 7
    %v2043 = vsub.s32 %v784, %v2042
    %v2044 = vrot.slane %v2013, %v2043
    %v2045 = vlaneseq
    %v2046 = vshrl.u32 %v2045, 7
    %v2047 = vsub.s32 %v784, %v2046
    %v2048 = vrot.slane %v2016, %v2047
    %v2049 = vsel %vm817, %v2024, %v2020
    %v2050 = vsel %vm819, %v2028, %v2049
    %v2051 = vsel %vm821, %v2032, %v2050
    %v2052 = vsel %vm823, %v2036, %v2051
    %v2053 = vsel %vm825, %v2040, %v2052
    %v2054 = vsel %vm827, %v2044, %v2053
    %v2055 = vsel %vm829, %v2048, %v2054
    %v2057 = vsel %vm832, %v2055, 0.0
    %2058 = vadd.xlane.f32.xlu0 %v2057
    %v2059 = vpop.xlane.xlu0 %2058
    %v2061 = vlaneseq
    %v2062 = vshrl.u32 %v2061, 7
    %v2063 = vsub.s32 0, %v2062
    %v2064 = vrot.slane %v2059, %v2063
    %v2065 = vlaneseq
    %v2066 = vshrl.u32 %v2065, 7
    %v2067 = vsub.s32 1, %v2066
    %v2068 = vrot.slane %v2059, %v2067
    %v2069 = vlaneseq
    %v2070 = vshrl.u32 %v2069, 7
    %v2071 = vsub.s32 2, %v2070
    %v2072 = vrot.slane %v2059, %v2071
    %v2073 = vlaneseq
    %v2074 = vshrl.u32 %v2073, 7
    %v2075 = vsub.s32 3, %v2074
    %v2076 = vrot.slane %v2059, %v2075
    %v2077 = vlaneseq
    %v2078 = vshrl.u32 %v2077, 7
    %v2079 = vsub.s32 4, %v2078
    %v2080 = vrot.slane %v2059, %v2079
    %v2081 = vlaneseq
    %v2082 = vshrl.u32 %v2081, 7
    %v2083 = vsub.s32 5, %v2082
    %v2084 = vrot.slane %v2059, %v2083
    %v2085 = vlaneseq
    %v2086 = vshrl.u32 %v2085, 7
    %v2087 = vsub.s32 6, %v2086
    %v2088 = vrot.slane %v2059, %v2087
    %v2089 = vlaneseq
    %v2090 = vshrl.u32 %v2089, 7
    %v2091 = vsub.s32 7, %v2090
    %v2092 = vrot.slane %v2059, %v2091
    %v2101 = vrcp.pop %v2064
    %v2102 = vmul.f32 %v1970, %v2101
    %v2103 = vrcp.pop %v2068
    %v2104 = vmul.f32 %v1972, %v2103
    %v2105 = vrcp.pop %v2072
    %v2106 = vmul.f32 %v1974, %v2105
    %v2107 = vrcp.pop %v2076
    %v2108 = vmul.f32 %v1976, %v2107
    %v2109 = vrcp.pop %v2080
    %v2110 = vmul.f32 %v1978, %v2109
    %v2111 = vrcp.pop %v2084
    %v2112 = vmul.f32 %v1980, %v2111
    %v2113 = vrcp.pop %v2088
    %v2114 = vmul.f32 %v1982, %v2113
    %v2115 = vrcp.pop %v2092
    %v2116 = vmul.f32 %v1984, %v2115
    %2118 = vset.pattern.permute.xlu0 0
    %2119 = vperm.xlu0 %2118, %v2102
    %v2120 = vpop.permute.xlu0 %2119
    %2123 = vset.pattern.permute.xlu0 0
    %2124 = vperm.xlu0 %2123, %v2104
    %v2125 = vpop.permute.xlu0 %2124
    %2128 = vset.pattern.permute.xlu0 0
    %2129 = vperm.xlu0 %2128, %v2106
    %v2130 = vpop.permute.xlu0 %2129
    %2133 = vset.pattern.permute.xlu0 0
    %2134 = vperm.xlu0 %2133, %v2108
    %v2135 = vpop.permute.xlu0 %2134
    %2138 = vset.pattern.permute.xlu0 0
    %2139 = vperm.xlu0 %2138, %v2110
    %v2140 = vpop.permute.xlu0 %2139
    %2143 = vset.pattern.permute.xlu0 0
    %2144 = vperm.xlu0 %2143, %v2112
    %v2145 = vpop.permute.xlu0 %2144
    %2148 = vset.pattern.permute.xlu0 0
    %2149 = vperm.xlu0 %2148, %v2114
    %v2150 = vpop.permute.xlu0 %2149
    %2153 = vset.pattern.permute.xlu0 0
    %2154 = vperm.xlu0 %2153, %v2116
    %v2155 = vpop.permute.xlu0 %2154
    %v2157 = vmul.f32 %v2120, %v154
    %v2158 = vmul.f32 %v2125, %v155
    %v2159 = vmul.f32 %v2130, %v156
    %v2160 = vmul.f32 %v2135, %v157
    %v2161 = vmul.f32 %v2140, %v158
    %v2162 = vmul.f32 %v2145, %v159
    %v2163 = vmul.f32 %v2150, %v160
    %v2164 = vmul.f32 %v2155, %v161
    %v2165 = vsel %vm653, %v2157, 0.0
    %v2166 = vrot.slane %v2165, 4
    %v2167 = vadd.f32 %v2165, %v2166
    %v2168 = vrot.slane %v2167, 2
    %v2169 = vadd.f32 %v2167, %v2168
    %v2170 = vrot.slane %v2169, 1
    %v2171 = vadd.f32 %v2169, %v2170
    %v2172 = vsel %vm653, %v2158, 0.0
    %v2173 = vrot.slane %v2172, 4
    %v2174 = vadd.f32 %v2172, %v2173
    %v2175 = vrot.slane %v2174, 2
    %v2176 = vadd.f32 %v2174, %v2175
    %v2177 = vrot.slane %v2176, 1
    %v2178 = vadd.f32 %v2176, %v2177
    %v2179 = vsel %vm653, %v2159, 0.0
    %v2180 = vrot.slane %v2179, 4
    %v2181 = vadd.f32 %v2179, %v2180
    %v2182 = vrot.slane %v2181, 2
    %v2183 = vadd.f32 %v2181, %v2182
    %v2184 = vrot.slane %v2183, 1
    %v2185 = vadd.f32 %v2183, %v2184
    %v2186 = vsel %vm653, %v2160, 0.0
    %v2187 = vrot.slane %v2186, 4
    %v2188 = vadd.f32 %v2186, %v2187
    %v2189 = vrot.slane %v2188, 2
    %v2190 = vadd.f32 %v2188, %v2189
    %v2191 = vrot.slane %v2190, 1
    %v2192 = vadd.f32 %v2190, %v2191
    %v2193 = vsel %vm653, %v2161, 0.0
    %v2194 = vrot.slane %v2193, 4
    %v2195 = vadd.f32 %v2193, %v2194
    %v2196 = vrot.slane %v2195, 2
    %v2197 = vadd.f32 %v2195, %v2196
    %v2198 = vrot.slane %v2197, 1
    %v2199 = vadd.f32 %v2197, %v2198
    %v2200 = vsel %vm653, %v2162, 0.0
    %v2201 = vrot.slane %v2200, 4
    %v2202 = vadd.f32 %v2200, %v2201
    %v2203 = vrot.slane %v2202, 2
    %v2204 = vadd.f32 %v2202, %v2203
    %v2205 = vrot.slane %v2204, 1
    %v2206 = vadd.f32 %v2204, %v2205
    %v2207 = vsel %vm653, %v2163, 0.0
    %v2208 = vrot.slane %v2207, 4
    %v2209 = vadd.f32 %v2207, %v2208
    %v2210 = vrot.slane %v2209, 2
    %v2211 = vadd.f32 %v2209, %v2210
    %v2212 = vrot.slane %v2211, 1
    %v2213 = vadd.f32 %v2211, %v2212
    %v2214 = vsel %vm653, %v2164, 0.0
    %v2215 = vrot.slane %v2214, 4
    %v2216 = vadd.f32 %v2214, %v2215
    %v2217 = vrot.slane %v2216, 2
    %v2218 = vadd.f32 %v2216, %v2217
    %v2219 = vrot.slane %v2218, 1
    %v2220 = vadd.f32 %v2218, %v2219
    %2221 = vmatprep.subr.mxu0 0.0
    %2222 = vmatpush1.msra.mxu0 %v259
    %2223 = vmatprep.subr.mxu0 0.0
    %2224 = vmatpush1.msra.mxu0 %v260
    %2225 = vmatprep.subr.mxu0 0.0
    %2226 = vmatpush1.msra.mxu0 %v261
    %2227 = vmatprep.subr.mxu0 0.0
    %2228 = vmatpush1.msra.mxu0 %v262
    %2229 = vmatprep.subr.mxu0 0.0
    %2230 = vmatpush1.msra.mxu0 %v263
    %2231 = vmatprep.subr.mxu0 0.0
    %2232 = vmatpush1.msra.mxu0 %v264
    %2233 = vmatprep.subr.mxu0 0.0
    %2234 = vmatpush1.msra.mxu0 %v265
    %2235 = vmatprep.subr.mxu0 0.0
    %2236 = vmatpush1.msra.mxu0 %v266
    %2237 = vmatprep.subr.mxu0 0.0
    %2238 = vmatpush1.msra.mxu0 %v267
    %2239 = vmatprep.subr.mxu0 0.0
    %2240 = vmatpush1.msra.mxu0 %v268
    %2241 = vmatprep.subr.mxu0 0.0
    %2242 = vmatpush1.msra.mxu0 %v269
    %2243 = vmatprep.subr.mxu0 0.0
    %2244 = vmatpush1.msra.mxu0 %v270
    %2245 = vmatprep.subr.mxu0 0.0
    %2246 = vmatpush1.msra.mxu0 %v271
    %2247 = vmatprep.subr.mxu0 0.0
    %2248 = vmatpush1.msra.mxu0 %v272
    %2249 = vmatprep.subr.mxu0 0.0
    %2250 = vmatpush1.msra.mxu0 %v273
    %2251 = vmatprep.subr.mxu0 0.0
    %2252 = vmatpush1.msra.mxu0 %v274
    %2253 = vmatprep.subr.mxu0 0.0
    %2254 = vmatpush1.msra.mxu0 0.0
    %2255 = vmatprep.subr.mxu0 0.0
    %2256 = vmatpush1.msra.mxu0 0.0
    %2257 = vmatprep.subr.mxu0 0.0
    %2258 = vmatpush1.msra.mxu0 0.0
    %2259 = vmatprep.subr.mxu0 0.0
    %2260 = vmatpush1.msra.mxu0 0.0
    %2261 = vmatprep.subr.mxu0 0.0
    %2262 = vmatpush1.msra.mxu0 0.0
    %2263 = vmatprep.subr.mxu0 0.0
    %2264 = vmatpush1.msra.mxu0 0.0
    %2265 = vmatprep.subr.mxu0 0.0
    %2266 = vmatpush1.msra.mxu0 0.0
    %2267 = vmatprep.subr.mxu0 0.0
    %2268 = vmatpush1.msra.mxu0 0.0
    %2269 = vmatprep.subr.mxu0 0.0
    %2270 = vmatpush1.msra.mxu0 0.0
    %2271 = vmatprep.subr.mxu0 0.0
    %2272 = vmatpush1.msra.mxu0 0.0
    %2273 = vmatprep.subr.mxu0 0.0
    %2274 = vmatpush1.msra.mxu0 0.0
    %2275 = vmatprep.subr.mxu0 0.0
    %2276 = vmatpush1.msra.mxu0 0.0
    %2277 = vmatprep.subr.mxu0 0.0
    %2278 = vmatpush1.msra.mxu0 0.0
    %2279 = vmatprep.subr.mxu0 0.0
    %2280 = vmatpush1.msra.mxu0 0.0
    %2281 = vmatprep.subr.mxu0 0.0
    %2282 = vmatpush1.msra.mxu0 0.0
    %2283 = vmatprep.subr.mxu0 0.0
    %2284 = vmatpush1.msra.mxu0 0.0
    %2285 = vmatprep.mubr.f32.mxu0 0.0
    %2286 = vmatmul.mubr.f32.gmra.mrb[0].mxu0 %v1644
    %v2287 = vpop.f32.mrb[0].mxu0
    %v2288 = vadd.f32 0.0, %v2287
    %v2289 = vpop.f32.mrb[0].mxu0
    %2290 = vdwg.mxu0
    %v2299 = vsel %vm817, %v2178, %v2171
    %v2300 = vsel %vm819, %v2185, %v2299
    %v2301 = vsel %vm821, %v2192, %v2300
    %v2302 = vsel %vm823, %v2199, %v2301
    %v2303 = vsel %vm825, %v2206, %v2302
    %v2304 = vsel %vm827, %v2213, %v2303
    %v2305 = vsel %vm829, %v2220, %v2304
    %2307 = vmatprep.subr.mxu0 0.0
    %2308 = vmatpush1.msra.mxu0 %v243
    %2309 = vmatprep.subr.mxu0 0.0
    %2310 = vmatpush1.msra.mxu0 %v244
    %2311 = vmatprep.subr.mxu0 0.0
    %2312 = vmatpush1.msra.mxu0 %v245
    %2313 = vmatprep.subr.mxu0 0.0
    %2314 = vmatpush1.msra.mxu0 %v246
    %2315 = vmatprep.subr.mxu0 0.0
    %2316 = vmatpush1.msra.mxu0 %v247
    %2317 = vmatprep.subr.mxu0 0.0
    %2318 = vmatpush1.msra.mxu0 %v248
    %2319 = vmatprep.subr.mxu0 0.0
    %2320 = vmatpush1.msra.mxu0 %v249
    %2321 = vmatprep.subr.mxu0 0.0
    %2322 = vmatpush1.msra.mxu0 %v250
    %2323 = vmatprep.subr.mxu0 0.0
    %2324 = vmatpush1.msra.mxu0 %v251
    %2325 = vmatprep.subr.mxu0 0.0
    %2326 = vmatpush1.msra.mxu0 %v252
    %2327 = vmatprep.subr.mxu0 0.0
    %2328 = vmatpush1.msra.mxu0 %v253
    %2329 = vmatprep.subr.mxu0 0.0
    %2330 = vmatpush1.msra.mxu0 %v254
    %2331 = vmatprep.subr.mxu0 0.0
    %2332 = vmatpush1.msra.mxu0 %v255
    %2333 = vmatprep.subr.mxu0 0.0
    %2334 = vmatpush1.msra.mxu0 %v256
    %2335 = vmatprep.subr.mxu0 0.0
    %2336 = vmatpush1.msra.mxu0 %v257
    %2337 = vmatprep.subr.mxu0 0.0
    %2338 = vmatpush1.msra.mxu0 %v258
    %2339 = vmatprep.subr.mxu0 0.0
    %2340 = vmatpush1.msra.mxu0 0.0
    %2341 = vmatprep.subr.mxu0 0.0
    %2342 = vmatpush1.msra.mxu0 0.0
    %2343 = vmatprep.subr.mxu0 0.0
    %2344 = vmatpush1.msra.mxu0 0.0
    %2345 = vmatprep.subr.mxu0 0.0
    %2346 = vmatpush1.msra.mxu0 0.0
    %2347 = vmatprep.subr.mxu0 0.0
    %2348 = vmatpush1.msra.mxu0 0.0
    %2349 = vmatprep.subr.mxu0 0.0
    %2350 = vmatpush1.msra.mxu0 0.0
    %2351 = vmatprep.subr.mxu0 0.0
    %2352 = vmatpush1.msra.mxu0 0.0
    %2353 = vmatprep.subr.mxu0 0.0
    %2354 = vmatpush1.msra.mxu0 0.0
    %2355 = vmatprep.subr.mxu0 0.0
    %2356 = vmatpush1.msra.mxu0 0.0
    %2357 = vmatprep.subr.mxu0 0.0
    %2358 = vmatpush1.msra.mxu0 0.0
    %2359 = vmatprep.subr.mxu0 0.0
    %2360 = vmatpush1.msra.mxu0 0.0
    %2361 = vmatprep.subr.mxu0 0.0
    %2362 = vmatpush1.msra.mxu0 0.0
    %2363 = vmatprep.subr.mxu0 0.0
    %2364 = vmatpush1.msra.mxu0 0.0
    %2365 = vmatprep.subr.mxu0 0.0
    %2366 = vmatpush1.msra.mxu0 0.0
    %2367 = vmatprep.subr.mxu0 0.0
    %2368 = vmatpush1.msra.mxu0 0.0
    %2369 = vmatprep.subr.mxu0 0.0
    %2370 = vmatpush1.msra.mxu0 0.0
    %2371 = vmatprep.mubr.f32.mxu0 0.0
    %2372 = vmatmul.mubr.f32.gmra.mrb[0].mxu0 %v2305
    %v2373 = vpop.f32.mrb[0].mxu0
    %v2374 = vadd.f32 %v2288, %v2373
    %v2375 = vpop.f32.mrb[0].mxu0
    %2376 = vdwg.mxu0
    %v2377 = vtanh.pop %v2374
    %2378 = vmatprep.subr.mxu0 %v276
    %2379 = vmatpush1.msra.mxu0 %v275
    %2380 = vmatprep.subr.mxu0 %v278
    %2381 = vmatpush1.msra.mxu0 %v277
    %2382 = vmatprep.subr.mxu0 %v280
    %2383 = vmatpush1.msra.mxu0 %v279
    %2384 = vmatprep.subr.mxu0 %v282
    %2385 = vmatpush1.msra.mxu0 %v281
    %2386 = vmatprep.subr.mxu0 %v284
    %2387 = vmatpush1.msra.mxu0 %v283
    %2388 = vmatprep.subr.mxu0 %v286
    %2389 = vmatpush1.msra.mxu0 %v285
    %2390 = vmatprep.subr.mxu0 %v288
    %2391 = vmatpush1.msra.mxu0 %v287
    %2392 = vmatprep.subr.mxu0 %v290
    %2393 = vmatpush1.msra.mxu0 %v289
    %2394 = vmatprep.subr.mxu0 %v292
    %2395 = vmatpush1.msra.mxu0 %v291
    %2396 = vmatprep.subr.mxu0 %v294
    %2397 = vmatpush1.msra.mxu0 %v293
    %2398 = vmatprep.subr.mxu0 %v296
    %2399 = vmatpush1.msra.mxu0 %v295
    %2400 = vmatprep.subr.mxu0 %v298
    %2401 = vmatpush1.msra.mxu0 %v297
    %2402 = vmatprep.subr.mxu0 %v300
    %2403 = vmatpush1.msra.mxu0 %v299
    %2404 = vmatprep.subr.mxu0 %v302
    %2405 = vmatpush1.msra.mxu0 %v301
    %2406 = vmatprep.subr.mxu0 %v304
    %2407 = vmatpush1.msra.mxu0 %v303
    %2408 = vmatprep.subr.mxu0 %v306
    %2409 = vmatpush1.msra.mxu0 %v305
    %2410 = vmatprep.subr.mxu0 0.0
    %2411 = vmatpush1.msra.mxu0 0.0
    %2412 = vmatprep.subr.mxu0 0.0
    %2413 = vmatpush1.msra.mxu0 0.0
    %2414 = vmatprep.subr.mxu0 0.0
    %2415 = vmatpush1.msra.mxu0 0.0
    %2416 = vmatprep.subr.mxu0 0.0
    %2417 = vmatpush1.msra.mxu0 0.0
    %2418 = vmatprep.subr.mxu0 0.0
    %2419 = vmatpush1.msra.mxu0 0.0
    %2420 = vmatprep.subr.mxu0 0.0
    %2421 = vmatpush1.msra.mxu0 0.0
    %2422 = vmatprep.subr.mxu0 0.0
    %2423 = vmatpush1.msra.mxu0 0.0
    %2424 = vmatprep.subr.mxu0 0.0
    %2425 = vmatpush1.msra.mxu0 0.0
    %2426 = vmatprep.subr.mxu0 0.0
    %2427 = vmatpush1.msra.mxu0 0.0
    %2428 = vmatprep.subr.mxu0 0.0
    %2429 = vmatpush1.msra.mxu0 0.0
    %2430 = vmatprep.subr.mxu0 0.0
    %2431 = vmatpush1.msra.mxu0 0.0
    %2432 = vmatprep.subr.mxu0 0.0
    %2433 = vmatpush1.msra.mxu0 0.0
    %2434 = vmatprep.subr.mxu0 0.0
    %2435 = vmatpush1.msra.mxu0 0.0
    %2436 = vmatprep.subr.mxu0 0.0
    %2437 = vmatpush1.msra.mxu0 0.0
    %2438 = vmatprep.subr.mxu0 0.0
    %2439 = vmatpush1.msra.mxu0 0.0
    %2440 = vmatprep.subr.mxu0 0.0
    %2441 = vmatpush1.msra.mxu0 0.0
    %2442 = vmatprep.mubr.f32.mxu0 0.0
    %2443 = vmatmul.mubr.f32.gmra.mrb[0].mxu0 %v2377
    %v2444 = vpop.f32.mrb[0].mxu0
    %v2445 = vadd.f32 %v1298, %v2444
    %v2446 = vpop.f32.mrb[0].mxu0
    %v2447 = vadd.f32 %v1302, %v2446
    %2448 = vdwg.mxu0
    %v2451 = vcombine.low %v2445, %v2447
    %v2452 = vcombine.high %v2445, %v2447
    %v2454 = vunpack.c.l.s4 1966171168
    %v2455 = vunpack.c.0.s8 %v2454
    %v2456 = vlaneseq
    %v2457 = vshrl.u32 %v2456, 7
    %v2458 = vsub.s32 %v2455, %v2457
    %v2459 = vrot.slane %v2451, %v2458
    %v2461 = vunpack.c.l.s4 1966171168
    %v2462 = vunpack.c.0.s8 %v2461
    %v2463 = vlaneseq
    %v2464 = vshrl.u32 %v2463, 7
    %v2465 = vsub.s32 %v2462, %v2464
    %v2466 = vrot.slane %v2452, %v2465
    %v2467 = vcombine.high %v2459, %v2459
    %v2468 = vcombine.high %v2466, %v2466
    %v2470 = vunpack.c.l.s4 1966171168
    %v2471 = vunpack.c.0.s8 %v2470
    %v2472 = vlaneseq
    %v2473 = vshrl.u32 %v2472, 7
    %v2474 = vsub.s32 %v2471, %v2473
    %v2475 = vrot.slane %v2459, %v2474
    %v2477 = vunpack.c.l.s4 1966171168
    %v2478 = vunpack.c.0.s8 %v2477
    %v2479 = vlaneseq
    %v2480 = vshrl.u32 %v2479, 7
    %v2481 = vsub.s32 %v2478, %v2480
    %v2482 = vrot.slane %v2466, %v2481
    %v2484 = vunpack.c.l.s4 1966171168
    %v2485 = vunpack.c.0.s8 %v2484
    %v2486 = vlaneseq
    %v2487 = vshrl.u32 %v2486, 7
    %v2488 = vsub.s32 %v2485, %v2487
    %v2489 = vrot.slane %v2467, %v2488
    %v2491 = vunpack.c.l.s4 1966171168
    %v2492 = vunpack.c.0.s8 %v2491
    %v2493 = vlaneseq
    %v2494 = vshrl.u32 %v2493, 7
    %v2495 = vsub.s32 %v2492, %v2494
    %v2496 = vrot.slane %v2468, %v2495
    %v2497 = vcombine.high %v2475, %v2475
    %v2498 = vcombine.high %v2482, %v2482
    %v2499 = vcombine.high %v2489, %v2489
    %v2500 = vcombine.high %v2496, %v2496
    %s2509 = scalar_lea.vmem %s11, 1
    %2510 = vst.msk [vmem:[%s2509] ss:$8 sm:$0x3] %vm1439, %v2475
    %2511 = vst.msk [vmem:[%s2509] ss:$8 sm:$0x0] %vm1439, %v2475
    %s2512 = scalar_lea.vmem %s11, 33
    %2513 = vst.msk [vmem:[%s2512] ss:$8 sm:$0x3] %vm1439, %v2489
    %2514 = vst.msk [vmem:[%s2512] ss:$8 sm:$0x0] %vm1439, %v2489
    %s2515 = scalar_lea.vmem %s11, 65
    %2516 = vst.msk [vmem:[%s2515] ss:$8 sm:$0x3] %vm1439, %v2497
    %2517 = vst.msk [vmem:[%s2515] ss:$8 sm:$0x0] %vm1439, %v2497
    %s2518 = scalar_lea.vmem %s11, 97
    %2519 = vst.msk [vmem:[%s2518] ss:$8 sm:$0x3] %vm1439, %v2499
    %2520 = vst.msk [vmem:[%s2518] ss:$8 sm:$0x0] %vm1439, %v2499
    %s2521 = scalar_lea.vmem %s11, 129
    %2522 = vst.msk [vmem:[%s2521] ss:$8 sm:$0x3] %vm1439, %v2482
    %2523 = vst.msk [vmem:[%s2521] ss:$8 sm:$0x0] %vm1439, %v2482
    %s2524 = scalar_lea.vmem %s11, 161
    %2525 = vst.msk [vmem:[%s2524] ss:$8 sm:$0x3] %vm1439, %v2496
    %2526 = vst.msk [vmem:[%s2524] ss:$8 sm:$0x0] %vm1439, %v2496
    %s2527 = scalar_lea.vmem %s11, 193
    %2528 = vst.msk [vmem:[%s2527] ss:$8 sm:$0x3] %vm1439, %v2498
    %2529 = vst.msk [vmem:[%s2527] ss:$8 sm:$0x0] %vm1439, %v2498
    %s2530 = scalar_lea.vmem %s11, 225
    %2531 = vst.msk [vmem:[%s2530] ss:$8 sm:$0x3] %vm1439, %v2500
    %2532 = vst.msk [vmem:[%s2530] ss:$8 sm:$0x0] %vm1439, %v2500
    %p2533 = scmp.lt.s32.totalorder %s1469, 10
    %s2534 = scalar_select %p2533, 1, 0
    %v2535 = vstv %s2534
    %vm2536 = vcmp.eq.s32.totalorder %v2535, 1
    %v2537 = vsel %vm2536, %v2377, %v1467
    %v2538 = vsel %vm2536, %v1642, %v1468
    %s2539 = sadd.s32 %s310, 2
    %s2540 = scalar_lea.vmem [#allocation4], 64
    %v2541 = vld [vmem:[%s2540] sm:$0xff]
    %v2542 = vld [vmem:[%s2540 + $0x8] sm:$0xff]
    %v2543 = vld [vmem:[%s2540 + $0x10] sm:$0xff]
    %v2544 = vld [vmem:[%s2540 + $0x18] sm:$0xff]
    %2545 = vmatprep.subr.mxu0 %v164
    %2546 = vmatpush1.msra.mxu0 %v163
    %2547 = vmatprep.subr.mxu0 %v168
    %2548 = vmatpush1.msra.mxu0 %v167
    %2549 = vmatprep.subr.mxu0 %v172
    %2550 = vmatpush1.msra.mxu0 %v171
    %2551 = vmatprep.subr.mxu0 %v176
    %2552 = vmatpush1.msra.mxu0 %v175
    %2553 = vmatprep.subr.mxu0 %v180
    %2554 = vmatpush1.msra.mxu0 %v179
    %2555 = vmatprep.subr.mxu0 %v184
    %2556 = vmatpush1.msra.mxu0 %v183
    %2557 = vmatprep.subr.mxu0 %v188
    %2558 = vmatpush1.msra.mxu0 %v187
    %2559 = vmatprep.subr.mxu0 %v192
    %2560 = vmatpush1.msra.mxu0 %v191
    %2561 = vmatprep.subr.mxu0 %v196
    %2562 = vmatpush1.msra.mxu0 %v195
    %2563 = vmatprep.subr.mxu0 %v200
    %2564 = vmatpush1.msra.mxu0 %v199
    %2565 = vmatprep.subr.mxu0 %v204
    %2566 = vmatpush1.msra.mxu0 %v203
    %2567 = vmatprep.subr.mxu0 %v208
    %2568 = vmatpush1.msra.mxu0 %v207
    %2569 = vmatprep.subr.mxu0 %v212
    %2570 = vmatpush1.msra.mxu0 %v211
    %2571 = vmatprep.subr.mxu0 %v216
    %2572 = vmatpush1.msra.mxu0 %v215
    %2573 = vmatprep.subr.mxu0 %v220
    %2574 = vmatpush1.msra.mxu0 %v219
    %2575 = vmatprep.subr.mxu0 %v224
    %2576 = vmatpush1.msra.mxu0 %v223
    %2577 = vmatprep.subr.mxu0 0.0
    %2578 = vmatpush1.msra.mxu0 0.0
    %2579 = vmatprep.subr.mxu0 0.0
    %2580 = vmatpush1.msra.mxu0 0.0
    %2581 = vmatprep.subr.mxu0 0.0
    %2582 = vmatpush1.msra.mxu0 0.0
    %2583 = vmatprep.subr.mxu0 0.0
    %2584 = vmatpush1.msra.mxu0 0.0
    %2585 = vmatprep.subr.mxu0 0.0
    %2586 = vmatpush1.msra.mxu0 0.0
    %2587 = vmatprep.subr.mxu0 0.0
    %2588 = vmatpush1.msra.mxu0 0.0
    %2589 = vmatprep.subr.mxu0 0.0
    %2590 = vmatpush1.msra.mxu0 0.0
    %2591 = vmatprep.subr.mxu0 0.0
    %2592 = vmatpush1.msra.mxu0 0.0
    %2593 = vmatprep.subr.mxu0 0.0
    %2594 = vmatpush1.msra.mxu0 0.0
    %2595 = vmatprep.subr.mxu0 0.0
    %2596 = vmatpush1.msra.mxu0 0.0
    %2597 = vmatprep.subr.mxu0 0.0
    %2598 = vmatpush1.msra.mxu0 0.0
    %2599 = vmatprep.subr.mxu0 0.0
    %2600 = vmatpush1.msra.mxu0 0.0
    %2601 = vmatprep.subr.mxu0 0.0
    %2602 = vmatpush1.msra.mxu0 0.0
    %2603 = vmatprep.subr.mxu0 0.0
    %2604 = vmatpush1.msra.mxu0 0.0
    %2605 = vmatprep.subr.mxu0 0.0
    %2606 = vmatpush1.msra.mxu0 0.0
    %2607 = vmatprep.subr.mxu0 0.0
    %2608 = vmatpush1.msra.mxu0 0.0
    %2609 = vmatprep.mubr.f32.mxu0 0.0
    %2610 = vmatmul.mubr.f32.gmra.mrb[0].mxu0 %v2537
    %v2611 = vpop.f32.mrb[0].mxu0
    %v2612 = vadd.f32 0.0, %v2611
    %v2613 = vpop.f32.mrb[0].mxu0
    %v2614 = vadd.f32 0.0, %v2613
    %2615 = vdwg.mxu0
    %2616 = vmatprep.subr.mxu0 %v166
    %2617 = vmatpush1.msra.mxu0 %v165
    %2618 = vmatprep.subr.mxu0 %v170
    %2619 = vmatpush1.msra.mxu0 %v169
    %2620 = vmatprep.subr.mxu0 %v174
    %2621 = vmatpush1.msra.mxu0 %v173
    %2622 = vmatprep.subr.mxu0 %v178
    %2623 = vmatpush1.msra.mxu0 %v177
    %2624 = vmatprep.subr.mxu0 %v182
    %2625 = vmatpush1.msra.mxu0 %v181
    %2626 = vmatprep.subr.mxu0 %v186
    %2627 = vmatpush1.msra.mxu0 %v185
    %2628 = vmatprep.subr.mxu0 %v190
    %2629 = vmatpush1.msra.mxu0 %v189
    %2630 = vmatprep.subr.mxu0 %v194
    %2631 = vmatpush1.msra.mxu0 %v193
    %2632 = vmatprep.subr.mxu0 %v198
    %2633 = vmatpush1.msra.mxu0 %v197
    %2634 = vmatprep.subr.mxu0 %v202
    %2635 = vmatpush1.msra.mxu0 %v201
    %2636 = vmatprep.subr.mxu0 %v206
    %2637 = vmatpush1.msra.mxu0 %v205
    %2638 = vmatprep.subr.mxu0 %v210
    %2639 = vmatpush1.msra.mxu0 %v209
    %2640 = vmatprep.subr.mxu0 %v214
    %2641 = vmatpush1.msra.mxu0 %v213
    %2642 = vmatprep.subr.mxu0 %v218
    %2643 = vmatpush1.msra.mxu0 %v217
    %2644 = vmatprep.subr.mxu0 %v222
    %2645 = vmatpush1.msra.mxu0 %v221
    %2646 = vmatprep.subr.mxu0 %v226
    %2647 = vmatpush1.msra.mxu0 %v225
    %2648 = vmatprep.subr.mxu0 0.0
    %2649 = vmatpush1.msra.mxu0 0.0
    %2650 = vmatprep.subr.mxu0 0.0
    %2651 = vmatpush1.msra.mxu0 0.0
    %2652 = vmatprep.subr.mxu0 0.0
    %2653 = vmatpush1.msra.mxu0 0.0
    %2654 = vmatprep.subr.mxu0 0.0
    %2655 = vmatpush1.msra.mxu0 0.0
    %2656 = vmatprep.subr.mxu0 0.0
    %2657 = vmatpush1.msra.mxu0 0.0
    %2658 = vmatprep.subr.mxu0 0.0
    %2659 = vmatpush1.msra.mxu0 0.0
    %2660 = vmatprep.subr.mxu0 0.0
    %2661 = vmatpush1.msra.mxu0 0.0
    %2662 = vmatprep.subr.mxu0 0.0
    %2663 = vmatpush1.msra.mxu0 0.0
    %2664 = vmatprep.subr.mxu0 0.0
    %2665 = vmatpush1.msra.mxu0 0.0
    %2666 = vmatprep.subr.mxu0 0.0
    %2667 = vmatpush1.msra.mxu0 0.0
    %2668 = vmatprep.subr.mxu0 0.0
    %2669 = vmatpush1.msra.mxu0 0.0
    %2670 = vmatprep.subr.mxu0 0.0
    %2671 = vmatpush1.msra.mxu0 0.0
    %2672 = vmatprep.subr.mxu0 0.0
    %2673 = vmatpush1.msra.mxu0 0.0
    %2674 = vmatprep.subr.mxu0 0.0
    %2675 = vmatpush1.msra.mxu0 0.0
    %2676 = vmatprep.subr.mxu0 0.0
    %2677 = vmatpush1.msra.mxu0 0.0
    %2678 = vmatprep.subr.mxu0 0.0
    %2679 = vmatpush1.msra.mxu0 0.0
    %2680 = vmatprep.mubr.f32.mxu0 0.0
    %2681 = vmatmul.mubr.f32.gmra.mrb[0].mxu0 %v2537
    %v2682 = vpop.f32.mrb[0].mxu0
    %v2683 = vadd.f32 0.0, %v2682
    %v2684 = vpop.f32.mrb[0].mxu0
    %v2685 = vadd.f32 0.0, %v2684
    %2686 = vdwg.mxu0
    %v2687 = vadd.f32 %v2541, %v2612
    %v2688 = vadd.f32 %v2542, %v2614
    %v2689 = vadd.f32 %v2543, %v2683
    %v2690 = vadd.f32 %v2544, %v2685
    %v2691 = vxor.u32 %v2687, 2147483648
    %v2692 = vmul.f32 %v2691, 1.442695
    %v2693 = vpow.pop %v2692
    %v2694 = vadd.f32 %v2693, 1.0
    %v2695 = vrcp.pop %v2694
    %v2696 = vmul.f32 1.0, %v2695
    %v2697 = vxor.u32 %v2688, 2147483648
    %v2698 = vmul.f32 %v2697, 1.442695
    %v2699 = vpow.pop %v2698
    %v2700 = vadd.f32 %v2699, 1.0
    %v2701 = vrcp.pop %v2700
    %v2702 = vmul.f32 1.0, %v2701
    %v2703 = vtanh.pop %v2689
    %v2704 = vxor.u32 %v2690, 2147483648
    %v2705 = vmul.f32 %v2704, 1.442695
    %v2706 = vpow.pop %v2705
    %v2707 = vadd.f32 %v2706, 1.0
    %v2708 = vrcp.pop %v2707
    %v2709 = vmul.f32 1.0, %v2708
    %v2710 = vmul.f32 %v2702, %v2538
    %v2711 = vmul.f32 %v2696, %v2703
    %v2712 = vadd.f32 %v2710, %v2711
    %v2713 = vtanh.pop %v2712
    %v2714 = vmul.f32 %v2709, %v2713
    %2715 = vmatprep.subr.mxu0 0.0
    %2716 = vmatpush1.msra.mxu0 %v227
    %2717 = vmatprep.subr.mxu0 0.0
    %2718 = vmatpush1.msra.mxu0 %v228
    %2719 = vmatprep.subr.mxu0 0.0
    %2720 = vmatpush1.msra.mxu0 %v229
    %2721 = vmatprep.subr.mxu0 0.0
    %2722 = vmatpush1.msra.mxu0 %v230
    %2723 = vmatprep.subr.mxu0 0.0
    %2724 = vmatpush1.msra.mxu0 %v231
    %2725 = vmatprep.subr.mxu0 0.0
    %2726 = vmatpush1.msra.mxu0 %v232
    %2727 = vmatprep.subr.mxu0 0.0
    %2728 = vmatpush1.msra.mxu0 %v233
    %2729 = vmatprep.subr.mxu0 0.0
    %2730 = vmatpush1.msra.mxu0 %v234
    %2731 = vmatprep.subr.mxu0 0.0
    %2732 = vmatpush1.msra.mxu0 %v235
    %2733 = vmatprep.subr.mxu0 0.0
    %2734 = vmatpush1.msra.mxu0 %v236
    %2735 = vmatprep.subr.mxu0 0.0
    %2736 = vmatpush1.msra.mxu0 %v237
    %2737 = vmatprep.subr.mxu0 0.0
    %2738 = vmatpush1.msra.mxu0 %v238
    %2739 = vmatprep.subr.mxu0 0.0
    %2740 = vmatpush1.msra.mxu0 %v239
    %2741 = vmatprep.subr.mxu0 0.0
    %2742 = vmatpush1.msra.mxu0 %v240
    %2743 = vmatprep.subr.mxu0 0.0
    %2744 = vmatpush1.msra.mxu0 %v241
    %2745 = vmatprep.subr.mxu0 0.0
    %2746 = vmatpush1.msra.mxu0 %v242
    %2747 = vmatprep.subr.mxu0 0.0
    %2748 = vmatpush1.msra.mxu0 0.0
    %2749 = vmatprep.subr.mxu0 0.0
    %2750 = vmatpush1.msra.mxu0 0.0
    %2751 = vmatprep.subr.mxu0 0.0
    %2752 = vmatpush1.msra.mxu0 0.0
    %2753 = vmatprep.subr.mxu0 0.0
    %2754 = vmatpush1.msra.mxu0 0.0
    %2755 = vmatprep.subr.mxu0 0.0
    %2756 = vmatpush1.msra.mxu0 0.0
    %2757 = vmatprep.subr.mxu0 0.0
    %2758 = vmatpush1.msra.mxu0 0.0
    %2759 = vmatprep.subr.mxu0 0.0
    %2760 = vmatpush1.msra.mxu0 0.0
    %2761 = vmatprep.subr.mxu0 0.0
    %2762 = vmatpush1.msra.mxu0 0.0
    %2763 = vmatprep.subr.mxu0 0.0
    %2764 = vmatpush1.msra.mxu0 0.0
    %2765 = vmatprep.subr.mxu0 0.0
    %2766 = vmatpush1.msra.mxu0 0.0
    %2767 = vmatprep.subr.mxu0 0.0
    %2768 = vmatpush1.msra.mxu0 0.0
    %2769 = vmatprep.subr.mxu0 0.0
    %2770 = vmatpush1.msra.mxu0 0.0
    %2771 = vmatprep.subr.mxu0 0.0
    %2772 = vmatpush1.msra.mxu0 0.0
    %2773 = vmatprep.subr.mxu0 0.0
    %2774 = vmatpush1.msra.mxu0 0.0
    %2775 = vmatprep.subr.mxu0 0.0
    %2776 = vmatpush1.msra.mxu0 0.0
    %2777 = vmatprep.subr.mxu0 0.0
    %2778 = vmatpush1.msra.mxu0 0.0
    %2779 = vmatprep.mubr.f32.mxu0 0.0
    %2780 = vmatmul.mubr.f32.gmra.mrb[0].mxu0 %v2714
    %v2781 = vpop.f32.mrb[0].mxu0
    %v2782 = vadd.f32 0.0, %v2781
    %v2783 = vpop.f32.mrb[0].mxu0
    %2784 = vdwg.mxu0
    %v2786 = vcombine.high %v2782, %v2782
    %v2788 = vunpack.c.l.s4 1966171168
    %v2789 = vunpack.c.0.s8 %v2788
    %v2790 = vlaneseq
    %v2791 = vshrl.u32 %v2790, 7
    %v2792 = vsub.s32 %v2789, %v2791
    %v2793 = vrot.slane %v2782, %v2792
    %v2795 = vunpack.c.l.s4 1966171168
    %v2796 = vunpack.c.0.s8 %v2795
    %v2797 = vlaneseq
    %v2798 = vshrl.u32 %v2797, 7
    %v2799 = vsub.s32 %v2796, %v2798
    %v2800 = vrot.slane %v2786, %v2799
    %v2801 = vcombine.high %v2793, %v2793
    %v2802 = vcombine.high %v2800, %v2800
    %v2804 = vunpack.c.l.s4 1966171168
    %v2805 = vunpack.c.0.s8 %v2804
    %v2806 = vlaneseq
    %v2807 = vshrl.u32 %v2806, 7
    %v2808 = vsub.s32 %v2805, %v2807
    %v2809 = vrot.slane %v2793, %v2808
    %v2811 = vunpack.c.l.s4 1966171168
    %v2812 = vunpack.c.0.s8 %v2811
    %v2813 = vlaneseq
    %v2814 = vshrl.u32 %v2813, 7
    %v2815 = vsub.s32 %v2812, %v2814
    %v2816 = vrot.slane %v2800, %v2815
    %v2818 = vunpack.c.l.s4 1966171168
    %v2819 = vunpack.c.0.s8 %v2818
    %v2820 = vlaneseq
    %v2821 = vshrl.u32 %v2820, 7
    %v2822 = vsub.s32 %v2819, %v2821
    %v2823 = vrot.slane %v2801, %v2822
    %v2825 = vunpack.c.l.s4 1966171168
    %v2826 = vunpack.c.0.s8 %v2825
    %v2827 = vlaneseq
    %v2828 = vshrl.u32 %v2827, 7
    %v2829 = vsub.s32 %v2826, %v2828
    %v2830 = vrot.slane %v2802, %v2829
    %v2831 = vcombine.high %v2809, %v2809
    %v2832 = vcombine.high %v2816, %v2816
    %v2833 = vcombine.high %v2823, %v2823
    %v2834 = vcombine.high %v2830, %v2830
    %v2835 = vlaneseq
    %v2836 = vshrl.u32 %v2835, 7
    %v2837 = vsub.s32 0, %v2836
    %v2838 = vrot.slane %v2809, %v2837
    %v2839 = vlaneseq
    %v2840 = vshrl.u32 %v2839, 7
    %v2841 = vsub.s32 0, %v2840
    %v2842 = vrot.slane %v2823, %v2841
    %v2843 = vlaneseq
    %v2844 = vshrl.u32 %v2843, 7
    %v2845 = vsub.s32 0, %v2844
    %v2846 = vrot.slane %v2831, %v2845
    %v2847 = vlaneseq
    %v2848 = vshrl.u32 %v2847, 7
    %v2849 = vsub.s32 0, %v2848
    %v2850 = vrot.slane %v2833, %v2849
    %v2851 = vlaneseq
    %v2852 = vshrl.u32 %v2851, 7
    %v2853 = vsub.s32 0, %v2852
    %v2854 = vrot.slane %v2816, %v2853
    %v2855 = vlaneseq
    %v2856 = vshrl.u32 %v2855, 7
    %v2857 = vsub.s32 0, %v2856
    %v2858 = vrot.slane %v2830, %v2857
    %v2859 = vlaneseq
    %v2860 = vshrl.u32 %v2859, 7
    %v2861 = vsub.s32 0, %v2860
    %v2862 = vrot.slane %v2832, %v2861
    %v2863 = vlaneseq
    %v2864 = vshrl.u32 %v2863, 7
    %v2865 = vsub.s32 0, %v2864
    %v2866 = vrot.slane %v2834, %v2865
    %v2875 = vmul.f32 %v154, %v2838
    %v2876 = vmul.f32 %v155, %v2842
    %v2877 = vmul.f32 %v156, %v2846
    %v2878 = vmul.f32 %v157, %v2850
    %v2879 = vmul.f32 %v158, %v2854
    %v2880 = vmul.f32 %v159, %v2858
    %v2881 = vmul.f32 %v160, %v2862
    %v2882 = vmul.f32 %v161, %v2866
    %v2883 = vsel %vm653, %v2875, 0.0
    %2884 = vadd.xlane.f32.xlu0 %v2883
    %v2885 = vpop.xlane.xlu0 %2884
    %v2886 = vsel %vm653, %v2876, 0.0
    %2887 = vadd.xlane.f32.xlu0 %v2886
    %v2888 = vpop.xlane.xlu0 %2887
    %v2889 = vsel %vm653, %v2877, 0.0
    %2890 = vadd.xlane.f32.xlu0 %v2889
    %v2891 = vpop.xlane.xlu0 %2890
    %v2892 = vsel %vm653, %v2878, 0.0
    %2893 = vadd.xlane.f32.xlu0 %v2892
    %v2894 = vpop.xlane.xlu0 %2893
    %v2895 = vsel %vm653, %v2879, 0.0
    %2896 = vadd.xlane.f32.xlu0 %v2895
    %v2897 = vpop.xlane.xlu0 %2896
    %v2898 = vsel %vm653, %v2880, 0.0
    %2899 = vadd.xlane.f32.xlu0 %v2898
    %v2900 = vpop.xlane.xlu0 %2899
    %v2901 = vsel %vm653, %v2881, 0.0
    %2902 = vadd.xlane.f32.xlu0 %v2901
    %v2903 = vpop.xlane.xlu0 %2902
    %v2904 = vsel %vm653, %v2882, 0.0
    %2905 = vadd.xlane.f32.xlu0 %v2904
    %v2906 = vpop.xlane.xlu0 %2905
    %v2907 = vadd.f32 %v2885, %v685
    %v2908 = vadd.f32 %v2888, %v692
    %v2909 = vadd.f32 %v2891, %v699
    %v2910 = vadd.f32 %v2894, %v706
    %v2911 = vadd.f32 %v2897, %v713
    %v2912 = vadd.f32 %v2900, %v720
    %v2913 = vadd.f32 %v2903, %v727
    %v2914 = vadd.f32 %v2906, %v734
    %2923 = vset.pattern.permute.xlu0 0
    %2924 = vperm.xlu0 %2923, %v2907
    %v2925 = vpop.permute.xlu0 %2924
    %2926 = vset.pattern.permute.xlu0 0
    %2927 = vperm.xlu0 %2926, %v2908
    %v2928 = vpop.permute.xlu0 %2927
    %2929 = vset.pattern.permute.xlu0 0
    %2930 = vperm.xlu0 %2929, %v2909
    %v2931 = vpop.permute.xlu0 %2930
    %2932 = vset.pattern.permute.xlu0 0
    %2933 = vperm.xlu0 %2932, %v2910
    %v2934 = vpop.permute.xlu0 %2933
    %2935 = vset.pattern.permute.xlu0 0
    %2936 = vperm.xlu0 %2935, %v2911
    %v2937 = vpop.permute.xlu0 %2936
    %2938 = vset.pattern.permute.xlu0 0
    %2939 = vperm.xlu0 %2938, %v2912
    %v2940 = vpop.permute.xlu0 %2939
    %2941 = vset.pattern.permute.xlu0 0
    %2942 = vperm.xlu0 %2941, %v2913
    %v2943 = vpop.permute.xlu0 %2942
    %2944 = vset.pattern.permute.xlu0 0
    %2945 = vperm.xlu0 %2944, %v2914
    %v2946 = vpop.permute.xlu0 %2945
    %v2947 = vlaneseq
    %v2948 = vshrl.u32 %v2947, 7
    %v2949 = vsub.s32 %v784, %v2948
    %v2950 = vrot.slane %v2925, %v2949
    %v2951 = vlaneseq
    %v2952 = vshrl.u32 %v2951, 7
    %v2953 = vsub.s32 %v784, %v2952
    %v2954 = vrot.slane %v2928, %v2953
    %v2955 = vlaneseq
    %v2956 = vshrl.u32 %v2955, 7
    %v2957 = vsub.s32 %v784, %v2956
    %v2958 = vrot.slane %v2931, %v2957
    %v2959 = vlaneseq
    %v2960 = vshrl.u32 %v2959, 7
    %v2961 = vsub.s32 %v784, %v2960
    %v2962 = vrot.slane %v2934, %v2961
    %v2963 = vlaneseq
    %v2964 = vshrl.u32 %v2963, 7
    %v2965 = vsub.s32 %v784, %v2964
    %v2966 = vrot.slane %v2937, %v2965
    %v2967 = vlaneseq
    %v2968 = vshrl.u32 %v2967, 7
    %v2969 = vsub.s32 %v784, %v2968
    %v2970 = vrot.slane %v2940, %v2969
    %v2971 = vlaneseq
    %v2972 = vshrl.u32 %v2971, 7
    %v2973 = vsub.s32 %v784, %v2972
    %v2974 = vrot.slane %v2943, %v2973
    %v2975 = vlaneseq
    %v2976 = vshrl.u32 %v2975, 7
    %v2977 = vsub.s32 %v784, %v2976
    %v2978 = vrot.slane %v2946, %v2977
    %v2979 = vsel %vm817, %v2954, %v2950
    %v2980 = vsel %vm819, %v2958, %v2979
    %v2981 = vsel %vm821, %v2962, %v2980
    %v2982 = vsel %vm823, %v2966, %v2981
    %v2983 = vsel %vm825, %v2970, %v2982
    %v2984 = vsel %vm827, %v2974, %v2983
    %v2985 = vsel %vm829, %v2978, %v2984
    %v2987 = vsel %vm832, %v2985, -inf
    %2988 = vmax.xlane.f32.xlu0 %v2987
    %v2989 = vpop.xlane.xlu0 %2988
    %v2991 = vlaneseq
    %v2992 = vshrl.u32 %v2991, 7
    %v2993 = vsub.s32 0, %v2992
    %v2994 = vrot.slane %v2989, %v2993
    %v2995 = vlaneseq
    %v2996 = vshrl.u32 %v2995, 7
    %v2997 = vsub.s32 1, %v2996
    %v2998 = vrot.slane %v2989, %v2997
    %v2999 = vlaneseq
    %v3000 = vshrl.u32 %v2999, 7
    %v3001 = vsub.s32 2, %v3000
    %v3002 = vrot.slane %v2989, %v3001
    %v3003 = vlaneseq
    %v3004 = vshrl.u32 %v3003, 7
    %v3005 = vsub.s32 3, %v3004
    %v3006 = vrot.slane %v2989, %v3005
    %v3007 = vlaneseq
    %v3008 = vshrl.u32 %v3007, 7
    %v3009 = vsub.s32 4, %v3008
    %v3010 = vrot.slane %v2989, %v3009
    %v3011 = vlaneseq
    %v3012 = vshrl.u32 %v3011, 7
    %v3013 = vsub.s32 5, %v3012
    %v3014 = vrot.slane %v2989, %v3013
    %v3015 = vlaneseq
    %v3016 = vshrl.u32 %v3015, 7
    %v3017 = vsub.s32 6, %v3016
    %v3018 = vrot.slane %v2989, %v3017
    %v3019 = vlaneseq
    %v3020 = vshrl.u32 %v3019, 7
    %v3021 = vsub.s32 7, %v3020
    %v3022 = vrot.slane %v2989, %v3021
    %v3031 = vsub.f32 %v2907, %v2994
    %v3032 = vsub.f32 %v2908, %v2998
    %v3033 = vsub.f32 %v2909, %v3002
    %v3034 = vsub.f32 %v2910, %v3006
    %v3035 = vsub.f32 %v2911, %v3010
    %v3036 = vsub.f32 %v2912, %v3014
    %v3037 = vsub.f32 %v2913, %v3018
    %v3038 = vsub.f32 %v2914, %v3022
    %v3039 = vmul.f32 %v3031, 1.442695
    %v3040 = vpow.pop %v3039
    %v3041 = vmul.f32 %v3032, 1.442695
    %v3042 = vpow.pop %v3041
    %v3043 = vmul.f32 %v3033, 1.442695
    %v3044 = vpow.pop %v3043
    %v3045 = vmul.f32 %v3034, 1.442695
    %v3046 = vpow.pop %v3045
    %v3047 = vmul.f32 %v3035, 1.442695
    %v3048 = vpow.pop %v3047
    %v3049 = vmul.f32 %v3036, 1.442695
    %v3050 = vpow.pop %v3049
    %v3051 = vmul.f32 %v3037, 1.442695
    %v3052 = vpow.pop %v3051
    %v3053 = vmul.f32 %v3038, 1.442695
    %v3054 = vpow.pop %v3053
    %3063 = vset.pattern.permute.xlu0 0
    %3064 = vperm.xlu0 %3063, %v3040
    %v3065 = vpop.permute.xlu0 %3064
    %3066 = vset.pattern.permute.xlu0 0
    %3067 = vperm.xlu0 %3066, %v3042
    %v3068 = vpop.permute.xlu0 %3067
    %3069 = vset.pattern.permute.xlu0 0
    %3070 = vperm.xlu0 %3069, %v3044
    %v3071 = vpop.permute.xlu0 %3070
    %3072 = vset.pattern.permute.xlu0 0
    %3073 = vperm.xlu0 %3072, %v3046
    %v3074 = vpop.permute.xlu0 %3073
    %3075 = vset.pattern.permute.xlu0 0
    %3076 = vperm.xlu0 %3075, %v3048
    %v3077 = vpop.permute.xlu0 %3076
    %3078 = vset.pattern.permute.xlu0 0
    %3079 = vperm.xlu0 %3078, %v3050
    %v3080 = vpop.permute.xlu0 %3079
    %3081 = vset.pattern.permute.xlu0 0
    %3082 = vperm.xlu0 %3081, %v3052
    %v3083 = vpop.permute.xlu0 %3082
    %3084 = vset.pattern.permute.xlu0 0
    %3085 = vperm.xlu0 %3084, %v3054
    %v3086 = vpop.permute.xlu0 %3085
    %v3087 = vlaneseq
    %v3088 = vshrl.u32 %v3087, 7
    %v3089 = vsub.s32 %v784, %v3088
    %v3090 = vrot.slane %v3065, %v3089
    %v3091 = vlaneseq
    %v3092 = vshrl.u32 %v3091, 7
    %v3093 = vsub.s32 %v784, %v3092
    %v3094 = vrot.slane %v3068, %v3093
    %v3095 = vlaneseq
    %v3096 = vshrl.u32 %v3095, 7
    %v3097 = vsub.s32 %v784, %v3096
    %v3098 = vrot.slane %v3071, %v3097
    %v3099 = vlaneseq
    %v3100 = vshrl.u32 %v3099, 7
    %v3101 = vsub.s32 %v784, %v3100
    %v3102 = vrot.slane %v3074, %v3101
    %v3103 = vlaneseq
    %v3104 = vshrl.u32 %v3103, 7
    %v3105 = vsub.s32 %v784, %v3104
    %v3106 = vrot.slane %v3077, %v3105
    %v3107 = vlaneseq
    %v3108 = vshrl.u32 %v3107, 7
    %v3109 = vsub.s32 %v784, %v3108
    %v3110 = vrot.slane %v3080, %v3109
    %v3111 = vlaneseq
    %v3112 = vshrl.u32 %v3111, 7
    %v3113 = vsub.s32 %v784, %v3112
    %v3114 = vrot.slane %v3083, %v3113
    %v3115 = vlaneseq
    %v3116 = vshrl.u32 %v3115, 7
    %v3117 = vsub.s32 %v784, %v3116
    %v3118 = vrot.slane %v3086, %v3117
    %v3119 = vsel %vm817, %v3094, %v3090
    %v3120 = vsel %vm819, %v3098, %v3119
    %v3121 = vsel %vm821, %v3102, %v3120
    %v3122 = vsel %vm823, %v3106, %v3121
    %v3123 = vsel %vm825, %v3110, %v3122
    %v3124 = vsel %vm827, %v3114, %v3123
    %v3125 = vsel %vm829, %v3118, %v3124
    %v3127 = vsel %vm832, %v3125, 0.0
    %3128 = vadd.xlane.f32.xlu0 %v3127
    %v3129 = vpop.xlane.xlu0 %3128
    %v3131 = vlaneseq
    %v3132 = vshrl.u32 %v3131, 7
    %v3133 = vsub.s32 0, %v3132
    %v3134 = vrot.slane %v3129, %v3133
    %v3135 = vlaneseq
    %v3136 = vshrl.u32 %v3135, 7
    %v3137 = vsub.s32 1, %v3136
    %v3138 = vrot.slane %v3129, %v3137
    %v3139 = vlaneseq
    %v3140 = vshrl.u32 %v3139, 7
    %v3141 = vsub.s32 2, %v3140
    %v3142 = vrot.slane %v3129, %v3141
    %v3143 = vlaneseq
    %v3144 = vshrl.u32 %v3143, 7
    %v3145 = vsub.s32 3, %v3144
    %v3146 = vrot.slane %v3129, %v3145
    %v3147 = vlaneseq
    %v3148 = vshrl.u32 %v3147, 7
    %v3149 = vsub.s32 4, %v3148
    %v3150 = vrot.slane %v3129, %v3149
    %v3151 = vlaneseq
    %v3152 = vshrl.u32 %v3151, 7
    %v3153 = vsub.s32 5, %v3152
    %v3154 = vrot.slane %v3129, %v3153
    %v3155 = vlaneseq
    %v3156 = vshrl.u32 %v3155, 7
    %v3157 = vsub.s32 6, %v3156
    %v3158 = vrot.slane %v3129, %v3157
    %v3159 = vlaneseq
    %v3160 = vshrl.u32 %v3159, 7
    %v3161 = vsub.s32 7, %v3160
    %v3162 = vrot.slane %v3129, %v3161
    %v3171 = vrcp.pop %v3134
    %v3172 = vmul.f32 %v3040, %v3171
    %v3173 = vrcp.pop %v3138
    %v3174 = vmul.f32 %v3042, %v3173
    %v3175 = vrcp.pop %v3142
    %v3176 = vmul.f32 %v3044, %v3175
    %v3177 = vrcp.pop %v3146
    %v3178 = vmul.f32 %v3046, %v3177
    %v3179 = vrcp.pop %v3150
    %v3180 = vmul.f32 %v3048, %v3179
    %v3181 = vrcp.pop %v3154
    %v3182 = vmul.f32 %v3050, %v3181
    %v3183 = vrcp.pop %v3158
    %v3184 = vmul.f32 %v3052, %v3183
    %v3185 = vrcp.pop %v3162
    %v3186 = vmul.f32 %v3054, %v3185
    %3188 = vset.pattern.permute.xlu0 0
    %3189 = vperm.xlu0 %3188, %v3172
    %v3190 = vpop.permute.xlu0 %3189
    %3193 = vset.pattern.permute.xlu0 0
    %3194 = vperm.xlu0 %3193, %v3174
    %v3195 = vpop.permute.xlu0 %3194
    %3198 = vset.pattern.permute.xlu0 0
    %3199 = vperm.xlu0 %3198, %v3176
    %v3200 = vpop.permute.xlu0 %3199
    %3203 = vset.pattern.permute.xlu0 0
    %3204 = vperm.xlu0 %3203, %v3178
    %v3205 = vpop.permute.xlu0 %3204
    %3208 = vset.pattern.permute.xlu0 0
    %3209 = vperm.xlu0 %3208, %v3180
    %v3210 = vpop.permute.xlu0 %3209
    %3213 = vset.pattern.permute.xlu0 0
    %3214 = vperm.xlu0 %3213, %v3182
    %v3215 = vpop.permute.xlu0 %3214
    %3218 = vset.pattern.permute.xlu0 0
    %3219 = vperm.xlu0 %3218, %v3184
    %v3220 = vpop.permute.xlu0 %3219
    %3223 = vset.pattern.permute.xlu0 0
    %3224 = vperm.xlu0 %3223, %v3186
    %v3225 = vpop.permute.xlu0 %3224
    %v3227 = vmul.f32 %v3190, %v154
    %v3228 = vmul.f32 %v3195, %v155
    %v3229 = vmul.f32 %v3200, %v156
    %v3230 = vmul.f32 %v3205, %v157
    %v3231 = vmul.f32 %v3210, %v158
    %v3232 = vmul.f32 %v3215, %v159
    %v3233 = vmul.f32 %v3220, %v160
    %v3234 = vmul.f32 %v3225, %v161
    %v3235 = vsel %vm653, %v3227, 0.0
    %v3236 = vrot.slane %v3235, 4
    %v3237 = vadd.f32 %v3235, %v3236
    %v3238 = vrot.slane %v3237, 2
    %v3239 = vadd.f32 %v3237, %v3238
    %v3240 = vrot.slane %v3239, 1
    %v3241 = vadd.f32 %v3239, %v3240
    %v3242 = vsel %vm653, %v3228, 0.0
    %v3243 = vrot.slane %v3242, 4
    %v3244 = vadd.f32 %v3242, %v3243
    %v3245 = vrot.slane %v3244, 2
    %v3246 = vadd.f32 %v3244, %v3245
    %v3247 = vrot.slane %v3246, 1
    %v3248 = vadd.f32 %v3246, %v3247
    %v3249 = vsel %vm653, %v3229, 0.0
    %v3250 = vrot.slane %v3249, 4
    %v3251 = vadd.f32 %v3249, %v3250
    %v3252 = vrot.slane %v3251, 2
    %v3253 = vadd.f32 %v3251, %v3252
    %v3254 = vrot.slane %v3253, 1
    %v3255 = vadd.f32 %v3253, %v3254
    %v3256 = vsel %vm653, %v3230, 0.0
    %v3257 = vrot.slane %v3256, 4
    %v3258 = vadd.f32 %v3256, %v3257
    %v3259 = vrot.slane %v3258, 2
    %v3260 = vadd.f32 %v3258, %v3259
    %v3261 = vrot.slane %v3260, 1
    %v3262 = vadd.f32 %v3260, %v3261
    %v3263 = vsel %vm653, %v3231, 0.0
    %v3264 = vrot.slane %v3263, 4
    %v3265 = vadd.f32 %v3263, %v3264
    %v3266 = vrot.slane %v3265, 2
    %v3267 = vadd.f32 %v3265, %v3266
    %v3268 = vrot.slane %v3267, 1
    %v3269 = vadd.f32 %v3267, %v3268
    %v3270 = vsel %vm653, %v3232, 0.0
    %v3271 = vrot.slane %v3270, 4
    %v3272 = vadd.f32 %v3270, %v3271
    %v3273 = vrot.slane %v3272, 2
    %v3274 = vadd.f32 %v3272, %v3273
    %v3275 = vrot.slane %v3274, 1
    %v3276 = vadd.f32 %v3274, %v3275
    %v3277 = vsel %vm653, %v3233, 0.0
    %v3278 = vrot.slane %v3277, 4
    %v3279 = vadd.f32 %v3277, %v3278
    %v3280 = vrot.slane %v3279, 2
    %v3281 = vadd.f32 %v3279, %v3280
    %v3282 = vrot.slane %v3281, 1
    %v3283 = vadd.f32 %v3281, %v3282
    %v3284 = vsel %vm653, %v3234, 0.0
    %v3285 = vrot.slane %v3284, 4
    %v3286 = vadd.f32 %v3284, %v3285
    %v3287 = vrot.slane %v3286, 2
    %v3288 = vadd.f32 %v3286, %v3287
    %v3289 = vrot.slane %v3288, 1
    %v3290 = vadd.f32 %v3288, %v3289
    %3291 = vmatprep.subr.mxu0 0.0
    %3292 = vmatpush1.msra.mxu0 %v259
    %3293 = vmatprep.subr.mxu0 0.0
    %3294 = vmatpush1.msra.mxu0 %v260
    %3295 = vmatprep.subr.mxu0 0.0
    %3296 = vmatpush1.msra.mxu0 %v261
    %3297 = vmatprep.subr.mxu0 0.0
    %3298 = vmatpush1.msra.mxu0 %v262
    %3299 = vmatprep.subr.mxu0 0.0
    %3300 = vmatpush1.msra.mxu0 %v263
    %3301 = vmatprep.subr.mxu0 0.0
    %3302 = vmatpush1.msra.mxu0 %v264
    %3303 = vmatprep.subr.mxu0 0.0
    %3304 = vmatpush1.msra.mxu0 %v265
    %3305 = vmatprep.subr.mxu0 0.0
    %3306 = vmatpush1.msra.mxu0 %v266
    %3307 = vmatprep.subr.mxu0 0.0
    %3308 = vmatpush1.msra.mxu0 %v267
    %3309 = vmatprep.subr.mxu0 0.0
    %3310 = vmatpush1.msra.mxu0 %v268
    %3311 = vmatprep.subr.mxu0 0.0
    %3312 = vmatpush1.msra.mxu0 %v269
    %3313 = vmatprep.subr.mxu0 0.0
    %3314 = vmatpush1.msra.mxu0 %v270
    %3315 = vmatprep.subr.mxu0 0.0
    %3316 = vmatpush1.msra.mxu0 %v271
    %3317 = vmatprep.subr.mxu0 0.0
    %3318 = vmatpush1.msra.mxu0 %v272
    %3319 = vmatprep.subr.mxu0 0.0
    %3320 = vmatpush1.msra.mxu0 %v273
    %3321 = vmatprep.subr.mxu0 0.0
    %3322 = vmatpush1.msra.mxu0 %v274
    %3323 = vmatprep.subr.mxu0 0.0
    %3324 = vmatpush1.msra.mxu0 0.0
    %3325 = vmatprep.subr.mxu0 0.0
    %3326 = vmatpush1.msra.mxu0 0.0
    %3327 = vmatprep.subr.mxu0 0.0
    %3328 = vmatpush1.msra.mxu0 0.0
    %3329 = vmatprep.subr.mxu0 0.0
    %3330 = vmatpush1.msra.mxu0 0.0
    %3331 = vmatprep.subr.mxu0 0.0
    %3332 = vmatpush1.msra.mxu0 0.0
    %3333 = vmatprep.subr.mxu0 0.0
    %3334 = vmatpush1.msra.mxu0 0.0
    %3335 = vmatprep.subr.mxu0 0.0
    %3336 = vmatpush1.msra.mxu0 0.0
    %3337 = vmatprep.subr.mxu0 0.0
    %3338 = vmatpush1.msra.mxu0 0.0
    %3339 = vmatprep.subr.mxu0 0.0
    %3340 = vmatpush1.msra.mxu0 0.0
    %3341 = vmatprep.subr.mxu0 0.0
    %3342 = vmatpush1.msra.mxu0 0.0
    %3343 = vmatprep.subr.mxu0 0.0
    %3344 = vmatpush1.msra.mxu0 0.0
    %3345 = vmatprep.subr.mxu0 0.0
    %3346 = vmatpush1.msra.mxu0 0.0
    %3347 = vmatprep.subr.mxu0 0.0
    %3348 = vmatpush1.msra.mxu0 0.0
    %3349 = vmatprep.subr.mxu0 0.0
    %3350 = vmatpush1.msra.mxu0 0.0
    %3351 = vmatprep.subr.mxu0 0.0
    %3352 = vmatpush1.msra.mxu0 0.0
    %3353 = vmatprep.subr.mxu0 0.0
    %3354 = vmatpush1.msra.mxu0 0.0
    %3355 = vmatprep.mubr.f32.mxu0 0.0
    %3356 = vmatmul.mubr.f32.gmra.mrb[0].mxu0 %v2714
    %v3357 = vpop.f32.mrb[0].mxu0
    %v3358 = vadd.f32 0.0, %v3357
    %v3359 = vpop.f32.mrb[0].mxu0
    %3360 = vdwg.mxu0
    %v3369 = vsel %vm817, %v3248, %v3241
    %v3370 = vsel %vm819, %v3255, %v3369
    %v3371 = vsel %vm821, %v3262, %v3370
    %v3372 = vsel %vm823, %v3269, %v3371
    %v3373 = vsel %vm825, %v3276, %v3372
    %v3374 = vsel %vm827, %v3283, %v3373
    %v3375 = vsel %vm829, %v3290, %v3374
    %3377 = vmatprep.subr.mxu0 0.0
    %3378 = vmatpush1.msra.mxu0 %v243
    %3379 = vmatprep.subr.mxu0 0.0
    %3380 = vmatpush1.msra.mxu0 %v244
    %3381 = vmatprep.subr.mxu0 0.0
    %3382 = vmatpush1.msra.mxu0 %v245
    %3383 = vmatprep.subr.mxu0 0.0
    %3384 = vmatpush1.msra.mxu0 %v246
    %3385 = vmatprep.subr.mxu0 0.0
    %3386 = vmatpush1.msra.mxu0 %v247
    %3387 = vmatprep.subr.mxu0 0.0
    %3388 = vmatpush1.msra.mxu0 %v248
    %3389 = vmatprep.subr.mxu0 0.0
    %3390 = vmatpush1.msra.mxu0 %v249
    %3391 = vmatprep.subr.mxu0 0.0
    %3392 = vmatpush1.msra.mxu0 %v250
    %3393 = vmatprep.subr.mxu0 0.0
    %3394 = vmatpush1.msra.mxu0 %v251
    %3395 = vmatprep.subr.mxu0 0.0
    %3396 = vmatpush1.msra.mxu0 %v252
    %3397 = vmatprep.subr.mxu0 0.0
    %3398 = vmatpush1.msra.mxu0 %v253
    %3399 = vmatprep.subr.mxu0 0.0
    %3400 = vmatpush1.msra.mxu0 %v254
    %3401 = vmatprep.subr.mxu0 0.0
    %3402 = vmatpush1.msra.mxu0 %v255
    %3403 = vmatprep.subr.mxu0 0.0
    %3404 = vmatpush1.msra.mxu0 %v256
    %3405 = vmatprep.subr.mxu0 0.0
    %3406 = vmatpush1.msra.mxu0 %v257
    %3407 = vmatprep.subr.mxu0 0.0
    %3408 = vmatpush1.msra.mxu0 %v258
    %3409 = vmatprep.subr.mxu0 0.0
    %3410 = vmatpush1.msra.mxu0 0.0
    %3411 = vmatprep.subr.mxu0 0.0
    %3412 = vmatpush1.msra.mxu0 0.0
    %3413 = vmatprep.subr.mxu0 0.0
    %3414 = vmatpush1.msra.mxu0 0.0
    %3415 = vmatprep.subr.mxu0 0.0
    %3416 = vmatpush1.msra.mxu0 0.0
    %3417 = vmatprep.subr.mxu0 0.0
    %3418 = vmatpush1.msra.mxu0 0.0
    %3419 = vmatprep.subr.mxu0 0.0
    %3420 = vmatpush1.msra.mxu0 0.0
    %3421 = vmatprep.subr.mxu0 0.0
    %3422 = vmatpush1.msra.mxu0 0.0
    %3423 = vmatprep.subr.mxu0 0.0
    %3424 = vmatpush1.msra.mxu0 0.0
    %3425 = vmatprep.subr.mxu0 0.0
    %3426 = vmatpush1.msra.mxu0 0.0
    %3427 = vmatprep.subr.mxu0 0.0
    %3428 = vmatpush1.msra.mxu0 0.0
    %3429 = vmatprep.subr.mxu0 0.0
    %3430 = vmatpush1.msra.mxu0 0.0
    %3431 = vmatprep.subr.mxu0 0.0
    %3432 = vmatpush1.msra.mxu0 0.0
    %3433 = vmatprep.subr.mxu0 0.0
    %3434 = vmatpush1.msra.mxu0 0.0
    %3435 = vmatprep.subr.mxu0 0.0
    %3436 = vmatpush1.msra.mxu0 0.0
    %3437 = vmatprep.subr.mxu0 0.0
    %3438 = vmatpush1.msra.mxu0 0.0
    %3439 = vmatprep.subr.mxu0 0.0
    %3440 = vmatpush1.msra.mxu0 0.0
    %3441 = vmatprep.mubr.f32.mxu0 0.0
    %3442 = vmatmul.mubr.f32.gmra.mrb[0].mxu0 %v3375
    %v3443 = vpop.f32.mrb[0].mxu0
    %v3444 = vadd.f32 %v3358, %v3443
    %v3445 = vpop.f32.mrb[0].mxu0
    %3446 = vdwg.mxu0
    %v3447 = vtanh.pop %v3444
    %3448 = vmatprep.subr.mxu0 %v276
    %3449 = vmatpush1.msra.mxu0 %v275
    %3450 = vmatprep.subr.mxu0 %v278
    %3451 = vmatpush1.msra.mxu0 %v277
    %3452 = vmatprep.subr.mxu0 %v280
    %3453 = vmatpush1.msra.mxu0 %v279
    %3454 = vmatprep.subr.mxu0 %v282
    %3455 = vmatpush1.msra.mxu0 %v281
    %3456 = vmatprep.subr.mxu0 %v284
    %3457 = vmatpush1.msra.mxu0 %v283
    %3458 = vmatprep.subr.mxu0 %v286
    %3459 = vmatpush1.msra.mxu0 %v285
    %3460 = vmatprep.subr.mxu0 %v288
    %3461 = vmatpush1.msra.mxu0 %v287
    %3462 = vmatprep.subr.mxu0 %v290
    %3463 = vmatpush1.msra.mxu0 %v289
    %3464 = vmatprep.subr.mxu0 %v292
    %3465 = vmatpush1.msra.mxu0 %v291
    %3466 = vmatprep.subr.mxu0 %v294
    %3467 = vmatpush1.msra.mxu0 %v293
    %3468 = vmatprep.subr.mxu0 %v296
    %3469 = vmatpush1.msra.mxu0 %v295
    %3470 = vmatprep.subr.mxu0 %v298
    %3471 = vmatpush1.msra.mxu0 %v297
    %3472 = vmatprep.subr.mxu0 %v300
    %3473 = vmatpush1.msra.mxu0 %v299
    %3474 = vmatprep.subr.mxu0 %v302
    %3475 = vmatpush1.msra.mxu0 %v301
    %3476 = vmatprep.subr.mxu0 %v304
    %3477 = vmatpush1.msra.mxu0 %v303
    %3478 = vmatprep.subr.mxu0 %v306
    %3479 = vmatpush1.msra.mxu0 %v305
    %3480 = vmatprep.subr.mxu0 0.0
    %3481 = vmatpush1.msra.mxu0 0.0
    %3482 = vmatprep.subr.mxu0 0.0
    %3483 = vmatpush1.msra.mxu0 0.0
    %3484 = vmatprep.subr.mxu0 0.0
    %3485 = vmatpush1.msra.mxu0 0.0
    %3486 = vmatprep.subr.mxu0 0.0
    %3487 = vmatpush1.msra.mxu0 0.0
    %3488 = vmatprep.subr.mxu0 0.0
    %3489 = vmatpush1.msra.mxu0 0.0
    %3490 = vmatprep.subr.mxu0 0.0
    %3491 = vmatpush1.msra.mxu0 0.0
    %3492 = vmatprep.subr.mxu0 0.0
    %3493 = vmatpush1.msra.mxu0 0.0
    %3494 = vmatprep.subr.mxu0 0.0
    %3495 = vmatpush1.msra.mxu0 0.0
    %3496 = vmatprep.subr.mxu0 0.0
    %3497 = vmatpush1.msra.mxu0 0.0
    %3498 = vmatprep.subr.mxu0 0.0
    %3499 = vmatpush1.msra.mxu0 0.0
    %3500 = vmatprep.subr.mxu0 0.0
    %3501 = vmatpush1.msra.mxu0 0.0
    %3502 = vmatprep.subr.mxu0 0.0
    %3503 = vmatpush1.msra.mxu0 0.0
    %3504 = vmatprep.subr.mxu0 0.0
    %3505 = vmatpush1.msra.mxu0 0.0
    %3506 = vmatprep.subr.mxu0 0.0
    %3507 = vmatpush1.msra.mxu0 0.0
    %3508 = vmatprep.subr.mxu0 0.0
    %3509 = vmatpush1.msra.mxu0 0.0
    %3510 = vmatprep.subr.mxu0 0.0
    %3511 = vmatpush1.msra.mxu0 0.0
    %3512 = vmatprep.mubr.f32.mxu0 0.0
    %3513 = vmatmul.mubr.f32.gmra.mrb[0].mxu0 %v3447
    %v3514 = vpop.f32.mrb[0].mxu0
    %v3515 = vadd.f32 %v1298, %v3514
    %v3516 = vpop.f32.mrb[0].mxu0
    %v3517 = vadd.f32 %v1302, %v3516
    %3518 = vdwg.mxu0
    %v3521 = vcombine.low %v3515, %v3517
    %v3522 = vcombine.high %v3515, %v3517
    %v3524 = vunpack.c.l.s4 1966171168
    %v3525 = vunpack.c.0.s8 %v3524
    %v3526 = vlaneseq
    %v3527 = vshrl.u32 %v3526, 7
    %v3528 = vsub.s32 %v3525, %v3527
    %v3529 = vrot.slane %v3521, %v3528
    %v3531 = vunpack.c.l.s4 1966171168
    %v3532 = vunpack.c.0.s8 %v3531
    %v3533 = vlaneseq
    %v3534 = vshrl.u32 %v3533, 7
    %v3535 = vsub.s32 %v3532, %v3534
    %v3536 = vrot.slane %v3522, %v3535
    %v3537 = vcombine.high %v3529, %v3529
    %v3538 = vcombine.high %v3536, %v3536
    %v3540 = vunpack.c.l.s4 1966171168
    %v3541 = vunpack.c.0.s8 %v3540
    %v3542 = vlaneseq
    %v3543 = vshrl.u32 %v3542, 7
    %v3544 = vsub.s32 %v3541, %v3543
    %v3545 = vrot.slane %v3529, %v3544
    %v3547 = vunpack.c.l.s4 1966171168
    %v3548 = vunpack.c.0.s8 %v3547
    %v3549 = vlaneseq
    %v3550 = vshrl.u32 %v3549, 7
    %v3551 = vsub.s32 %v3548, %v3550
    %v3552 = vrot.slane %v3536, %v3551
    %v3554 = vunpack.c.l.s4 1966171168
    %v3555 = vunpack.c.0.s8 %v3554
    %v3556 = vlaneseq
    %v3557 = vshrl.u32 %v3556, 7
    %v3558 = vsub.s32 %v3555, %v3557
    %v3559 = vrot.slane %v3537, %v3558
    %v3561 = vunpack.c.l.s4 1966171168
    %v3562 = vunpack.c.0.s8 %v3561
    %v3563 = vlaneseq
    %v3564 = vshrl.u32 %v3563, 7
    %v3565 = vsub.s32 %v3562, %v3564
    %v3566 = vrot.slane %v3538, %v3565
    %v3567 = vcombine.high %v3545, %v3545
    %v3568 = vcombine.high %v3552, %v3552
    %v3569 = vcombine.high %v3559, %v3559
    %v3570 = vcombine.high %v3566, %v3566
    %s3579 = scalar_lea.vmem %s11, 2
    %3580 = vst.msk [vmem:[%s3579] ss:$8 sm:$0x3] %vm1439, %v3545
    %3581 = vst.msk [vmem:[%s3579] ss:$8 sm:$0x0] %vm1439, %v3545
    %s3582 = scalar_lea.vmem %s11, 34
    %3583 = vst.msk [vmem:[%s3582] ss:$8 sm:$0x3] %vm1439, %v3559
    %3584 = vst.msk [vmem:[%s3582] ss:$8 sm:$0x0] %vm1439, %v3559
    %s3585 = scalar_lea.vmem %s11, 66
    %3586 = vst.msk [vmem:[%s3585] ss:$8 sm:$0x3] %vm1439, %v3567
    %3587 = vst.msk [vmem:[%s3585] ss:$8 sm:$0x0] %vm1439, %v3567
    %s3588 = scalar_lea.vmem %s11, 98
    %3589 = vst.msk [vmem:[%s3588] ss:$8 sm:$0x3] %vm1439, %v3569
    %3590 = vst.msk [vmem:[%s3588] ss:$8 sm:$0x0] %vm1439, %v3569
    %s3591 = scalar_lea.vmem %s11, 130
    %3592 = vst.msk [vmem:[%s3591] ss:$8 sm:$0x3] %vm1439, %v3552
    %3593 = vst.msk [vmem:[%s3591] ss:$8 sm:$0x0] %vm1439, %v3552
    %s3594 = scalar_lea.vmem %s11, 162
    %3595 = vst.msk [vmem:[%s3594] ss:$8 sm:$0x3] %vm1439, %v3566
    %3596 = vst.msk [vmem:[%s3594] ss:$8 sm:$0x0] %vm1439, %v3566
    %s3597 = scalar_lea.vmem %s11, 194
    %3598 = vst.msk [vmem:[%s3597] ss:$8 sm:$0x3] %vm1439, %v3568
    %3599 = vst.msk [vmem:[%s3597] ss:$8 sm:$0x0] %vm1439, %v3568
    %s3600 = scalar_lea.vmem %s11, 226
    %3601 = vst.msk [vmem:[%s3600] ss:$8 sm:$0x3] %vm1439, %v3570
    %3602 = vst.msk [vmem:[%s3600] ss:$8 sm:$0x0] %vm1439, %v3570
    %p3603 = scmp.lt.s32.totalorder %s2539, 10
    %s3604 = scalar_select %p3603, 1, 0
    %v3605 = vstv %s3604
    %vm3606 = vcmp.eq.s32.totalorder %v3605, 1
    %v3607 = vsel %vm3606, %v3447, %v2537
    %v3608 = vsel %vm3606, %v2712, %v2538
    %s3609 = sadd.s32 %s310, 3
    %s3610 = scalar_lea.vmem [#allocation4], 96
    %v3611 = vld [vmem:[%s3610] sm:$0xff]
    %v3612 = vld [vmem:[%s3610 + $0x8] sm:$0xff]
    %v3613 = vld [vmem:[%s3610 + $0x10] sm:$0xff]
    %v3614 = vld [vmem:[%s3610 + $0x18] sm:$0xff]
    %3615 = vmatprep.subr.mxu0 %v164
    %3616 = vmatpush1.msra.mxu0 %v163
    %3617 = vmatprep.subr.mxu0 %v168
    %3618 = vmatpush1.msra.mxu0 %v167
    %3619 = vmatprep.subr.mxu0 %v172
    %3620 = vmatpush1.msra.mxu0 %v171
    %3621 = vmatprep.subr.mxu0 %v176
    %3622 = vmatpush1.msra.mxu0 %v175
    %3623 = vmatprep.subr.mxu0 %v180
    %3624 = vmatpush1.msra.mxu0 %v179
    %3625 = vmatprep.subr.mxu0 %v184
    %3626 = vmatpush1.msra.mxu0 %v183
    %3627 = vmatprep.subr.mxu0 %v188
    %3628 = vmatpush1.msra.mxu0 %v187
    %3629 = vmatprep.subr.mxu0 %v192
    %3630 = vmatpush1.msra.mxu0 %v191
    %3631 = vmatprep.subr.mxu0 %v196
    %3632 = vmatpush1.msra.mxu0 %v195
    %3633 = vmatprep.subr.mxu0 %v200
    %3634 = vmatpush1.msra.mxu0 %v199
    %3635 = vmatprep.subr.mxu0 %v204
    %3636 = vmatpush1.msra.mxu0 %v203
    %3637 = vmatprep.subr.mxu0 %v208
    %3638 = vmatpush1.msra.mxu0 %v207
    %3639 = vmatprep.subr.mxu0 %v212
    %3640 = vmatpush1.msra.mxu0 %v211
    %3641 = vmatprep.subr.mxu0 %v216
    %3642 = vmatpush1.msra.mxu0 %v215
    %3643 = vmatprep.subr.mxu0 %v220
    %3644 = vmatpush1.msra.mxu0 %v219
    %3645 = vmatprep.subr.mxu0 %v224
    %3646 = vmatpush1.msra.mxu0 %v223
    %3647 = vmatprep.subr.mxu0 0.0
    %3648 = vmatpush1.msra.mxu0 0.0
    %3649 = vmatprep.subr.mxu0 0.0
    %3650 = vmatpush1.msra.mxu0 0.0
    %3651 = vmatprep.subr.mxu0 0.0
    %3652 = vmatpush1.msra.mxu0 0.0
    %3653 = vmatprep.subr.mxu0 0.0
    %3654 = vmatpush1.msra.mxu0 0.0
    %3655 = vmatprep.subr.mxu0 0.0
    %3656 = vmatpush1.msra.mxu0 0.0
    %3657 = vmatprep.subr.mxu0 0.0
    %3658 = vmatpush1.msra.mxu0 0.0
    %3659 = vmatprep.subr.mxu0 0.0
    %3660 = vmatpush1.msra.mxu0 0.0
    %3661 = vmatprep.subr.mxu0 0.0
    %3662 = vmatpush1.msra.mxu0 0.0
    %3663 = vmatprep.subr.mxu0 0.0
    %3664 = vmatpush1.msra.mxu0 0.0
    %3665 = vmatprep.subr.mxu0 0.0
    %3666 = vmatpush1.msra.mxu0 0.0
    %3667 = vmatprep.subr.mxu0 0.0
    %3668 = vmatpush1.msra.mxu0 0.0
    %3669 = vmatprep.subr.mxu0 0.0
    %3670 = vmatpush1.msra.mxu0 0.0
    %3671 = vmatprep.subr.mxu0 0.0
    %3672 = vmatpush1.msra.mxu0 0.0
    %3673 = vmatprep.subr.mxu0 0.0
    %3674 = vmatpush1.msra.mxu0 0.0
    %3675 = vmatprep.subr.mxu0 0.0
    %3676 = vmatpush1.msra.mxu0 0.0
    %3677 = vmatprep.subr.mxu0 0.0
    %3678 = vmatpush1.msra.mxu0 0.0
    %3679 = vmatprep.mubr.f32.mxu0 0.0
    %3680 = vmatmul.mubr.f32.gmra.mrb[0].mxu0 %v3607
    %v3681 = vpop.f32.mrb[0].mxu0
    %v3682 = vadd.f32 0.0, %v3681
    %v3683 = vpop.f32.mrb[0].mxu0
    %v3684 = vadd.f32 0.0, %v3683
    %3685 = vdwg.mxu0
    %3686 = vmatprep.subr.mxu0 %v166
    %3687 = vmatpush1.msra.mxu0 %v165
    %3688 = vmatprep.subr.mxu0 %v170
    %3689 = vmatpush1.msra.mxu0 %v169
    %3690 = vmatprep.subr.mxu0 %v174
    %3691 = vmatpush1.msra.mxu0 %v173
    %3692 = vmatprep.subr.mxu0 %v178
    %3693 = vmatpush1.msra.mxu0 %v177
    %3694 = vmatprep.subr.mxu0 %v182
    %3695 = vmatpush1.msra.mxu0 %v181
    %3696 = vmatprep.subr.mxu0 %v186
    %3697 = vmatpush1.msra.mxu0 %v185
    %3698 = vmatprep.subr.mxu0 %v190
    %3699 = vmatpush1.msra.mxu0 %v189
    %3700 = vmatprep.subr.mxu0 %v194
    %3701 = vmatpush1.msra.mxu0 %v193
    %3702 = vmatprep.subr.mxu0 %v198
    %3703 = vmatpush1.msra.mxu0 %v197
    %3704 = vmatprep.subr.mxu0 %v202
    %3705 = vmatpush1.msra.mxu0 %v201
    %3706 = vmatprep.subr.mxu0 %v206
    %3707 = vmatpush1.msra.mxu0 %v205
    %3708 = vmatprep.subr.mxu0 %v210
    %3709 = vmatpush1.msra.mxu0 %v209
    %3710 = vmatprep.subr.mxu0 %v214
    %3711 = vmatpush1.msra.mxu0 %v213
    %3712 = vmatprep.subr.mxu0 %v218
    %3713 = vmatpush1.msra.mxu0 %v217
    %3714 = vmatprep.subr.mxu0 %v222
    %3715 = vmatpush1.msra.mxu0 %v221
    %3716 = vmatprep.subr.mxu0 %v226
    %3717 = vmatpush1.msra.mxu0 %v225
    %3718 = vmatprep.subr.mxu0 0.0
    %3719 = vmatpush1.msra.mxu0 0.0
    %3720 = vmatprep.subr.mxu0 0.0
    %3721 = vmatpush1.msra.mxu0 0.0
    %3722 = vmatprep.subr.mxu0 0.0
    %3723 = vmatpush1.msra.mxu0 0.0
    %3724 = vmatprep.subr.mxu0 0.0
    %3725 = vmatpush1.msra.mxu0 0.0
    %3726 = vmatprep.subr.mxu0 0.0
    %3727 = vmatpush1.msra.mxu0 0.0
    %3728 = vmatprep.subr.mxu0 0.0
    %3729 = vmatpush1.msra.mxu0 0.0
    %3730 = vmatprep.subr.mxu0 0.0
    %3731 = vmatpush1.msra.mxu0 0.0
    %3732 = vmatprep.subr.mxu0 0.0
    %3733 = vmatpush1.msra.mxu0 0.0
    %3734 = vmatprep.subr.mxu0 0.0
    %3735 = vmatpush1.msra.mxu0 0.0
    %3736 = vmatprep.subr.mxu0 0.0
    %3737 = vmatpush1.msra.mxu0 0.0
    %3738 = vmatprep.subr.mxu0 0.0
    %3739 = vmatpush1.msra.mxu0 0.0
    %3740 = vmatprep.subr.mxu0 0.0
    %3741 = vmatpush1.msra.mxu0 0.0
    %3742 = vmatprep.subr.mxu0 0.0
    %3743 = vmatpush1.msra.mxu0 0.0
    %3744 = vmatprep.subr.mxu0 0.0
    %3745 = vmatpush1.msra.mxu0 0.0
    %3746 = vmatprep.subr.mxu0 0.0
    %3747 = vmatpush1.msra.mxu0 0.0
    %3748 = vmatprep.subr.mxu0 0.0
    %3749 = vmatpush1.msra.mxu0 0.0
    %3750 = vmatprep.mubr.f32.mxu0 0.0
    %3751 = vmatmul.mubr.f32.gmra.mrb[0].mxu0 %v3607
    %v3752 = vpop.f32.mrb[0].mxu0
    %v3753 = vadd.f32 0.0, %v3752
    %v3754 = vpop.f32.mrb[0].mxu0
    %v3755 = vadd.f32 0.0, %v3754
    %3756 = vdwg.mxu0
    %v3757 = vadd.f32 %v3611, %v3682
    %v3758 = vadd.f32 %v3612, %v3684
    %v3759 = vadd.f32 %v3613, %v3753
    %v3760 = vadd.f32 %v3614, %v3755
    %v3761 = vxor.u32 %v3757, 2147483648
    %v3762 = vmul.f32 %v3761, 1.442695
    %v3763 = vpow.pop %v3762
    %v3764 = vadd.f32 %v3763, 1.0
    %v3765 = vrcp.pop %v3764
    %v3766 = vmul.f32 1.0, %v3765
    %v3767 = vxor.u32 %v3758, 2147483648
    %v3768 = vmul.f32 %v3767, 1.442695
    %v3769 = vpow.pop %v3768
    %v3770 = vadd.f32 %v3769, 1.0
    %v3771 = vrcp.pop %v3770
    %v3772 = vmul.f32 1.0, %v3771
    %v3773 = vtanh.pop %v3759
    %v3774 = vxor.u32 %v3760, 2147483648
    %v3775 = vmul.f32 %v3774, 1.442695
    %v3776 = vpow.pop %v3775
    %v3777 = vadd.f32 %v3776, 1.0
    %v3778 = vrcp.pop %v3777
    %v3779 = vmul.f32 1.0, %v3778
    %v3780 = vmul.f32 %v3772, %v3608
    %v3781 = vmul.f32 %v3766, %v3773
    %v3782 = vadd.f32 %v3780, %v3781
    %v3783 = vtanh.pop %v3782
    %v3784 = vmul.f32 %v3779, %v3783
    %3785 = vmatprep.subr.mxu0 0.0
    %3786 = vmatpush1.msra.mxu0 %v227
    %3787 = vmatprep.subr.mxu0 0.0
    %3788 = vmatpush1.msra.mxu0 %v228
    %3789 = vmatprep.subr.mxu0 0.0
    %3790 = vmatpush1.msra.mxu0 %v229
    %3791 = vmatprep.subr.mxu0 0.0
    %3792 = vmatpush1.msra.mxu0 %v230
    %3793 = vmatprep.subr.mxu0 0.0
    %3794 = vmatpush1.msra.mxu0 %v231
    %3795 = vmatprep.subr.mxu0 0.0
    %3796 = vmatpush1.msra.mxu0 %v232
    %3797 = vmatprep.subr.mxu0 0.0
    %3798 = vmatpush1.msra.mxu0 %v233
    %3799 = vmatprep.subr.mxu0 0.0
    %3800 = vmatpush1.msra.mxu0 %v234
    %3801 = vmatprep.subr.mxu0 0.0
    %3802 = vmatpush1.msra.mxu0 %v235
    %3803 = vmatprep.subr.mxu0 0.0
    %3804 = vmatpush1.msra.mxu0 %v236
    %3805 = vmatprep.subr.mxu0 0.0
    %3806 = vmatpush1.msra.mxu0 %v237
    %3807 = vmatprep.subr.mxu0 0.0
    %3808 = vmatpush1.msra.mxu0 %v238
    %3809 = vmatprep.subr.mxu0 0.0
    %3810 = vmatpush1.msra.mxu0 %v239
    %3811 = vmatprep.subr.mxu0 0.0
    %3812 = vmatpush1.msra.mxu0 %v240
    %3813 = vmatprep.subr.mxu0 0.0
    %3814 = vmatpush1.msra.mxu0 %v241
    %3815 = vmatprep.subr.mxu0 0.0
    %3816 = vmatpush1.msra.mxu0 %v242
    %3817 = vmatprep.subr.mxu0 0.0
    %3818 = vmatpush1.msra.mxu0 0.0
    %3819 = vmatprep.subr.mxu0 0.0
    %3820 = vmatpush1.msra.mxu0 0.0
    %3821 = vmatprep.subr.mxu0 0.0
    %3822 = vmatpush1.msra.mxu0 0.0
    %3823 = vmatprep.subr.mxu0 0.0
    %3824 = vmatpush1.msra.mxu0 0.0
    %3825 = vmatprep.subr.mxu0 0.0
    %3826 = vmatpush1.msra.mxu0 0.0
    %3827 = vmatprep.subr.mxu0 0.0
    %3828 = vmatpush1.msra.mxu0 0.0
    %3829 = vmatprep.subr.mxu0 0.0
    %3830 = vmatpush1.msra.mxu0 0.0
    %3831 = vmatprep.subr.mxu0 0.0
    %3832 = vmatpush1.msra.mxu0 0.0
    %3833 = vmatprep.subr.mxu0 0.0
    %3834 = vmatpush1.msra.mxu0 0.0
    %3835 = vmatprep.subr.mxu0 0.0
    %3836 = vmatpush1.msra.mxu0 0.0
    %3837 = vmatprep.subr.mxu0 0.0
    %3838 = vmatpush1.msra.mxu0 0.0
    %3839 = vmatprep.subr.mxu0 0.0
    %3840 = vmatpush1.msra.mxu0 0.0
    %3841 = vmatprep.subr.mxu0 0.0
    %3842 = vmatpush1.msra.mxu0 0.0
    %3843 = vmatprep.subr.mxu0 0.0
    %3844 = vmatpush1.msra.mxu0 0.0
    %3845 = vmatprep.subr.mxu0 0.0
    %3846 = vmatpush1.msra.mxu0 0.0
    %3847 = vmatprep.subr.mxu0 0.0
    %3848 = vmatpush1.msra.mxu0 0.0
    %3849 = vmatprep.mubr.f32.mxu0 0.0
    %3850 = vmatmul.mubr.f32.gmra.mrb[0].mxu0 %v3784
    %v3851 = vpop.f32.mrb[0].mxu0
    %v3852 = vadd.f32 0.0, %v3851
    %v3853 = vpop.f32.mrb[0].mxu0
    %3854 = vdwg.mxu0
    %v3856 = vcombine.high %v3852, %v3852
    %v3858 = vunpack.c.l.s4 1966171168
    %v3859 = vunpack.c.0.s8 %v3858
    %v3860 = vlaneseq
    %v3861 = vshrl.u32 %v3860, 7
    %v3862 = vsub.s32 %v3859, %v3861
    %v3863 = vrot.slane %v3852, %v3862
    %v3865 = vunpack.c.l.s4 1966171168
    %v3866 = vunpack.c.0.s8 %v3865
    %v3867 = vlaneseq
    %v3868 = vshrl.u32 %v3867, 7
    %v3869 = vsub.s32 %v3866, %v3868
    %v3870 = vrot.slane %v3856, %v3869
    %v3871 = vcombine.high %v3863, %v3863
    %v3872 = vcombine.high %v3870, %v3870
    %v3874 = vunpack.c.l.s4 1966171168
    %v3875 = vunpack.c.0.s8 %v3874
    %v3876 = vlaneseq
    %v3877 = vshrl.u32 %v3876, 7
    %v3878 = vsub.s32 %v3875, %v3877
    %v3879 = vrot.slane %v3863, %v3878
    %v3881 = vunpack.c.l.s4 1966171168
    %v3882 = vunpack.c.0.s8 %v3881
    %v3883 = vlaneseq
    %v3884 = vshrl.u32 %v3883, 7
    %v3885 = vsub.s32 %v3882, %v3884
    %v3886 = vrot.slane %v3870, %v3885
    %v3888 = vunpack.c.l.s4 1966171168
    %v3889 = vunpack.c.0.s8 %v3888
    %v3890 = vlaneseq
    %v3891 = vshrl.u32 %v3890, 7
    %v3892 = vsub.s32 %v3889, %v3891
    %v3893 = vrot.slane %v3871, %v3892
    %v3895 = vunpack.c.l.s4 1966171168
    %v3896 = vunpack.c.0.s8 %v3895
    %v3897 = vlaneseq
    %v3898 = vshrl.u32 %v3897, 7
    %v3899 = vsub.s32 %v3896, %v3898
    %v3900 = vrot.slane %v3872, %v3899
    %v3901 = vcombine.high %v3879, %v3879
    %v3902 = vcombine.high %v3886, %v3886
    %v3903 = vcombine.high %v3893, %v3893
    %v3904 = vcombine.high %v3900, %v3900
    %v3905 = vlaneseq
    %v3906 = vshrl.u32 %v3905, 7
    %v3907 = vsub.s32 0, %v3906
    %v3908 = vrot.slane %v3879, %v3907
    %v3909 = vlaneseq
    %v3910 = vshrl.u32 %v3909, 7
    %v3911 = vsub.s32 0, %v3910
    %v3912 = vrot.slane %v3893, %v3911
    %v3913 = vlaneseq
    %v3914 = vshrl.u32 %v3913, 7
    %v3915 = vsub.s32 0, %v3914
    %v3916 = vrot.slane %v3901, %v3915
    %v3917 = vlaneseq
    %v3918 = vshrl.u32 %v3917, 7
    %v3919 = vsub.s32 0, %v3918
    %v3920 = vrot.slane %v3903, %v3919
    %v3921 = vlaneseq
    %v3922 = vshrl.u32 %v3921, 7
    %v3923 = vsub.s32 0, %v3922
    %v3924 = vrot.slane %v3886, %v3923
    %v3925 = vlaneseq
    %v3926 = vshrl.u32 %v3925, 7
    %v3927 = vsub.s32 0, %v3926
    %v3928 = vrot.slane %v3900, %v3927
    %v3929 = vlaneseq
    %v3930 = vshrl.u32 %v3929, 7
    %v3931 = vsub.s32 0, %v3930
    %v3932 = vrot.slane %v3902, %v3931
    %v3933 = vlaneseq
    %v3934 = vshrl.u32 %v3933, 7
    %v3935 = vsub.s32 0, %v3934
    %v3936 = vrot.slane %v3904, %v3935
    %v3945 = vmul.f32 %v154, %v3908
    %v3946 = vmul.f32 %v155, %v3912
    %v3947 = vmul.f32 %v156, %v3916
    %v3948 = vmul.f32 %v157, %v3920
    %v3949 = vmul.f32 %v158, %v3924
    %v3950 = vmul.f32 %v159, %v3928
    %v3951 = vmul.f32 %v160, %v3932
    %v3952 = vmul.f32 %v161, %v3936
    %v3953 = vsel %vm653, %v3945, 0.0
    %3954 = vadd.xlane.f32.xlu0 %v3953
    %v3955 = vpop.xlane.xlu0 %3954
    %v3956 = vsel %vm653, %v3946, 0.0
    %3957 = vadd.xlane.f32.xlu0 %v3956
    %v3958 = vpop.xlane.xlu0 %3957
    %v3959 = vsel %vm653, %v3947, 0.0
    %3960 = vadd.xlane.f32.xlu0 %v3959
    %v3961 = vpop.xlane.xlu0 %3960
    %v3962 = vsel %vm653, %v3948, 0.0
    %3963 = vadd.xlane.f32.xlu0 %v3962
    %v3964 = vpop.xlane.xlu0 %3963
    %v3965 = vsel %vm653, %v3949, 0.0
    %3966 = vadd.xlane.f32.xlu0 %v3965
    %v3967 = vpop.xlane.xlu0 %3966
    %v3968 = vsel %vm653, %v3950, 0.0
    %3969 = vadd.xlane.f32.xlu0 %v3968
    %v3970 = vpop.xlane.xlu0 %3969
    %v3971 = vsel %vm653, %v3951, 0.0
    %3972 = vadd.xlane.f32.xlu0 %v3971
    %v3973 = vpop.xlane.xlu0 %3972
    %v3974 = vsel %vm653, %v3952, 0.0
    %3975 = vadd.xlane.f32.xlu0 %v3974
    %v3976 = vpop.xlane.xlu0 %3975
    %v3977 = vadd.f32 %v3955, %v685
    %v3978 = vadd.f32 %v3958, %v692
    %v3979 = vadd.f32 %v3961, %v699
    %v3980 = vadd.f32 %v3964, %v706
    %v3981 = vadd.f32 %v3967, %v713
    %v3982 = vadd.f32 %v3970, %v720
    %v3983 = vadd.f32 %v3973, %v727
    %v3984 = vadd.f32 %v3976, %v734
    %3993 = vset.pattern.permute.xlu0 0
    %3994 = vperm.xlu0 %3993, %v3977
    %v3995 = vpop.permute.xlu0 %3994
    %3996 = vset.pattern.permute.xlu0 0
    %3997 = vperm.xlu0 %3996, %v3978
    %v3998 = vpop.permute.xlu0 %3997
    %3999 = vset.pattern.permute.xlu0 0
    %4000 = vperm.xlu0 %3999, %v3979
    %v4001 = vpop.permute.xlu0 %4000
    %4002 = vset.pattern.permute.xlu0 0
    %4003 = vperm.xlu0 %4002, %v3980
    %v4004 = vpop.permute.xlu0 %4003
    %4005 = vset.pattern.permute.xlu0 0
    %4006 = vperm.xlu0 %4005, %v3981
    %v4007 = vpop.permute.xlu0 %4006
    %4008 = vset.pattern.permute.xlu0 0
    %4009 = vperm.xlu0 %4008, %v3982
    %v4010 = vpop.permute.xlu0 %4009
    %4011 = vset.pattern.permute.xlu0 0
    %4012 = vperm.xlu0 %4011, %v3983
    %v4013 = vpop.permute.xlu0 %4012
    %4014 = vset.pattern.permute.xlu0 0
    %4015 = vperm.xlu0 %4014, %v3984
    %v4016 = vpop.permute.xlu0 %4015
    %v4017 = vlaneseq
    %v4018 = vshrl.u32 %v4017, 7
    %v4019 = vsub.s32 %v784, %v4018
    %v4020 = vrot.slane %v3995, %v4019
    %v4021 = vlaneseq
    %v4022 = vshrl.u32 %v4021, 7
    %v4023 = vsub.s32 %v784, %v4022
    %v4024 = vrot.slane %v3998, %v4023
    %v4025 = vlaneseq
    %v4026 = vshrl.u32 %v4025, 7
    %v4027 = vsub.s32 %v784, %v4026
    %v4028 = vrot.slane %v4001, %v4027
    %v4029 = vlaneseq
    %v4030 = vshrl.u32 %v4029, 7
    %v4031 = vsub.s32 %v784, %v4030
    %v4032 = vrot.slane %v4004, %v4031
    %v4033 = vlaneseq
    %v4034 = vshrl.u32 %v4033, 7
    %v4035 = vsub.s32 %v784, %v4034
    %v4036 = vrot.slane %v4007, %v4035
    %v4037 = vlaneseq
    %v4038 = vshrl.u32 %v4037, 7
    %v4039 = vsub.s32 %v784, %v4038
    %v4040 = vrot.slane %v4010, %v4039
    %v4041 = vlaneseq
    %v4042 = vshrl.u32 %v4041, 7
    %v4043 = vsub.s32 %v784, %v4042
    %v4044 = vrot.slane %v4013, %v4043
    %v4045 = vlaneseq
    %v4046 = vshrl.u32 %v4045, 7
    %v4047 = vsub.s32 %v784, %v4046
    %v4048 = vrot.slane %v4016, %v4047
    %v4049 = vsel %vm817, %v4024, %v4020
    %v4050 = vsel %vm819, %v4028, %v4049
    %v4051 = vsel %vm821, %v4032, %v4050
    %v4052 = vsel %vm823, %v4036, %v4051
    %v4053 = vsel %vm825, %v4040, %v4052
    %v4054 = vsel %vm827, %v4044, %v4053
    %v4055 = vsel %vm829, %v4048, %v4054
    %v4057 = vsel %vm832, %v4055, -inf
    %4058 = vmax.xlane.f32.xlu0 %v4057
    %v4059 = vpop.xlane.xlu0 %4058
    %v4061 = vlaneseq
    %v4062 = vshrl.u32 %v4061, 7
    %v4063 = vsub.s32 0, %v4062
    %v4064 = vrot.slane %v4059, %v4063
    %v4065 = vlaneseq
    %v4066 = vshrl.u32 %v4065, 7
    %v4067 = vsub.s32 1, %v4066
    %v4068 = vrot.slane %v4059, %v4067
    %v4069 = vlaneseq
    %v4070 = vshrl.u32 %v4069, 7
    %v4071 = vsub.s32 2, %v4070
    %v4072 = vrot.slane %v4059, %v4071
    %v4073 = vlaneseq
    %v4074 = vshrl.u32 %v4073, 7
    %v4075 = vsub.s32 3, %v4074
    %v4076 = vrot.slane %v4059, %v4075
    %v4077 = vlaneseq
    %v4078 = vshrl.u32 %v4077, 7
    %v4079 = vsub.s32 4, %v4078
    %v4080 = vrot.slane %v4059, %v4079
    %v4081 = vlaneseq
    %v4082 = vshrl.u32 %v4081, 7
    %v4083 = vsub.s32 5, %v4082
    %v4084 = vrot.slane %v4059, %v4083
    %v4085 = vlaneseq
    %v4086 = vshrl.u32 %v4085, 7
    %v4087 = vsub.s32 6, %v4086
    %v4088 = vrot.slane %v4059, %v4087
    %v4089 = vlaneseq
    %v4090 = vshrl.u32 %v4089, 7
    %v4091 = vsub.s32 7, %v4090
    %v4092 = vrot.slane %v4059, %v4091
    %v4101 = vsub.f32 %v3977, %v4064
    %v4102 = vsub.f32 %v3978, %v4068
    %v4103 = vsub.f32 %v3979, %v4072
    %v4104 = vsub.f32 %v3980, %v4076
    %v4105 = vsub.f32 %v3981, %v4080
    %v4106 = vsub.f32 %v3982, %v4084
    %v4107 = vsub.f32 %v3983, %v4088
    %v4108 = vsub.f32 %v3984, %v4092
    %v4109 = vmul.f32 %v4101, 1.442695
    %v4110 = vpow.pop %v4109
    %v4111 = vmul.f32 %v4102, 1.442695
    %v4112 = vpow.pop %v4111
    %v4113 = vmul.f32 %v4103, 1.442695
    %v4114 = vpow.pop %v4113
    %v4115 = vmul.f32 %v4104, 1.442695
    %v4116 = vpow.pop %v4115
    %v4117 = vmul.f32 %v4105, 1.442695
    %v4118 = vpow.pop %v4117
    %v4119 = vmul.f32 %v4106, 1.442695
    %v4120 = vpow.pop %v4119
    %v4121 = vmul.f32 %v4107, 1.442695
    %v4122 = vpow.pop %v4121
    %v4123 = vmul.f32 %v4108, 1.442695
    %v4124 = vpow.pop %v4123
    %4133 = vset.pattern.permute.xlu0 0
    %4134 = vperm.xlu0 %4133, %v4110
    %v4135 = vpop.permute.xlu0 %4134
    %4136 = vset.pattern.permute.xlu0 0
    %4137 = vperm.xlu0 %4136, %v4112
    %v4138 = vpop.permute.xlu0 %4137
    %4139 = vset.pattern.permute.xlu0 0
    %4140 = vperm.xlu0 %4139, %v4114
    %v4141 = vpop.permute.xlu0 %4140
    %4142 = vset.pattern.permute.xlu0 0
    %4143 = vperm.xlu0 %4142, %v4116
    %v4144 = vpop.permute.xlu0 %4143
    %4145 = vset.pattern.permute.xlu0 0
    %4146 = vperm.xlu0 %4145, %v4118
    %v4147 = vpop.permute.xlu0 %4146
    %4148 = vset.pattern.permute.xlu0 0
    %4149 = vperm.xlu0 %4148, %v4120
    %v4150 = vpop.permute.xlu0 %4149
    %4151 = vset.pattern.permute.xlu0 0
    %4152 = vperm.xlu0 %4151, %v4122
    %v4153 = vpop.permute.xlu0 %4152
    %4154 = vset.pattern.permute.xlu0 0
    %4155 = vperm.xlu0 %4154, %v4124
    %v4156 = vpop.permute.xlu0 %4155
    %v4157 = vlaneseq
    %v4158 = vshrl.u32 %v4157, 7
    %v4159 = vsub.s32 %v784, %v4158
    %v4160 = vrot.slane %v4135, %v4159
    %v4161 = vlaneseq
    %v4162 = vshrl.u32 %v4161, 7
    %v4163 = vsub.s32 %v784, %v4162
    %v4164 = vrot.slane %v4138, %v4163
    %v4165 = vlaneseq
    %v4166 = vshrl.u32 %v4165, 7
    %v4167 = vsub.s32 %v784, %v4166
    %v4168 = vrot.slane %v4141, %v4167
    %v4169 = vlaneseq
    %v4170 = vshrl.u32 %v4169, 7
    %v4171 = vsub.s32 %v784, %v4170
    %v4172 = vrot.slane %v4144, %v4171
    %v4173 = vlaneseq
    %v4174 = vshrl.u32 %v4173, 7
    %v4175 = vsub.s32 %v784, %v4174
    %v4176 = vrot.slane %v4147, %v4175
    %v4177 = vlaneseq
    %v4178 = vshrl.u32 %v4177, 7
    %v4179 = vsub.s32 %v784, %v4178
    %v4180 = vrot.slane %v4150, %v4179
    %v4181 = vlaneseq
    %v4182 = vshrl.u32 %v4181, 7
    %v4183 = vsub.s32 %v784, %v4182
    %v4184 = vrot.slane %v4153, %v4183
    %v4185 = vlaneseq
    %v4186 = vshrl.u32 %v4185, 7
    %v4187 = vsub.s32 %v784, %v4186
    %v4188 = vrot.slane %v4156, %v4187
    %v4189 = vsel %vm817, %v4164, %v4160
    %v4190 = vsel %vm819, %v4168, %v4189
    %v4191 = vsel %vm821, %v4172, %v4190
    %v4192 = vsel %vm823, %v4176, %v4191
    %v4193 = vsel %vm825, %v4180, %v4192
    %v4194 = vsel %vm827, %v4184, %v4193
    %v4195 = vsel %vm829, %v4188, %v4194
    %v4197 = vsel %vm832, %v4195, 0.0
    %4198 = vadd.xlane.f32.xlu0 %v4197
    %v4199 = vpop.xlane.xlu0 %4198
    %v4201 = vlaneseq
    %v4202 = vshrl.u32 %v4201, 7
    %v4203 = vsub.s32 0, %v4202
    %v4204 = vrot.slane %v4199, %v4203
    %v4205 = vlaneseq
    %v4206 = vshrl.u32 %v4205, 7
    %v4207 = vsub.s32 1, %v4206
    %v4208 = vrot.slane %v4199, %v4207
    %v4209 = vlaneseq
    %v4210 = vshrl.u32 %v4209, 7
    %v4211 = vsub.s32 2, %v4210
    %v4212 = vrot.slane %v4199, %v4211
    %v4213 = vlaneseq
    %v4214 = vshrl.u32 %v4213, 7
    %v4215 = vsub.s32 3, %v4214
    %v4216 = vrot.slane %v4199, %v4215
    %v4217 = vlaneseq
    %v4218 = vshrl.u32 %v4217, 7
    %v4219 = vsub.s32 4, %v4218
    %v4220 = vrot.slane %v4199, %v4219
    %v4221 = vlaneseq
    %v4222 = vshrl.u32 %v4221, 7
    %v4223 = vsub.s32 5, %v4222
    %v4224 = vrot.slane %v4199, %v4223
    %v4225 = vlaneseq
    %v4226 = vshrl.u32 %v4225, 7
    %v4227 = vsub.s32 6, %v4226
    %v4228 = vrot.slane %v4199, %v4227
    %v4229 = vlaneseq
    %v4230 = vshrl.u32 %v4229, 7
    %v4231 = vsub.s32 7, %v4230
    %v4232 = vrot.slane %v4199, %v4231
    %v4241 = vrcp.pop %v4204
    %v4242 = vmul.f32 %v4110, %v4241
    %v4243 = vrcp.pop %v4208
    %v4244 = vmul.f32 %v4112, %v4243
    %v4245 = vrcp.pop %v4212
    %v4246 = vmul.f32 %v4114, %v4245
    %v4247 = vrcp.pop %v4216
    %v4248 = vmul.f32 %v4116, %v4247
    %v4249 = vrcp.pop %v4220
    %v4250 = vmul.f32 %v4118, %v4249
    %v4251 = vrcp.pop %v4224
    %v4252 = vmul.f32 %v4120, %v4251
    %v4253 = vrcp.pop %v4228
    %v4254 = vmul.f32 %v4122, %v4253
    %v4255 = vrcp.pop %v4232
    %v4256 = vmul.f32 %v4124, %v4255
    %4258 = vset.pattern.permute.xlu0 0
    %4259 = vperm.xlu0 %4258, %v4242
    %v4260 = vpop.permute.xlu0 %4259
    %4263 = vset.pattern.permute.xlu0 0
    %4264 = vperm.xlu0 %4263, %v4244
    %v4265 = vpop.permute.xlu0 %4264
    %4268 = vset.pattern.permute.xlu0 0
    %4269 = vperm.xlu0 %4268, %v4246
    %v4270 = vpop.permute.xlu0 %4269
    %4273 = vset.pattern.permute.xlu0 0
    %4274 = vperm.xlu0 %4273, %v4248
    %v4275 = vpop.permute.xlu0 %4274
    %4278 = vset.pattern.permute.xlu0 0
    %4279 = vperm.xlu0 %4278, %v4250
    %v4280 = vpop.permute.xlu0 %4279
    %4283 = vset.pattern.permute.xlu0 0
    %4284 = vperm.xlu0 %4283, %v4252
    %v4285 = vpop.permute.xlu0 %4284
    %4288 = vset.pattern.permute.xlu0 0
    %4289 = vperm.xlu0 %4288, %v4254
    %v4290 = vpop.permute.xlu0 %4289
    %4293 = vset.pattern.permute.xlu0 0
    %4294 = vperm.xlu0 %4293, %v4256
    %v4295 = vpop.permute.xlu0 %4294
    %v4297 = vmul.f32 %v4260, %v154
    %v4298 = vmul.f32 %v4265, %v155
    %v4299 = vmul.f32 %v4270, %v156
    %v4300 = vmul.f32 %v4275, %v157
    %v4301 = vmul.f32 %v4280, %v158
    %v4302 = vmul.f32 %v4285, %v159
    %v4303 = vmul.f32 %v4290, %v160
    %v4304 = vmul.f32 %v4295, %v161
    %v4305 = vsel %vm653, %v4297, 0.0
    %v4306 = vrot.slane %v4305, 4
    %v4307 = vadd.f32 %v4305, %v4306
    %v4308 = vrot.slane %v4307, 2
    %v4309 = vadd.f32 %v4307, %v4308
    %v4310 = vrot.slane %v4309, 1
    %v4311 = vadd.f32 %v4309, %v4310
    %v4312 = vsel %vm653, %v4298, 0.0
    %v4313 = vrot.slane %v4312, 4
    %v4314 = vadd.f32 %v4312, %v4313
    %v4315 = vrot.slane %v4314, 2
    %v4316 = vadd.f32 %v4314, %v4315
    %v4317 = vrot.slane %v4316, 1
    %v4318 = vadd.f32 %v4316, %v4317
    %v4319 = vsel %vm653, %v4299, 0.0
    %v4320 = vrot.slane %v4319, 4
    %v4321 = vadd.f32 %v4319, %v4320
    %v4322 = vrot.slane %v4321, 2
    %v4323 = vadd.f32 %v4321, %v4322
    %v4324 = vrot.slane %v4323, 1
    %v4325 = vadd.f32 %v4323, %v4324
    %v4326 = vsel %vm653, %v4300, 0.0
    %v4327 = vrot.slane %v4326, 4
    %v4328 = vadd.f32 %v4326, %v4327
    %v4329 = vrot.slane %v4328, 2
    %v4330 = vadd.f32 %v4328, %v4329
    %v4331 = vrot.slane %v4330, 1
    %v4332 = vadd.f32 %v4330, %v4331
    %v4333 = vsel %vm653, %v4301, 0.0
    %v4334 = vrot.slane %v4333, 4
    %v4335 = vadd.f32 %v4333, %v4334
    %v4336 = vrot.slane %v4335, 2
    %v4337 = vadd.f32 %v4335, %v4336
    %v4338 = vrot.slane %v4337, 1
    %v4339 = vadd.f32 %v4337, %v4338
    %v4340 = vsel %vm653, %v4302, 0.0
    %v4341 = vrot.slane %v4340, 4
    %v4342 = vadd.f32 %v4340, %v4341
    %v4343 = vrot.slane %v4342, 2
    %v4344 = vadd.f32 %v4342, %v4343
    %v4345 = vrot.slane %v4344, 1
    %v4346 = vadd.f32 %v4344, %v4345
    %v4347 = vsel %vm653, %v4303, 0.0
    %v4348 = vrot.slane %v4347, 4
    %v4349 = vadd.f32 %v4347, %v4348
    %v4350 = vrot.slane %v4349, 2
    %v4351 = vadd.f32 %v4349, %v4350
    %v4352 = vrot.slane %v4351, 1
    %v4353 = vadd.f32 %v4351, %v4352
    %v4354 = vsel %vm653, %v4304, 0.0
    %v4355 = vrot.slane %v4354, 4
    %v4356 = vadd.f32 %v4354, %v4355
    %v4357 = vrot.slane %v4356, 2
    %v4358 = vadd.f32 %v4356, %v4357
    %v4359 = vrot.slane %v4358, 1
    %v4360 = vadd.f32 %v4358, %v4359
    %4361 = vmatprep.subr.mxu0 0.0
    %4362 = vmatpush1.msra.mxu0 %v259
    %4363 = vmatprep.subr.mxu0 0.0
    %4364 = vmatpush1.msra.mxu0 %v260
    %4365 = vmatprep.subr.mxu0 0.0
    %4366 = vmatpush1.msra.mxu0 %v261
    %4367 = vmatprep.subr.mxu0 0.0
    %4368 = vmatpush1.msra.mxu0 %v262
    %4369 = vmatprep.subr.mxu0 0.0
    %4370 = vmatpush1.msra.mxu0 %v263
    %4371 = vmatprep.subr.mxu0 0.0
    %4372 = vmatpush1.msra.mxu0 %v264
    %4373 = vmatprep.subr.mxu0 0.0
    %4374 = vmatpush1.msra.mxu0 %v265
    %4375 = vmatprep.subr.mxu0 0.0
    %4376 = vmatpush1.msra.mxu0 %v266
    %4377 = vmatprep.subr.mxu0 0.0
    %4378 = vmatpush1.msra.mxu0 %v267
    %4379 = vmatprep.subr.mxu0 0.0
    %4380 = vmatpush1.msra.mxu0 %v268
    %4381 = vmatprep.subr.mxu0 0.0
    %4382 = vmatpush1.msra.mxu0 %v269
    %4383 = vmatprep.subr.mxu0 0.0
    %4384 = vmatpush1.msra.mxu0 %v270
    %4385 = vmatprep.subr.mxu0 0.0
    %4386 = vmatpush1.msra.mxu0 %v271
    %4387 = vmatprep.subr.mxu0 0.0
    %4388 = vmatpush1.msra.mxu0 %v272
    %4389 = vmatprep.subr.mxu0 0.0
    %4390 = vmatpush1.msra.mxu0 %v273
    %4391 = vmatprep.subr.mxu0 0.0
    %4392 = vmatpush1.msra.mxu0 %v274
    %4393 = vmatprep.subr.mxu0 0.0
    %4394 = vmatpush1.msra.mxu0 0.0
    %4395 = vmatprep.subr.mxu0 0.0
    %4396 = vmatpush1.msra.mxu0 0.0
    %4397 = vmatprep.subr.mxu0 0.0
    %4398 = vmatpush1.msra.mxu0 0.0
    %4399 = vmatprep.subr.mxu0 0.0
    %4400 = vmatpush1.msra.mxu0 0.0
    %4401 = vmatprep.subr.mxu0 0.0
    %4402 = vmatpush1.msra.mxu0 0.0
    %4403 = vmatprep.subr.mxu0 0.0
    %4404 = vmatpush1.msra.mxu0 0.0
    %4405 = vmatprep.subr.mxu0 0.0
    %4406 = vmatpush1.msra.mxu0 0.0
    %4407 = vmatprep.subr.mxu0 0.0
    %4408 = vmatpush1.msra.mxu0 0.0
    %4409 = vmatprep.subr.mxu0 0.0
    %4410 = vmatpush1.msra.mxu0 0.0
    %4411 = vmatprep.subr.mxu0 0.0
    %4412 = vmatpush1.msra.mxu0 0.0
    %4413 = vmatprep.subr.mxu0 0.0
    %4414 = vmatpush1.msra.mxu0 0.0
    %4415 = vmatprep.subr.mxu0 0.0
    %4416 = vmatpush1.msra.mxu0 0.0
    %4417 = vmatprep.subr.mxu0 0.0
    %4418 = vmatpush1.msra.mxu0 0.0
    %4419 = vmatprep.subr.mxu0 0.0
    %4420 = vmatpush1.msra.mxu0 0.0
    %4421 = vmatprep.subr.mxu0 0.0
    %4422 = vmatpush1.msra.mxu0 0.0
    %4423 = vmatprep.subr.mxu0 0.0
    %4424 = vmatpush1.msra.mxu0 0.0
    %4425 = vmatprep.mubr.f32.mxu0 0.0
    %4426 = vmatmul.mubr.f32.gmra.mrb[0].mxu0 %v3784
    %v4427 = vpop.f32.mrb[0].mxu0
    %v4428 = vadd.f32 0.0, %v4427
    %v4429 = vpop.f32.mrb[0].mxu0
    %4430 = vdwg.mxu0
    %v4439 = vsel %vm817, %v4318, %v4311
    %v4440 = vsel %vm819, %v4325, %v4439
    %v4441 = vsel %vm821, %v4332, %v4440
    %v4442 = vsel %vm823, %v4339, %v4441
    %v4443 = vsel %vm825, %v4346, %v4442
    %v4444 = vsel %vm827, %v4353, %v4443
    %v4445 = vsel %vm829, %v4360, %v4444
    %4447 = vmatprep.subr.mxu0 0.0
    %4448 = vmatpush1.msra.mxu0 %v243
    %4449 = vmatprep.subr.mxu0 0.0
    %4450 = vmatpush1.msra.mxu0 %v244
    %4451 = vmatprep.subr.mxu0 0.0
    %4452 = vmatpush1.msra.mxu0 %v245
    %4453 = vmatprep.subr.mxu0 0.0
    %4454 = vmatpush1.msra.mxu0 %v246
    %4455 = vmatprep.subr.mxu0 0.0
    %4456 = vmatpush1.msra.mxu0 %v247
    %4457 = vmatprep.subr.mxu0 0.0
    %4458 = vmatpush1.msra.mxu0 %v248
    %4459 = vmatprep.subr.mxu0 0.0
    %4460 = vmatpush1.msra.mxu0 %v249
    %4461 = vmatprep.subr.mxu0 0.0
    %4462 = vmatpush1.msra.mxu0 %v250
    %4463 = vmatprep.subr.mxu0 0.0
    %4464 = vmatpush1.msra.mxu0 %v251
    %4465 = vmatprep.subr.mxu0 0.0
    %4466 = vmatpush1.msra.mxu0 %v252
    %4467 = vmatprep.subr.mxu0 0.0
    %4468 = vmatpush1.msra.mxu0 %v253
    %4469 = vmatprep.subr.mxu0 0.0
    %4470 = vmatpush1.msra.mxu0 %v254
    %4471 = vmatprep.subr.mxu0 0.0
    %4472 = vmatpush1.msra.mxu0 %v255
    %4473 = vmatprep.subr.mxu0 0.0
    %4474 = vmatpush1.msra.mxu0 %v256
    %4475 = vmatprep.subr.mxu0 0.0
    %4476 = vmatpush1.msra.mxu0 %v257
    %4477 = vmatprep.subr.mxu0 0.0
    %4478 = vmatpush1.msra.mxu0 %v258
    %4479 = vmatprep.subr.mxu0 0.0
    %4480 = vmatpush1.msra.mxu0 0.0
    %4481 = vmatprep.subr.mxu0 0.0
    %4482 = vmatpush1.msra.mxu0 0.0
    %4483 = vmatprep.subr.mxu0 0.0
    %4484 = vmatpush1.msra.mxu0 0.0
    %4485 = vmatprep.subr.mxu0 0.0
    %4486 = vmatpush1.msra.mxu0 0.0
    %4487 = vmatprep.subr.mxu0 0.0
    %4488 = vmatpush1.msra.mxu0 0.0
    %4489 = vmatprep.subr.mxu0 0.0
    %4490 = vmatpush1.msra.mxu0 0.0
    %4491 = vmatprep.subr.mxu0 0.0
    %4492 = vmatpush1.msra.mxu0 0.0
    %4493 = vmatprep.subr.mxu0 0.0
    %4494 = vmatpush1.msra.mxu0 0.0
    %4495 = vmatprep.subr.mxu0 0.0
    %4496 = vmatpush1.msra.mxu0 0.0
    %4497 = vmatprep.subr.mxu0 0.0
    %4498 = vmatpush1.msra.mxu0 0.0
    %4499 = vmatprep.subr.mxu0 0.0
    %4500 = vmatpush1.msra.mxu0 0.0
    %4501 = vmatprep.subr.mxu0 0.0
    %4502 = vmatpush1.msra.mxu0 0.0
    %4503 = vmatprep.subr.mxu0 0.0
    %4504 = vmatpush1.msra.mxu0 0.0
    %4505 = vmatprep.subr.mxu0 0.0
    %4506 = vmatpush1.msra.mxu0 0.0
    %4507 = vmatprep.subr.mxu0 0.0
    %4508 = vmatpush1.msra.mxu0 0.0
    %4509 = vmatprep.subr.mxu0 0.0
    %4510 = vmatpush1.msra.mxu0 0.0
    %4511 = vmatprep.mubr.f32.mxu0 0.0
    %4512 = vmatmul.mubr.f32.gmra.mrb[0].mxu0 %v4445
    %v4513 = vpop.f32.mrb[0].mxu0
    %v4514 = vadd.f32 %v4428, %v4513
    %v4515 = vpop.f32.mrb[0].mxu0
    %4516 = vdwg.mxu0
    %v4517 = vtanh.pop %v4514
    %4518 = vmatprep.subr.mxu0 %v276
    %4519 = vmatpush1.msra.mxu0 %v275
    %4520 = vmatprep.subr.mxu0 %v278
    %4521 = vmatpush1.msra.mxu0 %v277
    %4522 = vmatprep.subr.mxu0 %v280
    %4523 = vmatpush1.msra.mxu0 %v279
    %4524 = vmatprep.subr.mxu0 %v282
    %4525 = vmatpush1.msra.mxu0 %v281
    %4526 = vmatprep.subr.mxu0 %v284
    %4527 = vmatpush1.msra.mxu0 %v283
    %4528 = vmatprep.subr.mxu0 %v286
    %4529 = vmatpush1.msra.mxu0 %v285
    %4530 = vmatprep.subr.mxu0 %v288
    %4531 = vmatpush1.msra.mxu0 %v287
    %4532 = vmatprep.subr.mxu0 %v290
    %4533 = vmatpush1.msra.mxu0 %v289
    %4534 = vmatprep.subr.mxu0 %v292
    %4535 = vmatpush1.msra.mxu0 %v291
    %4536 = vmatprep.subr.mxu0 %v294
    %4537 = vmatpush1.msra.mxu0 %v293
    %4538 = vmatprep.subr.mxu0 %v296
    %4539 = vmatpush1.msra.mxu0 %v295
    %4540 = vmatprep.subr.mxu0 %v298
    %4541 = vmatpush1.msra.mxu0 %v297
    %4542 = vmatprep.subr.mxu0 %v300
    %4543 = vmatpush1.msra.mxu0 %v299
    %4544 = vmatprep.subr.mxu0 %v302
    %4545 = vmatpush1.msra.mxu0 %v301
    %4546 = vmatprep.subr.mxu0 %v304
    %4547 = vmatpush1.msra.mxu0 %v303
    %4548 = vmatprep.subr.mxu0 %v306
    %4549 = vmatpush1.msra.mxu0 %v305
    %4550 = vmatprep.subr.mxu0 0.0
    %4551 = vmatpush1.msra.mxu0 0.0
    %4552 = vmatprep.subr.mxu0 0.0
    %4553 = vmatpush1.msra.mxu0 0.0
    %4554 = vmatprep.subr.mxu0 0.0
    %4555 = vmatpush1.msra.mxu0 0.0
    %4556 = vmatprep.subr.mxu0 0.0
    %4557 = vmatpush1.msra.mxu0 0.0
    %4558 = vmatprep.subr.mxu0 0.0
    %4559 = vmatpush1.msra.mxu0 0.0
    %4560 = vmatprep.subr.mxu0 0.0
    %4561 = vmatpush1.msra.mxu0 0.0
    %4562 = vmatprep.subr.mxu0 0.0
    %4563 = vmatpush1.msra.mxu0 0.0
    %4564 = vmatprep.subr.mxu0 0.0
    %4565 = vmatpush1.msra.mxu0 0.0
    %4566 = vmatprep.subr.mxu0 0.0
    %4567 = vmatpush1.msra.mxu0 0.0
    %4568 = vmatprep.subr.mxu0 0.0
    %4569 = vmatpush1.msra.mxu0 0.0
    %4570 = vmatprep.subr.mxu0 0.0
    %4571 = vmatpush1.msra.mxu0 0.0
    %4572 = vmatprep.subr.mxu0 0.0
    %4573 = vmatpush1.msra.mxu0 0.0
    %4574 = vmatprep.subr.mxu0 0.0
    %4575 = vmatpush1.msra.mxu0 0.0
    %4576 = vmatprep.subr.mxu0 0.0
    %4577 = vmatpush1.msra.mxu0 0.0
    %4578 = vmatprep.subr.mxu0 0.0
    %4579 = vmatpush1.msra.mxu0 0.0
    %4580 = vmatprep.subr.mxu0 0.0
    %4581 = vmatpush1.msra.mxu0 0.0
    %4582 = vmatprep.mubr.f32.mxu0 0.0
    %4583 = vmatmul.mubr.f32.gmra.mrb[0].mxu0 %v4517
    %v4584 = vpop.f32.mrb[0].mxu0
    %v4585 = vadd.f32 %v1298, %v4584
    %v4586 = vpop.f32.mrb[0].mxu0
    %v4587 = vadd.f32 %v1302, %v4586
    %4588 = vdwg.mxu0
    %v4591 = vcombine.low %v4585, %v4587
    %v4592 = vcombine.high %v4585, %v4587
    %v4594 = vunpack.c.l.s4 1966171168
    %v4595 = vunpack.c.0.s8 %v4594
    %v4596 = vlaneseq
    %v4597 = vshrl.u32 %v4596, 7
    %v4598 = vsub.s32 %v4595, %v4597
    %v4599 = vrot.slane %v4591, %v4598
    %v4601 = vunpack.c.l.s4 1966171168
    %v4602 = vunpack.c.0.s8 %v4601
    %v4603 = vlaneseq
    %v4604 = vshrl.u32 %v4603, 7
    %v4605 = vsub.s32 %v4602, %v4604
    %v4606 = vrot.slane %v4592, %v4605
    %v4607 = vcombine.high %v4599, %v4599
    %v4608 = vcombine.high %v4606, %v4606
    %v4610 = vunpack.c.l.s4 1966171168
    %v4611 = vunpack.c.0.s8 %v4610
    %v4612 = vlaneseq
    %v4613 = vshrl.u32 %v4612, 7
    %v4614 = vsub.s32 %v4611, %v4613
    %v4615 = vrot.slane %v4599, %v4614
    %v4617 = vunpack.c.l.s4 1966171168
    %v4618 = vunpack.c.0.s8 %v4617
    %v4619 = vlaneseq
    %v4620 = vshrl.u32 %v4619, 7
    %v4621 = vsub.s32 %v4618, %v4620
    %v4622 = vrot.slane %v4606, %v4621
    %v4624 = vunpack.c.l.s4 1966171168
    %v4625 = vunpack.c.0.s8 %v4624
    %v4626 = vlaneseq
    %v4627 = vshrl.u32 %v4626, 7
    %v4628 = vsub.s32 %v4625, %v4627
    %v4629 = vrot.slane %v4607, %v4628
    %v4631 = vunpack.c.l.s4 1966171168
    %v4632 = vunpack.c.0.s8 %v4631
    %v4633 = vlaneseq
    %v4634 = vshrl.u32 %v4633, 7
    %v4635 = vsub.s32 %v4632, %v4634
    %v4636 = vrot.slane %v4608, %v4635
    %v4637 = vcombine.high %v4615, %v4615
    %v4638 = vcombine.high %v4622, %v4622
    %v4639 = vcombine.high %v4629, %v4629
    %v4640 = vcombine.high %v4636, %v4636
    %s4649 = scalar_lea.vmem %s11, 3
    %4650 = vst.msk [vmem:[%s4649] ss:$8 sm:$0x3] %vm1439, %v4615
    %4651 = vst.msk [vmem:[%s4649] ss:$8 sm:$0x0] %vm1439, %v4615
    %s4652 = scalar_lea.vmem %s11, 35
    %4653 = vst.msk [vmem:[%s4652] ss:$8 sm:$0x3] %vm1439, %v4629
    %4654 = vst.msk [vmem:[%s4652] ss:$8 sm:$0x0] %vm1439, %v4629
    %s4655 = scalar_lea.vmem %s11, 67
    %4656 = vst.msk [vmem:[%s4655] ss:$8 sm:$0x3] %vm1439, %v4637
    %4657 = vst.msk [vmem:[%s4655] ss:$8 sm:$0x0] %vm1439, %v4637
    %s4658 = scalar_lea.vmem %s11, 99
    %4659 = vst.msk [vmem:[%s4658] ss:$8 sm:$0x3] %vm1439, %v4639
    %4660 = vst.msk [vmem:[%s4658] ss:$8 sm:$0x0] %vm1439, %v4639
    %s4661 = scalar_lea.vmem %s11, 131
    %4662 = vst.msk [vmem:[%s4661] ss:$8 sm:$0x3] %vm1439, %v4622
    %4663 = vst.msk [vmem:[%s4661] ss:$8 sm:$0x0] %vm1439, %v4622
    %s4664 = scalar_lea.vmem %s11, 163
    %4665 = vst.msk [vmem:[%s4664] ss:$8 sm:$0x3] %vm1439, %v4636
    %4666 = vst.msk [vmem:[%s4664] ss:$8 sm:$0x0] %vm1439, %v4636
    %s4667 = scalar_lea.vmem %s11, 195
    %4668 = vst.msk [vmem:[%s4667] ss:$8 sm:$0x3] %vm1439, %v4638
    %4669 = vst.msk [vmem:[%s4667] ss:$8 sm:$0x0] %vm1439, %v4638
    %s4670 = scalar_lea.vmem %s11, 227
    %4671 = vst.msk [vmem:[%s4670] ss:$8 sm:$0x3] %vm1439, %v4640
    %4672 = vst.msk [vmem:[%s4670] ss:$8 sm:$0x0] %vm1439, %v4640
    %p4673 = scmp.lt.s32.totalorder %s3609, 10
    %s4674 = scalar_select %p4673, 1, 0
    %v4675 = vstv %s4674
    %vm4676 = vcmp.eq.s32.totalorder %v4675, 1
    %v4677 = vsel %vm4676, %v4517, %v3607
    %v4678 = vsel %vm4676, %v3782, %v3608
    %s4679 = sadd.s32 %s310, 4
    %s4680 = scalar_lea.vmem [#allocation4], 128
    %v4681 = vld [vmem:[%s4680] sm:$0xff]
    %v4682 = vld [vmem:[%s4680 + $0x8] sm:$0xff]
    %v4683 = vld [vmem:[%s4680 + $0x10] sm:$0xff]
    %v4684 = vld [vmem:[%s4680 + $0x18] sm:$0xff]
    %4685 = vmatprep.subr.mxu0 %v164
    %4686 = vmatpush1.msra.mxu0 %v163
    %4687 = vmatprep.subr.mxu0 %v168
    %4688 = vmatpush1.msra.mxu0 %v167
    %4689 = vmatprep.subr.mxu0 %v172
    %4690 = vmatpush1.msra.mxu0 %v171
    %4691 = vmatprep.subr.mxu0 %v176
    %4692 = vmatpush1.msra.mxu0 %v175
    %4693 = vmatprep.subr.mxu0 %v180
    %4694 = vmatpush1.msra.mxu0 %v179
    %4695 = vmatprep.subr.mxu0 %v184
    %4696 = vmatpush1.msra.mxu0 %v183
    %4697 = vmatprep.subr.mxu0 %v188
    %4698 = vmatpush1.msra.mxu0 %v187
    %4699 = vmatprep.subr.mxu0 %v192
    %4700 = vmatpush1.msra.mxu0 %v191
    %4701 = vmatprep.subr.mxu0 %v196
    %4702 = vmatpush1.msra.mxu0 %v195
    %4703 = vmatprep.subr.mxu0 %v200
    %4704 = vmatpush1.msra.mxu0 %v199
    %4705 = vmatprep.subr.mxu0 %v204
    %4706 = vmatpush1.msra.mxu0 %v203
    %4707 = vmatprep.subr.mxu0 %v208
    %4708 = vmatpush1.msra.mxu0 %v207
    %4709 = vmatprep.subr.mxu0 %v212
    %4710 = vmatpush1.msra.mxu0 %v211
    %4711 = vmatprep.subr.mxu0 %v216
    %4712 = vmatpush1.msra.mxu0 %v215
    %4713 = vmatprep.subr.mxu0 %v220
    %4714 = vmatpush1.msra.mxu0 %v219
    %4715 = vmatprep.subr.mxu0 %v224
    %4716 = vmatpush1.msra.mxu0 %v223
    %4717 = vmatprep.subr.mxu0 0.0
    %4718 = vmatpush1.msra.mxu0 0.0
    %4719 = vmatprep.subr.mxu0 0.0
    %4720 = vmatpush1.msra.mxu0 0.0
    %4721 = vmatprep.subr.mxu0 0.0
    %4722 = vmatpush1.msra.mxu0 0.0
    %4723 = vmatprep.subr.mxu0 0.0
    %4724 = vmatpush1.msra.mxu0 0.0
    %4725 = vmatprep.subr.mxu0 0.0
    %4726 = vmatpush1.msra.mxu0 0.0
    %4727 = vmatprep.subr.mxu0 0.0
    %4728 = vmatpush1.msra.mxu0 0.0
    %4729 = vmatprep.subr.mxu0 0.0
    %4730 = vmatpush1.msra.mxu0 0.0
    %4731 = vmatprep.subr.mxu0 0.0
    %4732 = vmatpush1.msra.mxu0 0.0
    %4733 = vmatprep.subr.mxu0 0.0
    %4734 = vmatpush1.msra.mxu0 0.0
    %4735 = vmatprep.subr.mxu0 0.0
    %4736 = vmatpush1.msra.mxu0 0.0
    %4737 = vmatprep.subr.mxu0 0.0
    %4738 = vmatpush1.msra.mxu0 0.0
    %4739 = vmatprep.subr.mxu0 0.0
    %4740 = vmatpush1.msra.mxu0 0.0
    %4741 = vmatprep.subr.mxu0 0.0
    %4742 = vmatpush1.msra.mxu0 0.0
    %4743 = vmatprep.subr.mxu0 0.0
    %4744 = vmatpush1.msra.mxu0 0.0
    %4745 = vmatprep.subr.mxu0 0.0
    %4746 = vmatpush1.msra.mxu0 0.0
    %4747 = vmatprep.subr.mxu0 0.0
    %4748 = vmatpush1.msra.mxu0 0.0
    %4749 = vmatprep.mubr.f32.mxu0 0.0
    %4750 = vmatmul.mubr.f32.gmra.mrb[0].mxu0 %v4677
    %v4751 = vpop.f32.mrb[0].mxu0
    %v4752 = vadd.f32 0.0, %v4751
    %v4753 = vpop.f32.mrb[0].mxu0
    %v4754 = vadd.f32 0.0, %v4753
    %4755 = vdwg.mxu0
    %4756 = vmatprep.subr.mxu0 %v166
    %4757 = vmatpush1.msra.mxu0 %v165
    %4758 = vmatprep.subr.mxu0 %v170
    %4759 = vmatpush1.msra.mxu0 %v169
    %4760 = vmatprep.subr.mxu0 %v174
    %4761 = vmatpush1.msra.mxu0 %v173
    %4762 = vmatprep.subr.mxu0 %v178
    %4763 = vmatpush1.msra.mxu0 %v177
    %4764 = vmatprep.subr.mxu0 %v182
    %4765 = vmatpush1.msra.mxu0 %v181
    %4766 = vmatprep.subr.mxu0 %v186
    %4767 = vmatpush1.msra.mxu0 %v185
    %4768 = vmatprep.subr.mxu0 %v190
    %4769 = vmatpush1.msra.mxu0 %v189
    %4770 = vmatprep.subr.mxu0 %v194
    %4771 = vmatpush1.msra.mxu0 %v193
    %4772 = vmatprep.subr.mxu0 %v198
    %4773 = vmatpush1.msra.mxu0 %v197
    %4774 = vmatprep.subr.mxu0 %v202
    %4775 = vmatpush1.msra.mxu0 %v201
    %4776 = vmatprep.subr.mxu0 %v206
    %4777 = vmatpush1.msra.mxu0 %v205
    %4778 = vmatprep.subr.mxu0 %v210
    %4779 = vmatpush1.msra.mxu0 %v209
    %4780 = vmatprep.subr.mxu0 %v214
    %4781 = vmatpush1.msra.mxu0 %v213
    %4782 = vmatprep.subr.mxu0 %v218
    %4783 = vmatpush1.msra.mxu0 %v217
    %4784 = vmatprep.subr.mxu0 %v222
    %4785 = vmatpush1.msra.mxu0 %v221
    %4786 = vmatprep.subr.mxu0 %v226
    %4787 = vmatpush1.msra.mxu0 %v225
    %4788 = vmatprep.subr.mxu0 0.0
    %4789 = vmatpush1.msra.mxu0 0.0
    %4790 = vmatprep.subr.mxu0 0.0
    %4791 = vmatpush1.msra.mxu0 0.0
    %4792 = vmatprep.subr.mxu0 0.0
    %4793 = vmatpush1.msra.mxu0 0.0
    %4794 = vmatprep.subr.mxu0 0.0
    %4795 = vmatpush1.msra.mxu0 0.0
    %4796 = vmatprep.subr.mxu0 0.0
    %4797 = vmatpush1.msra.mxu0 0.0
    %4798 = vmatprep.subr.mxu0 0.0
    %4799 = vmatpush1.msra.mxu0 0.0
    %4800 = vmatprep.subr.mxu0 0.0
    %4801 = vmatpush1.msra.mxu0 0.0
    %4802 = vmatprep.subr.mxu0 0.0
    %4803 = vmatpush1.msra.mxu0 0.0
    %4804 = vmatprep.subr.mxu0 0.0
    %4805 = vmatpush1.msra.mxu0 0.0
    %4806 = vmatprep.subr.mxu0 0.0
    %4807 = vmatpush1.msra.mxu0 0.0
    %4808 = vmatprep.subr.mxu0 0.0
    %4809 = vmatpush1.msra.mxu0 0.0
    %4810 = vmatprep.subr.mxu0 0.0
    %4811 = vmatpush1.msra.mxu0 0.0
    %4812 = vmatprep.subr.mxu0 0.0
    %4813 = vmatpush1.msra.mxu0 0.0
    %4814 = vmatprep.subr.mxu0 0.0
    %4815 = vmatpush1.msra.mxu0 0.0
    %4816 = vmatprep.subr.mxu0 0.0
    %4817 = vmatpush1.msra.mxu0 0.0
    %4818 = vmatprep.subr.mxu0 0.0
    %4819 = vmatpush1.msra.mxu0 0.0
    %4820 = vmatprep.mubr.f32.mxu0 0.0
    %4821 = vmatmul.mubr.f32.gmra.mrb[0].mxu0 %v4677
    %v4822 = vpop.f32.mrb[0].mxu0
    %v4823 = vadd.f32 0.0, %v4822
    %v4824 = vpop.f32.mrb[0].mxu0
    %v4825 = vadd.f32 0.0, %v4824
    %4826 = vdwg.mxu0
    %v4827 = vadd.f32 %v4681, %v4752
    %v4828 = vadd.f32 %v4682, %v4754
    %v4829 = vadd.f32 %v4683, %v4823
    %v4830 = vadd.f32 %v4684, %v4825
    %v4831 = vxor.u32 %v4827, 2147483648
    %v4832 = vmul.f32 %v4831, 1.442695
    %v4833 = vpow.pop %v4832
    %v4834 = vadd.f32 %v4833, 1.0
    %v4835 = vrcp.pop %v4834
    %v4836 = vmul.f32 1.0, %v4835
    %v4837 = vxor.u32 %v4828, 2147483648
    %v4838 = vmul.f32 %v4837, 1.442695
    %v4839 = vpow.pop %v4838
    %v4840 = vadd.f32 %v4839, 1.0
    %v4841 = vrcp.pop %v4840
    %v4842 = vmul.f32 1.0, %v4841
    %v4843 = vtanh.pop %v4829
    %v4844 = vxor.u32 %v4830, 2147483648
    %v4845 = vmul.f32 %v4844, 1.442695
    %v4846 = vpow.pop %v4845
    %v4847 = vadd.f32 %v4846, 1.0
    %v4848 = vrcp.pop %v4847
    %v4849 = vmul.f32 1.0, %v4848
    %v4850 = vmul.f32 %v4842, %v4678
    %v4851 = vmul.f32 %v4836, %v4843
    %v4852 = vadd.f32 %v4850, %v4851
    %v4853 = vtanh.pop %v4852
    %v4854 = vmul.f32 %v4849, %v4853
    %4855 = vmatprep.subr.mxu0 0.0
    %4856 = vmatpush1.msra.mxu0 %v227
    %4857 = vmatprep.subr.mxu0 0.0
    %4858 = vmatpush1.msra.mxu0 %v228
    %4859 = vmatprep.subr.mxu0 0.0
    %4860 = vmatpush1.msra.mxu0 %v229
    %4861 = vmatprep.subr.mxu0 0.0
    %4862 = vmatpush1.msra.mxu0 %v230
    %4863 = vmatprep.subr.mxu0 0.0
    %4864 = vmatpush1.msra.mxu0 %v231
    %4865 = vmatprep.subr.mxu0 0.0
    %4866 = vmatpush1.msra.mxu0 %v232
    %4867 = vmatprep.subr.mxu0 0.0
    %4868 = vmatpush1.msra.mxu0 %v233
    %4869 = vmatprep.subr.mxu0 0.0
    %4870 = vmatpush1.msra.mxu0 %v234
    %4871 = vmatprep.subr.mxu0 0.0
    %4872 = vmatpush1.msra.mxu0 %v235
    %4873 = vmatprep.subr.mxu0 0.0
    %4874 = vmatpush1.msra.mxu0 %v236
    %4875 = vmatprep.subr.mxu0 0.0
    %4876 = vmatpush1.msra.mxu0 %v237
    %4877 = vmatprep.subr.mxu0 0.0
    %4878 = vmatpush1.msra.mxu0 %v238
    %4879 = vmatprep.subr.mxu0 0.0
    %4880 = vmatpush1.msra.mxu0 %v239
    %4881 = vmatprep.subr.mxu0 0.0
    %4882 = vmatpush1.msra.mxu0 %v240
    %4883 = vmatprep.subr.mxu0 0.0
    %4884 = vmatpush1.msra.mxu0 %v241
    %4885 = vmatprep.subr.mxu0 0.0
    %4886 = vmatpush1.msra.mxu0 %v242
    %4887 = vmatprep.subr.mxu0 0.0
    %4888 = vmatpush1.msra.mxu0 0.0
    %4889 = vmatprep.subr.mxu0 0.0
    %4890 = vmatpush1.msra.mxu0 0.0
    %4891 = vmatprep.subr.mxu0 0.0
    %4892 = vmatpush1.msra.mxu0 0.0
    %4893 = vmatprep.subr.mxu0 0.0
    %4894 = vmatpush1.msra.mxu0 0.0
    %4895 = vmatprep.subr.mxu0 0.0
    %4896 = vmatpush1.msra.mxu0 0.0
    %4897 = vmatprep.subr.mxu0 0.0
    %4898 = vmatpush1.msra.mxu0 0.0
    %4899 = vmatprep.subr.mxu0 0.0
    %4900 = vmatpush1.msra.mxu0 0.0
    %4901 = vmatprep.subr.mxu0 0.0
    %4902 = vmatpush1.msra.mxu0 0.0
    %4903 = vmatprep.subr.mxu0 0.0
    %4904 = vmatpush1.msra.mxu0 0.0
    %4905 = vmatprep.subr.mxu0 0.0
    %4906 = vmatpush1.msra.mxu0 0.0
    %4907 = vmatprep.subr.mxu0 0.0
    %4908 = vmatpush1.msra.mxu0 0.0
    %4909 = vmatprep.subr.mxu0 0.0
    %4910 = vmatpush1.msra.mxu0 0.0
    %4911 = vmatprep.subr.mxu0 0.0
    %4912 = vmatpush1.msra.mxu0 0.0
    %4913 = vmatprep.subr.mxu0 0.0
    %4914 = vmatpush1.msra.mxu0 0.0
    %4915 = vmatprep.subr.mxu0 0.0
    %4916 = vmatpush1.msra.mxu0 0.0
    %4917 = vmatprep.subr.mxu0 0.0
    %4918 = vmatpush1.msra.mxu0 0.0
    %4919 = vmatprep.mubr.f32.mxu0 0.0
    %4920 = vmatmul.mubr.f32.gmra.mrb[0].mxu0 %v4854
    %v4921 = vpop.f32.mrb[0].mxu0
    %v4922 = vadd.f32 0.0, %v4921
    %v4923 = vpop.f32.mrb[0].mxu0
    %4924 = vdwg.mxu0
    %v4926 = vcombine.high %v4922, %v4922
    %v4928 = vunpack.c.l.s4 1966171168
    %v4929 = vunpack.c.0.s8 %v4928
    %v4930 = vlaneseq
    %v4931 = vshrl.u32 %v4930, 7
    %v4932 = vsub.s32 %v4929, %v4931
    %v4933 = vrot.slane %v4922, %v4932
    %v4935 = vunpack.c.l.s4 1966171168
    %v4936 = vunpack.c.0.s8 %v4935
    %v4937 = vlaneseq
    %v4938 = vshrl.u32 %v4937, 7
    %v4939 = vsub.s32 %v4936, %v4938
    %v4940 = vrot.slane %v4926, %v4939
    %v4941 = vcombine.high %v4933, %v4933
    %v4942 = vcombine.high %v4940, %v4940
    %v4944 = vunpack.c.l.s4 1966171168
    %v4945 = vunpack.c.0.s8 %v4944
    %v4946 = vlaneseq
    %v4947 = vshrl.u32 %v4946, 7
    %v4948 = vsub.s32 %v4945, %v4947
    %v4949 = vrot.slane %v4933, %v4948
    %v4951 = vunpack.c.l.s4 1966171168
    %v4952 = vunpack.c.0.s8 %v4951
    %v4953 = vlaneseq
    %v4954 = vshrl.u32 %v4953, 7
    %v4955 = vsub.s32 %v4952, %v4954
    %v4956 = vrot.slane %v4940, %v4955
    %v4958 = vunpack.c.l.s4 1966171168
    %v4959 = vunpack.c.0.s8 %v4958
    %v4960 = vlaneseq
    %v4961 = vshrl.u32 %v4960, 7
    %v4962 = vsub.s32 %v4959, %v4961
    %v4963 = vrot.slane %v4941, %v4962
    %v4965 = vunpack.c.l.s4 1966171168
    %v4966 = vunpack.c.0.s8 %v4965
    %v4967 = vlaneseq
    %v4968 = vshrl.u32 %v4967, 7
    %v4969 = vsub.s32 %v4966, %v4968
    %v4970 = vrot.slane %v4942, %v4969
    %v4971 = vcombine.high %v4949, %v4949
    %v4972 = vcombine.high %v4956, %v4956
    %v4973 = vcombine.high %v4963, %v4963
    %v4974 = vcombine.high %v4970, %v4970
    %v4975 = vlaneseq
    %v4976 = vshrl.u32 %v4975, 7
    %v4977 = vsub.s32 0, %v4976
    %v4978 = vrot.slane %v4949, %v4977
    %v4979 = vlaneseq
    %v4980 = vshrl.u32 %v4979, 7
    %v4981 = vsub.s32 0, %v4980
    %v4982 = vrot.slane %v4963, %v4981
    %v4983 = vlaneseq
    %v4984 = vshrl.u32 %v4983, 7
    %v4985 = vsub.s32 0, %v4984
    %v4986 = vrot.slane %v4971, %v4985
    %v4987 = vlaneseq
    %v4988 = vshrl.u32 %v4987, 7
    %v4989 = vsub.s32 0, %v4988
    %v4990 = vrot.slane %v4973, %v4989
    %v4991 = vlaneseq
    %v4992 = vshrl.u32 %v4991, 7
    %v4993 = vsub.s32 0, %v4992
    %v4994 = vrot.slane %v4956, %v4993
    %v4995 = vlaneseq
    %v4996 = vshrl.u32 %v4995, 7
    %v4997 = vsub.s32 0, %v4996
    %v4998 = vrot.slane %v4970, %v4997
    %v4999 = vlaneseq
    %v5000 = vshrl.u32 %v4999, 7
    %v5001 = vsub.s32 0, %v5000
    %v5002 = vrot.slane %v4972, %v5001
    %v5003 = vlaneseq
    %v5004 = vshrl.u32 %v5003, 7
    %v5005 = vsub.s32 0, %v5004
    %v5006 = vrot.slane %v4974, %v5005
    %v5015 = vmul.f32 %v154, %v4978
    %v5016 = vmul.f32 %v155, %v4982
    %v5017 = vmul.f32 %v156, %v4986
    %v5018 = vmul.f32 %v157, %v4990
    %v5019 = vmul.f32 %v158, %v4994
    %v5020 = vmul.f32 %v159, %v4998
    %v5021 = vmul.f32 %v160, %v5002
    %v5022 = vmul.f32 %v161, %v5006
    %v5023 = vsel %vm653, %v5015, 0.0
    %5024 = vadd.xlane.f32.xlu0 %v5023
    %v5025 = vpop.xlane.xlu0 %5024
    %v5026 = vsel %vm653, %v5016, 0.0
    %5027 = vadd.xlane.f32.xlu0 %v5026
    %v5028 = vpop.xlane.xlu0 %5027
    %v5029 = vsel %vm653, %v5017, 0.0
    %5030 = vadd.xlane.f32.xlu0 %v5029
    %v5031 = vpop.xlane.xlu0 %5030
    %v5032 = vsel %vm653, %v5018, 0.0
    %5033 = vadd.xlane.f32.xlu0 %v5032
    %v5034 = vpop.xlane.xlu0 %5033
    %v5035 = vsel %vm653, %v5019, 0.0
    %5036 = vadd.xlane.f32.xlu0 %v5035
    %v5037 = vpop.xlane.xlu0 %5036
    %v5038 = vsel %vm653, %v5020, 0.0
    %5039 = vadd.xlane.f32.xlu0 %v5038
    %v5040 = vpop.xlane.xlu0 %5039
    %v5041 = vsel %vm653, %v5021, 0.0
    %5042 = vadd.xlane.f32.xlu0 %v5041
    %v5043 = vpop.xlane.xlu0 %5042
    %v5044 = vsel %vm653, %v5022, 0.0
    %5045 = vadd.xlane.f32.xlu0 %v5044
    %v5046 = vpop.xlane.xlu0 %5045
    %v5047 = vadd.f32 %v5025, %v685
    %v5048 = vadd.f32 %v5028, %v692
    %v5049 = vadd.f32 %v5031, %v699
    %v5050 = vadd.f32 %v5034, %v706
    %v5051 = vadd.f32 %v5037, %v713
    %v5052 = vadd.f32 %v5040, %v720
    %v5053 = vadd.f32 %v5043, %v727
    %v5054 = vadd.f32 %v5046, %v734
    %5063 = vset.pattern.permute.xlu0 0
    %5064 = vperm.xlu0 %5063, %v5047
    %v5065 = vpop.permute.xlu0 %5064
    %5066 = vset.pattern.permute.xlu0 0
    %5067 = vperm.xlu0 %5066, %v5048
    %v5068 = vpop.permute.xlu0 %5067
    %5069 = vset.pattern.permute.xlu0 0
    %5070 = vperm.xlu0 %5069, %v5049
    %v5071 = vpop.permute.xlu0 %5070
    %5072 = vset.pattern.permute.xlu0 0
    %5073 = vperm.xlu0 %5072, %v5050
    %v5074 = vpop.permute.xlu0 %5073
    %5075 = vset.pattern.permute.xlu0 0
    %5076 = vperm.xlu0 %5075, %v5051
    %v5077 = vpop.permute.xlu0 %5076
    %5078 = vset.pattern.permute.xlu0 0
    %5079 = vperm.xlu0 %5078, %v5052
    %v5080 = vpop.permute.xlu0 %5079
    %5081 = vset.pattern.permute.xlu0 0
    %5082 = vperm.xlu0 %5081, %v5053
    %v5083 = vpop.permute.xlu0 %5082
    %5084 = vset.pattern.permute.xlu0 0
    %5085 = vperm.xlu0 %5084, %v5054
    %v5086 = vpop.permute.xlu0 %5085
    %v5087 = vlaneseq
    %v5088 = vshrl.u32 %v5087, 7
    %v5089 = vsub.s32 %v784, %v5088
    %v5090 = vrot.slane %v5065, %v5089
    %v5091 = vlaneseq
    %v5092 = vshrl.u32 %v5091, 7
    %v5093 = vsub.s32 %v784, %v5092
    %v5094 = vrot.slane %v5068, %v5093
    %v5095 = vlaneseq
    %v5096 = vshrl.u32 %v5095, 7
    %v5097 = vsub.s32 %v784, %v5096
    %v5098 = vrot.slane %v5071, %v5097
    %v5099 = vlaneseq
    %v5100 = vshrl.u32 %v5099, 7
    %v5101 = vsub.s32 %v784, %v5100
    %v5102 = vrot.slane %v5074, %v5101
    %v5103 = vlaneseq
    %v5104 = vshrl.u32 %v5103, 7
    %v5105 = vsub.s32 %v784, %v5104
    %v5106 = vrot.slane %v5077, %v5105
    %v5107 = vlaneseq
    %v5108 = vshrl.u32 %v5107, 7
    %v5109 = vsub.s32 %v784, %v5108
    %v5110 = vrot.slane %v5080, %v5109
    %v5111 = vlaneseq
    %v5112 = vshrl.u32 %v5111, 7
    %v5113 = vsub.s32 %v784, %v5112
    %v5114 = vrot.slane %v5083, %v5113
    %v5115 = vlaneseq
    %v5116 = vshrl.u32 %v5115, 7
    %v5117 = vsub.s32 %v784, %v5116
    %v5118 = vrot.slane %v5086, %v5117
    %v5119 = vsel %vm817, %v5094, %v5090
    %v5120 = vsel %vm819, %v5098, %v5119
    %v5121 = vsel %vm821, %v5102, %v5120
    %v5122 = vsel %vm823, %v5106, %v5121
    %v5123 = vsel %vm825, %v5110, %v5122
    %v5124 = vsel %vm827, %v5114, %v5123
    %v5125 = vsel %vm829, %v5118, %v5124
    %v5127 = vsel %vm832, %v5125, -inf
    %5128 = vmax.xlane.f32.xlu0 %v5127
    %v5129 = vpop.xlane.xlu0 %5128
    %v5131 = vlaneseq
    %v5132 = vshrl.u32 %v5131, 7
    %v5133 = vsub.s32 0, %v5132
    %v5134 = vrot.slane %v5129, %v5133
    %v5135 = vlaneseq
    %v5136 = vshrl.u32 %v5135, 7
    %v5137 = vsub.s32 1, %v5136
    %v5138 = vrot.slane %v5129, %v5137
    %v5139 = vlaneseq
    %v5140 = vshrl.u32 %v5139, 7
    %v5141 = vsub.s32 2, %v5140
    %v5142 = vrot.slane %v5129, %v5141
    %v5143 = vlaneseq
    %v5144 = vshrl.u32 %v5143, 7
    %v5145 = vsub.s32 3, %v5144
    %v5146 = vrot.slane %v5129, %v5145
    %v5147 = vlaneseq
    %v5148 = vshrl.u32 %v5147, 7
    %v5149 = vsub.s32 4, %v5148
    %v5150 = vrot.slane %v5129, %v5149
    %v5151 = vlaneseq
    %v5152 = vshrl.u32 %v5151, 7
    %v5153 = vsub.s32 5, %v5152
    %v5154 = vrot.slane %v5129, %v5153
    %v5155 = vlaneseq
    %v5156 = vshrl.u32 %v5155, 7
    %v5157 = vsub.s32 6, %v5156
    %v5158 = vrot.slane %v5129, %v5157
    %v5159 = vlaneseq
    %v5160 = vshrl.u32 %v5159, 7
    %v5161 = vsub.s32 7, %v5160
    %v5162 = vrot.slane %v5129, %v5161
    %v5171 = vsub.f32 %v5047, %v5134
    %v5172 = vsub.f32 %v5048, %v5138
    %v5173 = vsub.f32 %v5049, %v5142
    %v5174 = vsub.f32 %v5050, %v5146
    %v5175 = vsub.f32 %v5051, %v5150
    %v5176 = vsub.f32 %v5052, %v5154
    %v5177 = vsub.f32 %v5053, %v5158
    %v5178 = vsub.f32 %v5054, %v5162
    %v5179 = vmul.f32 %v5171, 1.442695
    %v5180 = vpow.pop %v5179
    %v5181 = vmul.f32 %v5172, 1.442695
    %v5182 = vpow.pop %v5181
    %v5183 = vmul.f32 %v5173, 1.442695
    %v5184 = vpow.pop %v5183
    %v5185 = vmul.f32 %v5174, 1.442695
    %v5186 = vpow.pop %v5185
    %v5187 = vmul.f32 %v5175, 1.442695
    %v5188 = vpow.pop %v5187
    %v5189 = vmul.f32 %v5176, 1.442695
    %v5190 = vpow.pop %v5189
    %v5191 = vmul.f32 %v5177, 1.442695
    %v5192 = vpow.pop %v5191
    %v5193 = vmul.f32 %v5178, 1.442695
    %v5194 = vpow.pop %v5193
    %5203 = vset.pattern.permute.xlu0 0
    %5204 = vperm.xlu0 %5203, %v5180
    %v5205 = vpop.permute.xlu0 %5204
    %5206 = vset.pattern.permute.xlu0 0
    %5207 = vperm.xlu0 %5206, %v5182
    %v5208 = vpop.permute.xlu0 %5207
    %5209 = vset.pattern.permute.xlu0 0
    %5210 = vperm.xlu0 %5209, %v5184
    %v5211 = vpop.permute.xlu0 %5210
    %5212 = vset.pattern.permute.xlu0 0
    %5213 = vperm.xlu0 %5212, %v5186
    %v5214 = vpop.permute.xlu0 %5213
    %5215 = vset.pattern.permute.xlu0 0
    %5216 = vperm.xlu0 %5215, %v5188
    %v5217 = vpop.permute.xlu0 %5216
    %5218 = vset.pattern.permute.xlu0 0
    %5219 = vperm.xlu0 %5218, %v5190
    %v5220 = vpop.permute.xlu0 %5219
    %5221 = vset.pattern.permute.xlu0 0
    %5222 = vperm.xlu0 %5221, %v5192
    %v5223 = vpop.permute.xlu0 %5222
    %5224 = vset.pattern.permute.xlu0 0
    %5225 = vperm.xlu0 %5224, %v5194
    %v5226 = vpop.permute.xlu0 %5225
    %v5227 = vlaneseq
    %v5228 = vshrl.u32 %v5227, 7
    %v5229 = vsub.s32 %v784, %v5228
    %v5230 = vrot.slane %v5205, %v5229
    %v5231 = vlaneseq
    %v5232 = vshrl.u32 %v5231, 7
    %v5233 = vsub.s32 %v784, %v5232
    %v5234 = vrot.slane %v5208, %v5233
    %v5235 = vlaneseq
    %v5236 = vshrl.u32 %v5235, 7
    %v5237 = vsub.s32 %v784, %v5236
    %v5238 = vrot.slane %v5211, %v5237
    %v5239 = vlaneseq
    %v5240 = vshrl.u32 %v5239, 7
    %v5241 = vsub.s32 %v784, %v5240
    %v5242 = vrot.slane %v5214, %v5241
    %v5243 = vlaneseq
    %v5244 = vshrl.u32 %v5243, 7
    %v5245 = vsub.s32 %v784, %v5244
    %v5246 = vrot.slane %v5217, %v5245
    %v5247 = vlaneseq
    %v5248 = vshrl.u32 %v5247, 7
    %v5249 = vsub.s32 %v784, %v5248
    %v5250 = vrot.slane %v5220, %v5249
    %v5251 = vlaneseq
    %v5252 = vshrl.u32 %v5251, 7
    %v5253 = vsub.s32 %v784, %v5252
    %v5254 = vrot.slane %v5223, %v5253
    %v5255 = vlaneseq
    %v5256 = vshrl.u32 %v5255, 7
    %v5257 = vsub.s32 %v784, %v5256
    %v5258 = vrot.slane %v5226, %v5257
    %v5259 = vsel %vm817, %v5234, %v5230
    %v5260 = vsel %vm819, %v5238, %v5259
    %v5261 = vsel %vm821, %v5242, %v5260
    %v5262 = vsel %vm823, %v5246, %v5261
    %v5263 = vsel %vm825, %v5250, %v5262
    %v5264 = vsel %vm827, %v5254, %v5263
    %v5265 = vsel %vm829, %v5258, %v5264
    %v5267 = vsel %vm832, %v5265, 0.0
    %5268 = vadd.xlane.f32.xlu0 %v5267
    %v5269 = vpop.xlane.xlu0 %5268
    %v5271 = vlaneseq
    %v5272 = vshrl.u32 %v5271, 7
    %v5273 = vsub.s32 0, %v5272
    %v5274 = vrot.slane %v5269, %v5273
    %v5275 = vlaneseq
    %v5276 = vshrl.u32 %v5275, 7
    %v5277 = vsub.s32 1, %v5276
    %v5278 = vrot.slane %v5269, %v5277
    %v5279 = vlaneseq
    %v5280 = vshrl.u32 %v5279, 7
    %v5281 = vsub.s32 2, %v5280
    %v5282 = vrot.slane %v5269, %v5281
    %v5283 = vlaneseq
    %v5284 = vshrl.u32 %v5283, 7
    %v5285 = vsub.s32 3, %v5284
    %v5286 = vrot.slane %v5269, %v5285
    %v5287 = vlaneseq
    %v5288 = vshrl.u32 %v5287, 7
    %v5289 = vsub.s32 4, %v5288
    %v5290 = vrot.slane %v5269, %v5289
    %v5291 = vlaneseq
    %v5292 = vshrl.u32 %v5291, 7
    %v5293 = vsub.s32 5, %v5292
    %v5294 = vrot.slane %v5269, %v5293
    %v5295 = vlaneseq
    %v5296 = vshrl.u32 %v5295, 7
    %v5297 = vsub.s32 6, %v5296
    %v5298 = vrot.slane %v5269, %v5297
    %v5299 = vlaneseq
    %v5300 = vshrl.u32 %v5299, 7
    %v5301 = vsub.s32 7, %v5300
    %v5302 = vrot.slane %v5269, %v5301
    %v5311 = vrcp.pop %v5274
    %v5312 = vmul.f32 %v5180, %v5311
    %v5313 = vrcp.pop %v5278
    %v5314 = vmul.f32 %v5182, %v5313
    %v5315 = vrcp.pop %v5282
    %v5316 = vmul.f32 %v5184, %v5315
    %v5317 = vrcp.pop %v5286
    %v5318 = vmul.f32 %v5186, %v5317
    %v5319 = vrcp.pop %v5290
    %v5320 = vmul.f32 %v5188, %v5319
    %v5321 = vrcp.pop %v5294
    %v5322 = vmul.f32 %v5190, %v5321
    %v5323 = vrcp.pop %v5298
    %v5324 = vmul.f32 %v5192, %v5323
    %v5325 = vrcp.pop %v5302
    %v5326 = vmul.f32 %v5194, %v5325
    %5328 = vset.pattern.permute.xlu0 0
    %5329 = vperm.xlu0 %5328, %v5312
    %v5330 = vpop.permute.xlu0 %5329
    %5333 = vset.pattern.permute.xlu0 0
    %5334 = vperm.xlu0 %5333, %v5314
    %v5335 = vpop.permute.xlu0 %5334
    %5338 = vset.pattern.permute.xlu0 0
    %5339 = vperm.xlu0 %5338, %v5316
    %v5340 = vpop.permute.xlu0 %5339
    %5343 = vset.pattern.permute.xlu0 0
    %5344 = vperm.xlu0 %5343, %v5318
    %v5345 = vpop.permute.xlu0 %5344
    %5348 = vset.pattern.permute.xlu0 0
    %5349 = vperm.xlu0 %5348, %v5320
    %v5350 = vpop.permute.xlu0 %5349
    %5353 = vset.pattern.permute.xlu0 0
    %5354 = vperm.xlu0 %5353, %v5322
    %v5355 = vpop.permute.xlu0 %5354
    %5358 = vset.pattern.permute.xlu0 0
    %5359 = vperm.xlu0 %5358, %v5324
    %v5360 = vpop.permute.xlu0 %5359
    %5363 = vset.pattern.permute.xlu0 0
    %5364 = vperm.xlu0 %5363, %v5326
    %v5365 = vpop.permute.xlu0 %5364
    %v5367 = vmul.f32 %v5330, %v154
    %v5368 = vmul.f32 %v5335, %v155
    %v5369 = vmul.f32 %v5340, %v156
    %v5370 = vmul.f32 %v5345, %v157
    %v5371 = vmul.f32 %v5350, %v158
    %v5372 = vmul.f32 %v5355, %v159
    %v5373 = vmul.f32 %v5360, %v160
    %v5374 = vmul.f32 %v5365, %v161
    %v5375 = vsel %vm653, %v5367, 0.0
    %v5376 = vrot.slane %v5375, 4
    %v5377 = vadd.f32 %v5375, %v5376
    %v5378 = vrot.slane %v5377, 2
    %v5379 = vadd.f32 %v5377, %v5378
    %v5380 = vrot.slane %v5379, 1
    %v5381 = vadd.f32 %v5379, %v5380
    %v5382 = vsel %vm653, %v5368, 0.0
    %v5383 = vrot.slane %v5382, 4
    %v5384 = vadd.f32 %v5382, %v5383
    %v5385 = vrot.slane %v5384, 2
    %v5386 = vadd.f32 %v5384, %v5385
    %v5387 = vrot.slane %v5386, 1
    %v5388 = vadd.f32 %v5386, %v5387
    %v5389 = vsel %vm653, %v5369, 0.0
    %v5390 = vrot.slane %v5389, 4
    %v5391 = vadd.f32 %v5389, %v5390
    %v5392 = vrot.slane %v5391, 2
    %v5393 = vadd.f32 %v5391, %v5392
    %v5394 = vrot.slane %v5393, 1
    %v5395 = vadd.f32 %v5393, %v5394
    %v5396 = vsel %vm653, %v5370, 0.0
    %v5397 = vrot.slane %v5396, 4
    %v5398 = vadd.f32 %v5396, %v5397
    %v5399 = vrot.slane %v5398, 2
    %v5400 = vadd.f32 %v5398, %v5399
    %v5401 = vrot.slane %v5400, 1
    %v5402 = vadd.f32 %v5400, %v5401
    %v5403 = vsel %vm653, %v5371, 0.0
    %v5404 = vrot.slane %v5403, 4
    %v5405 = vadd.f32 %v5403, %v5404
    %v5406 = vrot.slane %v5405, 2
    %v5407 = vadd.f32 %v5405, %v5406
    %v5408 = vrot.slane %v5407, 1
    %v5409 = vadd.f32 %v5407, %v5408
    %v5410 = vsel %vm653, %v5372, 0.0
    %v5411 = vrot.slane %v5410, 4
    %v5412 = vadd.f32 %v5410, %v5411
    %v5413 = vrot.slane %v5412, 2
    %v5414 = vadd.f32 %v5412, %v5413
    %v5415 = vrot.slane %v5414, 1
    %v5416 = vadd.f32 %v5414, %v5415
    %v5417 = vsel %vm653, %v5373, 0.0
    %v5418 = vrot.slane %v5417, 4
    %v5419 = vadd.f32 %v5417, %v5418
    %v5420 = vrot.slane %v5419, 2
    %v5421 = vadd.f32 %v5419, %v5420
    %v5422 = vrot.slane %v5421, 1
    %v5423 = vadd.f32 %v5421, %v5422
    %v5424 = vsel %vm653, %v5374, 0.0
    %v5425 = vrot.slane %v5424, 4
    %v5426 = vadd.f32 %v5424, %v5425
    %v5427 = vrot.slane %v5426, 2
    %v5428 = vadd.f32 %v5426, %v5427
    %v5429 = vrot.slane %v5428, 1
    %v5430 = vadd.f32 %v5428, %v5429
    %5431 = vmatprep.subr.mxu0 0.0
    %5432 = vmatpush1.msra.mxu0 %v259
    %5433 = vmatprep.subr.mxu0 0.0
    %5434 = vmatpush1.msra.mxu0 %v260
    %5435 = vmatprep.subr.mxu0 0.0
    %5436 = vmatpush1.msra.mxu0 %v261
    %5437 = vmatprep.subr.mxu0 0.0
    %5438 = vmatpush1.msra.mxu0 %v262
    %5439 = vmatprep.subr.mxu0 0.0
    %5440 = vmatpush1.msra.mxu0 %v263
    %5441 = vmatprep.subr.mxu0 0.0
    %5442 = vmatpush1.msra.mxu0 %v264
    %5443 = vmatprep.subr.mxu0 0.0
    %5444 = vmatpush1.msra.mxu0 %v265
    %5445 = vmatprep.subr.mxu0 0.0
    %5446 = vmatpush1.msra.mxu0 %v266
    %5447 = vmatprep.subr.mxu0 0.0
    %5448 = vmatpush1.msra.mxu0 %v267
    %5449 = vmatprep.subr.mxu0 0.0
    %5450 = vmatpush1.msra.mxu0 %v268
    %5451 = vmatprep.subr.mxu0 0.0
    %5452 = vmatpush1.msra.mxu0 %v269
    %5453 = vmatprep.subr.mxu0 0.0
    %5454 = vmatpush1.msra.mxu0 %v270
    %5455 = vmatprep.subr.mxu0 0.0
    %5456 = vmatpush1.msra.mxu0 %v271
    %5457 = vmatprep.subr.mxu0 0.0
    %5458 = vmatpush1.msra.mxu0 %v272
    %5459 = vmatprep.subr.mxu0 0.0
    %5460 = vmatpush1.msra.mxu0 %v273
    %5461 = vmatprep.subr.mxu0 0.0
    %5462 = vmatpush1.msra.mxu0 %v274
    %5463 = vmatprep.subr.mxu0 0.0
    %5464 = vmatpush1.msra.mxu0 0.0
    %5465 = vmatprep.subr.mxu0 0.0
    %5466 = vmatpush1.msra.mxu0 0.0
    %5467 = vmatprep.subr.mxu0 0.0
    %5468 = vmatpush1.msra.mxu0 0.0
    %5469 = vmatprep.subr.mxu0 0.0
    %5470 = vmatpush1.msra.mxu0 0.0
    %5471 = vmatprep.subr.mxu0 0.0
    %5472 = vmatpush1.msra.mxu0 0.0
    %5473 = vmatprep.subr.mxu0 0.0
    %5474 = vmatpush1.msra.mxu0 0.0
    %5475 = vmatprep.subr.mxu0 0.0
    %5476 = vmatpush1.msra.mxu0 0.0
    %5477 = vmatprep.subr.mxu0 0.0
    %5478 = vmatpush1.msra.mxu0 0.0
    %5479 = vmatprep.subr.mxu0 0.0
    %5480 = vmatpush1.msra.mxu0 0.0
    %5481 = vmatprep.subr.mxu0 0.0
    %5482 = vmatpush1.msra.mxu0 0.0
    %5483 = vmatprep.subr.mxu0 0.0
    %5484 = vmatpush1.msra.mxu0 0.0
    %5485 = vmatprep.subr.mxu0 0.0
    %5486 = vmatpush1.msra.mxu0 0.0
    %5487 = vmatprep.subr.mxu0 0.0
    %5488 = vmatpush1.msra.mxu0 0.0
    %5489 = vmatprep.subr.mxu0 0.0
    %5490 = vmatpush1.msra.mxu0 0.0
    %5491 = vmatprep.subr.mxu0 0.0
    %5492 = vmatpush1.msra.mxu0 0.0
    %5493 = vmatprep.subr.mxu0 0.0
    %5494 = vmatpush1.msra.mxu0 0.0
    %5495 = vmatprep.mubr.f32.mxu0 0.0
    %5496 = vmatmul.mubr.f32.gmra.mrb[0].mxu0 %v4854
    %v5497 = vpop.f32.mrb[0].mxu0
    %v5498 = vadd.f32 0.0, %v5497
    %v5499 = vpop.f32.mrb[0].mxu0
    %5500 = vdwg.mxu0
    %v5509 = vsel %vm817, %v5388, %v5381
    %v5510 = vsel %vm819, %v5395, %v5509
    %v5511 = vsel %vm821, %v5402, %v5510
    %v5512 = vsel %vm823, %v5409, %v5511
    %v5513 = vsel %vm825, %v5416, %v5512
    %v5514 = vsel %vm827, %v5423, %v5513
    %v5515 = vsel %vm829, %v5430, %v5514
    %5517 = vmatprep.subr.mxu0 0.0
    %5518 = vmatpush1.msra.mxu0 %v243
    %5519 = vmatprep.subr.mxu0 0.0
    %5520 = vmatpush1.msra.mxu0 %v244
    %5521 = vmatprep.subr.mxu0 0.0
    %5522 = vmatpush1.msra.mxu0 %v245
    %5523 = vmatprep.subr.mxu0 0.0
    %5524 = vmatpush1.msra.mxu0 %v246
    %5525 = vmatprep.subr.mxu0 0.0
    %5526 = vmatpush1.msra.mxu0 %v247
    %5527 = vmatprep.subr.mxu0 0.0
    %5528 = vmatpush1.msra.mxu0 %v248
    %5529 = vmatprep.subr.mxu0 0.0
    %5530 = vmatpush1.msra.mxu0 %v249
    %5531 = vmatprep.subr.mxu0 0.0
    %5532 = vmatpush1.msra.mxu0 %v250
    %5533 = vmatprep.subr.mxu0 0.0
    %5534 = vmatpush1.msra.mxu0 %v251
    %5535 = vmatprep.subr.mxu0 0.0
    %5536 = vmatpush1.msra.mxu0 %v252
    %5537 = vmatprep.subr.mxu0 0.0
    %5538 = vmatpush1.msra.mxu0 %v253
    %5539 = vmatprep.subr.mxu0 0.0
    %5540 = vmatpush1.msra.mxu0 %v254
    %5541 = vmatprep.subr.mxu0 0.0
    %5542 = vmatpush1.msra.mxu0 %v255
    %5543 = vmatprep.subr.mxu0 0.0
    %5544 = vmatpush1.msra.mxu0 %v256
    %5545 = vmatprep.subr.mxu0 0.0
    %5546 = vmatpush1.msra.mxu0 %v257
    %5547 = vmatprep.subr.mxu0 0.0
    %5548 = vmatpush1.msra.mxu0 %v258
    %5549 = vmatprep.subr.mxu0 0.0
    %5550 = vmatpush1.msra.mxu0 0.0
    %5551 = vmatprep.subr.mxu0 0.0
    %5552 = vmatpush1.msra.mxu0 0.0
    %5553 = vmatprep.subr.mxu0 0.0
    %5554 = vmatpush1.msra.mxu0 0.0
    %5555 = vmatprep.subr.mxu0 0.0
    %5556 = vmatpush1.msra.mxu0 0.0
    %5557 = vmatprep.subr.mxu0 0.0
    %5558 = vmatpush1.msra.mxu0 0.0
    %5559 = vmatprep.subr.mxu0 0.0
    %5560 = vmatpush1.msra.mxu0 0.0
    %5561 = vmatprep.subr.mxu0 0.0
    %5562 = vmatpush1.msra.mxu0 0.0
    %5563 = vmatprep.subr.mxu0 0.0
    %5564 = vmatpush1.msra.mxu0 0.0
    %5565 = vmatprep.subr.mxu0 0.0
    %5566 = vmatpush1.msra.mxu0 0.0
    %5567 = vmatprep.subr.mxu0 0.0
    %5568 = vmatpush1.msra.mxu0 0.0
    %5569 = vmatprep.subr.mxu0 0.0
    %5570 = vmatpush1.msra.mxu0 0.0
    %5571 = vmatprep.subr.mxu0 0.0
    %5572 = vmatpush1.msra.mxu0 0.0
    %5573 = vmatprep.subr.mxu0 0.0
    %5574 = vmatpush1.msra.mxu0 0.0
    %5575 = vmatprep.subr.mxu0 0.0
    %5576 = vmatpush1.msra.mxu0 0.0
    %5577 = vmatprep.subr.mxu0 0.0
    %5578 = vmatpush1.msra.mxu0 0.0
    %5579 = vmatprep.subr.mxu0 0.0
    %5580 = vmatpush1.msra.mxu0 0.0
    %5581 = vmatprep.mubr.f32.mxu0 0.0
    %5582 = vmatmul.mubr.f32.gmra.mrb[0].mxu0 %v5515
    %v5583 = vpop.f32.mrb[0].mxu0
    %v5584 = vadd.f32 %v5498, %v5583
    %v5585 = vpop.f32.mrb[0].mxu0
    %5586 = vdwg.mxu0
    %v5587 = vtanh.pop %v5584
    %5588 = vmatprep.subr.mxu0 %v276
    %5589 = vmatpush1.msra.mxu0 %v275
    %5590 = vmatprep.subr.mxu0 %v278
    %5591 = vmatpush1.msra.mxu0 %v277
    %5592 = vmatprep.subr.mxu0 %v280
    %5593 = vmatpush1.msra.mxu0 %v279
    %5594 = vmatprep.subr.mxu0 %v282
    %5595 = vmatpush1.msra.mxu0 %v281
    %5596 = vmatprep.subr.mxu0 %v284
    %5597 = vmatpush1.msra.mxu0 %v283
    %5598 = vmatprep.subr.mxu0 %v286
    %5599 = vmatpush1.msra.mxu0 %v285
    %5600 = vmatprep.subr.mxu0 %v288
    %5601 = vmatpush1.msra.mxu0 %v287
    %5602 = vmatprep.subr.mxu0 %v290
    %5603 = vmatpush1.msra.mxu0 %v289
    %5604 = vmatprep.subr.mxu0 %v292
    %5605 = vmatpush1.msra.mxu0 %v291
    %5606 = vmatprep.subr.mxu0 %v294
    %5607 = vmatpush1.msra.mxu0 %v293
    %5608 = vmatprep.subr.mxu0 %v296
    %5609 = vmatpush1.msra.mxu0 %v295
    %5610 = vmatprep.subr.mxu0 %v298
    %5611 = vmatpush1.msra.mxu0 %v297
    %5612 = vmatprep.subr.mxu0 %v300
    %5613 = vmatpush1.msra.mxu0 %v299
    %5614 = vmatprep.subr.mxu0 %v302
    %5615 = vmatpush1.msra.mxu0 %v301
    %5616 = vmatprep.subr.mxu0 %v304
    %5617 = vmatpush1.msra.mxu0 %v303
    %5618 = vmatprep.subr.mxu0 %v306
    %5619 = vmatpush1.msra.mxu0 %v305
    %5620 = vmatprep.subr.mxu0 0.0
    %5621 = vmatpush1.msra.mxu0 0.0
    %5622 = vmatprep.subr.mxu0 0.0
    %5623 = vmatpush1.msra.mxu0 0.0
    %5624 = vmatprep.subr.mxu0 0.0
    %5625 = vmatpush1.msra.mxu0 0.0
    %5626 = vmatprep.subr.mxu0 0.0
    %5627 = vmatpush1.msra.mxu0 0.0
    %5628 = vmatprep.subr.mxu0 0.0
    %5629 = vmatpush1.msra.mxu0 0.0
    %5630 = vmatprep.subr.mxu0 0.0
    %5631 = vmatpush1.msra.mxu0 0.0
    %5632 = vmatprep.subr.mxu0 0.0
    %5633 = vmatpush1.msra.mxu0 0.0
    %5634 = vmatprep.subr.mxu0 0.0
    %5635 = vmatpush1.msra.mxu0 0.0
    %5636 = vmatprep.subr.mxu0 0.0
    %5637 = vmatpush1.msra.mxu0 0.0
    %5638 = vmatprep.subr.mxu0 0.0
    %5639 = vmatpush1.msra.mxu0 0.0
    %5640 = vmatprep.subr.mxu0 0.0
    %5641 = vmatpush1.msra.mxu0 0.0
    %5642 = vmatprep.subr.mxu0 0.0
    %5643 = vmatpush1.msra.mxu0 0.0
    %5644 = vmatprep.subr.mxu0 0.0
    %5645 = vmatpush1.msra.mxu0 0.0
    %5646 = vmatprep.subr.mxu0 0.0
    %5647 = vmatpush1.msra.mxu0 0.0
    %5648 = vmatprep.subr.mxu0 0.0
    %5649 = vmatpush1.msra.mxu0 0.0
    %5650 = vmatprep.subr.mxu0 0.0
    %5651 = vmatpush1.msra.mxu0 0.0
    %5652 = vmatprep.mubr.f32.mxu0 0.0
    %5653 = vmatmul.mubr.f32.gmra.mrb[0].mxu0 %v5587
    %v5654 = vpop.f32.mrb[0].mxu0
    %v5655 = vadd.f32 %v1298, %v5654
    %v5656 = vpop.f32.mrb[0].mxu0
    %v5657 = vadd.f32 %v1302, %v5656
    %5658 = vdwg.mxu0
    %v5661 = vcombine.low %v5655, %v5657
    %v5662 = vcombine.high %v5655, %v5657
    %v5664 = vunpack.c.l.s4 1966171168
    %v5665 = vunpack.c.0.s8 %v5664
    %v5666 = vlaneseq
    %v5667 = vshrl.u32 %v5666, 7
    %v5668 = vsub.s32 %v5665, %v5667
    %v5669 = vrot.slane %v5661, %v5668
    %v5671 = vunpack.c.l.s4 1966171168
    %v5672 = vunpack.c.0.s8 %v5671
    %v5673 = vlaneseq
    %v5674 = vshrl.u32 %v5673, 7
    %v5675 = vsub.s32 %v5672, %v5674
    %v5676 = vrot.slane %v5662, %v5675
    %v5677 = vcombine.high %v5669, %v5669
    %v5678 = vcombine.high %v5676, %v5676
    %v5680 = vunpack.c.l.s4 1966171168
    %v5681 = vunpack.c.0.s8 %v5680
    %v5682 = vlaneseq
    %v5683 = vshrl.u32 %v5682, 7
    %v5684 = vsub.s32 %v5681, %v5683
    %v5685 = vrot.slane %v5669, %v5684
    %v5687 = vunpack.c.l.s4 1966171168
    %v5688 = vunpack.c.0.s8 %v5687
    %v5689 = vlaneseq
    %v5690 = vshrl.u32 %v5689, 7
    %v5691 = vsub.s32 %v5688, %v5690
    %v5692 = vrot.slane %v5676, %v5691
    %v5694 = vunpack.c.l.s4 1966171168
    %v5695 = vunpack.c.0.s8 %v5694
    %v5696 = vlaneseq
    %v5697 = vshrl.u32 %v5696, 7
    %v5698 = vsub.s32 %v5695, %v5697
    %v5699 = vrot.slane %v5677, %v5698
    %v5701 = vunpack.c.l.s4 1966171168
    %v5702 = vunpack.c.0.s8 %v5701
    %v5703 = vlaneseq
    %v5704 = vshrl.u32 %v5703, 7
    %v5705 = vsub.s32 %v5702, %v5704
    %v5706 = vrot.slane %v5678, %v5705
    %v5707 = vcombine.high %v5685, %v5685
    %v5708 = vcombine.high %v5692, %v5692
    %v5709 = vcombine.high %v5699, %v5699
    %v5710 = vcombine.high %v5706, %v5706
    %s5719 = scalar_lea.vmem %s11, 4
    %5720 = vst.msk [vmem:[%s5719] ss:$8 sm:$0x3] %vm1439, %v5685
    %5721 = vst.msk [vmem:[%s5719] ss:$8 sm:$0x0] %vm1439, %v5685
    %s5722 = scalar_lea.vmem %s11, 36
    %5723 = vst.msk [vmem:[%s5722] ss:$8 sm:$0x3] %vm1439, %v5699
    %5724 = vst.msk [vmem:[%s5722] ss:$8 sm:$0x0] %vm1439, %v5699
    %s5725 = scalar_lea.vmem %s11, 68
    %5726 = vst.msk [vmem:[%s5725] ss:$8 sm:$0x3] %vm1439, %v5707
    %5727 = vst.msk [vmem:[%s5725] ss:$8 sm:$0x0] %vm1439, %v5707
    %s5728 = scalar_lea.vmem %s11, 100
    %5729 = vst.msk [vmem:[%s5728] ss:$8 sm:$0x3] %vm1439, %v5709
    %5730 = vst.msk [vmem:[%s5728] ss:$8 sm:$0x0] %vm1439, %v5709
    %s5731 = scalar_lea.vmem %s11, 132
    %5732 = vst.msk [vmem:[%s5731] ss:$8 sm:$0x3] %vm1439, %v5692
    %5733 = vst.msk [vmem:[%s5731] ss:$8 sm:$0x0] %vm1439, %v5692
    %s5734 = scalar_lea.vmem %s11, 164
    %5735 = vst.msk [vmem:[%s5734] ss:$8 sm:$0x3] %vm1439, %v5706
    %5736 = vst.msk [vmem:[%s5734] ss:$8 sm:$0x0] %vm1439, %v5706
    %s5737 = scalar_lea.vmem %s11, 196
    %5738 = vst.msk [vmem:[%s5737] ss:$8 sm:$0x3] %vm1439, %v5708
    %5739 = vst.msk [vmem:[%s5737] ss:$8 sm:$0x0] %vm1439, %v5708
    %s5740 = scalar_lea.vmem %s11, 228
    %5741 = vst.msk [vmem:[%s5740] ss:$8 sm:$0x3] %vm1439, %v5710
    %5742 = vst.msk [vmem:[%s5740] ss:$8 sm:$0x0] %vm1439, %v5710
    %p5743 = scmp.lt.s32.totalorder %s4679, 10
    %s5744 = scalar_select %p5743, 1, 0
    %v5745 = vstv %s5744
    %vm5746 = vcmp.eq.s32.totalorder %v5745, 1
    %v5747 = vsel %vm5746, %v5587, %v4677
    %v5748 = vsel %vm5746, %v4852, %v4678
    %s5749 = sadd.s32 %s310, 5
    %s5750 = scalar_lea.vmem [#allocation4], 160
    %v5751 = vld [vmem:[%s5750] sm:$0xff]
    %v5752 = vld [vmem:[%s5750 + $0x8] sm:$0xff]
    %v5753 = vld [vmem:[%s5750 + $0x10] sm:$0xff]
    %v5754 = vld [vmem:[%s5750 + $0x18] sm:$0xff]
    %5755 = vmatprep.subr.mxu0 %v164
    %5756 = vmatpush1.msra.mxu0 %v163
    %5757 = vmatprep.subr.mxu0 %v168
    %5758 = vmatpush1.msra.mxu0 %v167
    %5759 = vmatprep.subr.mxu0 %v172
    %5760 = vmatpush1.msra.mxu0 %v171
    %5761 = vmatprep.subr.mxu0 %v176
    %5762 = vmatpush1.msra.mxu0 %v175
    %5763 = vmatprep.subr.mxu0 %v180
    %5764 = vmatpush1.msra.mxu0 %v179
    %5765 = vmatprep.subr.mxu0 %v184
    %5766 = vmatpush1.msra.mxu0 %v183
    %5767 = vmatprep.subr.mxu0 %v188
    %5768 = vmatpush1.msra.mxu0 %v187
    %5769 = vmatprep.subr.mxu0 %v192
    %5770 = vmatpush1.msra.mxu0 %v191
    %5771 = vmatprep.subr.mxu0 %v196
    %5772 = vmatpush1.msra.mxu0 %v195
    %5773 = vmatprep.subr.mxu0 %v200
    %5774 = vmatpush1.msra.mxu0 %v199
    %5775 = vmatprep.subr.mxu0 %v204
    %5776 = vmatpush1.msra.mxu0 %v203
    %5777 = vmatprep.subr.mxu0 %v208
    %5778 = vmatpush1.msra.mxu0 %v207
    %5779 = vmatprep.subr.mxu0 %v212
    %5780 = vmatpush1.msra.mxu0 %v211
    %5781 = vmatprep.subr.mxu0 %v216
    %5782 = vmatpush1.msra.mxu0 %v215
    %5783 = vmatprep.subr.mxu0 %v220
    %5784 = vmatpush1.msra.mxu0 %v219
    %5785 = vmatprep.subr.mxu0 %v224
    %5786 = vmatpush1.msra.mxu0 %v223
    %5787 = vmatprep.subr.mxu0 0.0
    %5788 = vmatpush1.msra.mxu0 0.0
    %5789 = vmatprep.subr.mxu0 0.0
    %5790 = vmatpush1.msra.mxu0 0.0
    %5791 = vmatprep.subr.mxu0 0.0
    %5792 = vmatpush1.msra.mxu0 0.0
    %5793 = vmatprep.subr.mxu0 0.0
    %5794 = vmatpush1.msra.mxu0 0.0
    %5795 = vmatprep.subr.mxu0 0.0
    %5796 = vmatpush1.msra.mxu0 0.0
    %5797 = vmatprep.subr.mxu0 0.0
    %5798 = vmatpush1.msra.mxu0 0.0
    %5799 = vmatprep.subr.mxu0 0.0
    %5800 = vmatpush1.msra.mxu0 0.0
    %5801 = vmatprep.subr.mxu0 0.0
    %5802 = vmatpush1.msra.mxu0 0.0
    %5803 = vmatprep.subr.mxu0 0.0
    %5804 = vmatpush1.msra.mxu0 0.0
    %5805 = vmatprep.subr.mxu0 0.0
    %5806 = vmatpush1.msra.mxu0 0.0
    %5807 = vmatprep.subr.mxu0 0.0
    %5808 = vmatpush1.msra.mxu0 0.0
    %5809 = vmatprep.subr.mxu0 0.0
    %5810 = vmatpush1.msra.mxu0 0.0
    %5811 = vmatprep.subr.mxu0 0.0
    %5812 = vmatpush1.msra.mxu0 0.0
    %5813 = vmatprep.subr.mxu0 0.0
    %5814 = vmatpush1.msra.mxu0 0.0
    %5815 = vmatprep.subr.mxu0 0.0
    %5816 = vmatpush1.msra.mxu0 0.0
    %5817 = vmatprep.subr.mxu0 0.0
    %5818 = vmatpush1.msra.mxu0 0.0
    %5819 = vmatprep.mubr.f32.mxu0 0.0
    %5820 = vmatmul.mubr.f32.gmra.mrb[0].mxu0 %v5747
    %v5821 = vpop.f32.mrb[0].mxu0
    %v5822 = vadd.f32 0.0, %v5821
    %v5823 = vpop.f32.mrb[0].mxu0
    %v5824 = vadd.f32 0.0, %v5823
    %5825 = vdwg.mxu0
    %5826 = vmatprep.subr.mxu0 %v166
    %5827 = vmatpush1.msra.mxu0 %v165
    %5828 = vmatprep.subr.mxu0 %v170
    %5829 = vmatpush1.msra.mxu0 %v169
    %5830 = vmatprep.subr.mxu0 %v174
    %5831 = vmatpush1.msra.mxu0 %v173
    %5832 = vmatprep.subr.mxu0 %v178
    %5833 = vmatpush1.msra.mxu0 %v177
    %5834 = vmatprep.subr.mxu0 %v182
    %5835 = vmatpush1.msra.mxu0 %v181
    %5836 = vmatprep.subr.mxu0 %v186
    %5837 = vmatpush1.msra.mxu0 %v185
    %5838 = vmatprep.subr.mxu0 %v190
    %5839 = vmatpush1.msra.mxu0 %v189
    %5840 = vmatprep.subr.mxu0 %v194
    %5841 = vmatpush1.msra.mxu0 %v193
    %5842 = vmatprep.subr.mxu0 %v198
    %5843 = vmatpush1.msra.mxu0 %v197
    %5844 = vmatprep.subr.mxu0 %v202
    %5845 = vmatpush1.msra.mxu0 %v201
    %5846 = vmatprep.subr.mxu0 %v206
    %5847 = vmatpush1.msra.mxu0 %v205
    %5848 = vmatprep.subr.mxu0 %v210
    %5849 = vmatpush1.msra.mxu0 %v209
    %5850 = vmatprep.subr.mxu0 %v214
    %5851 = vmatpush1.msra.mxu0 %v213
    %5852 = vmatprep.subr.mxu0 %v218
    %5853 = vmatpush1.msra.mxu0 %v217
    %5854 = vmatprep.subr.mxu0 %v222
    %5855 = vmatpush1.msra.mxu0 %v221
    %5856 = vmatprep.subr.mxu0 %v226
    %5857 = vmatpush1.msra.mxu0 %v225
    %5858 = vmatprep.subr.mxu0 0.0
    %5859 = vmatpush1.msra.mxu0 0.0
    %5860 = vmatprep.subr.mxu0 0.0
    %5861 = vmatpush1.msra.mxu0 0.0
    %5862 = vmatprep.subr.mxu0 0.0
    %5863 = vmatpush1.msra.mxu0 0.0
    %5864 = vmatprep.subr.mxu0 0.0
    %5865 = vmatpush1.msra.mxu0 0.0
    %5866 = vmatprep.subr.mxu0 0.0
    %5867 = vmatpush1.msra.mxu0 0.0
    %5868 = vmatprep.subr.mxu0 0.0
    %5869 = vmatpush1.msra.mxu0 0.0
    %5870 = vmatprep.subr.mxu0 0.0
    %5871 = vmatpush1.msra.mxu0 0.0
    %5872 = vmatprep.subr.mxu0 0.0
    %5873 = vmatpush1.msra.mxu0 0.0
    %5874 = vmatprep.subr.mxu0 0.0
    %5875 = vmatpush1.msra.mxu0 0.0
    %5876 = vmatprep.subr.mxu0 0.0
    %5877 = vmatpush1.msra.mxu0 0.0
    %5878 = vmatprep.subr.mxu0 0.0
    %5879 = vmatpush1.msra.mxu0 0.0
    %5880 = vmatprep.subr.mxu0 0.0
    %5881 = vmatpush1.msra.mxu0 0.0
    %5882 = vmatprep.subr.mxu0 0.0
    %5883 = vmatpush1.msra.mxu0 0.0
    %5884 = vmatprep.subr.mxu0 0.0
    %5885 = vmatpush1.msra.mxu0 0.0
    %5886 = vmatprep.subr.mxu0 0.0
    %5887 = vmatpush1.msra.mxu0 0.0
    %5888 = vmatprep.subr.mxu0 0.0
    %5889 = vmatpush1.msra.mxu0 0.0
    %5890 = vmatprep.mubr.f32.mxu0 0.0
    %5891 = vmatmul.mubr.f32.gmra.mrb[0].mxu0 %v5747
    %v5892 = vpop.f32.mrb[0].mxu0
    %v5893 = vadd.f32 0.0, %v5892
    %v5894 = vpop.f32.mrb[0].mxu0
    %v5895 = vadd.f32 0.0, %v5894
    %5896 = vdwg.mxu0
    %v5897 = vadd.f32 %v5751, %v5822
    %v5898 = vadd.f32 %v5752, %v5824
    %v5899 = vadd.f32 %v5753, %v5893
    %v5900 = vadd.f32 %v5754, %v5895
    %v5901 = vxor.u32 %v5897, 2147483648
    %v5902 = vmul.f32 %v5901, 1.442695
    %v5903 = vpow.pop %v5902
    %v5904 = vadd.f32 %v5903, 1.0
    %v5905 = vrcp.pop %v5904
    %v5906 = vmul.f32 1.0, %v5905
    %v5907 = vxor.u32 %v5898, 2147483648
    %v5908 = vmul.f32 %v5907, 1.442695
    %v5909 = vpow.pop %v5908
    %v5910 = vadd.f32 %v5909, 1.0
    %v5911 = vrcp.pop %v5910
    %v5912 = vmul.f32 1.0, %v5911
    %v5913 = vtanh.pop %v5899
    %v5914 = vxor.u32 %v5900, 2147483648
    %v5915 = vmul.f32 %v5914, 1.442695
    %v5916 = vpow.pop %v5915
    %v5917 = vadd.f32 %v5916, 1.0
    %v5918 = vrcp.pop %v5917
    %v5919 = vmul.f32 1.0, %v5918
    %v5920 = vmul.f32 %v5912, %v5748
    %v5921 = vmul.f32 %v5906, %v5913
    %v5922 = vadd.f32 %v5920, %v5921
    %v5923 = vtanh.pop %v5922
    %v5924 = vmul.f32 %v5919, %v5923
    %5925 = vmatprep.subr.mxu0 0.0
    %5926 = vmatpush1.msra.mxu0 %v227
    %5927 = vmatprep.subr.mxu0 0.0
    %5928 = vmatpush1.msra.mxu0 %v228
    %5929 = vmatprep.subr.mxu0 0.0
    %5930 = vmatpush1.msra.mxu0 %v229
    %5931 = vmatprep.subr.mxu0 0.0
    %5932 = vmatpush1.msra.mxu0 %v230
    %5933 = vmatprep.subr.mxu0 0.0
    %5934 = vmatpush1.msra.mxu0 %v231
    %5935 = vmatprep.subr.mxu0 0.0
    %5936 = vmatpush1.msra.mxu0 %v232
    %5937 = vmatprep.subr.mxu0 0.0
    %5938 = vmatpush1.msra.mxu0 %v233
    %5939 = vmatprep.subr.mxu0 0.0
    %5940 = vmatpush1.msra.mxu0 %v234
    %5941 = vmatprep.subr.mxu0 0.0
    %5942 = vmatpush1.msra.mxu0 %v235
    %5943 = vmatprep.subr.mxu0 0.0
    %5944 = vmatpush1.msra.mxu0 %v236
    %5945 = vmatprep.subr.mxu0 0.0
    %5946 = vmatpush1.msra.mxu0 %v237
    %5947 = vmatprep.subr.mxu0 0.0
    %5948 = vmatpush1.msra.mxu0 %v238
    %5949 = vmatprep.subr.mxu0 0.0
    %5950 = vmatpush1.msra.mxu0 %v239
    %5951 = vmatprep.subr.mxu0 0.0
    %5952 = vmatpush1.msra.mxu0 %v240
    %5953 = vmatprep.subr.mxu0 0.0
    %5954 = vmatpush1.msra.mxu0 %v241
    %5955 = vmatprep.subr.mxu0 0.0
    %5956 = vmatpush1.msra.mxu0 %v242
    %5957 = vmatprep.subr.mxu0 0.0
    %5958 = vmatpush1.msra.mxu0 0.0
    %5959 = vmatprep.subr.mxu0 0.0
    %5960 = vmatpush1.msra.mxu0 0.0
    %5961 = vmatprep.subr.mxu0 0.0
    %5962 = vmatpush1.msra.mxu0 0.0
    %5963 = vmatprep.subr.mxu0 0.0
    %5964 = vmatpush1.msra.mxu0 0.0
    %5965 = vmatprep.subr.mxu0 0.0
    %5966 = vmatpush1.msra.mxu0 0.0
    %5967 = vmatprep.subr.mxu0 0.0
    %5968 = vmatpush1.msra.mxu0 0.0
    %5969 = vmatprep.subr.mxu0 0.0
    %5970 = vmatpush1.msra.mxu0 0.0
    %5971 = vmatprep.subr.mxu0 0.0
    %5972 = vmatpush1.msra.mxu0 0.0
    %5973 = vmatprep.subr.mxu0 0.0
    %5974 = vmatpush1.msra.mxu0 0.0
    %5975 = vmatprep.subr.mxu0 0.0
    %5976 = vmatpush1.msra.mxu0 0.0
    %5977 = vmatprep.subr.mxu0 0.0
    %5978 = vmatpush1.msra.mxu0 0.0
    %5979 = vmatprep.subr.mxu0 0.0
    %5980 = vmatpush1.msra.mxu0 0.0
    %5981 = vmatprep.subr.mxu0 0.0
    %5982 = vmatpush1.msra.mxu0 0.0
    %5983 = vmatprep.subr.mxu0 0.0
    %5984 = vmatpush1.msra.mxu0 0.0
    %5985 = vmatprep.subr.mxu0 0.0
    %5986 = vmatpush1.msra.mxu0 0.0
    %5987 = vmatprep.subr.mxu0 0.0
    %5988 = vmatpush1.msra.mxu0 0.0
    %5989 = vmatprep.mubr.f32.mxu0 0.0
    %5990 = vmatmul.mubr.f32.gmra.mrb[0].mxu0 %v5924
    %v5991 = vpop.f32.mrb[0].mxu0
    %v5992 = vadd.f32 0.0, %v5991
    %v5993 = vpop.f32.mrb[0].mxu0
    %5994 = vdwg.mxu0
    %v5996 = vcombine.high %v5992, %v5992
    %v5998 = vunpack.c.l.s4 1966171168
    %v5999 = vunpack.c.0.s8 %v5998
    %v6000 = vlaneseq
    %v6001 = vshrl.u32 %v6000, 7
    %v6002 = vsub.s32 %v5999, %v6001
    %v6003 = vrot.slane %v5992, %v6002
    %v6005 = vunpack.c.l.s4 1966171168
    %v6006 = vunpack.c.0.s8 %v6005
    %v6007 = vlaneseq
    %v6008 = vshrl.u32 %v6007, 7
    %v6009 = vsub.s32 %v6006, %v6008
    %v6010 = vrot.slane %v5996, %v6009
    %v6011 = vcombine.high %v6003, %v6003
    %v6012 = vcombine.high %v6010, %v6010
    %v6014 = vunpack.c.l.s4 1966171168
    %v6015 = vunpack.c.0.s8 %v6014
    %v6016 = vlaneseq
    %v6017 = vshrl.u32 %v6016, 7
    %v6018 = vsub.s32 %v6015, %v6017
    %v6019 = vrot.slane %v6003, %v6018
    %v6021 = vunpack.c.l.s4 1966171168
    %v6022 = vunpack.c.0.s8 %v6021
    %v6023 = vlaneseq
    %v6024 = vshrl.u32 %v6023, 7
    %v6025 = vsub.s32 %v6022, %v6024
    %v6026 = vrot.slane %v6010, %v6025
    %v6028 = vunpack.c.l.s4 1966171168
    %v6029 = vunpack.c.0.s8 %v6028
    %v6030 = vlaneseq
    %v6031 = vshrl.u32 %v6030, 7
    %v6032 = vsub.s32 %v6029, %v6031
    %v6033 = vrot.slane %v6011, %v6032
    %v6035 = vunpack.c.l.s4 1966171168
    %v6036 = vunpack.c.0.s8 %v6035
    %v6037 = vlaneseq
    %v6038 = vshrl.u32 %v6037, 7
    %v6039 = vsub.s32 %v6036, %v6038
    %v6040 = vrot.slane %v6012, %v6039
    %v6041 = vcombine.high %v6019, %v6019
    %v6042 = vcombine.high %v6026, %v6026
    %v6043 = vcombine.high %v6033, %v6033
    %v6044 = vcombine.high %v6040, %v6040
    %v6045 = vlaneseq
    %v6046 = vshrl.u32 %v6045, 7
    %v6047 = vsub.s32 0, %v6046
    %v6048 = vrot.slane %v6019, %v6047
    %v6049 = vlaneseq
    %v6050 = vshrl.u32 %v6049, 7
    %v6051 = vsub.s32 0, %v6050
    %v6052 = vrot.slane %v6033, %v6051
    %v6053 = vlaneseq
    %v6054 = vshrl.u32 %v6053, 7
    %v6055 = vsub.s32 0, %v6054
    %v6056 = vrot.slane %v6041, %v6055
    %v6057 = vlaneseq
    %v6058 = vshrl.u32 %v6057, 7
    %v6059 = vsub.s32 0, %v6058
    %v6060 = vrot.slane %v6043, %v6059
    %v6061 = vlaneseq
    %v6062 = vshrl.u32 %v6061, 7
    %v6063 = vsub.s32 0, %v6062
    %v6064 = vrot.slane %v6026, %v6063
    %v6065 = vlaneseq
    %v6066 = vshrl.u32 %v6065, 7
    %v6067 = vsub.s32 0, %v6066
    %v6068 = vrot.slane %v6040, %v6067
    %v6069 = vlaneseq
    %v6070 = vshrl.u32 %v6069, 7
    %v6071 = vsub.s32 0, %v6070
    %v6072 = vrot.slane %v6042, %v6071
    %v6073 = vlaneseq
    %v6074 = vshrl.u32 %v6073, 7
    %v6075 = vsub.s32 0, %v6074
    %v6076 = vrot.slane %v6044, %v6075
    %v6085 = vmul.f32 %v154, %v6048
    %v6086 = vmul.f32 %v155, %v6052
    %v6087 = vmul.f32 %v156, %v6056
    %v6088 = vmul.f32 %v157, %v6060
    %v6089 = vmul.f32 %v158, %v6064
    %v6090 = vmul.f32 %v159, %v6068
    %v6091 = vmul.f32 %v160, %v6072
    %v6092 = vmul.f32 %v161, %v6076
    %v6093 = vsel %vm653, %v6085, 0.0
    %6094 = vadd.xlane.f32.xlu0 %v6093
    %v6095 = vpop.xlane.xlu0 %6094
    %v6096 = vsel %vm653, %v6086, 0.0
    %6097 = vadd.xlane.f32.xlu0 %v6096
    %v6098 = vpop.xlane.xlu0 %6097
    %v6099 = vsel %vm653, %v6087, 0.0
    %6100 = vadd.xlane.f32.xlu0 %v6099
    %v6101 = vpop.xlane.xlu0 %6100
    %v6102 = vsel %vm653, %v6088, 0.0
    %6103 = vadd.xlane.f32.xlu0 %v6102
    %v6104 = vpop.xlane.xlu0 %6103
    %v6105 = vsel %vm653, %v6089, 0.0
    %6106 = vadd.xlane.f32.xlu0 %v6105
    %v6107 = vpop.xlane.xlu0 %6106
    %v6108 = vsel %vm653, %v6090, 0.0
    %6109 = vadd.xlane.f32.xlu0 %v6108
    %v6110 = vpop.xlane.xlu0 %6109
    %v6111 = vsel %vm653, %v6091, 0.0
    %6112 = vadd.xlane.f32.xlu0 %v6111
    %v6113 = vpop.xlane.xlu0 %6112
    %v6114 = vsel %vm653, %v6092, 0.0
    %6115 = vadd.xlane.f32.xlu0 %v6114
    %v6116 = vpop.xlane.xlu0 %6115
    %v6117 = vadd.f32 %v6095, %v685
    %v6118 = vadd.f32 %v6098, %v692
    %v6119 = vadd.f32 %v6101, %v699
    %v6120 = vadd.f32 %v6104, %v706
    %v6121 = vadd.f32 %v6107, %v713
    %v6122 = vadd.f32 %v6110, %v720
    %v6123 = vadd.f32 %v6113, %v727
    %v6124 = vadd.f32 %v6116, %v734
    %6133 = vset.pattern.permute.xlu0 0
    %6134 = vperm.xlu0 %6133, %v6117
    %v6135 = vpop.permute.xlu0 %6134
    %6136 = vset.pattern.permute.xlu0 0
    %6137 = vperm.xlu0 %6136, %v6118
    %v6138 = vpop.permute.xlu0 %6137
    %6139 = vset.pattern.permute.xlu0 0
    %6140 = vperm.xlu0 %6139, %v6119
    %v6141 = vpop.permute.xlu0 %6140
    %6142 = vset.pattern.permute.xlu0 0
    %6143 = vperm.xlu0 %6142, %v6120
    %v6144 = vpop.permute.xlu0 %6143
    %6145 = vset.pattern.permute.xlu0 0
    %6146 = vperm.xlu0 %6145, %v6121
    %v6147 = vpop.permute.xlu0 %6146
    %6148 = vset.pattern.permute.xlu0 0
    %6149 = vperm.xlu0 %6148, %v6122
    %v6150 = vpop.permute.xlu0 %6149
    %6151 = vset.pattern.permute.xlu0 0
    %6152 = vperm.xlu0 %6151, %v6123
    %v6153 = vpop.permute.xlu0 %6152
    %6154 = vset.pattern.permute.xlu0 0
    %6155 = vperm.xlu0 %6154, %v6124
    %v6156 = vpop.permute.xlu0 %6155
    %v6157 = vlaneseq
    %v6158 = vshrl.u32 %v6157, 7
    %v6159 = vsub.s32 %v784, %v6158
    %v6160 = vrot.slane %v6135, %v6159
    %v6161 = vlaneseq
    %v6162 = vshrl.u32 %v6161, 7
    %v6163 = vsub.s32 %v784, %v6162
    %v6164 = vrot.slane %v6138, %v6163
    %v6165 = vlaneseq
    %v6166 = vshrl.u32 %v6165, 7
    %v6167 = vsub.s32 %v784, %v6166
    %v6168 = vrot.slane %v6141, %v6167
    %v6169 = vlaneseq
    %v6170 = vshrl.u32 %v6169, 7
    %v6171 = vsub.s32 %v784, %v6170
    %v6172 = vrot.slane %v6144, %v6171
    %v6173 = vlaneseq
    %v6174 = vshrl.u32 %v6173, 7
    %v6175 = vsub.s32 %v784, %v6174
    %v6176 = vrot.slane %v6147, %v6175
    %v6177 = vlaneseq
    %v6178 = vshrl.u32 %v6177, 7
    %v6179 = vsub.s32 %v784, %v6178
    %v6180 = vrot.slane %v6150, %v6179
    %v6181 = vlaneseq
    %v6182 = vshrl.u32 %v6181, 7
    %v6183 = vsub.s32 %v784, %v6182
    %v6184 = vrot.slane %v6153, %v6183
    %v6185 = vlaneseq
    %v6186 = vshrl.u32 %v6185, 7
    %v6187 = vsub.s32 %v784, %v6186
    %v6188 = vrot.slane %v6156, %v6187
    %v6189 = vsel %vm817, %v6164, %v6160
    %v6190 = vsel %vm819, %v6168, %v6189
    %v6191 = vsel %vm821, %v6172, %v6190
    %v6192 = vsel %vm823, %v6176, %v6191
    %v6193 = vsel %vm825, %v6180, %v6192
    %v6194 = vsel %vm827, %v6184, %v6193
    %v6195 = vsel %vm829, %v6188, %v6194
    %v6197 = vsel %vm832, %v6195, -inf
    %6198 = vmax.xlane.f32.xlu0 %v6197
    %v6199 = vpop.xlane.xlu0 %6198
    %v6201 = vlaneseq
    %v6202 = vshrl.u32 %v6201, 7
    %v6203 = vsub.s32 0, %v6202
    %v6204 = vrot.slane %v6199, %v6203
    %v6205 = vlaneseq
    %v6206 = vshrl.u32 %v6205, 7
    %v6207 = vsub.s32 1, %v6206
    %v6208 = vrot.slane %v6199, %v6207
    %v6209 = vlaneseq
    %v6210 = vshrl.u32 %v6209, 7
    %v6211 = vsub.s32 2, %v6210
    %v6212 = vrot.slane %v6199, %v6211
    %v6213 = vlaneseq
    %v6214 = vshrl.u32 %v6213, 7
    %v6215 = vsub.s32 3, %v6214
    %v6216 = vrot.slane %v6199, %v6215
    %v6217 = vlaneseq
    %v6218 = vshrl.u32 %v6217, 7
    %v6219 = vsub.s32 4, %v6218
    %v6220 = vrot.slane %v6199, %v6219
    %v6221 = vlaneseq
    %v6222 = vshrl.u32 %v6221, 7
    %v6223 = vsub.s32 5, %v6222
    %v6224 = vrot.slane %v6199, %v6223
    %v6225 = vlaneseq
    %v6226 = vshrl.u32 %v6225, 7
    %v6227 = vsub.s32 6, %v6226
    %v6228 = vrot.slane %v6199, %v6227
    %v6229 = vlaneseq
    %v6230 = vshrl.u32 %v6229, 7
    %v6231 = vsub.s32 7, %v6230
    %v6232 = vrot.slane %v6199, %v6231
    %v6241 = vsub.f32 %v6117, %v6204
    %v6242 = vsub.f32 %v6118, %v6208
    %v6243 = vsub.f32 %v6119, %v6212
    %v6244 = vsub.f32 %v6120, %v6216
    %v6245 = vsub.f32 %v6121, %v6220
    %v6246 = vsub.f32 %v6122, %v6224
    %v6247 = vsub.f32 %v6123, %v6228
    %v6248 = vsub.f32 %v6124, %v6232
    %v6249 = vmul.f32 %v6241, 1.442695
    %v6250 = vpow.pop %v6249
    %v6251 = vmul.f32 %v6242, 1.442695
    %v6252 = vpow.pop %v6251
    %v6253 = vmul.f32 %v6243, 1.442695
    %v6254 = vpow.pop %v6253
    %v6255 = vmul.f32 %v6244, 1.442695
    %v6256 = vpow.pop %v6255
    %v6257 = vmul.f32 %v6245, 1.442695
    %v6258 = vpow.pop %v6257
    %v6259 = vmul.f32 %v6246, 1.442695
    %v6260 = vpow.pop %v6259
    %v6261 = vmul.f32 %v6247, 1.442695
    %v6262 = vpow.pop %v6261
    %v6263 = vmul.f32 %v6248, 1.442695
    %v6264 = vpow.pop %v6263
    %6273 = vset.pattern.permute.xlu0 0
    %6274 = vperm.xlu0 %6273, %v6250
    %v6275 = vpop.permute.xlu0 %6274
    %6276 = vset.pattern.permute.xlu0 0
    %6277 = vperm.xlu0 %6276, %v6252
    %v6278 = vpop.permute.xlu0 %6277
    %6279 = vset.pattern.permute.xlu0 0
    %6280 = vperm.xlu0 %6279, %v6254
    %v6281 = vpop.permute.xlu0 %6280
    %6282 = vset.pattern.permute.xlu0 0
    %6283 = vperm.xlu0 %6282, %v6256
    %v6284 = vpop.permute.xlu0 %6283
    %6285 = vset.pattern.permute.xlu0 0
    %6286 = vperm.xlu0 %6285, %v6258
    %v6287 = vpop.permute.xlu0 %6286
    %6288 = vset.pattern.permute.xlu0 0
    %6289 = vperm.xlu0 %6288, %v6260
    %v6290 = vpop.permute.xlu0 %6289
    %6291 = vset.pattern.permute.xlu0 0
    %6292 = vperm.xlu0 %6291, %v6262
    %v6293 = vpop.permute.xlu0 %6292
    %6294 = vset.pattern.permute.xlu0 0
    %6295 = vperm.xlu0 %6294, %v6264
    %v6296 = vpop.permute.xlu0 %6295
    %v6297 = vlaneseq
    %v6298 = vshrl.u32 %v6297, 7
    %v6299 = vsub.s32 %v784, %v6298
    %v6300 = vrot.slane %v6275, %v6299
    %v6301 = vlaneseq
    %v6302 = vshrl.u32 %v6301, 7
    %v6303 = vsub.s32 %v784, %v6302
    %v6304 = vrot.slane %v6278, %v6303
    %v6305 = vlaneseq
    %v6306 = vshrl.u32 %v6305, 7
    %v6307 = vsub.s32 %v784, %v6306
    %v6308 = vrot.slane %v6281, %v6307
    %v6309 = vlaneseq
    %v6310 = vshrl.u32 %v6309, 7
    %v6311 = vsub.s32 %v784, %v6310
    %v6312 = vrot.slane %v6284, %v6311
    %v6313 = vlaneseq
    %v6314 = vshrl.u32 %v6313, 7
    %v6315 = vsub.s32 %v784, %v6314
    %v6316 = vrot.slane %v6287, %v6315
    %v6317 = vlaneseq
    %v6318 = vshrl.u32 %v6317, 7
    %v6319 = vsub.s32 %v784, %v6318
    %v6320 = vrot.slane %v6290, %v6319
    %v6321 = vlaneseq
    %v6322 = vshrl.u32 %v6321, 7
    %v6323 = vsub.s32 %v784, %v6322
    %v6324 = vrot.slane %v6293, %v6323
    %v6325 = vlaneseq
    %v6326 = vshrl.u32 %v6325, 7
    %v6327 = vsub.s32 %v784, %v6326
    %v6328 = vrot.slane %v6296, %v6327
    %v6329 = vsel %vm817, %v6304, %v6300
    %v6330 = vsel %vm819, %v6308, %v6329
    %v6331 = vsel %vm821, %v6312, %v6330
    %v6332 = vsel %vm823, %v6316, %v6331
    %v6333 = vsel %vm825, %v6320, %v6332
    %v6334 = vsel %vm827, %v6324, %v6333
    %v6335 = vsel %vm829, %v6328, %v6334
    %v6337 = vsel %vm832, %v6335, 0.0
    %6338 = vadd.xlane.f32.xlu0 %v6337
    %v6339 = vpop.xlane.xlu0 %6338
    %v6341 = vlaneseq
    %v6342 = vshrl.u32 %v6341, 7
    %v6343 = vsub.s32 0, %v6342
    %v6344 = vrot.slane %v6339, %v6343
    %v6345 = vlaneseq
    %v6346 = vshrl.u32 %v6345, 7
    %v6347 = vsub.s32 1, %v6346
    %v6348 = vrot.slane %v6339, %v6347
    %v6349 = vlaneseq
    %v6350 = vshrl.u32 %v6349, 7
    %v6351 = vsub.s32 2, %v6350
    %v6352 = vrot.slane %v6339, %v6351
    %v6353 = vlaneseq
    %v6354 = vshrl.u32 %v6353, 7
    %v6355 = vsub.s32 3, %v6354
    %v6356 = vrot.slane %v6339, %v6355
    %v6357 = vlaneseq
    %v6358 = vshrl.u32 %v6357, 7
    %v6359 = vsub.s32 4, %v6358
    %v6360 = vrot.slane %v6339, %v6359
    %v6361 = vlaneseq
    %v6362 = vshrl.u32 %v6361, 7
    %v6363 = vsub.s32 5, %v6362
    %v6364 = vrot.slane %v6339, %v6363
    %v6365 = vlaneseq
    %v6366 = vshrl.u32 %v6365, 7
    %v6367 = vsub.s32 6, %v6366
    %v6368 = vrot.slane %v6339, %v6367
    %v6369 = vlaneseq
    %v6370 = vshrl.u32 %v6369, 7
    %v6371 = vsub.s32 7, %v6370
    %v6372 = vrot.slane %v6339, %v6371
    %v6381 = vrcp.pop %v6344
    %v6382 = vmul.f32 %v6250, %v6381
    %v6383 = vrcp.pop %v6348
    %v6384 = vmul.f32 %v6252, %v6383
    %v6385 = vrcp.pop %v6352
    %v6386 = vmul.f32 %v6254, %v6385
    %v6387 = vrcp.pop %v6356
    %v6388 = vmul.f32 %v6256, %v6387
    %v6389 = vrcp.pop %v6360
    %v6390 = vmul.f32 %v6258, %v6389
    %v6391 = vrcp.pop %v6364
    %v6392 = vmul.f32 %v6260, %v6391
    %v6393 = vrcp.pop %v6368
    %v6394 = vmul.f32 %v6262, %v6393
    %v6395 = vrcp.pop %v6372
    %v6396 = vmul.f32 %v6264, %v6395
    %6398 = vset.pattern.permute.xlu0 0
    %6399 = vperm.xlu0 %6398, %v6382
    %v6400 = vpop.permute.xlu0 %6399
    %6403 = vset.pattern.permute.xlu0 0
    %6404 = vperm.xlu0 %6403, %v6384
    %v6405 = vpop.permute.xlu0 %6404
    %6408 = vset.pattern.permute.xlu0 0
    %6409 = vperm.xlu0 %6408, %v6386
    %v6410 = vpop.permute.xlu0 %6409
    %6413 = vset.pattern.permute.xlu0 0
    %6414 = vperm.xlu0 %6413, %v6388
    %v6415 = vpop.permute.xlu0 %6414
    %6418 = vset.pattern.permute.xlu0 0
    %6419 = vperm.xlu0 %6418, %v6390
    %v6420 = vpop.permute.xlu0 %6419
    %6423 = vset.pattern.permute.xlu0 0
    %6424 = vperm.xlu0 %6423, %v6392
    %v6425 = vpop.permute.xlu0 %6424
    %6428 = vset.pattern.permute.xlu0 0
    %6429 = vperm.xlu0 %6428, %v6394
    %v6430 = vpop.permute.xlu0 %6429
    %6433 = vset.pattern.permute.xlu0 0
    %6434 = vperm.xlu0 %6433, %v6396
    %v6435 = vpop.permute.xlu0 %6434
    %v6437 = vmul.f32 %v6400, %v154
    %v6438 = vmul.f32 %v6405, %v155
    %v6439 = vmul.f32 %v6410, %v156
    %v6440 = vmul.f32 %v6415, %v157
    %v6441 = vmul.f32 %v6420, %v158
    %v6442 = vmul.f32 %v6425, %v159
    %v6443 = vmul.f32 %v6430, %v160
    %v6444 = vmul.f32 %v6435, %v161
    %v6445 = vsel %vm653, %v6437, 0.0
    %v6446 = vrot.slane %v6445, 4
    %v6447 = vadd.f32 %v6445, %v6446
    %v6448 = vrot.slane %v6447, 2
    %v6449 = vadd.f32 %v6447, %v6448
    %v6450 = vrot.slane %v6449, 1
    %v6451 = vadd.f32 %v6449, %v6450
    %v6452 = vsel %vm653, %v6438, 0.0
    %v6453 = vrot.slane %v6452, 4
    %v6454 = vadd.f32 %v6452, %v6453
    %v6455 = vrot.slane %v6454, 2
    %v6456 = vadd.f32 %v6454, %v6455
    %v6457 = vrot.slane %v6456, 1
    %v6458 = vadd.f32 %v6456, %v6457
    %v6459 = vsel %vm653, %v6439, 0.0
    %v6460 = vrot.slane %v6459, 4
    %v6461 = vadd.f32 %v6459, %v6460
    %v6462 = vrot.slane %v6461, 2
    %v6463 = vadd.f32 %v6461, %v6462
    %v6464 = vrot.slane %v6463, 1
    %v6465 = vadd.f32 %v6463, %v6464
    %v6466 = vsel %vm653, %v6440, 0.0
    %v6467 = vrot.slane %v6466, 4
    %v6468 = vadd.f32 %v6466, %v6467
    %v6469 = vrot.slane %v6468, 2
    %v6470 = vadd.f32 %v6468, %v6469
    %v6471 = vrot.slane %v6470, 1
    %v6472 = vadd.f32 %v6470, %v6471
    %v6473 = vsel %vm653, %v6441, 0.0
    %v6474 = vrot.slane %v6473, 4
    %v6475 = vadd.f32 %v6473, %v6474
    %v6476 = vrot.slane %v6475, 2
    %v6477 = vadd.f32 %v6475, %v6476
    %v6478 = vrot.slane %v6477, 1
    %v6479 = vadd.f32 %v6477, %v6478
    %v6480 = vsel %vm653, %v6442, 0.0
    %v6481 = vrot.slane %v6480, 4
    %v6482 = vadd.f32 %v6480, %v6481
    %v6483 = vrot.slane %v6482, 2
    %v6484 = vadd.f32 %v6482, %v6483
    %v6485 = vrot.slane %v6484, 1
    %v6486 = vadd.f32 %v6484, %v6485
    %v6487 = vsel %vm653, %v6443, 0.0
    %v6488 = vrot.slane %v6487, 4
    %v6489 = vadd.f32 %v6487, %v6488
    %v6490 = vrot.slane %v6489, 2
    %v6491 = vadd.f32 %v6489, %v6490
    %v6492 = vrot.slane %v6491, 1
    %v6493 = vadd.f32 %v6491, %v6492
    %v6494 = vsel %vm653, %v6444, 0.0
    %v6495 = vrot.slane %v6494, 4
    %v6496 = vadd.f32 %v6494, %v6495
    %v6497 = vrot.slane %v6496, 2
    %v6498 = vadd.f32 %v6496, %v6497
    %v6499 = vrot.slane %v6498, 1
    %v6500 = vadd.f32 %v6498, %v6499
    %6501 = vmatprep.subr.mxu0 0.0
    %6502 = vmatpush1.msra.mxu0 %v259
    %6503 = vmatprep.subr.mxu0 0.0
    %6504 = vmatpush1.msra.mxu0 %v260
    %6505 = vmatprep.subr.mxu0 0.0
    %6506 = vmatpush1.msra.mxu0 %v261
    %6507 = vmatprep.subr.mxu0 0.0
    %6508 = vmatpush1.msra.mxu0 %v262
    %6509 = vmatprep.subr.mxu0 0.0
    %6510 = vmatpush1.msra.mxu0 %v263
    %6511 = vmatprep.subr.mxu0 0.0
    %6512 = vmatpush1.msra.mxu0 %v264
    %6513 = vmatprep.subr.mxu0 0.0
    %6514 = vmatpush1.msra.mxu0 %v265
    %6515 = vmatprep.subr.mxu0 0.0
    %6516 = vmatpush1.msra.mxu0 %v266
    %6517 = vmatprep.subr.mxu0 0.0
    %6518 = vmatpush1.msra.mxu0 %v267
    %6519 = vmatprep.subr.mxu0 0.0
    %6520 = vmatpush1.msra.mxu0 %v268
    %6521 = vmatprep.subr.mxu0 0.0
    %6522 = vmatpush1.msra.mxu0 %v269
    %6523 = vmatprep.subr.mxu0 0.0
    %6524 = vmatpush1.msra.mxu0 %v270
    %6525 = vmatprep.subr.mxu0 0.0
    %6526 = vmatpush1.msra.mxu0 %v271
    %6527 = vmatprep.subr.mxu0 0.0
    %6528 = vmatpush1.msra.mxu0 %v272
    %6529 = vmatprep.subr.mxu0 0.0
    %6530 = vmatpush1.msra.mxu0 %v273
    %6531 = vmatprep.subr.mxu0 0.0
    %6532 = vmatpush1.msra.mxu0 %v274
    %6533 = vmatprep.subr.mxu0 0.0
    %6534 = vmatpush1.msra.mxu0 0.0
    %6535 = vmatprep.subr.mxu0 0.0
    %6536 = vmatpush1.msra.mxu0 0.0
    %6537 = vmatprep.subr.mxu0 0.0
    %6538 = vmatpush1.msra.mxu0 0.0
    %6539 = vmatprep.subr.mxu0 0.0
    %6540 = vmatpush1.msra.mxu0 0.0
    %6541 = vmatprep.subr.mxu0 0.0
    %6542 = vmatpush1.msra.mxu0 0.0
    %6543 = vmatprep.subr.mxu0 0.0
    %6544 = vmatpush1.msra.mxu0 0.0
    %6545 = vmatprep.subr.mxu0 0.0
    %6546 = vmatpush1.msra.mxu0 0.0
    %6547 = vmatprep.subr.mxu0 0.0
    %6548 = vmatpush1.msra.mxu0 0.0
    %6549 = vmatprep.subr.mxu0 0.0
    %6550 = vmatpush1.msra.mxu0 0.0
    %6551 = vmatprep.subr.mxu0 0.0
    %6552 = vmatpush1.msra.mxu0 0.0
    %6553 = vmatprep.subr.mxu0 0.0
    %6554 = vmatpush1.msra.mxu0 0.0
    %6555 = vmatprep.subr.mxu0 0.0
    %6556 = vmatpush1.msra.mxu0 0.0
    %6557 = vmatprep.subr.mxu0 0.0
    %6558 = vmatpush1.msra.mxu0 0.0
    %6559 = vmatprep.subr.mxu0 0.0
    %6560 = vmatpush1.msra.mxu0 0.0
    %6561 = vmatprep.subr.mxu0 0.0
    %6562 = vmatpush1.msra.mxu0 0.0
    %6563 = vmatprep.subr.mxu0 0.0
    %6564 = vmatpush1.msra.mxu0 0.0
    %6565 = vmatprep.mubr.f32.mxu0 0.0
    %6566 = vmatmul.mubr.f32.gmra.mrb[0].mxu0 %v5924
    %v6567 = vpop.f32.mrb[0].mxu0
    %v6568 = vadd.f32 0.0, %v6567
    %v6569 = vpop.f32.mrb[0].mxu0
    %6570 = vdwg.mxu0
    %v6579 = vsel %vm817, %v6458, %v6451
    %v6580 = vsel %vm819, %v6465, %v6579
    %v6581 = vsel %vm821, %v6472, %v6580
    %v6582 = vsel %vm823, %v6479, %v6581
    %v6583 = vsel %vm825, %v6486, %v6582
    %v6584 = vsel %vm827, %v6493, %v6583
    %v6585 = vsel %vm829, %v6500, %v6584
    %6587 = vmatprep.subr.mxu0 0.0
    %6588 = vmatpush1.msra.mxu0 %v243
    %6589 = vmatprep.subr.mxu0 0.0
    %6590 = vmatpush1.msra.mxu0 %v244
    %6591 = vmatprep.subr.mxu0 0.0
    %6592 = vmatpush1.msra.mxu0 %v245
    %6593 = vmatprep.subr.mxu0 0.0
    %6594 = vmatpush1.msra.mxu0 %v246
    %6595 = vmatprep.subr.mxu0 0.0
    %6596 = vmatpush1.msra.mxu0 %v247
    %6597 = vmatprep.subr.mxu0 0.0
    %6598 = vmatpush1.msra.mxu0 %v248
    %6599 = vmatprep.subr.mxu0 0.0
    %6600 = vmatpush1.msra.mxu0 %v249
    %6601 = vmatprep.subr.mxu0 0.0
    %6602 = vmatpush1.msra.mxu0 %v250
    %6603 = vmatprep.subr.mxu0 0.0
    %6604 = vmatpush1.msra.mxu0 %v251
    %6605 = vmatprep.subr.mxu0 0.0
    %6606 = vmatpush1.msra.mxu0 %v252
    %6607 = vmatprep.subr.mxu0 0.0
    %6608 = vmatpush1.msra.mxu0 %v253
    %6609 = vmatprep.subr.mxu0 0.0
    %6610 = vmatpush1.msra.mxu0 %v254
    %6611 = vmatprep.subr.mxu0 0.0
    %6612 = vmatpush1.msra.mxu0 %v255
    %6613 = vmatprep.subr.mxu0 0.0
    %6614 = vmatpush1.msra.mxu0 %v256
    %6615 = vmatprep.subr.mxu0 0.0
    %6616 = vmatpush1.msra.mxu0 %v257
    %6617 = vmatprep.subr.mxu0 0.0
    %6618 = vmatpush1.msra.mxu0 %v258
    %6619 = vmatprep.subr.mxu0 0.0
    %6620 = vmatpush1.msra.mxu0 0.0
    %6621 = vmatprep.subr.mxu0 0.0
    %6622 = vmatpush1.msra.mxu0 0.0
    %6623 = vmatprep.subr.mxu0 0.0
    %6624 = vmatpush1.msra.mxu0 0.0
    %6625 = vmatprep.subr.mxu0 0.0
    %6626 = vmatpush1.msra.mxu0 0.0
    %6627 = vmatprep.subr.mxu0 0.0
    %6628 = vmatpush1.msra.mxu0 0.0
    %6629 = vmatprep.subr.mxu0 0.0
    %6630 = vmatpush1.msra.mxu0 0.0
    %6631 = vmatprep.subr.mxu0 0.0
    %6632 = vmatpush1.msra.mxu0 0.0
    %6633 = vmatprep.subr.mxu0 0.0
    %6634 = vmatpush1.msra.mxu0 0.0
    %6635 = vmatprep.subr.mxu0 0.0
    %6636 = vmatpush1.msra.mxu0 0.0
    %6637 = vmatprep.subr.mxu0 0.0
    %6638 = vmatpush1.msra.mxu0 0.0
    %6639 = vmatprep.subr.mxu0 0.0
    %6640 = vmatpush1.msra.mxu0 0.0
    %6641 = vmatprep.subr.mxu0 0.0
    %6642 = vmatpush1.msra.mxu0 0.0
    %6643 = vmatprep.subr.mxu0 0.0
    %6644 = vmatpush1.msra.mxu0 0.0
    %6645 = vmatprep.subr.mxu0 0.0
    %6646 = vmatpush1.msra.mxu0 0.0
    %6647 = vmatprep.subr.mxu0 0.0
    %6648 = vmatpush1.msra.mxu0 0.0
    %6649 = vmatprep.subr.mxu0 0.0
    %6650 = vmatpush1.msra.mxu0 0.0
    %6651 = vmatprep.mubr.f32.mxu0 0.0
    %6652 = vmatmul.mubr.f32.gmra.mrb[0].mxu0 %v6585
    %v6653 = vpop.f32.mrb[0].mxu0
    %v6654 = vadd.f32 %v6568, %v6653
    %v6655 = vpop.f32.mrb[0].mxu0
    %6656 = vdwg.mxu0
    %v6657 = vtanh.pop %v6654
    %6658 = vmatprep.subr.mxu0 %v276
    %6659 = vmatpush1.msra.mxu0 %v275
    %6660 = vmatprep.subr.mxu0 %v278
    %6661 = vmatpush1.msra.mxu0 %v277
    %6662 = vmatprep.subr.mxu0 %v280
    %6663 = vmatpush1.msra.mxu0 %v279
    %6664 = vmatprep.subr.mxu0 %v282
    %6665 = vmatpush1.msra.mxu0 %v281
    %6666 = vmatprep.subr.mxu0 %v284
    %6667 = vmatpush1.msra.mxu0 %v283
    %6668 = vmatprep.subr.mxu0 %v286
    %6669 = vmatpush1.msra.mxu0 %v285
    %6670 = vmatprep.subr.mxu0 %v288
    %6671 = vmatpush1.msra.mxu0 %v287
    %6672 = vmatprep.subr.mxu0 %v290
    %6673 = vmatpush1.msra.mxu0 %v289
    %6674 = vmatprep.subr.mxu0 %v292
    %6675 = vmatpush1.msra.mxu0 %v291
    %6676 = vmatprep.subr.mxu0 %v294
    %6677 = vmatpush1.msra.mxu0 %v293
    %6678 = vmatprep.subr.mxu0 %v296
    %6679 = vmatpush1.msra.mxu0 %v295
    %6680 = vmatprep.subr.mxu0 %v298
    %6681 = vmatpush1.msra.mxu0 %v297
    %6682 = vmatprep.subr.mxu0 %v300
    %6683 = vmatpush1.msra.mxu0 %v299
    %6684 = vmatprep.subr.mxu0 %v302
    %6685 = vmatpush1.msra.mxu0 %v301
    %6686 = vmatprep.subr.mxu0 %v304
    %6687 = vmatpush1.msra.mxu0 %v303
    %6688 = vmatprep.subr.mxu0 %v306
    %6689 = vmatpush1.msra.mxu0 %v305
    %6690 = vmatprep.subr.mxu0 0.0
    %6691 = vmatpush1.msra.mxu0 0.0
    %6692 = vmatprep.subr.mxu0 0.0
    %6693 = vmatpush1.msra.mxu0 0.0
    %6694 = vmatprep.subr.mxu0 0.0
    %6695 = vmatpush1.msra.mxu0 0.0
    %6696 = vmatprep.subr.mxu0 0.0
    %6697 = vmatpush1.msra.mxu0 0.0
    %6698 = vmatprep.subr.mxu0 0.0
    %6699 = vmatpush1.msra.mxu0 0.0
    %6700 = vmatprep.subr.mxu0 0.0
    %6701 = vmatpush1.msra.mxu0 0.0
    %6702 = vmatprep.subr.mxu0 0.0
    %6703 = vmatpush1.msra.mxu0 0.0
    %6704 = vmatprep.subr.mxu0 0.0
    %6705 = vmatpush1.msra.mxu0 0.0
    %6706 = vmatprep.subr.mxu0 0.0
    %6707 = vmatpush1.msra.mxu0 0.0
    %6708 = vmatprep.subr.mxu0 0.0
    %6709 = vmatpush1.msra.mxu0 0.0
    %6710 = vmatprep.subr.mxu0 0.0
    %6711 = vmatpush1.msra.mxu0 0.0
    %6712 = vmatprep.subr.mxu0 0.0
    %6713 = vmatpush1.msra.mxu0 0.0
    %6714 = vmatprep.subr.mxu0 0.0
    %6715 = vmatpush1.msra.mxu0 0.0
    %6716 = vmatprep.subr.mxu0 0.0
    %6717 = vmatpush1.msra.mxu0 0.0
    %6718 = vmatprep.subr.mxu0 0.0
    %6719 = vmatpush1.msra.mxu0 0.0
    %6720 = vmatprep.subr.mxu0 0.0
    %6721 = vmatpush1.msra.mxu0 0.0
    %6722 = vmatprep.mubr.f32.mxu0 0.0
    %6723 = vmatmul.mubr.f32.gmra.mrb[0].mxu0 %v6657
    %v6724 = vpop.f32.mrb[0].mxu0
    %v6725 = vadd.f32 %v1298, %v6724
    %v6726 = vpop.f32.mrb[0].mxu0
    %v6727 = vadd.f32 %v1302, %v6726
    %6728 = vdwg.mxu0
    %v6731 = vcombine.low %v6725, %v6727
    %v6732 = vcombine.high %v6725, %v6727
    %v6734 = vunpack.c.l.s4 1966171168
    %v6735 = vunpack.c.0.s8 %v6734
    %v6736 = vlaneseq
    %v6737 = vshrl.u32 %v6736, 7
    %v6738 = vsub.s32 %v6735, %v6737
    %v6739 = vrot.slane %v6731, %v6738
    %v6741 = vunpack.c.l.s4 1966171168
    %v6742 = vunpack.c.0.s8 %v6741
    %v6743 = vlaneseq
    %v6744 = vshrl.u32 %v6743, 7
    %v6745 = vsub.s32 %v6742, %v6744
    %v6746 = vrot.slane %v6732, %v6745
    %v6747 = vcombine.high %v6739, %v6739
    %v6748 = vcombine.high %v6746, %v6746
    %v6750 = vunpack.c.l.s4 1966171168
    %v6751 = vunpack.c.0.s8 %v6750
    %v6752 = vlaneseq
    %v6753 = vshrl.u32 %v6752, 7
    %v6754 = vsub.s32 %v6751, %v6753
    %v6755 = vrot.slane %v6739, %v6754
    %v6757 = vunpack.c.l.s4 1966171168
    %v6758 = vunpack.c.0.s8 %v6757
    %v6759 = vlaneseq
    %v6760 = vshrl.u32 %v6759, 7
    %v6761 = vsub.s32 %v6758, %v6760
    %v6762 = vrot.slane %v6746, %v6761
    %v6764 = vunpack.c.l.s4 1966171168
    %v6765 = vunpack.c.0.s8 %v6764
    %v6766 = vlaneseq
    %v6767 = vshrl.u32 %v6766, 7
    %v6768 = vsub.s32 %v6765, %v6767
    %v6769 = vrot.slane %v6747, %v6768
    %v6771 = vunpack.c.l.s4 1966171168
    %v6772 = vunpack.c.0.s8 %v6771
    %v6773 = vlaneseq
    %v6774 = vshrl.u32 %v6773, 7
    %v6775 = vsub.s32 %v6772, %v6774
    %v6776 = vrot.slane %v6748, %v6775
    %v6777 = vcombine.high %v6755, %v6755
    %v6778 = vcombine.high %v6762, %v6762
    %v6779 = vcombine.high %v6769, %v6769
    %v6780 = vcombine.high %v6776, %v6776
    %s6789 = scalar_lea.vmem %s11, 5
    %6790 = vst.msk [vmem:[%s6789] ss:$8 sm:$0x3] %vm1439, %v6755
    %6791 = vst.msk [vmem:[%s6789] ss:$8 sm:$0x0] %vm1439, %v6755
    %s6792 = scalar_lea.vmem %s11, 37
    %6793 = vst.msk [vmem:[%s6792] ss:$8 sm:$0x3] %vm1439, %v6769
    %6794 = vst.msk [vmem:[%s6792] ss:$8 sm:$0x0] %vm1439, %v6769
    %s6795 = scalar_lea.vmem %s11, 69
    %6796 = vst.msk [vmem:[%s6795] ss:$8 sm:$0x3] %vm1439, %v6777
    %6797 = vst.msk [vmem:[%s6795] ss:$8 sm:$0x0] %vm1439, %v6777
    %s6798 = scalar_lea.vmem %s11, 101
    %6799 = vst.msk [vmem:[%s6798] ss:$8 sm:$0x3] %vm1439, %v6779
    %6800 = vst.msk [vmem:[%s6798] ss:$8 sm:$0x0] %vm1439, %v6779
    %s6801 = scalar_lea.vmem %s11, 133
    %6802 = vst.msk [vmem:[%s6801] ss:$8 sm:$0x3] %vm1439, %v6762
    %6803 = vst.msk [vmem:[%s6801] ss:$8 sm:$0x0] %vm1439, %v6762
    %s6804 = scalar_lea.vmem %s11, 165
    %6805 = vst.msk [vmem:[%s6804] ss:$8 sm:$0x3] %vm1439, %v6776
    %6806 = vst.msk [vmem:[%s6804] ss:$8 sm:$0x0] %vm1439, %v6776
    %s6807 = scalar_lea.vmem %s11, 197
    %6808 = vst.msk [vmem:[%s6807] ss:$8 sm:$0x3] %vm1439, %v6778
    %6809 = vst.msk [vmem:[%s6807] ss:$8 sm:$0x0] %vm1439, %v6778
    %s6810 = scalar_lea.vmem %s11, 229
    %6811 = vst.msk [vmem:[%s6810] ss:$8 sm:$0x3] %vm1439, %v6780
    %6812 = vst.msk [vmem:[%s6810] ss:$8 sm:$0x0] %vm1439, %v6780
    %p6813 = scmp.lt.s32.totalorder %s5749, 10
    %s6814 = scalar_select %p6813, 1, 0
    %v6815 = vstv %s6814
    %vm6816 = vcmp.eq.s32.totalorder %v6815, 1
    %v6817 = vsel %vm6816, %v6657, %v5747
    %v6818 = vsel %vm6816, %v5922, %v5748
    %s6819 = sadd.s32 %s310, 6
    %s6820 = scalar_lea.vmem [#allocation4], 192
    %v6821 = vld [vmem:[%s6820] sm:$0xff]
    %v6822 = vld [vmem:[%s6820 + $0x8] sm:$0xff]
    %v6823 = vld [vmem:[%s6820 + $0x10] sm:$0xff]
    %v6824 = vld [vmem:[%s6820 + $0x18] sm:$0xff]
    %6825 = vmatprep.subr.mxu0 %v164
    %6826 = vmatpush1.msra.mxu0 %v163
    %6827 = vmatprep.subr.mxu0 %v168
    %6828 = vmatpush1.msra.mxu0 %v167
    %6829 = vmatprep.subr.mxu0 %v172
    %6830 = vmatpush1.msra.mxu0 %v171
    %6831 = vmatprep.subr.mxu0 %v176
    %6832 = vmatpush1.msra.mxu0 %v175
    %6833 = vmatprep.subr.mxu0 %v180
    %6834 = vmatpush1.msra.mxu0 %v179
    %6835 = vmatprep.subr.mxu0 %v184
    %6836 = vmatpush1.msra.mxu0 %v183
    %6837 = vmatprep.subr.mxu0 %v188
    %6838 = vmatpush1.msra.mxu0 %v187
    %6839 = vmatprep.subr.mxu0 %v192
    %6840 = vmatpush1.msra.mxu0 %v191
    %6841 = vmatprep.subr.mxu0 %v196
    %6842 = vmatpush1.msra.mxu0 %v195
    %6843 = vmatprep.subr.mxu0 %v200
    %6844 = vmatpush1.msra.mxu0 %v199
    %6845 = vmatprep.subr.mxu0 %v204
    %6846 = vmatpush1.msra.mxu0 %v203
    %6847 = vmatprep.subr.mxu0 %v208
    %6848 = vmatpush1.msra.mxu0 %v207
    %6849 = vmatprep.subr.mxu0 %v212
    %6850 = vmatpush1.msra.mxu0 %v211
    %6851 = vmatprep.subr.mxu0 %v216
    %6852 = vmatpush1.msra.mxu0 %v215
    %6853 = vmatprep.subr.mxu0 %v220
    %6854 = vmatpush1.msra.mxu0 %v219
    %6855 = vmatprep.subr.mxu0 %v224
    %6856 = vmatpush1.msra.mxu0 %v223
    %6857 = vmatprep.subr.mxu0 0.0
    %6858 = vmatpush1.msra.mxu0 0.0
    %6859 = vmatprep.subr.mxu0 0.0
    %6860 = vmatpush1.msra.mxu0 0.0
    %6861 = vmatprep.subr.mxu0 0.0
    %6862 = vmatpush1.msra.mxu0 0.0
    %6863 = vmatprep.subr.mxu0 0.0
    %6864 = vmatpush1.msra.mxu0 0.0
    %6865 = vmatprep.subr.mxu0 0.0
    %6866 = vmatpush1.msra.mxu0 0.0
    %6867 = vmatprep.subr.mxu0 0.0
    %6868 = vmatpush1.msra.mxu0 0.0
    %6869 = vmatprep.subr.mxu0 0.0
    %6870 = vmatpush1.msra.mxu0 0.0
    %6871 = vmatprep.subr.mxu0 0.0
    %6872 = vmatpush1.msra.mxu0 0.0
    %6873 = vmatprep.subr.mxu0 0.0
    %6874 = vmatpush1.msra.mxu0 0.0
    %6875 = vmatprep.subr.mxu0 0.0
    %6876 = vmatpush1.msra.mxu0 0.0
    %6877 = vmatprep.subr.mxu0 0.0
    %6878 = vmatpush1.msra.mxu0 0.0
    %6879 = vmatprep.subr.mxu0 0.0
    %6880 = vmatpush1.msra.mxu0 0.0
    %6881 = vmatprep.subr.mxu0 0.0
    %6882 = vmatpush1.msra.mxu0 0.0
    %6883 = vmatprep.subr.mxu0 0.0
    %6884 = vmatpush1.msra.mxu0 0.0
    %6885 = vmatprep.subr.mxu0 0.0
    %6886 = vmatpush1.msra.mxu0 0.0
    %6887 = vmatprep.subr.mxu0 0.0
    %6888 = vmatpush1.msra.mxu0 0.0
    %6889 = vmatprep.mubr.f32.mxu0 0.0
    %6890 = vmatmul.mubr.f32.gmra.mrb[0].mxu0 %v6817
    %v6891 = vpop.f32.mrb[0].mxu0
    %v6892 = vadd.f32 0.0, %v6891
    %v6893 = vpop.f32.mrb[0].mxu0
    %v6894 = vadd.f32 0.0, %v6893
    %6895 = vdwg.mxu0
    %6896 = vmatprep.subr.mxu0 %v166
    %6897 = vmatpush1.msra.mxu0 %v165
    %6898 = vmatprep.subr.mxu0 %v170
    %6899 = vmatpush1.msra.mxu0 %v169
    %6900 = vmatprep.subr.mxu0 %v174
    %6901 = vmatpush1.msra.mxu0 %v173
    %6902 = vmatprep.subr.mxu0 %v178
    %6903 = vmatpush1.msra.mxu0 %v177
    %6904 = vmatprep.subr.mxu0 %v182
    %6905 = vmatpush1.msra.mxu0 %v181
    %6906 = vmatprep.subr.mxu0 %v186
    %6907 = vmatpush1.msra.mxu0 %v185
    %6908 = vmatprep.subr.mxu0 %v190
    %6909 = vmatpush1.msra.mxu0 %v189
    %6910 = vmatprep.subr.mxu0 %v194
    %6911 = vmatpush1.msra.mxu0 %v193
    %6912 = vmatprep.subr.mxu0 %v198
    %6913 = vmatpush1.msra.mxu0 %v197
    %6914 = vmatprep.subr.mxu0 %v202
    %6915 = vmatpush1.msra.mxu0 %v201
    %6916 = vmatprep.subr.mxu0 %v206
    %6917 = vmatpush1.msra.mxu0 %v205
    %6918 = vmatprep.subr.mxu0 %v210
    %6919 = vmatpush1.msra.mxu0 %v209
    %6920 = vmatprep.subr.mxu0 %v214
    %6921 = vmatpush1.msra.mxu0 %v213
    %6922 = vmatprep.subr.mxu0 %v218
    %6923 = vmatpush1.msra.mxu0 %v217
    %6924 = vmatprep.subr.mxu0 %v222
    %6925 = vmatpush1.msra.mxu0 %v221
    %6926 = vmatprep.subr.mxu0 %v226
    %6927 = vmatpush1.msra.mxu0 %v225
    %6928 = vmatprep.subr.mxu0 0.0
    %6929 = vmatpush1.msra.mxu0 0.0
    %6930 = vmatprep.subr.mxu0 0.0
    %6931 = vmatpush1.msra.mxu0 0.0
    %6932 = vmatprep.subr.mxu0 0.0
    %6933 = vmatpush1.msra.mxu0 0.0
    %6934 = vmatprep.subr.mxu0 0.0
    %6935 = vmatpush1.msra.mxu0 0.0
    %6936 = vmatprep.subr.mxu0 0.0
    %6937 = vmatpush1.msra.mxu0 0.0
    %6938 = vmatprep.subr.mxu0 0.0
    %6939 = vmatpush1.msra.mxu0 0.0
    %6940 = vmatprep.subr.mxu0 0.0
    %6941 = vmatpush1.msra.mxu0 0.0
    %6942 = vmatprep.subr.mxu0 0.0
    %6943 = vmatpush1.msra.mxu0 0.0
    %6944 = vmatprep.subr.mxu0 0.0
    %6945 = vmatpush1.msra.mxu0 0.0
    %6946 = vmatprep.subr.mxu0 0.0
    %6947 = vmatpush1.msra.mxu0 0.0
    %6948 = vmatprep.subr.mxu0 0.0
    %6949 = vmatpush1.msra.mxu0 0.0
    %6950 = vmatprep.subr.mxu0 0.0
    %6951 = vmatpush1.msra.mxu0 0.0
    %6952 = vmatprep.subr.mxu0 0.0
    %6953 = vmatpush1.msra.mxu0 0.0
    %6954 = vmatprep.subr.mxu0 0.0
    %6955 = vmatpush1.msra.mxu0 0.0
    %6956 = vmatprep.subr.mxu0 0.0
    %6957 = vmatpush1.msra.mxu0 0.0
    %6958 = vmatprep.subr.mxu0 0.0
    %6959 = vmatpush1.msra.mxu0 0.0
    %6960 = vmatprep.mubr.f32.mxu0 0.0
    %6961 = vmatmul.mubr.f32.gmra.mrb[0].mxu0 %v6817
    %v6962 = vpop.f32.mrb[0].mxu0
    %v6963 = vadd.f32 0.0, %v6962
    %v6964 = vpop.f32.mrb[0].mxu0
    %v6965 = vadd.f32 0.0, %v6964
    %6966 = vdwg.mxu0
    %v6967 = vadd.f32 %v6821, %v6892
    %v6968 = vadd.f32 %v6822, %v6894
    %v6969 = vadd.f32 %v6823, %v6963
    %v6970 = vadd.f32 %v6824, %v6965
    %v6971 = vxor.u32 %v6967, 2147483648
    %v6972 = vmul.f32 %v6971, 1.442695
    %v6973 = vpow.pop %v6972
    %v6974 = vadd.f32 %v6973, 1.0
    %v6975 = vrcp.pop %v6974
    %v6976 = vmul.f32 1.0, %v6975
    %v6977 = vxor.u32 %v6968, 2147483648
    %v6978 = vmul.f32 %v6977, 1.442695
    %v6979 = vpow.pop %v6978
    %v6980 = vadd.f32 %v6979, 1.0
    %v6981 = vrcp.pop %v6980
    %v6982 = vmul.f32 1.0, %v6981
    %v6983 = vtanh.pop %v6969
    %v6984 = vxor.u32 %v6970, 2147483648
    %v6985 = vmul.f32 %v6984, 1.442695
    %v6986 = vpow.pop %v6985
    %v6987 = vadd.f32 %v6986, 1.0
    %v6988 = vrcp.pop %v6987
    %v6989 = vmul.f32 1.0, %v6988
    %v6990 = vmul.f32 %v6982, %v6818
    %v6991 = vmul.f32 %v6976, %v6983
    %v6992 = vadd.f32 %v6990, %v6991
    %v6993 = vtanh.pop %v6992
    %v6994 = vmul.f32 %v6989, %v6993
    %6995 = vmatprep.subr.mxu0 0.0
    %6996 = vmatpush1.msra.mxu0 %v227
    %6997 = vmatprep.subr.mxu0 0.0
    %6998 = vmatpush1.msra.mxu0 %v228
    %6999 = vmatprep.subr.mxu0 0.0
    %7000 = vmatpush1.msra.mxu0 %v229
    %7001 = vmatprep.subr.mxu0 0.0
    %7002 = vmatpush1.msra.mxu0 %v230
    %7003 = vmatprep.subr.mxu0 0.0
    %7004 = vmatpush1.msra.mxu0 %v231
    %7005 = vmatprep.subr.mxu0 0.0
    %7006 = vmatpush1.msra.mxu0 %v232
    %7007 = vmatprep.subr.mxu0 0.0
    %7008 = vmatpush1.msra.mxu0 %v233
    %7009 = vmatprep.subr.mxu0 0.0
    %7010 = vmatpush1.msra.mxu0 %v234
    %7011 = vmatprep.subr.mxu0 0.0
    %7012 = vmatpush1.msra.mxu0 %v235
    %7013 = vmatprep.subr.mxu0 0.0
    %7014 = vmatpush1.msra.mxu0 %v236
    %7015 = vmatprep.subr.mxu0 0.0
    %7016 = vmatpush1.msra.mxu0 %v237
    %7017 = vmatprep.subr.mxu0 0.0
    %7018 = vmatpush1.msra.mxu0 %v238
    %7019 = vmatprep.subr.mxu0 0.0
    %7020 = vmatpush1.msra.mxu0 %v239
    %7021 = vmatprep.subr.mxu0 0.0
    %7022 = vmatpush1.msra.mxu0 %v240
    %7023 = vmatprep.subr.mxu0 0.0
    %7024 = vmatpush1.msra.mxu0 %v241
    %7025 = vmatprep.subr.mxu0 0.0
    %7026 = vmatpush1.msra.mxu0 %v242
    %7027 = vmatprep.subr.mxu0 0.0
    %7028 = vmatpush1.msra.mxu0 0.0
    %7029 = vmatprep.subr.mxu0 0.0
    %7030 = vmatpush1.msra.mxu0 0.0
    %7031 = vmatprep.subr.mxu0 0.0
    %7032 = vmatpush1.msra.mxu0 0.0
    %7033 = vmatprep.subr.mxu0 0.0
    %7034 = vmatpush1.msra.mxu0 0.0
    %7035 = vmatprep.subr.mxu0 0.0
    %7036 = vmatpush1.msra.mxu0 0.0
    %7037 = vmatprep.subr.mxu0 0.0
    %7038 = vmatpush1.msra.mxu0 0.0
    %7039 = vmatprep.subr.mxu0 0.0
    %7040 = vmatpush1.msra.mxu0 0.0
    %7041 = vmatprep.subr.mxu0 0.0
    %7042 = vmatpush1.msra.mxu0 0.0
    %7043 = vmatprep.subr.mxu0 0.0
    %7044 = vmatpush1.msra.mxu0 0.0
    %7045 = vmatprep.subr.mxu0 0.0
    %7046 = vmatpush1.msra.mxu0 0.0
    %7047 = vmatprep.subr.mxu0 0.0
    %7048 = vmatpush1.msra.mxu0 0.0
    %7049 = vmatprep.subr.mxu0 0.0
    %7050 = vmatpush1.msra.mxu0 0.0
    %7051 = vmatprep.subr.mxu0 0.0
    %7052 = vmatpush1.msra.mxu0 0.0
    %7053 = vmatprep.subr.mxu0 0.0
    %7054 = vmatpush1.msra.mxu0 0.0
    %7055 = vmatprep.subr.mxu0 0.0
    %7056 = vmatpush1.msra.mxu0 0.0
    %7057 = vmatprep.subr.mxu0 0.0
    %7058 = vmatpush1.msra.mxu0 0.0
    %7059 = vmatprep.mubr.f32.mxu0 0.0
    %7060 = vmatmul.mubr.f32.gmra.mrb[0].mxu0 %v6994
    %v7061 = vpop.f32.mrb[0].mxu0
    %v7062 = vadd.f32 0.0, %v7061
    %v7063 = vpop.f32.mrb[0].mxu0
    %7064 = vdwg.mxu0
    %v7066 = vcombine.high %v7062, %v7062
    %v7068 = vunpack.c.l.s4 1966171168
    %v7069 = vunpack.c.0.s8 %v7068
    %v7070 = vlaneseq
    %v7071 = vshrl.u32 %v7070, 7
    %v7072 = vsub.s32 %v7069, %v7071
    %v7073 = vrot.slane %v7062, %v7072
    %v7075 = vunpack.c.l.s4 1966171168
    %v7076 = vunpack.c.0.s8 %v7075
    %v7077 = vlaneseq
    %v7078 = vshrl.u32 %v7077, 7
    %v7079 = vsub.s32 %v7076, %v7078
    %v7080 = vrot.slane %v7066, %v7079
    %v7081 = vcombine.high %v7073, %v7073
    %v7082 = vcombine.high %v7080, %v7080
    %v7084 = vunpack.c.l.s4 1966171168
    %v7085 = vunpack.c.0.s8 %v7084
    %v7086 = vlaneseq
    %v7087 = vshrl.u32 %v7086, 7
    %v7088 = vsub.s32 %v7085, %v7087
    %v7089 = vrot.slane %v7073, %v7088
    %v7091 = vunpack.c.l.s4 1966171168
    %v7092 = vunpack.c.0.s8 %v7091
    %v7093 = vlaneseq
    %v7094 = vshrl.u32 %v7093, 7
    %v7095 = vsub.s32 %v7092, %v7094
    %v7096 = vrot.slane %v7080, %v7095
    %v7098 = vunpack.c.l.s4 1966171168
    %v7099 = vunpack.c.0.s8 %v7098
    %v7100 = vlaneseq
    %v7101 = vshrl.u32 %v7100, 7
    %v7102 = vsub.s32 %v7099, %v7101
    %v7103 = vrot.slane %v7081, %v7102
    %v7105 = vunpack.c.l.s4 1966171168
    %v7106 = vunpack.c.0.s8 %v7105
    %v7107 = vlaneseq
    %v7108 = vshrl.u32 %v7107, 7
    %v7109 = vsub.s32 %v7106, %v7108
    %v7110 = vrot.slane %v7082, %v7109
    %v7111 = vcombine.high %v7089, %v7089
    %v7112 = vcombine.high %v7096, %v7096
    %v7113 = vcombine.high %v7103, %v7103
    %v7114 = vcombine.high %v7110, %v7110
    %v7115 = vlaneseq
    %v7116 = vshrl.u32 %v7115, 7
    %v7117 = vsub.s32 0, %v7116
    %v7118 = vrot.slane %v7089, %v7117
    %v7119 = vlaneseq
    %v7120 = vshrl.u32 %v7119, 7
    %v7121 = vsub.s32 0, %v7120
    %v7122 = vrot.slane %v7103, %v7121
    %v7123 = vlaneseq
    %v7124 = vshrl.u32 %v7123, 7
    %v7125 = vsub.s32 0, %v7124
    %v7126 = vrot.slane %v7111, %v7125
    %v7127 = vlaneseq
    %v7128 = vshrl.u32 %v7127, 7
    %v7129 = vsub.s32 0, %v7128
    %v7130 = vrot.slane %v7113, %v7129
    %v7131 = vlaneseq
    %v7132 = vshrl.u32 %v7131, 7
    %v7133 = vsub.s32 0, %v7132
    %v7134 = vrot.slane %v7096, %v7133
    %v7135 = vlaneseq
    %v7136 = vshrl.u32 %v7135, 7
    %v7137 = vsub.s32 0, %v7136
    %v7138 = vrot.slane %v7110, %v7137
    %v7139 = vlaneseq
    %v7140 = vshrl.u32 %v7139, 7
    %v7141 = vsub.s32 0, %v7140
    %v7142 = vrot.slane %v7112, %v7141
    %v7143 = vlaneseq
    %v7144 = vshrl.u32 %v7143, 7
    %v7145 = vsub.s32 0, %v7144
    %v7146 = vrot.slane %v7114, %v7145
    %v7155 = vmul.f32 %v154, %v7118
    %v7156 = vmul.f32 %v155, %v7122
    %v7157 = vmul.f32 %v156, %v7126
    %v7158 = vmul.f32 %v157, %v7130
    %v7159 = vmul.f32 %v158, %v7134
    %v7160 = vmul.f32 %v159, %v7138
    %v7161 = vmul.f32 %v160, %v7142
    %v7162 = vmul.f32 %v161, %v7146
    %v7163 = vsel %vm653, %v7155, 0.0
    %7164 = vadd.xlane.f32.xlu0 %v7163
    %v7165 = vpop.xlane.xlu0 %7164
    %v7166 = vsel %vm653, %v7156, 0.0
    %7167 = vadd.xlane.f32.xlu0 %v7166
    %v7168 = vpop.xlane.xlu0 %7167
    %v7169 = vsel %vm653, %v7157, 0.0
    %7170 = vadd.xlane.f32.xlu0 %v7169
    %v7171 = vpop.xlane.xlu0 %7170
    %v7172 = vsel %vm653, %v7158, 0.0
    %7173 = vadd.xlane.f32.xlu0 %v7172
    %v7174 = vpop.xlane.xlu0 %7173
    %v7175 = vsel %vm653, %v7159, 0.0
    %7176 = vadd.xlane.f32.xlu0 %v7175
    %v7177 = vpop.xlane.xlu0 %7176
    %v7178 = vsel %vm653, %v7160, 0.0
    %7179 = vadd.xlane.f32.xlu0 %v7178
    %v7180 = vpop.xlane.xlu0 %7179
    %v7181 = vsel %vm653, %v7161, 0.0
    %7182 = vadd.xlane.f32.xlu0 %v7181
    %v7183 = vpop.xlane.xlu0 %7182
    %v7184 = vsel %vm653, %v7162, 0.0
    %7185 = vadd.xlane.f32.xlu0 %v7184
    %v7186 = vpop.xlane.xlu0 %7185
    %v7187 = vadd.f32 %v7165, %v685
    %v7188 = vadd.f32 %v7168, %v692
    %v7189 = vadd.f32 %v7171, %v699
    %v7190 = vadd.f32 %v7174, %v706
    %v7191 = vadd.f32 %v7177, %v713
    %v7192 = vadd.f32 %v7180, %v720
    %v7193 = vadd.f32 %v7183, %v727
    %v7194 = vadd.f32 %v7186, %v734
    %7203 = vset.pattern.permute.xlu0 0
    %7204 = vperm.xlu0 %7203, %v7187
    %v7205 = vpop.permute.xlu0 %7204
    %7206 = vset.pattern.permute.xlu0 0
    %7207 = vperm.xlu0 %7206, %v7188
    %v7208 = vpop.permute.xlu0 %7207
    %7209 = vset.pattern.permute.xlu0 0
    %7210 = vperm.xlu0 %7209, %v7189
    %v7211 = vpop.permute.xlu0 %7210
    %7212 = vset.pattern.permute.xlu0 0
    %7213 = vperm.xlu0 %7212, %v7190
    %v7214 = vpop.permute.xlu0 %7213
    %7215 = vset.pattern.permute.xlu0 0
    %7216 = vperm.xlu0 %7215, %v7191
    %v7217 = vpop.permute.xlu0 %7216
    %7218 = vset.pattern.permute.xlu0 0
    %7219 = vperm.xlu0 %7218, %v7192
    %v7220 = vpop.permute.xlu0 %7219
    %7221 = vset.pattern.permute.xlu0 0
    %7222 = vperm.xlu0 %7221, %v7193
    %v7223 = vpop.permute.xlu0 %7222
    %7224 = vset.pattern.permute.xlu0 0
    %7225 = vperm.xlu0 %7224, %v7194
    %v7226 = vpop.permute.xlu0 %7225
    %v7227 = vlaneseq
    %v7228 = vshrl.u32 %v7227, 7
    %v7229 = vsub.s32 %v784, %v7228
    %v7230 = vrot.slane %v7205, %v7229
    %v7231 = vlaneseq
    %v7232 = vshrl.u32 %v7231, 7
    %v7233 = vsub.s32 %v784, %v7232
    %v7234 = vrot.slane %v7208, %v7233
    %v7235 = vlaneseq
    %v7236 = vshrl.u32 %v7235, 7
    %v7237 = vsub.s32 %v784, %v7236
    %v7238 = vrot.slane %v7211, %v7237
    %v7239 = vlaneseq
    %v7240 = vshrl.u32 %v7239, 7
    %v7241 = vsub.s32 %v784, %v7240
    %v7242 = vrot.slane %v7214, %v7241
    %v7243 = vlaneseq
    %v7244 = vshrl.u32 %v7243, 7
    %v7245 = vsub.s32 %v784, %v7244
    %v7246 = vrot.slane %v7217, %v7245
    %v7247 = vlaneseq
    %v7248 = vshrl.u32 %v7247, 7
    %v7249 = vsub.s32 %v784, %v7248
    %v7250 = vrot.slane %v7220, %v7249
    %v7251 = vlaneseq
    %v7252 = vshrl.u32 %v7251, 7
    %v7253 = vsub.s32 %v784, %v7252
    %v7254 = vrot.slane %v7223, %v7253
    %v7255 = vlaneseq
    %v7256 = vshrl.u32 %v7255, 7
    %v7257 = vsub.s32 %v784, %v7256
    %v7258 = vrot.slane %v7226, %v7257
    %v7259 = vsel %vm817, %v7234, %v7230
    %v7260 = vsel %vm819, %v7238, %v7259
    %v7261 = vsel %vm821, %v7242, %v7260
    %v7262 = vsel %vm823, %v7246, %v7261
    %v7263 = vsel %vm825, %v7250, %v7262
    %v7264 = vsel %vm827, %v7254, %v7263
    %v7265 = vsel %vm829, %v7258, %v7264
    %v7267 = vsel %vm832, %v7265, -inf
    %7268 = vmax.xlane.f32.xlu0 %v7267
    %v7269 = vpop.xlane.xlu0 %7268
    %v7271 = vlaneseq
    %v7272 = vshrl.u32 %v7271, 7
    %v7273 = vsub.s32 0, %v7272
    %v7274 = vrot.slane %v7269, %v7273
    %v7275 = vlaneseq
    %v7276 = vshrl.u32 %v7275, 7
    %v7277 = vsub.s32 1, %v7276
    %v7278 = vrot.slane %v7269, %v7277
    %v7279 = vlaneseq
    %v7280 = vshrl.u32 %v7279, 7
    %v7281 = vsub.s32 2, %v7280
    %v7282 = vrot.slane %v7269, %v7281
    %v7283 = vlaneseq
    %v7284 = vshrl.u32 %v7283, 7
    %v7285 = vsub.s32 3, %v7284
    %v7286 = vrot.slane %v7269, %v7285
    %v7287 = vlaneseq
    %v7288 = vshrl.u32 %v7287, 7
    %v7289 = vsub.s32 4, %v7288
    %v7290 = vrot.slane %v7269, %v7289
    %v7291 = vlaneseq
    %v7292 = vshrl.u32 %v7291, 7
    %v7293 = vsub.s32 5, %v7292
    %v7294 = vrot.slane %v7269, %v7293
    %v7295 = vlaneseq
    %v7296 = vshrl.u32 %v7295, 7
    %v7297 = vsub.s32 6, %v7296
    %v7298 = vrot.slane %v7269, %v7297
    %v7299 = vlaneseq
    %v7300 = vshrl.u32 %v7299, 7
    %v7301 = vsub.s32 7, %v7300
    %v7302 = vrot.slane %v7269, %v7301
    %v7311 = vsub.f32 %v7187, %v7274
    %v7312 = vsub.f32 %v7188, %v7278
    %v7313 = vsub.f32 %v7189, %v7282
    %v7314 = vsub.f32 %v7190, %v7286
    %v7315 = vsub.f32 %v7191, %v7290
    %v7316 = vsub.f32 %v7192, %v7294
    %v7317 = vsub.f32 %v7193, %v7298
    %v7318 = vsub.f32 %v7194, %v7302
    %v7319 = vmul.f32 %v7311, 1.442695
    %v7320 = vpow.pop %v7319
    %v7321 = vmul.f32 %v7312, 1.442695
    %v7322 = vpow.pop %v7321
    %v7323 = vmul.f32 %v7313, 1.442695
    %v7324 = vpow.pop %v7323
    %v7325 = vmul.f32 %v7314, 1.442695
    %v7326 = vpow.pop %v7325
    %v7327 = vmul.f32 %v7315, 1.442695
    %v7328 = vpow.pop %v7327
    %v7329 = vmul.f32 %v7316, 1.442695
    %v7330 = vpow.pop %v7329
    %v7331 = vmul.f32 %v7317, 1.442695
    %v7332 = vpow.pop %v7331
    %v7333 = vmul.f32 %v7318, 1.442695
    %v7334 = vpow.pop %v7333
    %7343 = vset.pattern.permute.xlu0 0
    %7344 = vperm.xlu0 %7343, %v7320
    %v7345 = vpop.permute.xlu0 %7344
    %7346 = vset.pattern.permute.xlu0 0
    %7347 = vperm.xlu0 %7346, %v7322
    %v7348 = vpop.permute.xlu0 %7347
    %7349 = vset.pattern.permute.xlu0 0
    %7350 = vperm.xlu0 %7349, %v7324
    %v7351 = vpop.permute.xlu0 %7350
    %7352 = vset.pattern.permute.xlu0 0
    %7353 = vperm.xlu0 %7352, %v7326
    %v7354 = vpop.permute.xlu0 %7353
    %7355 = vset.pattern.permute.xlu0 0
    %7356 = vperm.xlu0 %7355, %v7328
    %v7357 = vpop.permute.xlu0 %7356
    %7358 = vset.pattern.permute.xlu0 0
    %7359 = vperm.xlu0 %7358, %v7330
    %v7360 = vpop.permute.xlu0 %7359
    %7361 = vset.pattern.permute.xlu0 0
    %7362 = vperm.xlu0 %7361, %v7332
    %v7363 = vpop.permute.xlu0 %7362
    %7364 = vset.pattern.permute.xlu0 0
    %7365 = vperm.xlu0 %7364, %v7334
    %v7366 = vpop.permute.xlu0 %7365
    %v7367 = vlaneseq
    %v7368 = vshrl.u32 %v7367, 7
    %v7369 = vsub.s32 %v784, %v7368
    %v7370 = vrot.slane %v7345, %v7369
    %v7371 = vlaneseq
    %v7372 = vshrl.u32 %v7371, 7
    %v7373 = vsub.s32 %v784, %v7372
    %v7374 = vrot.slane %v7348, %v7373
    %v7375 = vlaneseq
    %v7376 = vshrl.u32 %v7375, 7
    %v7377 = vsub.s32 %v784, %v7376
    %v7378 = vrot.slane %v7351, %v7377
    %v7379 = vlaneseq
    %v7380 = vshrl.u32 %v7379, 7
    %v7381 = vsub.s32 %v784, %v7380
    %v7382 = vrot.slane %v7354, %v7381
    %v7383 = vlaneseq
    %v7384 = vshrl.u32 %v7383, 7
    %v7385 = vsub.s32 %v784, %v7384
    %v7386 = vrot.slane %v7357, %v7385
    %v7387 = vlaneseq
    %v7388 = vshrl.u32 %v7387, 7
    %v7389 = vsub.s32 %v784, %v7388
    %v7390 = vrot.slane %v7360, %v7389
    %v7391 = vlaneseq
    %v7392 = vshrl.u32 %v7391, 7
    %v7393 = vsub.s32 %v784, %v7392
    %v7394 = vrot.slane %v7363, %v7393
    %v7395 = vlaneseq
    %v7396 = vshrl.u32 %v7395, 7
    %v7397 = vsub.s32 %v784, %v7396
    %v7398 = vrot.slane %v7366, %v7397
    %v7399 = vsel %vm817, %v7374, %v7370
    %v7400 = vsel %vm819, %v7378, %v7399
    %v7401 = vsel %vm821, %v7382, %v7400
    %v7402 = vsel %vm823, %v7386, %v7401
    %v7403 = vsel %vm825, %v7390, %v7402
    %v7404 = vsel %vm827, %v7394, %v7403
    %v7405 = vsel %vm829, %v7398, %v7404
    %v7407 = vsel %vm832, %v7405, 0.0
    %7408 = vadd.xlane.f32.xlu0 %v7407
    %v7409 = vpop.xlane.xlu0 %7408
    %v7411 = vlaneseq
    %v7412 = vshrl.u32 %v7411, 7
    %v7413 = vsub.s32 0, %v7412
    %v7414 = vrot.slane %v7409, %v7413
    %v7415 = vlaneseq
    %v7416 = vshrl.u32 %v7415, 7
    %v7417 = vsub.s32 1, %v7416
    %v7418 = vrot.slane %v7409, %v7417
    %v7419 = vlaneseq
    %v7420 = vshrl.u32 %v7419, 7
    %v7421 = vsub.s32 2, %v7420
    %v7422 = vrot.slane %v7409, %v7421
    %v7423 = vlaneseq
    %v7424 = vshrl.u32 %v7423, 7
    %v7425 = vsub.s32 3, %v7424
    %v7426 = vrot.slane %v7409, %v7425
    %v7427 = vlaneseq
    %v7428 = vshrl.u32 %v7427, 7
    %v7429 = vsub.s32 4, %v7428
    %v7430 = vrot.slane %v7409, %v7429
    %v7431 = vlaneseq
    %v7432 = vshrl.u32 %v7431, 7
    %v7433 = vsub.s32 5, %v7432
    %v7434 = vrot.slane %v7409, %v7433
    %v7435 = vlaneseq
    %v7436 = vshrl.u32 %v7435, 7
    %v7437 = vsub.s32 6, %v7436
    %v7438 = vrot.slane %v7409, %v7437
    %v7439 = vlaneseq
    %v7440 = vshrl.u32 %v7439, 7
    %v7441 = vsub.s32 7, %v7440
    %v7442 = vrot.slane %v7409, %v7441
    %v7451 = vrcp.pop %v7414
    %v7452 = vmul.f32 %v7320, %v7451
    %v7453 = vrcp.pop %v7418
    %v7454 = vmul.f32 %v7322, %v7453
    %v7455 = vrcp.pop %v7422
    %v7456 = vmul.f32 %v7324, %v7455
    %v7457 = vrcp.pop %v7426
    %v7458 = vmul.f32 %v7326, %v7457
    %v7459 = vrcp.pop %v7430
    %v7460 = vmul.f32 %v7328, %v7459
    %v7461 = vrcp.pop %v7434
    %v7462 = vmul.f32 %v7330, %v7461
    %v7463 = vrcp.pop %v7438
    %v7464 = vmul.f32 %v7332, %v7463
    %v7465 = vrcp.pop %v7442
    %v7466 = vmul.f32 %v7334, %v7465
    %7468 = vset.pattern.permute.xlu0 0
    %7469 = vperm.xlu0 %7468, %v7452
    %v7470 = vpop.permute.xlu0 %7469
    %7473 = vset.pattern.permute.xlu0 0
    %7474 = vperm.xlu0 %7473, %v7454
    %v7475 = vpop.permute.xlu0 %7474
    %7478 = vset.pattern.permute.xlu0 0
    %7479 = vperm.xlu0 %7478, %v7456
    %v7480 = vpop.permute.xlu0 %7479
    %7483 = vset.pattern.permute.xlu0 0
    %7484 = vperm.xlu0 %7483, %v7458
    %v7485 = vpop.permute.xlu0 %7484
    %7488 = vset.pattern.permute.xlu0 0
    %7489 = vperm.xlu0 %7488, %v7460
    %v7490 = vpop.permute.xlu0 %7489
    %7493 = vset.pattern.permute.xlu0 0
    %7494 = vperm.xlu0 %7493, %v7462
    %v7495 = vpop.permute.xlu0 %7494
    %7498 = vset.pattern.permute.xlu0 0
    %7499 = vperm.xlu0 %7498, %v7464
    %v7500 = vpop.permute.xlu0 %7499
    %7503 = vset.pattern.permute.xlu0 0
    %7504 = vperm.xlu0 %7503, %v7466
    %v7505 = vpop.permute.xlu0 %7504
    %v7507 = vmul.f32 %v7470, %v154
    %v7508 = vmul.f32 %v7475, %v155
    %v7509 = vmul.f32 %v7480, %v156
    %v7510 = vmul.f32 %v7485, %v157
    %v7511 = vmul.f32 %v7490, %v158
    %v7512 = vmul.f32 %v7495, %v159
    %v7513 = vmul.f32 %v7500, %v160
    %v7514 = vmul.f32 %v7505, %v161
    %v7515 = vsel %vm653, %v7507, 0.0
    %v7516 = vrot.slane %v7515, 4
    %v7517 = vadd.f32 %v7515, %v7516
    %v7518 = vrot.slane %v7517, 2
    %v7519 = vadd.f32 %v7517, %v7518
    %v7520 = vrot.slane %v7519, 1
    %v7521 = vadd.f32 %v7519, %v7520
    %v7522 = vsel %vm653, %v7508, 0.0
    %v7523 = vrot.slane %v7522, 4
    %v7524 = vadd.f32 %v7522, %v7523
    %v7525 = vrot.slane %v7524, 2
    %v7526 = vadd.f32 %v7524, %v7525
    %v7527 = vrot.slane %v7526, 1
    %v7528 = vadd.f32 %v7526, %v7527
    %v7529 = vsel %vm653, %v7509, 0.0
    %v7530 = vrot.slane %v7529, 4
    %v7531 = vadd.f32 %v7529, %v7530
    %v7532 = vrot.slane %v7531, 2
    %v7533 = vadd.f32 %v7531, %v7532
    %v7534 = vrot.slane %v7533, 1
    %v7535 = vadd.f32 %v7533, %v7534
    %v7536 = vsel %vm653, %v7510, 0.0
    %v7537 = vrot.slane %v7536, 4
    %v7538 = vadd.f32 %v7536, %v7537
    %v7539 = vrot.slane %v7538, 2
    %v7540 = vadd.f32 %v7538, %v7539
    %v7541 = vrot.slane %v7540, 1
    %v7542 = vadd.f32 %v7540, %v7541
    %v7543 = vsel %vm653, %v7511, 0.0
    %v7544 = vrot.slane %v7543, 4
    %v7545 = vadd.f32 %v7543, %v7544
    %v7546 = vrot.slane %v7545, 2
    %v7547 = vadd.f32 %v7545, %v7546
    %v7548 = vrot.slane %v7547, 1
    %v7549 = vadd.f32 %v7547, %v7548
    %v7550 = vsel %vm653, %v7512, 0.0
    %v7551 = vrot.slane %v7550, 4
    %v7552 = vadd.f32 %v7550, %v7551
    %v7553 = vrot.slane %v7552, 2
    %v7554 = vadd.f32 %v7552, %v7553
    %v7555 = vrot.slane %v7554, 1
    %v7556 = vadd.f32 %v7554, %v7555
    %v7557 = vsel %vm653, %v7513, 0.0
    %v7558 = vrot.slane %v7557, 4
    %v7559 = vadd.f32 %v7557, %v7558
    %v7560 = vrot.slane %v7559, 2
    %v7561 = vadd.f32 %v7559, %v7560
    %v7562 = vrot.slane %v7561, 1
    %v7563 = vadd.f32 %v7561, %v7562
    %v7564 = vsel %vm653, %v7514, 0.0
    %v7565 = vrot.slane %v7564, 4
    %v7566 = vadd.f32 %v7564, %v7565
    %v7567 = vrot.slane %v7566, 2
    %v7568 = vadd.f32 %v7566, %v7567
    %v7569 = vrot.slane %v7568, 1
    %v7570 = vadd.f32 %v7568, %v7569
    %7571 = vmatprep.subr.mxu0 0.0
    %7572 = vmatpush1.msra.mxu0 %v259
    %7573 = vmatprep.subr.mxu0 0.0
    %7574 = vmatpush1.msra.mxu0 %v260
    %7575 = vmatprep.subr.mxu0 0.0
    %7576 = vmatpush1.msra.mxu0 %v261
    %7577 = vmatprep.subr.mxu0 0.0
    %7578 = vmatpush1.msra.mxu0 %v262
    %7579 = vmatprep.subr.mxu0 0.0
    %7580 = vmatpush1.msra.mxu0 %v263
    %7581 = vmatprep.subr.mxu0 0.0
    %7582 = vmatpush1.msra.mxu0 %v264
    %7583 = vmatprep.subr.mxu0 0.0
    %7584 = vmatpush1.msra.mxu0 %v265
    %7585 = vmatprep.subr.mxu0 0.0
    %7586 = vmatpush1.msra.mxu0 %v266
    %7587 = vmatprep.subr.mxu0 0.0
    %7588 = vmatpush1.msra.mxu0 %v267
    %7589 = vmatprep.subr.mxu0 0.0
    %7590 = vmatpush1.msra.mxu0 %v268
    %7591 = vmatprep.subr.mxu0 0.0
    %7592 = vmatpush1.msra.mxu0 %v269
    %7593 = vmatprep.subr.mxu0 0.0
    %7594 = vmatpush1.msra.mxu0 %v270
    %7595 = vmatprep.subr.mxu0 0.0
    %7596 = vmatpush1.msra.mxu0 %v271
    %7597 = vmatprep.subr.mxu0 0.0
    %7598 = vmatpush1.msra.mxu0 %v272
    %7599 = vmatprep.subr.mxu0 0.0
    %7600 = vmatpush1.msra.mxu0 %v273
    %7601 = vmatprep.subr.mxu0 0.0
    %7602 = vmatpush1.msra.mxu0 %v274
    %7603 = vmatprep.subr.mxu0 0.0
    %7604 = vmatpush1.msra.mxu0 0.0
    %7605 = vmatprep.subr.mxu0 0.0
    %7606 = vmatpush1.msra.mxu0 0.0
    %7607 = vmatprep.subr.mxu0 0.0
    %7608 = vmatpush1.msra.mxu0 0.0
    %7609 = vmatprep.subr.mxu0 0.0
    %7610 = vmatpush1.msra.mxu0 0.0
    %7611 = vmatprep.subr.mxu0 0.0
    %7612 = vmatpush1.msra.mxu0 0.0
    %7613 = vmatprep.subr.mxu0 0.0
    %7614 = vmatpush1.msra.mxu0 0.0
    %7615 = vmatprep.subr.mxu0 0.0
    %7616 = vmatpush1.msra.mxu0 0.0
    %7617 = vmatprep.subr.mxu0 0.0
    %7618 = vmatpush1.msra.mxu0 0.0
    %7619 = vmatprep.subr.mxu0 0.0
    %7620 = vmatpush1.msra.mxu0 0.0
    %7621 = vmatprep.subr.mxu0 0.0
    %7622 = vmatpush1.msra.mxu0 0.0
    %7623 = vmatprep.subr.mxu0 0.0
    %7624 = vmatpush1.msra.mxu0 0.0
    %7625 = vmatprep.subr.mxu0 0.0
    %7626 = vmatpush1.msra.mxu0 0.0
    %7627 = vmatprep.subr.mxu0 0.0
    %7628 = vmatpush1.msra.mxu0 0.0
    %7629 = vmatprep.subr.mxu0 0.0
    %7630 = vmatpush1.msra.mxu0 0.0
    %7631 = vmatprep.subr.mxu0 0.0
    %7632 = vmatpush1.msra.mxu0 0.0
    %7633 = vmatprep.subr.mxu0 0.0
    %7634 = vmatpush1.msra.mxu0 0.0
    %7635 = vmatprep.mubr.f32.mxu0 0.0
    %7636 = vmatmul.mubr.f32.gmra.mrb[0].mxu0 %v6994
    %v7637 = vpop.f32.mrb[0].mxu0
    %v7638 = vadd.f32 0.0, %v7637
    %v7639 = vpop.f32.mrb[0].mxu0
    %7640 = vdwg.mxu0
    %v7649 = vsel %vm817, %v7528, %v7521
    %v7650 = vsel %vm819, %v7535, %v7649
    %v7651 = vsel %vm821, %v7542, %v7650
    %v7652 = vsel %vm823, %v7549, %v7651
    %v7653 = vsel %vm825, %v7556, %v7652
    %v7654 = vsel %vm827, %v7563, %v7653
    %v7655 = vsel %vm829, %v7570, %v7654
    %7657 = vmatprep.subr.mxu0 0.0
    %7658 = vmatpush1.msra.mxu0 %v243
    %7659 = vmatprep.subr.mxu0 0.0
    %7660 = vmatpush1.msra.mxu0 %v244
    %7661 = vmatprep.subr.mxu0 0.0
    %7662 = vmatpush1.msra.mxu0 %v245
    %7663 = vmatprep.subr.mxu0 0.0
    %7664 = vmatpush1.msra.mxu0 %v246
    %7665 = vmatprep.subr.mxu0 0.0
    %7666 = vmatpush1.msra.mxu0 %v247
    %7667 = vmatprep.subr.mxu0 0.0
    %7668 = vmatpush1.msra.mxu0 %v248
    %7669 = vmatprep.subr.mxu0 0.0
    %7670 = vmatpush1.msra.mxu0 %v249
    %7671 = vmatprep.subr.mxu0 0.0
    %7672 = vmatpush1.msra.mxu0 %v250
    %7673 = vmatprep.subr.mxu0 0.0
    %7674 = vmatpush1.msra.mxu0 %v251
    %7675 = vmatprep.subr.mxu0 0.0
    %7676 = vmatpush1.msra.mxu0 %v252
    %7677 = vmatprep.subr.mxu0 0.0
    %7678 = vmatpush1.msra.mxu0 %v253
    %7679 = vmatprep.subr.mxu0 0.0
    %7680 = vmatpush1.msra.mxu0 %v254
    %7681 = vmatprep.subr.mxu0 0.0
    %7682 = vmatpush1.msra.mxu0 %v255
    %7683 = vmatprep.subr.mxu0 0.0
    %7684 = vmatpush1.msra.mxu0 %v256
    %7685 = vmatprep.subr.mxu0 0.0
    %7686 = vmatpush1.msra.mxu0 %v257
    %7687 = vmatprep.subr.mxu0 0.0
    %7688 = vmatpush1.msra.mxu0 %v258
    %7689 = vmatprep.subr.mxu0 0.0
    %7690 = vmatpush1.msra.mxu0 0.0
    %7691 = vmatprep.subr.mxu0 0.0
    %7692 = vmatpush1.msra.mxu0 0.0
    %7693 = vmatprep.subr.mxu0 0.0
    %7694 = vmatpush1.msra.mxu0 0.0
    %7695 = vmatprep.subr.mxu0 0.0
    %7696 = vmatpush1.msra.mxu0 0.0
    %7697 = vmatprep.subr.mxu0 0.0
    %7698 = vmatpush1.msra.mxu0 0.0
    %7699 = vmatprep.subr.mxu0 0.0
    %7700 = vmatpush1.msra.mxu0 0.0
    %7701 = vmatprep.subr.mxu0 0.0
    %7702 = vmatpush1.msra.mxu0 0.0
    %7703 = vmatprep.subr.mxu0 0.0
    %7704 = vmatpush1.msra.mxu0 0.0
    %7705 = vmatprep.subr.mxu0 0.0
    %7706 = vmatpush1.msra.mxu0 0.0
    %7707 = vmatprep.subr.mxu0 0.0
    %7708 = vmatpush1.msra.mxu0 0.0
    %7709 = vmatprep.subr.mxu0 0.0
    %7710 = vmatpush1.msra.mxu0 0.0
    %7711 = vmatprep.subr.mxu0 0.0
    %7712 = vmatpush1.msra.mxu0 0.0
    %7713 = vmatprep.subr.mxu0 0.0
    %7714 = vmatpush1.msra.mxu0 0.0
    %7715 = vmatprep.subr.mxu0 0.0
    %7716 = vmatpush1.msra.mxu0 0.0
    %7717 = vmatprep.subr.mxu0 0.0
    %7718 = vmatpush1.msra.mxu0 0.0
    %7719 = vmatprep.subr.mxu0 0.0
    %7720 = vmatpush1.msra.mxu0 0.0
    %7721 = vmatprep.mubr.f32.mxu0 0.0
    %7722 = vmatmul.mubr.f32.gmra.mrb[0].mxu0 %v7655
    %v7723 = vpop.f32.mrb[0].mxu0
    %v7724 = vadd.f32 %v7638, %v7723
    %v7725 = vpop.f32.mrb[0].mxu0
    %7726 = vdwg.mxu0
    %v7727 = vtanh.pop %v7724
    %7728 = vmatprep.subr.mxu0 %v276
    %7729 = vmatpush1.msra.mxu0 %v275
    %7730 = vmatprep.subr.mxu0 %v278
    %7731 = vmatpush1.msra.mxu0 %v277
    %7732 = vmatprep.subr.mxu0 %v280
    %7733 = vmatpush1.msra.mxu0 %v279
    %7734 = vmatprep.subr.mxu0 %v282
    %7735 = vmatpush1.msra.mxu0 %v281
    %7736 = vmatprep.subr.mxu0 %v284
    %7737 = vmatpush1.msra.mxu0 %v283
    %7738 = vmatprep.subr.mxu0 %v286
    %7739 = vmatpush1.msra.mxu0 %v285
    %7740 = vmatprep.subr.mxu0 %v288
    %7741 = vmatpush1.msra.mxu0 %v287
    %7742 = vmatprep.subr.mxu0 %v290
    %7743 = vmatpush1.msra.mxu0 %v289
    %7744 = vmatprep.subr.mxu0 %v292
    %7745 = vmatpush1.msra.mxu0 %v291
    %7746 = vmatprep.subr.mxu0 %v294
    %7747 = vmatpush1.msra.mxu0 %v293
    %7748 = vmatprep.subr.mxu0 %v296
    %7749 = vmatpush1.msra.mxu0 %v295
    %7750 = vmatprep.subr.mxu0 %v298
    %7751 = vmatpush1.msra.mxu0 %v297
    %7752 = vmatprep.subr.mxu0 %v300
    %7753 = vmatpush1.msra.mxu0 %v299
    %7754 = vmatprep.subr.mxu0 %v302
    %7755 = vmatpush1.msra.mxu0 %v301
    %7756 = vmatprep.subr.mxu0 %v304
    %7757 = vmatpush1.msra.mxu0 %v303
    %7758 = vmatprep.subr.mxu0 %v306
    %7759 = vmatpush1.msra.mxu0 %v305
    %7760 = vmatprep.subr.mxu0 0.0
    %7761 = vmatpush1.msra.mxu0 0.0
    %7762 = vmatprep.subr.mxu0 0.0
    %7763 = vmatpush1.msra.mxu0 0.0
    %7764 = vmatprep.subr.mxu0 0.0
    %7765 = vmatpush1.msra.mxu0 0.0
    %7766 = vmatprep.subr.mxu0 0.0
    %7767 = vmatpush1.msra.mxu0 0.0
    %7768 = vmatprep.subr.mxu0 0.0
    %7769 = vmatpush1.msra.mxu0 0.0
    %7770 = vmatprep.subr.mxu0 0.0
    %7771 = vmatpush1.msra.mxu0 0.0
    %7772 = vmatprep.subr.mxu0 0.0
    %7773 = vmatpush1.msra.mxu0 0.0
    %7774 = vmatprep.subr.mxu0 0.0
    %7775 = vmatpush1.msra.mxu0 0.0
    %7776 = vmatprep.subr.mxu0 0.0
    %7777 = vmatpush1.msra.mxu0 0.0
    %7778 = vmatprep.subr.mxu0 0.0
    %7779 = vmatpush1.msra.mxu0 0.0
    %7780 = vmatprep.subr.mxu0 0.0
    %7781 = vmatpush1.msra.mxu0 0.0
    %7782 = vmatprep.subr.mxu0 0.0
    %7783 = vmatpush1.msra.mxu0 0.0
    %7784 = vmatprep.subr.mxu0 0.0
    %7785 = vmatpush1.msra.mxu0 0.0
    %7786 = vmatprep.subr.mxu0 0.0
    %7787 = vmatpush1.msra.mxu0 0.0
    %7788 = vmatprep.subr.mxu0 0.0
    %7789 = vmatpush1.msra.mxu0 0.0
    %7790 = vmatprep.subr.mxu0 0.0
    %7791 = vmatpush1.msra.mxu0 0.0
    %7792 = vmatprep.mubr.f32.mxu0 0.0
    %7793 = vmatmul.mubr.f32.gmra.mrb[0].mxu0 %v7727
    %v7794 = vpop.f32.mrb[0].mxu0
    %v7795 = vadd.f32 %v1298, %v7794
    %v7796 = vpop.f32.mrb[0].mxu0
    %v7797 = vadd.f32 %v1302, %v7796
    %7798 = vdwg.mxu0
    %v7801 = vcombine.low %v7795, %v7797
    %v7802 = vcombine.high %v7795, %v7797
    %v7804 = vunpack.c.l.s4 1966171168
    %v7805 = vunpack.c.0.s8 %v7804
    %v7806 = vlaneseq
    %v7807 = vshrl.u32 %v7806, 7
    %v7808 = vsub.s32 %v7805, %v7807
    %v7809 = vrot.slane %v7801, %v7808
    %v7811 = vunpack.c.l.s4 1966171168
    %v7812 = vunpack.c.0.s8 %v7811
    %v7813 = vlaneseq
    %v7814 = vshrl.u32 %v7813, 7
    %v7815 = vsub.s32 %v7812, %v7814
    %v7816 = vrot.slane %v7802, %v7815
    %v7817 = vcombine.high %v7809, %v7809
    %v7818 = vcombine.high %v7816, %v7816
    %v7820 = vunpack.c.l.s4 1966171168
    %v7821 = vunpack.c.0.s8 %v7820
    %v7822 = vlaneseq
    %v7823 = vshrl.u32 %v7822, 7
    %v7824 = vsub.s32 %v7821, %v7823
    %v7825 = vrot.slane %v7809, %v7824
    %v7827 = vunpack.c.l.s4 1966171168
    %v7828 = vunpack.c.0.s8 %v7827
    %v7829 = vlaneseq
    %v7830 = vshrl.u32 %v7829, 7
    %v7831 = vsub.s32 %v7828, %v7830
    %v7832 = vrot.slane %v7816, %v7831
    %v7834 = vunpack.c.l.s4 1966171168
    %v7835 = vunpack.c.0.s8 %v7834
    %v7836 = vlaneseq
    %v7837 = vshrl.u32 %v7836, 7
    %v7838 = vsub.s32 %v7835, %v7837
    %v7839 = vrot.slane %v7817, %v7838
    %v7841 = vunpack.c.l.s4 1966171168
    %v7842 = vunpack.c.0.s8 %v7841
    %v7843 = vlaneseq
    %v7844 = vshrl.u32 %v7843, 7
    %v7845 = vsub.s32 %v7842, %v7844
    %v7846 = vrot.slane %v7818, %v7845
    %v7847 = vcombine.high %v7825, %v7825
    %v7848 = vcombine.high %v7832, %v7832
    %v7849 = vcombine.high %v7839, %v7839
    %v7850 = vcombine.high %v7846, %v7846
    %s7859 = scalar_lea.vmem %s11, 6
    %7860 = vst.msk [vmem:[%s7859] ss:$8 sm:$0x3] %vm1439, %v7825
    %7861 = vst.msk [vmem:[%s7859] ss:$8 sm:$0x0] %vm1439, %v7825
    %s7862 = scalar_lea.vmem %s11, 38
    %7863 = vst.msk [vmem:[%s7862] ss:$8 sm:$0x3] %vm1439, %v7839
    %7864 = vst.msk [vmem:[%s7862] ss:$8 sm:$0x0] %vm1439, %v7839
    %s7865 = scalar_lea.vmem %s11, 70
    %7866 = vst.msk [vmem:[%s7865] ss:$8 sm:$0x3] %vm1439, %v7847
    %7867 = vst.msk [vmem:[%s7865] ss:$8 sm:$0x0] %vm1439, %v7847
    %s7868 = scalar_lea.vmem %s11, 102
    %7869 = vst.msk [vmem:[%s7868] ss:$8 sm:$0x3] %vm1439, %v7849
    %7870 = vst.msk [vmem:[%s7868] ss:$8 sm:$0x0] %vm1439, %v7849
    %s7871 = scalar_lea.vmem %s11, 134
    %7872 = vst.msk [vmem:[%s7871] ss:$8 sm:$0x3] %vm1439, %v7832
    %7873 = vst.msk [vmem:[%s7871] ss:$8 sm:$0x0] %vm1439, %v7832
    %s7874 = scalar_lea.vmem %s11, 166
    %7875 = vst.msk [vmem:[%s7874] ss:$8 sm:$0x3] %vm1439, %v7846
    %7876 = vst.msk [vmem:[%s7874] ss:$8 sm:$0x0] %vm1439, %v7846
    %s7877 = scalar_lea.vmem %s11, 198
    %7878 = vst.msk [vmem:[%s7877] ss:$8 sm:$0x3] %vm1439, %v7848
    %7879 = vst.msk [vmem:[%s7877] ss:$8 sm:$0x0] %vm1439, %v7848
    %s7880 = scalar_lea.vmem %s11, 230
    %7881 = vst.msk [vmem:[%s7880] ss:$8 sm:$0x3] %vm1439, %v7850
    %7882 = vst.msk [vmem:[%s7880] ss:$8 sm:$0x0] %vm1439, %v7850
    %p7883 = scmp.lt.s32.totalorder %s6819, 10
    %s7884 = scalar_select %p7883, 1, 0
    %v7885 = vstv %s7884
    %vm7886 = vcmp.eq.s32.totalorder %v7885, 1
    %v7887 = vsel %vm7886, %v7727, %v6817
    %v7888 = vsel %vm7886, %v6992, %v6818
    %s7889 = sadd.s32 %s310, 7
    %s7890 = scalar_lea.vmem [#allocation4], 224
    %v7891 = vld [vmem:[%s7890] sm:$0xff]
    %v7892 = vld [vmem:[%s7890 + $0x8] sm:$0xff]
    %v7893 = vld [vmem:[%s7890 + $0x10] sm:$0xff]
    %v7894 = vld [vmem:[%s7890 + $0x18] sm:$0xff]
    %7895 = vmatprep.subr.mxu0 %v164
    %7896 = vmatpush1.msra.mxu0 %v163
    %7897 = vmatprep.subr.mxu0 %v168
    %7898 = vmatpush1.msra.mxu0 %v167
    %7899 = vmatprep.subr.mxu0 %v172
    %7900 = vmatpush1.msra.mxu0 %v171
    %7901 = vmatprep.subr.mxu0 %v176
    %7902 = vmatpush1.msra.mxu0 %v175
    %7903 = vmatprep.subr.mxu0 %v180
    %7904 = vmatpush1.msra.mxu0 %v179
    %7905 = vmatprep.subr.mxu0 %v184
    %7906 = vmatpush1.msra.mxu0 %v183
    %7907 = vmatprep.subr.mxu0 %v188
    %7908 = vmatpush1.msra.mxu0 %v187
    %7909 = vmatprep.subr.mxu0 %v192
    %7910 = vmatpush1.msra.mxu0 %v191
    %7911 = vmatprep.subr.mxu0 %v196
    %7912 = vmatpush1.msra.mxu0 %v195
    %7913 = vmatprep.subr.mxu0 %v200
    %7914 = vmatpush1.msra.mxu0 %v199
    %7915 = vmatprep.subr.mxu0 %v204
    %7916 = vmatpush1.msra.mxu0 %v203
    %7917 = vmatprep.subr.mxu0 %v208
    %7918 = vmatpush1.msra.mxu0 %v207
    %7919 = vmatprep.subr.mxu0 %v212
    %7920 = vmatpush1.msra.mxu0 %v211
    %7921 = vmatprep.subr.mxu0 %v216
    %7922 = vmatpush1.msra.mxu0 %v215
    %7923 = vmatprep.subr.mxu0 %v220
    %7924 = vmatpush1.msra.mxu0 %v219
    %7925 = vmatprep.subr.mxu0 %v224
    %7926 = vmatpush1.msra.mxu0 %v223
    %7927 = vmatprep.subr.mxu0 0.0
    %7928 = vmatpush1.msra.mxu0 0.0
    %7929 = vmatprep.subr.mxu0 0.0
    %7930 = vmatpush1.msra.mxu0 0.0
    %7931 = vmatprep.subr.mxu0 0.0
    %7932 = vmatpush1.msra.mxu0 0.0
    %7933 = vmatprep.subr.mxu0 0.0
    %7934 = vmatpush1.msra.mxu0 0.0
    %7935 = vmatprep.subr.mxu0 0.0
    %7936 = vmatpush1.msra.mxu0 0.0
    %7937 = vmatprep.subr.mxu0 0.0
    %7938 = vmatpush1.msra.mxu0 0.0
    %7939 = vmatprep.subr.mxu0 0.0
    %7940 = vmatpush1.msra.mxu0 0.0
    %7941 = vmatprep.subr.mxu0 0.0
    %7942 = vmatpush1.msra.mxu0 0.0
    %7943 = vmatprep.subr.mxu0 0.0
    %7944 = vmatpush1.msra.mxu0 0.0
    %7945 = vmatprep.subr.mxu0 0.0
    %7946 = vmatpush1.msra.mxu0 0.0
    %7947 = vmatprep.subr.mxu0 0.0
    %7948 = vmatpush1.msra.mxu0 0.0
    %7949 = vmatprep.subr.mxu0 0.0
    %7950 = vmatpush1.msra.mxu0 0.0
    %7951 = vmatprep.subr.mxu0 0.0
    %7952 = vmatpush1.msra.mxu0 0.0
    %7953 = vmatprep.subr.mxu0 0.0
    %7954 = vmatpush1.msra.mxu0 0.0
    %7955 = vmatprep.subr.mxu0 0.0
    %7956 = vmatpush1.msra.mxu0 0.0
    %7957 = vmatprep.subr.mxu0 0.0
    %7958 = vmatpush1.msra.mxu0 0.0
    %7959 = vmatprep.mubr.f32.mxu0 0.0
    %7960 = vmatmul.mubr.f32.gmra.mrb[0].mxu0 %v7887
    %v7961 = vpop.f32.mrb[0].mxu0
    %v7962 = vadd.f32 0.0, %v7961
    %v7963 = vpop.f32.mrb[0].mxu0
    %v7964 = vadd.f32 0.0, %v7963
    %7965 = vdwg.mxu0
    %7966 = vmatprep.subr.mxu0 %v166
    %7967 = vmatpush1.msra.mxu0 %v165
    %7968 = vmatprep.subr.mxu0 %v170
    %7969 = vmatpush1.msra.mxu0 %v169
    %7970 = vmatprep.subr.mxu0 %v174
    %7971 = vmatpush1.msra.mxu0 %v173
    %7972 = vmatprep.subr.mxu0 %v178
    %7973 = vmatpush1.msra.mxu0 %v177
    %7974 = vmatprep.subr.mxu0 %v182
    %7975 = vmatpush1.msra.mxu0 %v181
    %7976 = vmatprep.subr.mxu0 %v186
    %7977 = vmatpush1.msra.mxu0 %v185
    %7978 = vmatprep.subr.mxu0 %v190
    %7979 = vmatpush1.msra.mxu0 %v189
    %7980 = vmatprep.subr.mxu0 %v194
    %7981 = vmatpush1.msra.mxu0 %v193
    %7982 = vmatprep.subr.mxu0 %v198
    %7983 = vmatpush1.msra.mxu0 %v197
    %7984 = vmatprep.subr.mxu0 %v202
    %7985 = vmatpush1.msra.mxu0 %v201
    %7986 = vmatprep.subr.mxu0 %v206
    %7987 = vmatpush1.msra.mxu0 %v205
    %7988 = vmatprep.subr.mxu0 %v210
    %7989 = vmatpush1.msra.mxu0 %v209
    %7990 = vmatprep.subr.mxu0 %v214
    %7991 = vmatpush1.msra.mxu0 %v213
    %7992 = vmatprep.subr.mxu0 %v218
    %7993 = vmatpush1.msra.mxu0 %v217
    %7994 = vmatprep.subr.mxu0 %v222
    %7995 = vmatpush1.msra.mxu0 %v221
    %7996 = vmatprep.subr.mxu0 %v226
    %7997 = vmatpush1.msra.mxu0 %v225
    %7998 = vmatprep.subr.mxu0 0.0
    %7999 = vmatpush1.msra.mxu0 0.0
    %8000 = vmatprep.subr.mxu0 0.0
    %8001 = vmatpush1.msra.mxu0 0.0
    %8002 = vmatprep.subr.mxu0 0.0
    %8003 = vmatpush1.msra.mxu0 0.0
    %8004 = vmatprep.subr.mxu0 0.0
    %8005 = vmatpush1.msra.mxu0 0.0
    %8006 = vmatprep.subr.mxu0 0.0
    %8007 = vmatpush1.msra.mxu0 0.0
    %8008 = vmatprep.subr.mxu0 0.0
    %8009 = vmatpush1.msra.mxu0 0.0
    %8010 = vmatprep.subr.mxu0 0.0
    %8011 = vmatpush1.msra.mxu0 0.0
    %8012 = vmatprep.subr.mxu0 0.0
    %8013 = vmatpush1.msra.mxu0 0.0
    %8014 = vmatprep.subr.mxu0 0.0
    %8015 = vmatpush1.msra.mxu0 0.0
    %8016 = vmatprep.subr.mxu0 0.0
    %8017 = vmatpush1.msra.mxu0 0.0
    %8018 = vmatprep.subr.mxu0 0.0
    %8019 = vmatpush1.msra.mxu0 0.0
    %8020 = vmatprep.subr.mxu0 0.0
    %8021 = vmatpush1.msra.mxu0 0.0
    %8022 = vmatprep.subr.mxu0 0.0
    %8023 = vmatpush1.msra.mxu0 0.0
    %8024 = vmatprep.subr.mxu0 0.0
    %8025 = vmatpush1.msra.mxu0 0.0
    %8026 = vmatprep.subr.mxu0 0.0
    %8027 = vmatpush1.msra.mxu0 0.0
    %8028 = vmatprep.subr.mxu0 0.0
    %8029 = vmatpush1.msra.mxu0 0.0
    %8030 = vmatprep.mubr.f32.mxu0 0.0
    %8031 = vmatmul.mubr.f32.gmra.mrb[0].mxu0 %v7887
    %v8032 = vpop.f32.mrb[0].mxu0
    %v8033 = vadd.f32 0.0, %v8032
    %v8034 = vpop.f32.mrb[0].mxu0
    %v8035 = vadd.f32 0.0, %v8034
    %8036 = vdwg.mxu0
    %v8037 = vadd.f32 %v7891, %v7962
    %v8038 = vadd.f32 %v7892, %v7964
    %v8039 = vadd.f32 %v7893, %v8033
    %v8040 = vadd.f32 %v7894, %v8035
    %v8041 = vxor.u32 %v8037, 2147483648
    %v8042 = vmul.f32 %v8041, 1.442695
    %v8043 = vpow.pop %v8042
    %v8044 = vadd.f32 %v8043, 1.0
    %v8045 = vrcp.pop %v8044
    %v8046 = vmul.f32 1.0, %v8045
    %v8047 = vxor.u32 %v8038, 2147483648
    %v8048 = vmul.f32 %v8047, 1.442695
    %v8049 = vpow.pop %v8048
    %v8050 = vadd.f32 %v8049, 1.0
    %v8051 = vrcp.pop %v8050
    %v8052 = vmul.f32 1.0, %v8051
    %v8053 = vtanh.pop %v8039
    %v8054 = vxor.u32 %v8040, 2147483648
    %v8055 = vmul.f32 %v8054, 1.442695
    %v8056 = vpow.pop %v8055
    %v8057 = vadd.f32 %v8056, 1.0
    %v8058 = vrcp.pop %v8057
    %v8059 = vmul.f32 1.0, %v8058
    %v8060 = vmul.f32 %v8052, %v7888
    %v8061 = vmul.f32 %v8046, %v8053
    %v8062 = vadd.f32 %v8060, %v8061
    %v8063 = vtanh.pop %v8062
    %v8064 = vmul.f32 %v8059, %v8063
    %8065 = vmatprep.subr.mxu0 0.0
    %8066 = vmatpush1.msra.mxu0 %v227
    %8067 = vmatprep.subr.mxu0 0.0
    %8068 = vmatpush1.msra.mxu0 %v228
    %8069 = vmatprep.subr.mxu0 0.0
    %8070 = vmatpush1.msra.mxu0 %v229
    %8071 = vmatprep.subr.mxu0 0.0
    %8072 = vmatpush1.msra.mxu0 %v230
    %8073 = vmatprep.subr.mxu0 0.0
    %8074 = vmatpush1.msra.mxu0 %v231
    %8075 = vmatprep.subr.mxu0 0.0
    %8076 = vmatpush1.msra.mxu0 %v232
    %8077 = vmatprep.subr.mxu0 0.0
    %8078 = vmatpush1.msra.mxu0 %v233
    %8079 = vmatprep.subr.mxu0 0.0
    %8080 = vmatpush1.msra.mxu0 %v234
    %8081 = vmatprep.subr.mxu0 0.0
    %8082 = vmatpush1.msra.mxu0 %v235
    %8083 = vmatprep.subr.mxu0 0.0
    %8084 = vmatpush1.msra.mxu0 %v236
    %8085 = vmatprep.subr.mxu0 0.0
    %8086 = vmatpush1.msra.mxu0 %v237
    %8087 = vmatprep.subr.mxu0 0.0
    %8088 = vmatpush1.msra.mxu0 %v238
    %8089 = vmatprep.subr.mxu0 0.0
    %8090 = vmatpush1.msra.mxu0 %v239
    %8091 = vmatprep.subr.mxu0 0.0
    %8092 = vmatpush1.msra.mxu0 %v240
    %8093 = vmatprep.subr.mxu0 0.0
    %8094 = vmatpush1.msra.mxu0 %v241
    %8095 = vmatprep.subr.mxu0 0.0
    %8096 = vmatpush1.msra.mxu0 %v242
    %8097 = vmatprep.subr.mxu0 0.0
    %8098 = vmatpush1.msra.mxu0 0.0
    %8099 = vmatprep.subr.mxu0 0.0
    %8100 = vmatpush1.msra.mxu0 0.0
    %8101 = vmatprep.subr.mxu0 0.0
    %8102 = vmatpush1.msra.mxu0 0.0
    %8103 = vmatprep.subr.mxu0 0.0
    %8104 = vmatpush1.msra.mxu0 0.0
    %8105 = vmatprep.subr.mxu0 0.0
    %8106 = vmatpush1.msra.mxu0 0.0
    %8107 = vmatprep.subr.mxu0 0.0
    %8108 = vmatpush1.msra.mxu0 0.0
    %8109 = vmatprep.subr.mxu0 0.0
    %8110 = vmatpush1.msra.mxu0 0.0
    %8111 = vmatprep.subr.mxu0 0.0
    %8112 = vmatpush1.msra.mxu0 0.0
    %8113 = vmatprep.subr.mxu0 0.0
    %8114 = vmatpush1.msra.mxu0 0.0
    %8115 = vmatprep.subr.mxu0 0.0
    %8116 = vmatpush1.msra.mxu0 0.0
    %8117 = vmatprep.subr.mxu0 0.0
    %8118 = vmatpush1.msra.mxu0 0.0
    %8119 = vmatprep.subr.mxu0 0.0
    %8120 = vmatpush1.msra.mxu0 0.0
    %8121 = vmatprep.subr.mxu0 0.0
    %8122 = vmatpush1.msra.mxu0 0.0
    %8123 = vmatprep.subr.mxu0 0.0
    %8124 = vmatpush1.msra.mxu0 0.0
    %8125 = vmatprep.subr.mxu0 0.0
    %8126 = vmatpush1.msra.mxu0 0.0
    %8127 = vmatprep.subr.mxu0 0.0
    %8128 = vmatpush1.msra.mxu0 0.0
    %8129 = vmatprep.mubr.f32.mxu0 0.0
    %8130 = vmatmul.mubr.f32.gmra.mrb[0].mxu0 %v8064
    %v8131 = vpop.f32.mrb[0].mxu0
    %v8132 = vadd.f32 0.0, %v8131
    %v8133 = vpop.f32.mrb[0].mxu0
    %8134 = vdwg.mxu0
    %v8136 = vcombine.high %v8132, %v8132
    %v8138 = vunpack.c.l.s4 1966171168
    %v8139 = vunpack.c.0.s8 %v8138
    %v8140 = vlaneseq
    %v8141 = vshrl.u32 %v8140, 7
    %v8142 = vsub.s32 %v8139, %v8141
    %v8143 = vrot.slane %v8132, %v8142
    %v8145 = vunpack.c.l.s4 1966171168
    %v8146 = vunpack.c.0.s8 %v8145
    %v8147 = vlaneseq
    %v8148 = vshrl.u32 %v8147, 7
    %v8149 = vsub.s32 %v8146, %v8148
    %v8150 = vrot.slane %v8136, %v8149
    %v8151 = vcombine.high %v8143, %v8143
    %v8152 = vcombine.high %v8150, %v8150
    %v8154 = vunpack.c.l.s4 1966171168
    %v8155 = vunpack.c.0.s8 %v8154
    %v8156 = vlaneseq
    %v8157 = vshrl.u32 %v8156, 7
    %v8158 = vsub.s32 %v8155, %v8157
    %v8159 = vrot.slane %v8143, %v8158
    %v8161 = vunpack.c.l.s4 1966171168
    %v8162 = vunpack.c.0.s8 %v8161
    %v8163 = vlaneseq
    %v8164 = vshrl.u32 %v8163, 7
    %v8165 = vsub.s32 %v8162, %v8164
    %v8166 = vrot.slane %v8150, %v8165
    %v8168 = vunpack.c.l.s4 1966171168
    %v8169 = vunpack.c.0.s8 %v8168
    %v8170 = vlaneseq
    %v8171 = vshrl.u32 %v8170, 7
    %v8172 = vsub.s32 %v8169, %v8171
    %v8173 = vrot.slane %v8151, %v8172
    %v8175 = vunpack.c.l.s4 1966171168
    %v8176 = vunpack.c.0.s8 %v8175
    %v8177 = vlaneseq
    %v8178 = vshrl.u32 %v8177, 7
    %v8179 = vsub.s32 %v8176, %v8178
    %v8180 = vrot.slane %v8152, %v8179
    %v8181 = vcombine.high %v8159, %v8159
    %v8182 = vcombine.high %v8166, %v8166
    %v8183 = vcombine.high %v8173, %v8173
    %v8184 = vcombine.high %v8180, %v8180
    %v8185 = vlaneseq
    %v8186 = vshrl.u32 %v8185, 7
    %v8187 = vsub.s32 0, %v8186
    %v8188 = vrot.slane %v8159, %v8187
    %v8189 = vlaneseq
    %v8190 = vshrl.u32 %v8189, 7
    %v8191 = vsub.s32 0, %v8190
    %v8192 = vrot.slane %v8173, %v8191
    %v8193 = vlaneseq
    %v8194 = vshrl.u32 %v8193, 7
    %v8195 = vsub.s32 0, %v8194
    %v8196 = vrot.slane %v8181, %v8195
    %v8197 = vlaneseq
    %v8198 = vshrl.u32 %v8197, 7
    %v8199 = vsub.s32 0, %v8198
    %v8200 = vrot.slane %v8183, %v8199
    %v8201 = vlaneseq
    %v8202 = vshrl.u32 %v8201, 7
    %v8203 = vsub.s32 0, %v8202
    %v8204 = vrot.slane %v8166, %v8203
    %v8205 = vlaneseq
    %v8206 = vshrl.u32 %v8205, 7
    %v8207 = vsub.s32 0, %v8206
    %v8208 = vrot.slane %v8180, %v8207
    %v8209 = vlaneseq
    %v8210 = vshrl.u32 %v8209, 7
    %v8211 = vsub.s32 0, %v8210
    %v8212 = vrot.slane %v8182, %v8211
    %v8213 = vlaneseq
    %v8214 = vshrl.u32 %v8213, 7
    %v8215 = vsub.s32 0, %v8214
    %v8216 = vrot.slane %v8184, %v8215
    %v8225 = vmul.f32 %v154, %v8188
    %v8226 = vmul.f32 %v155, %v8192
    %v8227 = vmul.f32 %v156, %v8196
    %v8228 = vmul.f32 %v157, %v8200
    %v8229 = vmul.f32 %v158, %v8204
    %v8230 = vmul.f32 %v159, %v8208
    %v8231 = vmul.f32 %v160, %v8212
    %v8232 = vmul.f32 %v161, %v8216
    %v8233 = vsel %vm653, %v8225, 0.0
    %8234 = vadd.xlane.f32.xlu0 %v8233
    %v8235 = vpop.xlane.xlu0 %8234
    %v8236 = vsel %vm653, %v8226, 0.0
    %8237 = vadd.xlane.f32.xlu0 %v8236
    %v8238 = vpop.xlane.xlu0 %8237
    %v8239 = vsel %vm653, %v8227, 0.0
    %8240 = vadd.xlane.f32.xlu0 %v8239
    %v8241 = vpop.xlane.xlu0 %8240
    %v8242 = vsel %vm653, %v8228, 0.0
    %8243 = vadd.xlane.f32.xlu0 %v8242
    %v8244 = vpop.xlane.xlu0 %8243
    %v8245 = vsel %vm653, %v8229, 0.0
    %8246 = vadd.xlane.f32.xlu0 %v8245
    %v8247 = vpop.xlane.xlu0 %8246
    %v8248 = vsel %vm653, %v8230, 0.0
    %8249 = vadd.xlane.f32.xlu0 %v8248
    %v8250 = vpop.xlane.xlu0 %8249
    %v8251 = vsel %vm653, %v8231, 0.0
    %8252 = vadd.xlane.f32.xlu0 %v8251
    %v8253 = vpop.xlane.xlu0 %8252
    %v8254 = vsel %vm653, %v8232, 0.0
    %8255 = vadd.xlane.f32.xlu0 %v8254
    %v8256 = vpop.xlane.xlu0 %8255
    %v8257 = vadd.f32 %v8235, %v685
    %v8258 = vadd.f32 %v8238, %v692
    %v8259 = vadd.f32 %v8241, %v699
    %v8260 = vadd.f32 %v8244, %v706
    %v8261 = vadd.f32 %v8247, %v713
    %v8262 = vadd.f32 %v8250, %v720
    %v8263 = vadd.f32 %v8253, %v727
    %v8264 = vadd.f32 %v8256, %v734
    %8273 = vset.pattern.permute.xlu0 0
    %8274 = vperm.xlu0 %8273, %v8257
    %v8275 = vpop.permute.xlu0 %8274
    %8276 = vset.pattern.permute.xlu0 0
    %8277 = vperm.xlu0 %8276, %v8258
    %v8278 = vpop.permute.xlu0 %8277
    %8279 = vset.pattern.permute.xlu0 0
    %8280 = vperm.xlu0 %8279, %v8259
    %v8281 = vpop.permute.xlu0 %8280
    %8282 = vset.pattern.permute.xlu0 0
    %8283 = vperm.xlu0 %8282, %v8260
    %v8284 = vpop.permute.xlu0 %8283
    %8285 = vset.pattern.permute.xlu0 0
    %8286 = vperm.xlu0 %8285, %v8261
    %v8287 = vpop.permute.xlu0 %8286
    %8288 = vset.pattern.permute.xlu0 0
    %8289 = vperm.xlu0 %8288, %v8262
    %v8290 = vpop.permute.xlu0 %8289
    %8291 = vset.pattern.permute.xlu0 0
    %8292 = vperm.xlu0 %8291, %v8263
    %v8293 = vpop.permute.xlu0 %8292
    %8294 = vset.pattern.permute.xlu0 0
    %8295 = vperm.xlu0 %8294, %v8264
    %v8296 = vpop.permute.xlu0 %8295
    %v8297 = vlaneseq
    %v8298 = vshrl.u32 %v8297, 7
    %v8299 = vsub.s32 %v784, %v8298
    %v8300 = vrot.slane %v8275, %v8299
    %v8301 = vlaneseq
    %v8302 = vshrl.u32 %v8301, 7
    %v8303 = vsub.s32 %v784, %v8302
    %v8304 = vrot.slane %v8278, %v8303
    %v8305 = vlaneseq
    %v8306 = vshrl.u32 %v8305, 7
    %v8307 = vsub.s32 %v784, %v8306
    %v8308 = vrot.slane %v8281, %v8307
    %v8309 = vlaneseq
    %v8310 = vshrl.u32 %v8309, 7
    %v8311 = vsub.s32 %v784, %v8310
    %v8312 = vrot.slane %v8284, %v8311
    %v8313 = vlaneseq
    %v8314 = vshrl.u32 %v8313, 7
    %v8315 = vsub.s32 %v784, %v8314
    %v8316 = vrot.slane %v8287, %v8315
    %v8317 = vlaneseq
    %v8318 = vshrl.u32 %v8317, 7
    %v8319 = vsub.s32 %v784, %v8318
    %v8320 = vrot.slane %v8290, %v8319
    %v8321 = vlaneseq
    %v8322 = vshrl.u32 %v8321, 7
    %v8323 = vsub.s32 %v784, %v8322
    %v8324 = vrot.slane %v8293, %v8323
    %v8325 = vlaneseq
    %v8326 = vshrl.u32 %v8325, 7
    %v8327 = vsub.s32 %v784, %v8326
    %v8328 = vrot.slane %v8296, %v8327
    %v8329 = vsel %vm817, %v8304, %v8300
    %v8330 = vsel %vm819, %v8308, %v8329
    %v8331 = vsel %vm821, %v8312, %v8330
    %v8332 = vsel %vm823, %v8316, %v8331
    %v8333 = vsel %vm825, %v8320, %v8332
    %v8334 = vsel %vm827, %v8324, %v8333
    %v8335 = vsel %vm829, %v8328, %v8334
    %v8337 = vsel %vm832, %v8335, -inf
    %8338 = vmax.xlane.f32.xlu0 %v8337
    %v8339 = vpop.xlane.xlu0 %8338
    %v8341 = vlaneseq
    %v8342 = vshrl.u32 %v8341, 7
    %v8343 = vsub.s32 0, %v8342
    %v8344 = vrot.slane %v8339, %v8343
    %v8345 = vlaneseq
    %v8346 = vshrl.u32 %v8345, 7
    %v8347 = vsub.s32 1, %v8346
    %v8348 = vrot.slane %v8339, %v8347
    %v8349 = vlaneseq
    %v8350 = vshrl.u32 %v8349, 7
    %v8351 = vsub.s32 2, %v8350
    %v8352 = vrot.slane %v8339, %v8351
    %v8353 = vlaneseq
    %v8354 = vshrl.u32 %v8353, 7
    %v8355 = vsub.s32 3, %v8354
    %v8356 = vrot.slane %v8339, %v8355
    %v8357 = vlaneseq
    %v8358 = vshrl.u32 %v8357, 7
    %v8359 = vsub.s32 4, %v8358
    %v8360 = vrot.slane %v8339, %v8359
    %v8361 = vlaneseq
    %v8362 = vshrl.u32 %v8361, 7
    %v8363 = vsub.s32 5, %v8362
    %v8364 = vrot.slane %v8339, %v8363
    %v8365 = vlaneseq
    %v8366 = vshrl.u32 %v8365, 7
    %v8367 = vsub.s32 6, %v8366
    %v8368 = vrot.slane %v8339, %v8367
    %v8369 = vlaneseq
    %v8370 = vshrl.u32 %v8369, 7
    %v8371 = vsub.s32 7, %v8370
    %v8372 = vrot.slane %v8339, %v8371
    %v8381 = vsub.f32 %v8257, %v8344
    %v8382 = vsub.f32 %v8258, %v8348
    %v8383 = vsub.f32 %v8259, %v8352
    %v8384 = vsub.f32 %v8260, %v8356
    %v8385 = vsub.f32 %v8261, %v8360
    %v8386 = vsub.f32 %v8262, %v8364
    %v8387 = vsub.f32 %v8263, %v8368
    %v8388 = vsub.f32 %v8264, %v8372
    %v8389 = vmul.f32 %v8381, 1.442695
    %v8390 = vpow.pop %v8389
    %v8391 = vmul.f32 %v8382, 1.442695
    %v8392 = vpow.pop %v8391
    %v8393 = vmul.f32 %v8383, 1.442695
    %v8394 = vpow.pop %v8393
    %v8395 = vmul.f32 %v8384, 1.442695
    %v8396 = vpow.pop %v8395
    %v8397 = vmul.f32 %v8385, 1.442695
    %v8398 = vpow.pop %v8397
    %v8399 = vmul.f32 %v8386, 1.442695
    %v8400 = vpow.pop %v8399
    %v8401 = vmul.f32 %v8387, 1.442695
    %v8402 = vpow.pop %v8401
    %v8403 = vmul.f32 %v8388, 1.442695
    %v8404 = vpow.pop %v8403
    %8413 = vset.pattern.permute.xlu0 0
    %8414 = vperm.xlu0 %8413, %v8390
    %v8415 = vpop.permute.xlu0 %8414
    %8416 = vset.pattern.permute.xlu0 0
    %8417 = vperm.xlu0 %8416, %v8392
    %v8418 = vpop.permute.xlu0 %8417
    %8419 = vset.pattern.permute.xlu0 0
    %8420 = vperm.xlu0 %8419, %v8394
    %v8421 = vpop.permute.xlu0 %8420
    %8422 = vset.pattern.permute.xlu0 0
    %8423 = vperm.xlu0 %8422, %v8396
    %v8424 = vpop.permute.xlu0 %8423
    %8425 = vset.pattern.permute.xlu0 0
    %8426 = vperm.xlu0 %8425, %v8398
    %v8427 = vpop.permute.xlu0 %8426
    %8428 = vset.pattern.permute.xlu0 0
    %8429 = vperm.xlu0 %8428, %v8400
    %v8430 = vpop.permute.xlu0 %8429
    %8431 = vset.pattern.permute.xlu0 0
    %8432 = vperm.xlu0 %8431, %v8402
    %v8433 = vpop.permute.xlu0 %8432
    %8434 = vset.pattern.permute.xlu0 0
    %8435 = vperm.xlu0 %8434, %v8404
    %v8436 = vpop.permute.xlu0 %8435
    %v8437 = vlaneseq
    %v8438 = vshrl.u32 %v8437, 7
    %v8439 = vsub.s32 %v784, %v8438
    %v8440 = vrot.slane %v8415, %v8439
    %v8441 = vlaneseq
    %v8442 = vshrl.u32 %v8441, 7
    %v8443 = vsub.s32 %v784, %v8442
    %v8444 = vrot.slane %v8418, %v8443
    %v8445 = vlaneseq
    %v8446 = vshrl.u32 %v8445, 7
    %v8447 = vsub.s32 %v784, %v8446
    %v8448 = vrot.slane %v8421, %v8447
    %v8449 = vlaneseq
    %v8450 = vshrl.u32 %v8449, 7
    %v8451 = vsub.s32 %v784, %v8450
    %v8452 = vrot.slane %v8424, %v8451
    %v8453 = vlaneseq
    %v8454 = vshrl.u32 %v8453, 7
    %v8455 = vsub.s32 %v784, %v8454
    %v8456 = vrot.slane %v8427, %v8455
    %v8457 = vlaneseq
    %v8458 = vshrl.u32 %v8457, 7
    %v8459 = vsub.s32 %v784, %v8458
    %v8460 = vrot.slane %v8430, %v8459
    %v8461 = vlaneseq
    %v8462 = vshrl.u32 %v8461, 7
    %v8463 = vsub.s32 %v784, %v8462
    %v8464 = vrot.slane %v8433, %v8463
    %v8465 = vlaneseq
    %v8466 = vshrl.u32 %v8465, 7
    %v8467 = vsub.s32 %v784, %v8466
    %v8468 = vrot.slane %v8436, %v8467
    %v8469 = vsel %vm817, %v8444, %v8440
    %v8470 = vsel %vm819, %v8448, %v8469
    %v8471 = vsel %vm821, %v8452, %v8470
    %v8472 = vsel %vm823, %v8456, %v8471
    %v8473 = vsel %vm825, %v8460, %v8472
    %v8474 = vsel %vm827, %v8464, %v8473
    %v8475 = vsel %vm829, %v8468, %v8474
    %v8477 = vsel %vm832, %v8475, 0.0
    %8478 = vadd.xlane.f32.xlu0 %v8477
    %v8479 = vpop.xlane.xlu0 %8478
    %v8481 = vlaneseq
    %v8482 = vshrl.u32 %v8481, 7
    %v8483 = vsub.s32 0, %v8482
    %v8484 = vrot.slane %v8479, %v8483
    %v8485 = vlaneseq
    %v8486 = vshrl.u32 %v8485, 7
    %v8487 = vsub.s32 1, %v8486
    %v8488 = vrot.slane %v8479, %v8487
    %v8489 = vlaneseq
    %v8490 = vshrl.u32 %v8489, 7
    %v8491 = vsub.s32 2, %v8490
    %v8492 = vrot.slane %v8479, %v8491
    %v8493 = vlaneseq
    %v8494 = vshrl.u32 %v8493, 7
    %v8495 = vsub.s32 3, %v8494
    %v8496 = vrot.slane %v8479, %v8495
    %v8497 = vlaneseq
    %v8498 = vshrl.u32 %v8497, 7
    %v8499 = vsub.s32 4, %v8498
    %v8500 = vrot.slane %v8479, %v8499
    %v8501 = vlaneseq
    %v8502 = vshrl.u32 %v8501, 7
    %v8503 = vsub.s32 5, %v8502
    %v8504 = vrot.slane %v8479, %v8503
    %v8505 = vlaneseq
    %v8506 = vshrl.u32 %v8505, 7
    %v8507 = vsub.s32 6, %v8506
    %v8508 = vrot.slane %v8479, %v8507
    %v8509 = vlaneseq
    %v8510 = vshrl.u32 %v8509, 7
    %v8511 = vsub.s32 7, %v8510
    %v8512 = vrot.slane %v8479, %v8511
    %v8521 = vrcp.pop %v8484
    %v8522 = vmul.f32 %v8390, %v8521
    %v8523 = vrcp.pop %v8488
    %v8524 = vmul.f32 %v8392, %v8523
    %v8525 = vrcp.pop %v8492
    %v8526 = vmul.f32 %v8394, %v8525
    %v8527 = vrcp.pop %v8496
    %v8528 = vmul.f32 %v8396, %v8527
    %v8529 = vrcp.pop %v8500
    %v8530 = vmul.f32 %v8398, %v8529
    %v8531 = vrcp.pop %v8504
    %v8532 = vmul.f32 %v8400, %v8531
    %v8533 = vrcp.pop %v8508
    %v8534 = vmul.f32 %v8402, %v8533
    %v8535 = vrcp.pop %v8512
    %v8536 = vmul.f32 %v8404, %v8535
    %8538 = vset.pattern.permute.xlu0 0
    %8539 = vperm.xlu0 %8538, %v8522
    %v8540 = vpop.permute.xlu0 %8539
    %8543 = vset.pattern.permute.xlu0 0
    %8544 = vperm.xlu0 %8543, %v8524
    %v8545 = vpop.permute.xlu0 %8544
    %8548 = vset.pattern.permute.xlu0 0
    %8549 = vperm.xlu0 %8548, %v8526
    %v8550 = vpop.permute.xlu0 %8549
    %8553 = vset.pattern.permute.xlu0 0
    %8554 = vperm.xlu0 %8553, %v8528
    %v8555 = vpop.permute.xlu0 %8554
    %8558 = vset.pattern.permute.xlu0 0
    %8559 = vperm.xlu0 %8558, %v8530
    %v8560 = vpop.permute.xlu0 %8559
    %8563 = vset.pattern.permute.xlu0 0
    %8564 = vperm.xlu0 %8563, %v8532
    %v8565 = vpop.permute.xlu0 %8564
    %8568 = vset.pattern.permute.xlu0 0
    %8569 = vperm.xlu0 %8568, %v8534
    %v8570 = vpop.permute.xlu0 %8569
    %8573 = vset.pattern.permute.xlu0 0
    %8574 = vperm.xlu0 %8573, %v8536
    %v8575 = vpop.permute.xlu0 %8574
    %v8577 = vmul.f32 %v8540, %v154
    %v8578 = vmul.f32 %v8545, %v155
    %v8579 = vmul.f32 %v8550, %v156
    %v8580 = vmul.f32 %v8555, %v157
    %v8581 = vmul.f32 %v8560, %v158
    %v8582 = vmul.f32 %v8565, %v159
    %v8583 = vmul.f32 %v8570, %v160
    %v8584 = vmul.f32 %v8575, %v161
    %v8585 = vsel %vm653, %v8577, 0.0
    %v8586 = vrot.slane %v8585, 4
    %v8587 = vadd.f32 %v8585, %v8586
    %v8588 = vrot.slane %v8587, 2
    %v8589 = vadd.f32 %v8587, %v8588
    %v8590 = vrot.slane %v8589, 1
    %v8591 = vadd.f32 %v8589, %v8590
    %v8592 = vsel %vm653, %v8578, 0.0
    %v8593 = vrot.slane %v8592, 4
    %v8594 = vadd.f32 %v8592, %v8593
    %v8595 = vrot.slane %v8594, 2
    %v8596 = vadd.f32 %v8594, %v8595
    %v8597 = vrot.slane %v8596, 1
    %v8598 = vadd.f32 %v8596, %v8597
    %v8599 = vsel %vm653, %v8579, 0.0
    %v8600 = vrot.slane %v8599, 4
    %v8601 = vadd.f32 %v8599, %v8600
    %v8602 = vrot.slane %v8601, 2
    %v8603 = vadd.f32 %v8601, %v8602
    %v8604 = vrot.slane %v8603, 1
    %v8605 = vadd.f32 %v8603, %v8604
    %v8606 = vsel %vm653, %v8580, 0.0
    %v8607 = vrot.slane %v8606, 4
    %v8608 = vadd.f32 %v8606, %v8607
    %v8609 = vrot.slane %v8608, 2
    %v8610 = vadd.f32 %v8608, %v8609
    %v8611 = vrot.slane %v8610, 1
    %v8612 = vadd.f32 %v8610, %v8611
    %v8613 = vsel %vm653, %v8581, 0.0
    %v8614 = vrot.slane %v8613, 4
    %v8615 = vadd.f32 %v8613, %v8614
    %v8616 = vrot.slane %v8615, 2
    %v8617 = vadd.f32 %v8615, %v8616
    %v8618 = vrot.slane %v8617, 1
    %v8619 = vadd.f32 %v8617, %v8618
    %v8620 = vsel %vm653, %v8582, 0.0
    %v8621 = vrot.slane %v8620, 4
    %v8622 = vadd.f32 %v8620, %v8621
    %v8623 = vrot.slane %v8622, 2
    %v8624 = vadd.f32 %v8622, %v8623
    %v8625 = vrot.slane %v8624, 1
    %v8626 = vadd.f32 %v8624, %v8625
    %v8627 = vsel %vm653, %v8583, 0.0
    %v8628 = vrot.slane %v8627, 4
    %v8629 = vadd.f32 %v8627, %v8628
    %v8630 = vrot.slane %v8629, 2
    %v8631 = vadd.f32 %v8629, %v8630
    %v8632 = vrot.slane %v8631, 1
    %v8633 = vadd.f32 %v8631, %v8632
    %v8634 = vsel %vm653, %v8584, 0.0
    %v8635 = vrot.slane %v8634, 4
    %v8636 = vadd.f32 %v8634, %v8635
    %v8637 = vrot.slane %v8636, 2
    %v8638 = vadd.f32 %v8636, %v8637
    %v8639 = vrot.slane %v8638, 1
    %v8640 = vadd.f32 %v8638, %v8639
    %8641 = vmatprep.subr.mxu0 0.0
    %8642 = vmatpush1.msra.mxu0 %v259
    %8643 = vmatprep.subr.mxu0 0.0
    %8644 = vmatpush1.msra.mxu0 %v260
    %8645 = vmatprep.subr.mxu0 0.0
    %8646 = vmatpush1.msra.mxu0 %v261
    %8647 = vmatprep.subr.mxu0 0.0
    %8648 = vmatpush1.msra.mxu0 %v262
    %8649 = vmatprep.subr.mxu0 0.0
    %8650 = vmatpush1.msra.mxu0 %v263
    %8651 = vmatprep.subr.mxu0 0.0
    %8652 = vmatpush1.msra.mxu0 %v264
    %8653 = vmatprep.subr.mxu0 0.0
    %8654 = vmatpush1.msra.mxu0 %v265
    %8655 = vmatprep.subr.mxu0 0.0
    %8656 = vmatpush1.msra.mxu0 %v266
    %8657 = vmatprep.subr.mxu0 0.0
    %8658 = vmatpush1.msra.mxu0 %v267
    %8659 = vmatprep.subr.mxu0 0.0
    %8660 = vmatpush1.msra.mxu0 %v268
    %8661 = vmatprep.subr.mxu0 0.0
    %8662 = vmatpush1.msra.mxu0 %v269
    %8663 = vmatprep.subr.mxu0 0.0
    %8664 = vmatpush1.msra.mxu0 %v270
    %8665 = vmatprep.subr.mxu0 0.0
    %8666 = vmatpush1.msra.mxu0 %v271
    %8667 = vmatprep.subr.mxu0 0.0
    %8668 = vmatpush1.msra.mxu0 %v272
    %8669 = vmatprep.subr.mxu0 0.0
    %8670 = vmatpush1.msra.mxu0 %v273
    %8671 = vmatprep.subr.mxu0 0.0
    %8672 = vmatpush1.msra.mxu0 %v274
    %8673 = vmatprep.subr.mxu0 0.0
    %8674 = vmatpush1.msra.mxu0 0.0
    %8675 = vmatprep.subr.mxu0 0.0
    %8676 = vmatpush1.msra.mxu0 0.0
    %8677 = vmatprep.subr.mxu0 0.0
    %8678 = vmatpush1.msra.mxu0 0.0
    %8679 = vmatprep.subr.mxu0 0.0
    %8680 = vmatpush1.msra.mxu0 0.0
    %8681 = vmatprep.subr.mxu0 0.0
    %8682 = vmatpush1.msra.mxu0 0.0
    %8683 = vmatprep.subr.mxu0 0.0
    %8684 = vmatpush1.msra.mxu0 0.0
    %8685 = vmatprep.subr.mxu0 0.0
    %8686 = vmatpush1.msra.mxu0 0.0
    %8687 = vmatprep.subr.mxu0 0.0
    %8688 = vmatpush1.msra.mxu0 0.0
    %8689 = vmatprep.subr.mxu0 0.0
    %8690 = vmatpush1.msra.mxu0 0.0
    %8691 = vmatprep.subr.mxu0 0.0
    %8692 = vmatpush1.msra.mxu0 0.0
    %8693 = vmatprep.subr.mxu0 0.0
    %8694 = vmatpush1.msra.mxu0 0.0
    %8695 = vmatprep.subr.mxu0 0.0
    %8696 = vmatpush1.msra.mxu0 0.0
    %8697 = vmatprep.subr.mxu0 0.0
    %8698 = vmatpush1.msra.mxu0 0.0
    %8699 = vmatprep.subr.mxu0 0.0
    %8700 = vmatpush1.msra.mxu0 0.0
    %8701 = vmatprep.subr.mxu0 0.0
    %8702 = vmatpush1.msra.mxu0 0.0
    %8703 = vmatprep.subr.mxu0 0.0
    %8704 = vmatpush1.msra.mxu0 0.0
    %8705 = vmatprep.mubr.f32.mxu0 0.0
    %8706 = vmatmul.mubr.f32.gmra.mrb[0].mxu0 %v8064
    %v8707 = vpop.f32.mrb[0].mxu0
    %v8708 = vadd.f32 0.0, %v8707
    %v8709 = vpop.f32.mrb[0].mxu0
    %8710 = vdwg.mxu0
    %v8719 = vsel %vm817, %v8598, %v8591
    %v8720 = vsel %vm819, %v8605, %v8719
    %v8721 = vsel %vm821, %v8612, %v8720
    %v8722 = vsel %vm823, %v8619, %v8721
    %v8723 = vsel %vm825, %v8626, %v8722
    %v8724 = vsel %vm827, %v8633, %v8723
    %v8725 = vsel %vm829, %v8640, %v8724
    %8727 = vmatprep.subr.mxu0 0.0
    %8728 = vmatpush1.msra.mxu0 %v243
    %8729 = vmatprep.subr.mxu0 0.0
    %8730 = vmatpush1.msra.mxu0 %v244
    %8731 = vmatprep.subr.mxu0 0.0
    %8732 = vmatpush1.msra.mxu0 %v245
    %8733 = vmatprep.subr.mxu0 0.0
    %8734 = vmatpush1.msra.mxu0 %v246
    %8735 = vmatprep.subr.mxu0 0.0
    %8736 = vmatpush1.msra.mxu0 %v247
    %8737 = vmatprep.subr.mxu0 0.0
    %8738 = vmatpush1.msra.mxu0 %v248
    %8739 = vmatprep.subr.mxu0 0.0
    %8740 = vmatpush1.msra.mxu0 %v249
    %8741 = vmatprep.subr.mxu0 0.0
    %8742 = vmatpush1.msra.mxu0 %v250
    %8743 = vmatprep.subr.mxu0 0.0
    %8744 = vmatpush1.msra.mxu0 %v251
    %8745 = vmatprep.subr.mxu0 0.0
    %8746 = vmatpush1.msra.mxu0 %v252
    %8747 = vmatprep.subr.mxu0 0.0
    %8748 = vmatpush1.msra.mxu0 %v253
    %8749 = vmatprep.subr.mxu0 0.0
    %8750 = vmatpush1.msra.mxu0 %v254
    %8751 = vmatprep.subr.mxu0 0.0
    %8752 = vmatpush1.msra.mxu0 %v255
    %8753 = vmatprep.subr.mxu0 0.0
    %8754 = vmatpush1.msra.mxu0 %v256
    %8755 = vmatprep.subr.mxu0 0.0
    %8756 = vmatpush1.msra.mxu0 %v257
    %8757 = vmatprep.subr.mxu0 0.0
    %8758 = vmatpush1.msra.mxu0 %v258
    %8759 = vmatprep.subr.mxu0 0.0
    %8760 = vmatpush1.msra.mxu0 0.0
    %8761 = vmatprep.subr.mxu0 0.0
    %8762 = vmatpush1.msra.mxu0 0.0
    %8763 = vmatprep.subr.mxu0 0.0
    %8764 = vmatpush1.msra.mxu0 0.0
    %8765 = vmatprep.subr.mxu0 0.0
    %8766 = vmatpush1.msra.mxu0 0.0
    %8767 = vmatprep.subr.mxu0 0.0
    %8768 = vmatpush1.msra.mxu0 0.0
    %8769 = vmatprep.subr.mxu0 0.0
    %8770 = vmatpush1.msra.mxu0 0.0
    %8771 = vmatprep.subr.mxu0 0.0
    %8772 = vmatpush1.msra.mxu0 0.0
    %8773 = vmatprep.subr.mxu0 0.0
    %8774 = vmatpush1.msra.mxu0 0.0
    %8775 = vmatprep.subr.mxu0 0.0
    %8776 = vmatpush1.msra.mxu0 0.0
    %8777 = vmatprep.subr.mxu0 0.0
    %8778 = vmatpush1.msra.mxu0 0.0
    %8779 = vmatprep.subr.mxu0 0.0
    %8780 = vmatpush1.msra.mxu0 0.0
    %8781 = vmatprep.subr.mxu0 0.0
    %8782 = vmatpush1.msra.mxu0 0.0
    %8783 = vmatprep.subr.mxu0 0.0
    %8784 = vmatpush1.msra.mxu0 0.0
    %8785 = vmatprep.subr.mxu0 0.0
    %8786 = vmatpush1.msra.mxu0 0.0
    %8787 = vmatprep.subr.mxu0 0.0
    %8788 = vmatpush1.msra.mxu0 0.0
    %8789 = vmatprep.subr.mxu0 0.0
    %8790 = vmatpush1.msra.mxu0 0.0
    %8791 = vmatprep.mubr.f32.mxu0 0.0
    %8792 = vmatmul.mubr.f32.gmra.mrb[0].mxu0 %v8725
    %v8793 = vpop.f32.mrb[0].mxu0
    %v8794 = vadd.f32 %v8708, %v8793
    %v8795 = vpop.f32.mrb[0].mxu0
    %8796 = vdwg.mxu0
    %v8797 = vtanh.pop %v8794
    %8798 = vmatprep.subr.mxu0 %v276
    %8799 = vmatpush1.msra.mxu0 %v275
    %8800 = vmatprep.subr.mxu0 %v278
    %8801 = vmatpush1.msra.mxu0 %v277
    %8802 = vmatprep.subr.mxu0 %v280
    %8803 = vmatpush1.msra.mxu0 %v279
    %8804 = vmatprep.subr.mxu0 %v282
    %8805 = vmatpush1.msra.mxu0 %v281
    %8806 = vmatprep.subr.mxu0 %v284
    %8807 = vmatpush1.msra.mxu0 %v283
    %8808 = vmatprep.subr.mxu0 %v286
    %8809 = vmatpush1.msra.mxu0 %v285
    %8810 = vmatprep.subr.mxu0 %v288
    %8811 = vmatpush1.msra.mxu0 %v287
    %8812 = vmatprep.subr.mxu0 %v290
    %8813 = vmatpush1.msra.mxu0 %v289
    %8814 = vmatprep.subr.mxu0 %v292
    %8815 = vmatpush1.msra.mxu0 %v291
    %8816 = vmatprep.subr.mxu0 %v294
    %8817 = vmatpush1.msra.mxu0 %v293
    %8818 = vmatprep.subr.mxu0 %v296
    %8819 = vmatpush1.msra.mxu0 %v295
    %8820 = vmatprep.subr.mxu0 %v298
    %8821 = vmatpush1.msra.mxu0 %v297
    %8822 = vmatprep.subr.mxu0 %v300
    %8823 = vmatpush1.msra.mxu0 %v299
    %8824 = vmatprep.subr.mxu0 %v302
    %8825 = vmatpush1.msra.mxu0 %v301
    %8826 = vmatprep.subr.mxu0 %v304
    %8827 = vmatpush1.msra.mxu0 %v303
    %8828 = vmatprep.subr.mxu0 %v306
    %8829 = vmatpush1.msra.mxu0 %v305
    %8830 = vmatprep.subr.mxu0 0.0
    %8831 = vmatpush1.msra.mxu0 0.0
    %8832 = vmatprep.subr.mxu0 0.0
    %8833 = vmatpush1.msra.mxu0 0.0
    %8834 = vmatprep.subr.mxu0 0.0
    %8835 = vmatpush1.msra.mxu0 0.0
    %8836 = vmatprep.subr.mxu0 0.0
    %8837 = vmatpush1.msra.mxu0 0.0
    %8838 = vmatprep.subr.mxu0 0.0
    %8839 = vmatpush1.msra.mxu0 0.0
    %8840 = vmatprep.subr.mxu0 0.0
    %8841 = vmatpush1.msra.mxu0 0.0
    %8842 = vmatprep.subr.mxu0 0.0
    %8843 = vmatpush1.msra.mxu0 0.0
    %8844 = vmatprep.subr.mxu0 0.0
    %8845 = vmatpush1.msra.mxu0 0.0
    %8846 = vmatprep.subr.mxu0 0.0
    %8847 = vmatpush1.msra.mxu0 0.0
    %8848 = vmatprep.subr.mxu0 0.0
    %8849 = vmatpush1.msra.mxu0 0.0
    %8850 = vmatprep.subr.mxu0 0.0
    %8851 = vmatpush1.msra.mxu0 0.0
    %8852 = vmatprep.subr.mxu0 0.0
    %8853 = vmatpush1.msra.mxu0 0.0
    %8854 = vmatprep.subr.mxu0 0.0
    %8855 = vmatpush1.msra.mxu0 0.0
    %8856 = vmatprep.subr.mxu0 0.0
    %8857 = vmatpush1.msra.mxu0 0.0
    %8858 = vmatprep.subr.mxu0 0.0
    %8859 = vmatpush1.msra.mxu0 0.0
    %8860 = vmatprep.subr.mxu0 0.0
    %8861 = vmatpush1.msra.mxu0 0.0
    %8862 = vmatprep.mubr.f32.mxu0 0.0
    %8863 = vmatmul.mubr.f32.gmra.mrb[0].mxu0 %v8797
    %v8864 = vpop.f32.mrb[0].mxu0
    %v8865 = vadd.f32 %v1298, %v8864
    %v8866 = vpop.f32.mrb[0].mxu0
    %v8867 = vadd.f32 %v1302, %v8866
    %8868 = vdwg.mxu0
    %v8871 = vcombine.low %v8865, %v8867
    %v8872 = vcombine.high %v8865, %v8867
    %v8874 = vunpack.c.l.s4 1966171168
    %v8875 = vunpack.c.0.s8 %v8874
    %v8876 = vlaneseq
    %v8877 = vshrl.u32 %v8876, 7
    %v8878 = vsub.s32 %v8875, %v8877
    %v8879 = vrot.slane %v8871, %v8878
    %v8881 = vunpack.c.l.s4 1966171168
    %v8882 = vunpack.c.0.s8 %v8881
    %v8883 = vlaneseq
    %v8884 = vshrl.u32 %v8883, 7
    %v8885 = vsub.s32 %v8882, %v8884
    %v8886 = vrot.slane %v8872, %v8885
    %v8887 = vcombine.high %v8879, %v8879
    %v8888 = vcombine.high %v8886, %v8886
    %v8890 = vunpack.c.l.s4 1966171168
    %v8891 = vunpack.c.0.s8 %v8890
    %v8892 = vlaneseq
    %v8893 = vshrl.u32 %v8892, 7
    %v8894 = vsub.s32 %v8891, %v8893
    %v8895 = vrot.slane %v8879, %v8894
    %v8897 = vunpack.c.l.s4 1966171168
    %v8898 = vunpack.c.0.s8 %v8897
    %v8899 = vlaneseq
    %v8900 = vshrl.u32 %v8899, 7
    %v8901 = vsub.s32 %v8898, %v8900
    %v8902 = vrot.slane %v8886, %v8901
    %v8904 = vunpack.c.l.s4 1966171168
    %v8905 = vunpack.c.0.s8 %v8904
    %v8906 = vlaneseq
    %v8907 = vshrl.u32 %v8906, 7
    %v8908 = vsub.s32 %v8905, %v8907
    %v8909 = vrot.slane %v8887, %v8908
    %v8911 = vunpack.c.l.s4 1966171168
    %v8912 = vunpack.c.0.s8 %v8911
    %v8913 = vlaneseq
    %v8914 = vshrl.u32 %v8913, 7
    %v8915 = vsub.s32 %v8912, %v8914
    %v8916 = vrot.slane %v8888, %v8915
    %v8917 = vcombine.high %v8895, %v8895
    %v8918 = vcombine.high %v8902, %v8902
    %v8919 = vcombine.high %v8909, %v8909
    %v8920 = vcombine.high %v8916, %v8916
    %s8929 = scalar_lea.vmem %s11, 7
    %8930 = vst.msk [vmem:[%s8929] ss:$8 sm:$0x3] %vm1439, %v8895
    %8931 = vst.msk [vmem:[%s8929] ss:$8 sm:$0x0] %vm1439, %v8895
    %s8932 = scalar_lea.vmem %s11, 39
    %8933 = vst.msk [vmem:[%s8932] ss:$8 sm:$0x3] %vm1439, %v8909
    %8934 = vst.msk [vmem:[%s8932] ss:$8 sm:$0x0] %vm1439, %v8909
    %s8935 = scalar_lea.vmem %s11, 71
    %8936 = vst.msk [vmem:[%s8935] ss:$8 sm:$0x3] %vm1439, %v8917
    %8937 = vst.msk [vmem:[%s8935] ss:$8 sm:$0x0] %vm1439, %v8917
    %s8938 = scalar_lea.vmem %s11, 103
    %8939 = vst.msk [vmem:[%s8938] ss:$8 sm:$0x3] %vm1439, %v8919
    %8940 = vst.msk [vmem:[%s8938] ss:$8 sm:$0x0] %vm1439, %v8919
    %s8941 = scalar_lea.vmem %s11, 135
    %8942 = vst.msk [vmem:[%s8941] ss:$8 sm:$0x3] %vm1439, %v8902
    %8943 = vst.msk [vmem:[%s8941] ss:$8 sm:$0x0] %vm1439, %v8902
    %s8944 = scalar_lea.vmem %s11, 167
    %8945 = vst.msk [vmem:[%s8944] ss:$8 sm:$0x3] %vm1439, %v8916
    %8946 = vst.msk [vmem:[%s8944] ss:$8 sm:$0x0] %vm1439, %v8916
    %s8947 = scalar_lea.vmem %s11, 199
    %8948 = vst.msk [vmem:[%s8947] ss:$8 sm:$0x3] %vm1439, %v8918
    %8949 = vst.msk [vmem:[%s8947] ss:$8 sm:$0x0] %vm1439, %v8918
    %s8950 = scalar_lea.vmem %s11, 231
    %8951 = vst.msk [vmem:[%s8950] ss:$8 sm:$0x3] %vm1439, %v8920
    %8952 = vst.msk [vmem:[%s8950] ss:$8 sm:$0x0] %vm1439, %v8920
    %p8953 = scmp.lt.s32.totalorder %s7889, 10
    %s8954 = scalar_select %p8953, 1, 0
    %v8955 = vstv %s8954
    %vm8956 = vcmp.eq.s32.totalorder %v8955, 1
    %v8957 = vsel %vm8956, %v8797, %v7887
    %v8958 = vsel %vm8956, %v8062, %v7888
    %s8959 = sadd.s32 %s310, 8
    %s8960 = scalar_lea.vmem [#allocation4], 256
    %v8961 = vld [vmem:[%s8960] sm:$0xff]
    %v8962 = vld [vmem:[%s8960 + $0x8] sm:$0xff]
    %v8963 = vld [vmem:[%s8960 + $0x10] sm:$0xff]
    %v8964 = vld [vmem:[%s8960 + $0x18] sm:$0xff]
    %8965 = vmatprep.subr.mxu0 %v164
    %8966 = vmatpush1.msra.mxu0 %v163
    %8967 = vmatprep.subr.mxu0 %v168
    %8968 = vmatpush1.msra.mxu0 %v167
    %8969 = vmatprep.subr.mxu0 %v172
    %8970 = vmatpush1.msra.mxu0 %v171
    %8971 = vmatprep.subr.mxu0 %v176
    %8972 = vmatpush1.msra.mxu0 %v175
    %8973 = vmatprep.subr.mxu0 %v180
    %8974 = vmatpush1.msra.mxu0 %v179
    %8975 = vmatprep.subr.mxu0 %v184
    %8976 = vmatpush1.msra.mxu0 %v183
    %8977 = vmatprep.subr.mxu0 %v188
    %8978 = vmatpush1.msra.mxu0 %v187
    %8979 = vmatprep.subr.mxu0 %v192
    %8980 = vmatpush1.msra.mxu0 %v191
    %8981 = vmatprep.subr.mxu0 %v196
    %8982 = vmatpush1.msra.mxu0 %v195
    %8983 = vmatprep.subr.mxu0 %v200
    %8984 = vmatpush1.msra.mxu0 %v199
    %8985 = vmatprep.subr.mxu0 %v204
    %8986 = vmatpush1.msra.mxu0 %v203
    %8987 = vmatprep.subr.mxu0 %v208
    %8988 = vmatpush1.msra.mxu0 %v207
    %8989 = vmatprep.subr.mxu0 %v212
    %8990 = vmatpush1.msra.mxu0 %v211
    %8991 = vmatprep.subr.mxu0 %v216
    %8992 = vmatpush1.msra.mxu0 %v215
    %8993 = vmatprep.subr.mxu0 %v220
    %8994 = vmatpush1.msra.mxu0 %v219
    %8995 = vmatprep.subr.mxu0 %v224
    %8996 = vmatpush1.msra.mxu0 %v223
    %8997 = vmatprep.subr.mxu0 0.0
    %8998 = vmatpush1.msra.mxu0 0.0
    %8999 = vmatprep.subr.mxu0 0.0
    %9000 = vmatpush1.msra.mxu0 0.0
    %9001 = vmatprep.subr.mxu0 0.0
    %9002 = vmatpush1.msra.mxu0 0.0
    %9003 = vmatprep.subr.mxu0 0.0
    %9004 = vmatpush1.msra.mxu0 0.0
    %9005 = vmatprep.subr.mxu0 0.0
    %9006 = vmatpush1.msra.mxu0 0.0
    %9007 = vmatprep.subr.mxu0 0.0
    %9008 = vmatpush1.msra.mxu0 0.0
    %9009 = vmatprep.subr.mxu0 0.0
    %9010 = vmatpush1.msra.mxu0 0.0
    %9011 = vmatprep.subr.mxu0 0.0
    %9012 = vmatpush1.msra.mxu0 0.0
    %9013 = vmatprep.subr.mxu0 0.0
    %9014 = vmatpush1.msra.mxu0 0.0
    %9015 = vmatprep.subr.mxu0 0.0
    %9016 = vmatpush1.msra.mxu0 0.0
    %9017 = vmatprep.subr.mxu0 0.0
    %9018 = vmatpush1.msra.mxu0 0.0
    %9019 = vmatprep.subr.mxu0 0.0
    %9020 = vmatpush1.msra.mxu0 0.0
    %9021 = vmatprep.subr.mxu0 0.0
    %9022 = vmatpush1.msra.mxu0 0.0
    %9023 = vmatprep.subr.mxu0 0.0
    %9024 = vmatpush1.msra.mxu0 0.0
    %9025 = vmatprep.subr.mxu0 0.0
    %9026 = vmatpush1.msra.mxu0 0.0
    %9027 = vmatprep.subr.mxu0 0.0
    %9028 = vmatpush1.msra.mxu0 0.0
    %9029 = vmatprep.mubr.f32.mxu0 0.0
    %9030 = vmatmul.mubr.f32.gmra.mrb[0].mxu0 %v8957
    %v9031 = vpop.f32.mrb[0].mxu0
    %v9032 = vadd.f32 0.0, %v9031
    %v9033 = vpop.f32.mrb[0].mxu0
    %v9034 = vadd.f32 0.0, %v9033
    %9035 = vdwg.mxu0
    %9036 = vmatprep.subr.mxu0 %v166
    %9037 = vmatpush1.msra.mxu0 %v165
    %9038 = vmatprep.subr.mxu0 %v170
    %9039 = vmatpush1.msra.mxu0 %v169
    %9040 = vmatprep.subr.mxu0 %v174
    %9041 = vmatpush1.msra.mxu0 %v173
    %9042 = vmatprep.subr.mxu0 %v178
    %9043 = vmatpush1.msra.mxu0 %v177
    %9044 = vmatprep.subr.mxu0 %v182
    %9045 = vmatpush1.msra.mxu0 %v181
    %9046 = vmatprep.subr.mxu0 %v186
    %9047 = vmatpush1.msra.mxu0 %v185
    %9048 = vmatprep.subr.mxu0 %v190
    %9049 = vmatpush1.msra.mxu0 %v189
    %9050 = vmatprep.subr.mxu0 %v194
    %9051 = vmatpush1.msra.mxu0 %v193
    %9052 = vmatprep.subr.mxu0 %v198
    %9053 = vmatpush1.msra.mxu0 %v197
    %9054 = vmatprep.subr.mxu0 %v202
    %9055 = vmatpush1.msra.mxu0 %v201
    %9056 = vmatprep.subr.mxu0 %v206
    %9057 = vmatpush1.msra.mxu0 %v205
    %9058 = vmatprep.subr.mxu0 %v210
    %9059 = vmatpush1.msra.mxu0 %v209
    %9060 = vmatprep.subr.mxu0 %v214
    %9061 = vmatpush1.msra.mxu0 %v213
    %9062 = vmatprep.subr.mxu0 %v218
    %9063 = vmatpush1.msra.mxu0 %v217
    %9064 = vmatprep.subr.mxu0 %v222
    %9065 = vmatpush1.msra.mxu0 %v221
    %9066 = vmatprep.subr.mxu0 %v226
    %9067 = vmatpush1.msra.mxu0 %v225
    %9068 = vmatprep.subr.mxu0 0.0
    %9069 = vmatpush1.msra.mxu0 0.0
    %9070 = vmatprep.subr.mxu0 0.0
    %9071 = vmatpush1.msra.mxu0 0.0
    %9072 = vmatprep.subr.mxu0 0.0
    %9073 = vmatpush1.msra.mxu0 0.0
    %9074 = vmatprep.subr.mxu0 0.0
    %9075 = vmatpush1.msra.mxu0 0.0
    %9076 = vmatprep.subr.mxu0 0.0
    %9077 = vmatpush1.msra.mxu0 0.0
    %9078 = vmatprep.subr.mxu0 0.0
    %9079 = vmatpush1.msra.mxu0 0.0
    %9080 = vmatprep.subr.mxu0 0.0
    %9081 = vmatpush1.msra.mxu0 0.0
    %9082 = vmatprep.subr.mxu0 0.0
    %9083 = vmatpush1.msra.mxu0 0.0
    %9084 = vmatprep.subr.mxu0 0.0
    %9085 = vmatpush1.msra.mxu0 0.0
    %9086 = vmatprep.subr.mxu0 0.0
    %9087 = vmatpush1.msra.mxu0 0.0
    %9088 = vmatprep.subr.mxu0 0.0
    %9089 = vmatpush1.msra.mxu0 0.0
    %9090 = vmatprep.subr.mxu0 0.0
    %9091 = vmatpush1.msra.mxu0 0.0
    %9092 = vmatprep.subr.mxu0 0.0
    %9093 = vmatpush1.msra.mxu0 0.0
    %9094 = vmatprep.subr.mxu0 0.0
    %9095 = vmatpush1.msra.mxu0 0.0
    %9096 = vmatprep.subr.mxu0 0.0
    %9097 = vmatpush1.msra.mxu0 0.0
    %9098 = vmatprep.subr.mxu0 0.0
    %9099 = vmatpush1.msra.mxu0 0.0
    %9100 = vmatprep.mubr.f32.mxu0 0.0
    %9101 = vmatmul.mubr.f32.gmra.mrb[0].mxu0 %v8957
    %v9102 = vpop.f32.mrb[0].mxu0
    %v9103 = vadd.f32 0.0, %v9102
    %v9104 = vpop.f32.mrb[0].mxu0
    %v9105 = vadd.f32 0.0, %v9104
    %9106 = vdwg.mxu0
    %v9107 = vadd.f32 %v8961, %v9032
    %v9108 = vadd.f32 %v8962, %v9034
    %v9109 = vadd.f32 %v8963, %v9103
    %v9110 = vadd.f32 %v8964, %v9105
    %v9111 = vxor.u32 %v9107, 2147483648
    %v9112 = vmul.f32 %v9111, 1.442695
    %v9113 = vpow.pop %v9112
    %v9114 = vadd.f32 %v9113, 1.0
    %v9115 = vrcp.pop %v9114
    %v9116 = vmul.f32 1.0, %v9115
    %v9117 = vxor.u32 %v9108, 2147483648
    %v9118 = vmul.f32 %v9117, 1.442695
    %v9119 = vpow.pop %v9118
    %v9120 = vadd.f32 %v9119, 1.0
    %v9121 = vrcp.pop %v9120
    %v9122 = vmul.f32 1.0, %v9121
    %v9123 = vtanh.pop %v9109
    %v9124 = vxor.u32 %v9110, 2147483648
    %v9125 = vmul.f32 %v9124, 1.442695
    %v9126 = vpow.pop %v9125
    %v9127 = vadd.f32 %v9126, 1.0
    %v9128 = vrcp.pop %v9127
    %v9129 = vmul.f32 1.0, %v9128
    %v9130 = vmul.f32 %v9122, %v8958
    %v9131 = vmul.f32 %v9116, %v9123
    %v9132 = vadd.f32 %v9130, %v9131
    %v9133 = vtanh.pop %v9132
    %v9134 = vmul.f32 %v9129, %v9133
    %9135 = vmatprep.subr.mxu0 0.0
    %9136 = vmatpush1.msra.mxu0 %v227
    %9137 = vmatprep.subr.mxu0 0.0
    %9138 = vmatpush1.msra.mxu0 %v228
    %9139 = vmatprep.subr.mxu0 0.0
    %9140 = vmatpush1.msra.mxu0 %v229
    %9141 = vmatprep.subr.mxu0 0.0
    %9142 = vmatpush1.msra.mxu0 %v230
    %9143 = vmatprep.subr.mxu0 0.0
    %9144 = vmatpush1.msra.mxu0 %v231
    %9145 = vmatprep.subr.mxu0 0.0
    %9146 = vmatpush1.msra.mxu0 %v232
    %9147 = vmatprep.subr.mxu0 0.0
    %9148 = vmatpush1.msra.mxu0 %v233
    %9149 = vmatprep.subr.mxu0 0.0
    %9150 = vmatpush1.msra.mxu0 %v234
    %9151 = vmatprep.subr.mxu0 0.0
    %9152 = vmatpush1.msra.mxu0 %v235
    %9153 = vmatprep.subr.mxu0 0.0
    %9154 = vmatpush1.msra.mxu0 %v236
    %9155 = vmatprep.subr.mxu0 0.0
    %9156 = vmatpush1.msra.mxu0 %v237
    %9157 = vmatprep.subr.mxu0 0.0
    %9158 = vmatpush1.msra.mxu0 %v238
    %9159 = vmatprep.subr.mxu0 0.0
    %9160 = vmatpush1.msra.mxu0 %v239
    %9161 = vmatprep.subr.mxu0 0.0
    %9162 = vmatpush1.msra.mxu0 %v240
    %9163 = vmatprep.subr.mxu0 0.0
    %9164 = vmatpush1.msra.mxu0 %v241
    %9165 = vmatprep.subr.mxu0 0.0
    %9166 = vmatpush1.msra.mxu0 %v242
    %9167 = vmatprep.subr.mxu0 0.0
    %9168 = vmatpush1.msra.mxu0 0.0
    %9169 = vmatprep.subr.mxu0 0.0
    %9170 = vmatpush1.msra.mxu0 0.0
    %9171 = vmatprep.subr.mxu0 0.0
    %9172 = vmatpush1.msra.mxu0 0.0
    %9173 = vmatprep.subr.mxu0 0.0
    %9174 = vmatpush1.msra.mxu0 0.0
    %9175 = vmatprep.subr.mxu0 0.0
    %9176 = vmatpush1.msra.mxu0 0.0
    %9177 = vmatprep.subr.mxu0 0.0
    %9178 = vmatpush1.msra.mxu0 0.0
    %9179 = vmatprep.subr.mxu0 0.0
    %9180 = vmatpush1.msra.mxu0 0.0
    %9181 = vmatprep.subr.mxu0 0.0
    %9182 = vmatpush1.msra.mxu0 0.0
    %9183 = vmatprep.subr.mxu0 0.0
    %9184 = vmatpush1.msra.mxu0 0.0
    %9185 = vmatprep.subr.mxu0 0.0
    %9186 = vmatpush1.msra.mxu0 0.0
    %9187 = vmatprep.subr.mxu0 0.0
    %9188 = vmatpush1.msra.mxu0 0.0
    %9189 = vmatprep.subr.mxu0 0.0
    %9190 = vmatpush1.msra.mxu0 0.0
    %9191 = vmatprep.subr.mxu0 0.0
    %9192 = vmatpush1.msra.mxu0 0.0
    %9193 = vmatprep.subr.mxu0 0.0
    %9194 = vmatpush1.msra.mxu0 0.0
    %9195 = vmatprep.subr.mxu0 0.0
    %9196 = vmatpush1.msra.mxu0 0.0
    %9197 = vmatprep.subr.mxu0 0.0
    %9198 = vmatpush1.msra.mxu0 0.0
    %9199 = vmatprep.mubr.f32.mxu0 0.0
    %9200 = vmatmul.mubr.f32.gmra.mrb[0].mxu0 %v9134
    %v9201 = vpop.f32.mrb[0].mxu0
    %v9202 = vadd.f32 0.0, %v9201
    %v9203 = vpop.f32.mrb[0].mxu0
    %9204 = vdwg.mxu0
    %v9206 = vcombine.high %v9202, %v9202
    %v9208 = vunpack.c.l.s4 1966171168
    %v9209 = vunpack.c.0.s8 %v9208
    %v9210 = vlaneseq
    %v9211 = vshrl.u32 %v9210, 7
    %v9212 = vsub.s32 %v9209, %v9211
    %v9213 = vrot.slane %v9202, %v9212
    %v9215 = vunpack.c.l.s4 1966171168
    %v9216 = vunpack.c.0.s8 %v9215
    %v9217 = vlaneseq
    %v9218 = vshrl.u32 %v9217, 7
    %v9219 = vsub.s32 %v9216, %v9218
    %v9220 = vrot.slane %v9206, %v9219
    %v9221 = vcombine.high %v9213, %v9213
    %v9222 = vcombine.high %v9220, %v9220
    %v9224 = vunpack.c.l.s4 1966171168
    %v9225 = vunpack.c.0.s8 %v9224
    %v9226 = vlaneseq
    %v9227 = vshrl.u32 %v9226, 7
    %v9228 = vsub.s32 %v9225, %v9227
    %v9229 = vrot.slane %v9213, %v9228
    %v9231 = vunpack.c.l.s4 1966171168
    %v9232 = vunpack.c.0.s8 %v9231
    %v9233 = vlaneseq
    %v9234 = vshrl.u32 %v9233, 7
    %v9235 = vsub.s32 %v9232, %v9234
    %v9236 = vrot.slane %v9220, %v9235
    %v9238 = vunpack.c.l.s4 1966171168
    %v9239 = vunpack.c.0.s8 %v9238
    %v9240 = vlaneseq
    %v9241 = vshrl.u32 %v9240, 7
    %v9242 = vsub.s32 %v9239, %v9241
    %v9243 = vrot.slane %v9221, %v9242
    %v9245 = vunpack.c.l.s4 1966171168
    %v9246 = vunpack.c.0.s8 %v9245
    %v9247 = vlaneseq
    %v9248 = vshrl.u32 %v9247, 7
    %v9249 = vsub.s32 %v9246, %v9248
    %v9250 = vrot.slane %v9222, %v9249
    %v9251 = vcombine.high %v9229, %v9229
    %v9252 = vcombine.high %v9236, %v9236
    %v9253 = vcombine.high %v9243, %v9243
    %v9254 = vcombine.high %v9250, %v9250
    %v9255 = vlaneseq
    %v9256 = vshrl.u32 %v9255, 7
    %v9257 = vsub.s32 0, %v9256
    %v9258 = vrot.slane %v9229, %v9257
    %v9259 = vlaneseq
    %v9260 = vshrl.u32 %v9259, 7
    %v9261 = vsub.s32 0, %v9260
    %v9262 = vrot.slane %v9243, %v9261
    %v9263 = vlaneseq
    %v9264 = vshrl.u32 %v9263, 7
    %v9265 = vsub.s32 0, %v9264
    %v9266 = vrot.slane %v9251, %v9265
    %v9267 = vlaneseq
    %v9268 = vshrl.u32 %v9267, 7
    %v9269 = vsub.s32 0, %v9268
    %v9270 = vrot.slane %v9253, %v9269
    %v9271 = vlaneseq
    %v9272 = vshrl.u32 %v9271, 7
    %v9273 = vsub.s32 0, %v9272
    %v9274 = vrot.slane %v9236, %v9273
    %v9275 = vlaneseq
    %v9276 = vshrl.u32 %v9275, 7
    %v9277 = vsub.s32 0, %v9276
    %v9278 = vrot.slane %v9250, %v9277
    %v9279 = vlaneseq
    %v9280 = vshrl.u32 %v9279, 7
    %v9281 = vsub.s32 0, %v9280
    %v9282 = vrot.slane %v9252, %v9281
    %v9283 = vlaneseq
    %v9284 = vshrl.u32 %v9283, 7
    %v9285 = vsub.s32 0, %v9284
    %v9286 = vrot.slane %v9254, %v9285
    %v9295 = vmul.f32 %v154, %v9258
    %v9296 = vmul.f32 %v155, %v9262
    %v9297 = vmul.f32 %v156, %v9266
    %v9298 = vmul.f32 %v157, %v9270
    %v9299 = vmul.f32 %v158, %v9274
    %v9300 = vmul.f32 %v159, %v9278
    %v9301 = vmul.f32 %v160, %v9282
    %v9302 = vmul.f32 %v161, %v9286
    %v9303 = vsel %vm653, %v9295, 0.0
    %9304 = vadd.xlane.f32.xlu0 %v9303
    %v9305 = vpop.xlane.xlu0 %9304
    %v9306 = vsel %vm653, %v9296, 0.0
    %9307 = vadd.xlane.f32.xlu0 %v9306
    %v9308 = vpop.xlane.xlu0 %9307
    %v9309 = vsel %vm653, %v9297, 0.0
    %9310 = vadd.xlane.f32.xlu0 %v9309
    %v9311 = vpop.xlane.xlu0 %9310
    %v9312 = vsel %vm653, %v9298, 0.0
    %9313 = vadd.xlane.f32.xlu0 %v9312
    %v9314 = vpop.xlane.xlu0 %9313
    %v9315 = vsel %vm653, %v9299, 0.0
    %9316 = vadd.xlane.f32.xlu0 %v9315
    %v9317 = vpop.xlane.xlu0 %9316
    %v9318 = vsel %vm653, %v9300, 0.0
    %9319 = vadd.xlane.f32.xlu0 %v9318
    %v9320 = vpop.xlane.xlu0 %9319
    %v9321 = vsel %vm653, %v9301, 0.0
    %9322 = vadd.xlane.f32.xlu0 %v9321
    %v9323 = vpop.xlane.xlu0 %9322
    %v9324 = vsel %vm653, %v9302, 0.0
    %9325 = vadd.xlane.f32.xlu0 %v9324
    %v9326 = vpop.xlane.xlu0 %9325
    %v9327 = vadd.f32 %v9305, %v685
    %v9328 = vadd.f32 %v9308, %v692
    %v9329 = vadd.f32 %v9311, %v699
    %v9330 = vadd.f32 %v9314, %v706
    %v9331 = vadd.f32 %v9317, %v713
    %v9332 = vadd.f32 %v9320, %v720
    %v9333 = vadd.f32 %v9323, %v727
    %v9334 = vadd.f32 %v9326, %v734
    %9343 = vset.pattern.permute.xlu0 0
    %9344 = vperm.xlu0 %9343, %v9327
    %v9345 = vpop.permute.xlu0 %9344
    %9346 = vset.pattern.permute.xlu0 0
    %9347 = vperm.xlu0 %9346, %v9328
    %v9348 = vpop.permute.xlu0 %9347
    %9349 = vset.pattern.permute.xlu0 0
    %9350 = vperm.xlu0 %9349, %v9329
    %v9351 = vpop.permute.xlu0 %9350
    %9352 = vset.pattern.permute.xlu0 0
    %9353 = vperm.xlu0 %9352, %v9330
    %v9354 = vpop.permute.xlu0 %9353
    %9355 = vset.pattern.permute.xlu0 0
    %9356 = vperm.xlu0 %9355, %v9331
    %v9357 = vpop.permute.xlu0 %9356
    %9358 = vset.pattern.permute.xlu0 0
    %9359 = vperm.xlu0 %9358, %v9332
    %v9360 = vpop.permute.xlu0 %9359
    %9361 = vset.pattern.permute.xlu0 0
    %9362 = vperm.xlu0 %9361, %v9333
    %v9363 = vpop.permute.xlu0 %9362
    %9364 = vset.pattern.permute.xlu0 0
    %9365 = vperm.xlu0 %9364, %v9334
    %v9366 = vpop.permute.xlu0 %9365
    %v9367 = vlaneseq
    %v9368 = vshrl.u32 %v9367, 7
    %v9369 = vsub.s32 %v784, %v9368
    %v9370 = vrot.slane %v9345, %v9369
    %v9371 = vlaneseq
    %v9372 = vshrl.u32 %v9371, 7
    %v9373 = vsub.s32 %v784, %v9372
    %v9374 = vrot.slane %v9348, %v9373
    %v9375 = vlaneseq
    %v9376 = vshrl.u32 %v9375, 7
    %v9377 = vsub.s32 %v784, %v9376
    %v9378 = vrot.slane %v9351, %v9377
    %v9379 = vlaneseq
    %v9380 = vshrl.u32 %v9379, 7
    %v9381 = vsub.s32 %v784, %v9380
    %v9382 = vrot.slane %v9354, %v9381
    %v9383 = vlaneseq
    %v9384 = vshrl.u32 %v9383, 7
    %v9385 = vsub.s32 %v784, %v9384
    %v9386 = vrot.slane %v9357, %v9385
    %v9387 = vlaneseq
    %v9388 = vshrl.u32 %v9387, 7
    %v9389 = vsub.s32 %v784, %v9388
    %v9390 = vrot.slane %v9360, %v9389
    %v9391 = vlaneseq
    %v9392 = vshrl.u32 %v9391, 7
    %v9393 = vsub.s32 %v784, %v9392
    %v9394 = vrot.slane %v9363, %v9393
    %v9395 = vlaneseq
    %v9396 = vshrl.u32 %v9395, 7
    %v9397 = vsub.s32 %v784, %v9396
    %v9398 = vrot.slane %v9366, %v9397
    %v9399 = vsel %vm817, %v9374, %v9370
    %v9400 = vsel %vm819, %v9378, %v9399
    %v9401 = vsel %vm821, %v9382, %v9400
    %v9402 = vsel %vm823, %v9386, %v9401
    %v9403 = vsel %vm825, %v9390, %v9402
    %v9404 = vsel %vm827, %v9394, %v9403
    %v9405 = vsel %vm829, %v9398, %v9404
    %v9407 = vsel %vm832, %v9405, -inf
    %9408 = vmax.xlane.f32.xlu0 %v9407
    %v9409 = vpop.xlane.xlu0 %9408
    %v9411 = vlaneseq
    %v9412 = vshrl.u32 %v9411, 7
    %v9413 = vsub.s32 0, %v9412
    %v9414 = vrot.slane %v9409, %v9413
    %v9415 = vlaneseq
    %v9416 = vshrl.u32 %v9415, 7
    %v9417 = vsub.s32 1, %v9416
    %v9418 = vrot.slane %v9409, %v9417
    %v9419 = vlaneseq
    %v9420 = vshrl.u32 %v9419, 7
    %v9421 = vsub.s32 2, %v9420
    %v9422 = vrot.slane %v9409, %v9421
    %v9423 = vlaneseq
    %v9424 = vshrl.u32 %v9423, 7
    %v9425 = vsub.s32 3, %v9424
    %v9426 = vrot.slane %v9409, %v9425
    %v9427 = vlaneseq
    %v9428 = vshrl.u32 %v9427, 7
    %v9429 = vsub.s32 4, %v9428
    %v9430 = vrot.slane %v9409, %v9429
    %v9431 = vlaneseq
    %v9432 = vshrl.u32 %v9431, 7
    %v9433 = vsub.s32 5, %v9432
    %v9434 = vrot.slane %v9409, %v9433
    %v9435 = vlaneseq
    %v9436 = vshrl.u32 %v9435, 7
    %v9437 = vsub.s32 6, %v9436
    %v9438 = vrot.slane %v9409, %v9437
    %v9439 = vlaneseq
    %v9440 = vshrl.u32 %v9439, 7
    %v9441 = vsub.s32 7, %v9440
    %v9442 = vrot.slane %v9409, %v9441
    %v9451 = vsub.f32 %v9327, %v9414
    %v9452 = vsub.f32 %v9328, %v9418
    %v9453 = vsub.f32 %v9329, %v9422
    %v9454 = vsub.f32 %v9330, %v9426
    %v9455 = vsub.f32 %v9331, %v9430
    %v9456 = vsub.f32 %v9332, %v9434
    %v9457 = vsub.f32 %v9333, %v9438
    %v9458 = vsub.f32 %v9334, %v9442
    %v9459 = vmul.f32 %v9451, 1.442695
    %v9460 = vpow.pop %v9459
    %v9461 = vmul.f32 %v9452, 1.442695
    %v9462 = vpow.pop %v9461
    %v9463 = vmul.f32 %v9453, 1.442695
    %v9464 = vpow.pop %v9463
    %v9465 = vmul.f32 %v9454, 1.442695
    %v9466 = vpow.pop %v9465
    %v9467 = vmul.f32 %v9455, 1.442695
    %v9468 = vpow.pop %v9467
    %v9469 = vmul.f32 %v9456, 1.442695
    %v9470 = vpow.pop %v9469
    %v9471 = vmul.f32 %v9457, 1.442695
    %v9472 = vpow.pop %v9471
    %v9473 = vmul.f32 %v9458, 1.442695
    %v9474 = vpow.pop %v9473
    %9483 = vset.pattern.permute.xlu0 0
    %9484 = vperm.xlu0 %9483, %v9460
    %v9485 = vpop.permute.xlu0 %9484
    %9486 = vset.pattern.permute.xlu0 0
    %9487 = vperm.xlu0 %9486, %v9462
    %v9488 = vpop.permute.xlu0 %9487
    %9489 = vset.pattern.permute.xlu0 0
    %9490 = vperm.xlu0 %9489, %v9464
    %v9491 = vpop.permute.xlu0 %9490
    %9492 = vset.pattern.permute.xlu0 0
    %9493 = vperm.xlu0 %9492, %v9466
    %v9494 = vpop.permute.xlu0 %9493
    %9495 = vset.pattern.permute.xlu0 0
    %9496 = vperm.xlu0 %9495, %v9468
    %v9497 = vpop.permute.xlu0 %9496
    %9498 = vset.pattern.permute.xlu0 0
    %9499 = vperm.xlu0 %9498, %v9470
    %v9500 = vpop.permute.xlu0 %9499
    %9501 = vset.pattern.permute.xlu0 0
    %9502 = vperm.xlu0 %9501, %v9472
    %v9503 = vpop.permute.xlu0 %9502
    %9504 = vset.pattern.permute.xlu0 0
    %9505 = vperm.xlu0 %9504, %v9474
    %v9506 = vpop.permute.xlu0 %9505
    %v9507 = vlaneseq
    %v9508 = vshrl.u32 %v9507, 7
    %v9509 = vsub.s32 %v784, %v9508
    %v9510 = vrot.slane %v9485, %v9509
    %v9511 = vlaneseq
    %v9512 = vshrl.u32 %v9511, 7
    %v9513 = vsub.s32 %v784, %v9512
    %v9514 = vrot.slane %v9488, %v9513
    %v9515 = vlaneseq
    %v9516 = vshrl.u32 %v9515, 7
    %v9517 = vsub.s32 %v784, %v9516
    %v9518 = vrot.slane %v9491, %v9517
    %v9519 = vlaneseq
    %v9520 = vshrl.u32 %v9519, 7
    %v9521 = vsub.s32 %v784, %v9520
    %v9522 = vrot.slane %v9494, %v9521
    %v9523 = vlaneseq
    %v9524 = vshrl.u32 %v9523, 7
    %v9525 = vsub.s32 %v784, %v9524
    %v9526 = vrot.slane %v9497, %v9525
    %v9527 = vlaneseq
    %v9528 = vshrl.u32 %v9527, 7
    %v9529 = vsub.s32 %v784, %v9528
    %v9530 = vrot.slane %v9500, %v9529
    %v9531 = vlaneseq
    %v9532 = vshrl.u32 %v9531, 7
    %v9533 = vsub.s32 %v784, %v9532
    %v9534 = vrot.slane %v9503, %v9533
    %v9535 = vlaneseq
    %v9536 = vshrl.u32 %v9535, 7
    %v9537 = vsub.s32 %v784, %v9536
    %v9538 = vrot.slane %v9506, %v9537
    %v9539 = vsel %vm817, %v9514, %v9510
    %v9540 = vsel %vm819, %v9518, %v9539
    %v9541 = vsel %vm821, %v9522, %v9540
    %v9542 = vsel %vm823, %v9526, %v9541
    %v9543 = vsel %vm825, %v9530, %v9542
    %v9544 = vsel %vm827, %v9534, %v9543
    %v9545 = vsel %vm829, %v9538, %v9544
    %v9547 = vsel %vm832, %v9545, 0.0
    %9548 = vadd.xlane.f32.xlu0 %v9547
    %v9549 = vpop.xlane.xlu0 %9548
    %v9551 = vlaneseq
    %v9552 = vshrl.u32 %v9551, 7
    %v9553 = vsub.s32 0, %v9552
    %v9554 = vrot.slane %v9549, %v9553
    %v9555 = vlaneseq
    %v9556 = vshrl.u32 %v9555, 7
    %v9557 = vsub.s32 1, %v9556
    %v9558 = vrot.slane %v9549, %v9557
    %v9559 = vlaneseq
    %v9560 = vshrl.u32 %v9559, 7
    %v9561 = vsub.s32 2, %v9560
    %v9562 = vrot.slane %v9549, %v9561
    %v9563 = vlaneseq
    %v9564 = vshrl.u32 %v9563, 7
    %v9565 = vsub.s32 3, %v9564
    %v9566 = vrot.slane %v9549, %v9565
    %v9567 = vlaneseq
    %v9568 = vshrl.u32 %v9567, 7
    %v9569 = vsub.s32 4, %v9568
    %v9570 = vrot.slane %v9549, %v9569
    %v9571 = vlaneseq
    %v9572 = vshrl.u32 %v9571, 7
    %v9573 = vsub.s32 5, %v9572
    %v9574 = vrot.slane %v9549, %v9573
    %v9575 = vlaneseq
    %v9576 = vshrl.u32 %v9575, 7
    %v9577 = vsub.s32 6, %v9576
    %v9578 = vrot.slane %v9549, %v9577
    %v9579 = vlaneseq
    %v9580 = vshrl.u32 %v9579, 7
    %v9581 = vsub.s32 7, %v9580
    %v9582 = vrot.slane %v9549, %v9581
    %v9591 = vrcp.pop %v9554
    %v9592 = vmul.f32 %v9460, %v9591
    %v9593 = vrcp.pop %v9558
    %v9594 = vmul.f32 %v9462, %v9593
    %v9595 = vrcp.pop %v9562
    %v9596 = vmul.f32 %v9464, %v9595
    %v9597 = vrcp.pop %v9566
    %v9598 = vmul.f32 %v9466, %v9597
    %v9599 = vrcp.pop %v9570
    %v9600 = vmul.f32 %v9468, %v9599
    %v9601 = vrcp.pop %v9574
    %v9602 = vmul.f32 %v9470, %v9601
    %v9603 = vrcp.pop %v9578
    %v9604 = vmul.f32 %v9472, %v9603
    %v9605 = vrcp.pop %v9582
    %v9606 = vmul.f32 %v9474, %v9605
    %9608 = vset.pattern.permute.xlu0 0
    %9609 = vperm.xlu0 %9608, %v9592
    %v9610 = vpop.permute.xlu0 %9609
    %9613 = vset.pattern.permute.xlu0 0
    %9614 = vperm.xlu0 %9613, %v9594
    %v9615 = vpop.permute.xlu0 %9614
    %9618 = vset.pattern.permute.xlu0 0
    %9619 = vperm.xlu0 %9618, %v9596
    %v9620 = vpop.permute.xlu0 %9619
    %9623 = vset.pattern.permute.xlu0 0
    %9624 = vperm.xlu0 %9623, %v9598
    %v9625 = vpop.permute.xlu0 %9624
    %9628 = vset.pattern.permute.xlu0 0
    %9629 = vperm.xlu0 %9628, %v9600
    %v9630 = vpop.permute.xlu0 %9629
    %9633 = vset.pattern.permute.xlu0 0
    %9634 = vperm.xlu0 %9633, %v9602
    %v9635 = vpop.permute.xlu0 %9634
    %9638 = vset.pattern.permute.xlu0 0
    %9639 = vperm.xlu0 %9638, %v9604
    %v9640 = vpop.permute.xlu0 %9639
    %9643 = vset.pattern.permute.xlu0 0
    %9644 = vperm.xlu0 %9643, %v9606
    %v9645 = vpop.permute.xlu0 %9644
    %v9647 = vmul.f32 %v9610, %v154
    %v9648 = vmul.f32 %v9615, %v155
    %v9649 = vmul.f32 %v9620, %v156
    %v9650 = vmul.f32 %v9625, %v157
    %v9651 = vmul.f32 %v9630, %v158
    %v9652 = vmul.f32 %v9635, %v159
    %v9653 = vmul.f32 %v9640, %v160
    %v9654 = vmul.f32 %v9645, %v161
    %v9655 = vsel %vm653, %v9647, 0.0
    %v9656 = vrot.slane %v9655, 4
    %v9657 = vadd.f32 %v9655, %v9656
    %v9658 = vrot.slane %v9657, 2
    %v9659 = vadd.f32 %v9657, %v9658
    %v9660 = vrot.slane %v9659, 1
    %v9661 = vadd.f32 %v9659, %v9660
    %v9662 = vsel %vm653, %v9648, 0.0
    %v9663 = vrot.slane %v9662, 4
    %v9664 = vadd.f32 %v9662, %v9663
    %v9665 = vrot.slane %v9664, 2
    %v9666 = vadd.f32 %v9664, %v9665
    %v9667 = vrot.slane %v9666, 1
    %v9668 = vadd.f32 %v9666, %v9667
    %v9669 = vsel %vm653, %v9649, 0.0
    %v9670 = vrot.slane %v9669, 4
    %v9671 = vadd.f32 %v9669, %v9670
    %v9672 = vrot.slane %v9671, 2
    %v9673 = vadd.f32 %v9671, %v9672
    %v9674 = vrot.slane %v9673, 1
    %v9675 = vadd.f32 %v9673, %v9674
    %v9676 = vsel %vm653, %v9650, 0.0
    %v9677 = vrot.slane %v9676, 4
    %v9678 = vadd.f32 %v9676, %v9677
    %v9679 = vrot.slane %v9678, 2
    %v9680 = vadd.f32 %v9678, %v9679
    %v9681 = vrot.slane %v9680, 1
    %v9682 = vadd.f32 %v9680, %v9681
    %v9683 = vsel %vm653, %v9651, 0.0
    %v9684 = vrot.slane %v9683, 4
    %v9685 = vadd.f32 %v9683, %v9684
    %v9686 = vrot.slane %v9685, 2
    %v9687 = vadd.f32 %v9685, %v9686
    %v9688 = vrot.slane %v9687, 1
    %v9689 = vadd.f32 %v9687, %v9688
    %v9690 = vsel %vm653, %v9652, 0.0
    %v9691 = vrot.slane %v9690, 4
    %v9692 = vadd.f32 %v9690, %v9691
    %v9693 = vrot.slane %v9692, 2
    %v9694 = vadd.f32 %v9692, %v9693
    %v9695 = vrot.slane %v9694, 1
    %v9696 = vadd.f32 %v9694, %v9695
    %v9697 = vsel %vm653, %v9653, 0.0
    %v9698 = vrot.slane %v9697, 4
    %v9699 = vadd.f32 %v9697, %v9698
    %v9700 = vrot.slane %v9699, 2
    %v9701 = vadd.f32 %v9699, %v9700
    %v9702 = vrot.slane %v9701, 1
    %v9703 = vadd.f32 %v9701, %v9702
    %v9704 = vsel %vm653, %v9654, 0.0
    %v9705 = vrot.slane %v9704, 4
    %v9706 = vadd.f32 %v9704, %v9705
    %v9707 = vrot.slane %v9706, 2
    %v9708 = vadd.f32 %v9706, %v9707
    %v9709 = vrot.slane %v9708, 1
    %v9710 = vadd.f32 %v9708, %v9709
    %9711 = vmatprep.subr.mxu0 0.0
    %9712 = vmatpush1.msra.mxu0 %v259
    %9713 = vmatprep.subr.mxu0 0.0
    %9714 = vmatpush1.msra.mxu0 %v260
    %9715 = vmatprep.subr.mxu0 0.0
    %9716 = vmatpush1.msra.mxu0 %v261
    %9717 = vmatprep.subr.mxu0 0.0
    %9718 = vmatpush1.msra.mxu0 %v262
    %9719 = vmatprep.subr.mxu0 0.0
    %9720 = vmatpush1.msra.mxu0 %v263
    %9721 = vmatprep.subr.mxu0 0.0
    %9722 = vmatpush1.msra.mxu0 %v264
    %9723 = vmatprep.subr.mxu0 0.0
    %9724 = vmatpush1.msra.mxu0 %v265
    %9725 = vmatprep.subr.mxu0 0.0
    %9726 = vmatpush1.msra.mxu0 %v266
    %9727 = vmatprep.subr.mxu0 0.0
    %9728 = vmatpush1.msra.mxu0 %v267
    %9729 = vmatprep.subr.mxu0 0.0
    %9730 = vmatpush1.msra.mxu0 %v268
    %9731 = vmatprep.subr.mxu0 0.0
    %9732 = vmatpush1.msra.mxu0 %v269
    %9733 = vmatprep.subr.mxu0 0.0
    %9734 = vmatpush1.msra.mxu0 %v270
    %9735 = vmatprep.subr.mxu0 0.0
    %9736 = vmatpush1.msra.mxu0 %v271
    %9737 = vmatprep.subr.mxu0 0.0
    %9738 = vmatpush1.msra.mxu0 %v272
    %9739 = vmatprep.subr.mxu0 0.0
    %9740 = vmatpush1.msra.mxu0 %v273
    %9741 = vmatprep.subr.mxu0 0.0
    %9742 = vmatpush1.msra.mxu0 %v274
    %9743 = vmatprep.subr.mxu0 0.0
    %9744 = vmatpush1.msra.mxu0 0.0
    %9745 = vmatprep.subr.mxu0 0.0
    %9746 = vmatpush1.msra.mxu0 0.0
    %9747 = vmatprep.subr.mxu0 0.0
    %9748 = vmatpush1.msra.mxu0 0.0
    %9749 = vmatprep.subr.mxu0 0.0
    %9750 = vmatpush1.msra.mxu0 0.0
    %9751 = vmatprep.subr.mxu0 0.0
    %9752 = vmatpush1.msra.mxu0 0.0
    %9753 = vmatprep.subr.mxu0 0.0
    %9754 = vmatpush1.msra.mxu0 0.0
    %9755 = vmatprep.subr.mxu0 0.0
    %9756 = vmatpush1.msra.mxu0 0.0
    %9757 = vmatprep.subr.mxu0 0.0
    %9758 = vmatpush1.msra.mxu0 0.0
    %9759 = vmatprep.subr.mxu0 0.0
    %9760 = vmatpush1.msra.mxu0 0.0
    %9761 = vmatprep.subr.mxu0 0.0
    %9762 = vmatpush1.msra.mxu0 0.0
    %9763 = vmatprep.subr.mxu0 0.0
    %9764 = vmatpush1.msra.mxu0 0.0
    %9765 = vmatprep.subr.mxu0 0.0
    %9766 = vmatpush1.msra.mxu0 0.0
    %9767 = vmatprep.subr.mxu0 0.0
    %9768 = vmatpush1.msra.mxu0 0.0
    %9769 = vmatprep.subr.mxu0 0.0
    %9770 = vmatpush1.msra.mxu0 0.0
    %9771 = vmatprep.subr.mxu0 0.0
    %9772 = vmatpush1.msra.mxu0 0.0
    %9773 = vmatprep.subr.mxu0 0.0
    %9774 = vmatpush1.msra.mxu0 0.0
    %9775 = vmatprep.mubr.f32.mxu0 0.0
    %9776 = vmatmul.mubr.f32.gmra.mrb[0].mxu0 %v9134
    %v9777 = vpop.f32.mrb[0].mxu0
    %v9778 = vadd.f32 0.0, %v9777
    %v9779 = vpop.f32.mrb[0].mxu0
    %9780 = vdwg.mxu0
    %v9789 = vsel %vm817, %v9668, %v9661
    %v9790 = vsel %vm819, %v9675, %v9789
    %v9791 = vsel %vm821, %v9682, %v9790
    %v9792 = vsel %vm823, %v9689, %v9791
    %v9793 = vsel %vm825, %v9696, %v9792
    %v9794 = vsel %vm827, %v9703, %v9793
    %v9795 = vsel %vm829, %v9710, %v9794
    %9797 = vmatprep.subr.mxu0 0.0
    %9798 = vmatpush1.msra.mxu0 %v243
    %9799 = vmatprep.subr.mxu0 0.0
    %9800 = vmatpush1.msra.mxu0 %v244
    %9801 = vmatprep.subr.mxu0 0.0
    %9802 = vmatpush1.msra.mxu0 %v245
    %9803 = vmatprep.subr.mxu0 0.0
    %9804 = vmatpush1.msra.mxu0 %v246
    %9805 = vmatprep.subr.mxu0 0.0
    %9806 = vmatpush1.msra.mxu0 %v247
    %9807 = vmatprep.subr.mxu0 0.0
    %9808 = vmatpush1.msra.mxu0 %v248
    %9809 = vmatprep.subr.mxu0 0.0
    %9810 = vmatpush1.msra.mxu0 %v249
    %9811 = vmatprep.subr.mxu0 0.0
    %9812 = vmatpush1.msra.mxu0 %v250
    %9813 = vmatprep.subr.mxu0 0.0
    %9814 = vmatpush1.msra.mxu0 %v251
    %9815 = vmatprep.subr.mxu0 0.0
    %9816 = vmatpush1.msra.mxu0 %v252
    %9817 = vmatprep.subr.mxu0 0.0
    %9818 = vmatpush1.msra.mxu0 %v253
    %9819 = vmatprep.subr.mxu0 0.0
    %9820 = vmatpush1.msra.mxu0 %v254
    %9821 = vmatprep.subr.mxu0 0.0
    %9822 = vmatpush1.msra.mxu0 %v255
    %9823 = vmatprep.subr.mxu0 0.0
    %9824 = vmatpush1.msra.mxu0 %v256
    %9825 = vmatprep.subr.mxu0 0.0
    %9826 = vmatpush1.msra.mxu0 %v257
    %9827 = vmatprep.subr.mxu0 0.0
    %9828 = vmatpush1.msra.mxu0 %v258
    %9829 = vmatprep.subr.mxu0 0.0
    %9830 = vmatpush1.msra.mxu0 0.0
    %9831 = vmatprep.subr.mxu0 0.0
    %9832 = vmatpush1.msra.mxu0 0.0
    %9833 = vmatprep.subr.mxu0 0.0
    %9834 = vmatpush1.msra.mxu0 0.0
    %9835 = vmatprep.subr.mxu0 0.0
    %9836 = vmatpush1.msra.mxu0 0.0
    %9837 = vmatprep.subr.mxu0 0.0
    %9838 = vmatpush1.msra.mxu0 0.0
    %9839 = vmatprep.subr.mxu0 0.0
    %9840 = vmatpush1.msra.mxu0 0.0
    %9841 = vmatprep.subr.mxu0 0.0
    %9842 = vmatpush1.msra.mxu0 0.0
    %9843 = vmatprep.subr.mxu0 0.0
    %9844 = vmatpush1.msra.mxu0 0.0
    %9845 = vmatprep.subr.mxu0 0.0
    %9846 = vmatpush1.msra.mxu0 0.0
    %9847 = vmatprep.subr.mxu0 0.0
    %9848 = vmatpush1.msra.mxu0 0.0
    %9849 = vmatprep.subr.mxu0 0.0
    %9850 = vmatpush1.msra.mxu0 0.0
    %9851 = vmatprep.subr.mxu0 0.0
    %9852 = vmatpush1.msra.mxu0 0.0
    %9853 = vmatprep.subr.mxu0 0.0
    %9854 = vmatpush1.msra.mxu0 0.0
    %9855 = vmatprep.subr.mxu0 0.0
    %9856 = vmatpush1.msra.mxu0 0.0
    %9857 = vmatprep.subr.mxu0 0.0
    %9858 = vmatpush1.msra.mxu0 0.0
    %9859 = vmatprep.subr.mxu0 0.0
    %9860 = vmatpush1.msra.mxu0 0.0
    %9861 = vmatprep.mubr.f32.mxu0 0.0
    %9862 = vmatmul.mubr.f32.gmra.mrb[0].mxu0 %v9795
    %v9863 = vpop.f32.mrb[0].mxu0
    %v9864 = vadd.f32 %v9778, %v9863
    %v9865 = vpop.f32.mrb[0].mxu0
    %9866 = vdwg.mxu0
    %v9867 = vtanh.pop %v9864
    %9868 = vmatprep.subr.mxu0 %v276
    %9869 = vmatpush1.msra.mxu0 %v275
    %9870 = vmatprep.subr.mxu0 %v278
    %9871 = vmatpush1.msra.mxu0 %v277
    %9872 = vmatprep.subr.mxu0 %v280
    %9873 = vmatpush1.msra.mxu0 %v279
    %9874 = vmatprep.subr.mxu0 %v282
    %9875 = vmatpush1.msra.mxu0 %v281
    %9876 = vmatprep.subr.mxu0 %v284
    %9877 = vmatpush1.msra.mxu0 %v283
    %9878 = vmatprep.subr.mxu0 %v286
    %9879 = vmatpush1.msra.mxu0 %v285
    %9880 = vmatprep.subr.mxu0 %v288
    %9881 = vmatpush1.msra.mxu0 %v287
    %9882 = vmatprep.subr.mxu0 %v290
    %9883 = vmatpush1.msra.mxu0 %v289
    %9884 = vmatprep.subr.mxu0 %v292
    %9885 = vmatpush1.msra.mxu0 %v291
    %9886 = vmatprep.subr.mxu0 %v294
    %9887 = vmatpush1.msra.mxu0 %v293
    %9888 = vmatprep.subr.mxu0 %v296
    %9889 = vmatpush1.msra.mxu0 %v295
    %9890 = vmatprep.subr.mxu0 %v298
    %9891 = vmatpush1.msra.mxu0 %v297
    %9892 = vmatprep.subr.mxu0 %v300
    %9893 = vmatpush1.msra.mxu0 %v299
    %9894 = vmatprep.subr.mxu0 %v302
    %9895 = vmatpush1.msra.mxu0 %v301
    %9896 = vmatprep.subr.mxu0 %v304
    %9897 = vmatpush1.msra.mxu0 %v303
    %9898 = vmatprep.subr.mxu0 %v306
    %9899 = vmatpush1.msra.mxu0 %v305
    %9900 = vmatprep.subr.mxu0 0.0
    %9901 = vmatpush1.msra.mxu0 0.0
    %9902 = vmatprep.subr.mxu0 0.0
    %9903 = vmatpush1.msra.mxu0 0.0
    %9904 = vmatprep.subr.mxu0 0.0
    %9905 = vmatpush1.msra.mxu0 0.0
    %9906 = vmatprep.subr.mxu0 0.0
    %9907 = vmatpush1.msra.mxu0 0.0
    %9908 = vmatprep.subr.mxu0 0.0
    %9909 = vmatpush1.msra.mxu0 0.0
    %9910 = vmatprep.subr.mxu0 0.0
    %9911 = vmatpush1.msra.mxu0 0.0
    %9912 = vmatprep.subr.mxu0 0.0
    %9913 = vmatpush1.msra.mxu0 0.0
    %9914 = vmatprep.subr.mxu0 0.0
    %9915 = vmatpush1.msra.mxu0 0.0
    %9916 = vmatprep.subr.mxu0 0.0
    %9917 = vmatpush1.msra.mxu0 0.0
    %9918 = vmatprep.subr.mxu0 0.0
    %9919 = vmatpush1.msra.mxu0 0.0
    %9920 = vmatprep.subr.mxu0 0.0
    %9921 = vmatpush1.msra.mxu0 0.0
    %9922 = vmatprep.subr.mxu0 0.0
    %9923 = vmatpush1.msra.mxu0 0.0
    %9924 = vmatprep.subr.mxu0 0.0
    %9925 = vmatpush1.msra.mxu0 0.0
    %9926 = vmatprep.subr.mxu0 0.0
    %9927 = vmatpush1.msra.mxu0 0.0
    %9928 = vmatprep.subr.mxu0 0.0
    %9929 = vmatpush1.msra.mxu0 0.0
    %9930 = vmatprep.subr.mxu0 0.0
    %9931 = vmatpush1.msra.mxu0 0.0
    %9932 = vmatprep.mubr.f32.mxu0 0.0
    %9933 = vmatmul.mubr.f32.gmra.mrb[0].mxu0 %v9867
    %v9934 = vpop.f32.mrb[0].mxu0
    %v9935 = vadd.f32 %v1298, %v9934
    %v9936 = vpop.f32.mrb[0].mxu0
    %v9937 = vadd.f32 %v1302, %v9936
    %9938 = vdwg.mxu0
    %v9941 = vcombine.low %v9935, %v9937
    %v9942 = vcombine.high %v9935, %v9937
    %v9944 = vunpack.c.l.s4 1966171168
    %v9945 = vunpack.c.0.s8 %v9944
    %v9946 = vlaneseq
    %v9947 = vshrl.u32 %v9946, 7
    %v9948 = vsub.s32 %v9945, %v9947
    %v9949 = vrot.slane %v9941, %v9948
    %v9951 = vunpack.c.l.s4 1966171168
    %v9952 = vunpack.c.0.s8 %v9951
    %v9953 = vlaneseq
    %v9954 = vshrl.u32 %v9953, 7
    %v9955 = vsub.s32 %v9952, %v9954
    %v9956 = vrot.slane %v9942, %v9955
    %v9957 = vcombine.high %v9949, %v9949
    %v9958 = vcombine.high %v9956, %v9956
    %v9960 = vunpack.c.l.s4 1966171168
    %v9961 = vunpack.c.0.s8 %v9960
    %v9962 = vlaneseq
    %v9963 = vshrl.u32 %v9962, 7
    %v9964 = vsub.s32 %v9961, %v9963
    %v9965 = vrot.slane %v9949, %v9964
    %v9967 = vunpack.c.l.s4 1966171168
    %v9968 = vunpack.c.0.s8 %v9967
    %v9969 = vlaneseq
    %v9970 = vshrl.u32 %v9969, 7
    %v9971 = vsub.s32 %v9968, %v9970
    %v9972 = vrot.slane %v9956, %v9971
    %v9974 = vunpack.c.l.s4 1966171168
    %v9975 = vunpack.c.0.s8 %v9974
    %v9976 = vlaneseq
    %v9977 = vshrl.u32 %v9976, 7
    %v9978 = vsub.s32 %v9975, %v9977
    %v9979 = vrot.slane %v9957, %v9978
    %v9981 = vunpack.c.l.s4 1966171168
    %v9982 = vunpack.c.0.s8 %v9981
    %v9983 = vlaneseq
    %v9984 = vshrl.u32 %v9983, 7
    %v9985 = vsub.s32 %v9982, %v9984
    %v9986 = vrot.slane %v9958, %v9985
    %v9987 = vcombine.high %v9965, %v9965
    %v9988 = vcombine.high %v9972, %v9972
    %v9989 = vcombine.high %v9979, %v9979
    %v9990 = vcombine.high %v9986, %v9986
    %s9999 = scalar_lea.vmem %s11, 16
    %10000 = vst.msk [vmem:[%s9999] ss:$8 sm:$0x3] %vm1439, %v9965
    %10001 = vst.msk [vmem:[%s9999] ss:$8 sm:$0x0] %vm1439, %v9965
    %s10002 = scalar_lea.vmem %s11, 48
    %10003 = vst.msk [vmem:[%s10002] ss:$8 sm:$0x3] %vm1439, %v9979
    %10004 = vst.msk [vmem:[%s10002] ss:$8 sm:$0x0] %vm1439, %v9979
    %s10005 = scalar_lea.vmem %s11, 80
    %10006 = vst.msk [vmem:[%s10005] ss:$8 sm:$0x3] %vm1439, %v9987
    %10007 = vst.msk [vmem:[%s10005] ss:$8 sm:$0x0] %vm1439, %v9987
    %s10008 = scalar_lea.vmem %s11, 112
    %10009 = vst.msk [vmem:[%s10008] ss:$8 sm:$0x3] %vm1439, %v9989
    %10010 = vst.msk [vmem:[%s10008] ss:$8 sm:$0x0] %vm1439, %v9989
    %s10011 = scalar_lea.vmem %s11, 144
    %10012 = vst.msk [vmem:[%s10011] ss:$8 sm:$0x3] %vm1439, %v9972
    %10013 = vst.msk [vmem:[%s10011] ss:$8 sm:$0x0] %vm1439, %v9972
    %s10014 = scalar_lea.vmem %s11, 176
    %10015 = vst.msk [vmem:[%s10014] ss:$8 sm:$0x3] %vm1439, %v9986
    %10016 = vst.msk [vmem:[%s10014] ss:$8 sm:$0x0] %vm1439, %v9986
    %s10017 = scalar_lea.vmem %s11, 208
    %10018 = vst.msk [vmem:[%s10017] ss:$8 sm:$0x3] %vm1439, %v9988
    %10019 = vst.msk [vmem:[%s10017] ss:$8 sm:$0x0] %vm1439, %v9988
    %s10020 = scalar_lea.vmem %s11, 240
    %10021 = vst.msk [vmem:[%s10020] ss:$8 sm:$0x3] %vm1439, %v9990
    %10022 = vst.msk [vmem:[%s10020] ss:$8 sm:$0x0] %vm1439, %v9990
    %p10023 = scmp.lt.s32.totalorder %s8959, 10
    %s10024 = scalar_select %p10023, 1, 0
    %v10025 = vstv %s10024
    %vm10026 = vcmp.eq.s32.totalorder %v10025, 1
    %v10027 = vsel %vm10026, %v9867, %v8957
    %v10028 = vsel %vm10026, %v9132, %v8958
    %s10029 = sadd.s32 %s310, 9
    %s10030 = scalar_lea.vmem [#allocation4], 288
    %v10031 = vld [vmem:[%s10030] sm:$0xff]
    %v10032 = vld [vmem:[%s10030 + $0x8] sm:$0xff]
    %v10033 = vld [vmem:[%s10030 + $0x10] sm:$0xff]
    %v10034 = vld [vmem:[%s10030 + $0x18] sm:$0xff]
    %10035 = vmatprep.subr.mxu0 %v164
    %10036 = vmatpush1.msra.mxu0 %v163
    %10037 = vmatprep.subr.mxu0 %v168
    %10038 = vmatpush1.msra.mxu0 %v167
    %10039 = vmatprep.subr.mxu0 %v172
    %10040 = vmatpush1.msra.mxu0 %v171
    %10041 = vmatprep.subr.mxu0 %v176
    %10042 = vmatpush1.msra.mxu0 %v175
    %10043 = vmatprep.subr.mxu0 %v180
    %10044 = vmatpush1.msra.mxu0 %v179
    %10045 = vmatprep.subr.mxu0 %v184
    %10046 = vmatpush1.msra.mxu0 %v183
    %10047 = vmatprep.subr.mxu0 %v188
    %10048 = vmatpush1.msra.mxu0 %v187
    %10049 = vmatprep.subr.mxu0 %v192
    %10050 = vmatpush1.msra.mxu0 %v191
    %10051 = vmatprep.subr.mxu0 %v196
    %10052 = vmatpush1.msra.mxu0 %v195
    %10053 = vmatprep.subr.mxu0 %v200
    %10054 = vmatpush1.msra.mxu0 %v199
    %10055 = vmatprep.subr.mxu0 %v204
    %10056 = vmatpush1.msra.mxu0 %v203
    %10057 = vmatprep.subr.mxu0 %v208
    %10058 = vmatpush1.msra.mxu0 %v207
    %10059 = vmatprep.subr.mxu0 %v212
    %10060 = vmatpush1.msra.mxu0 %v211
    %10061 = vmatprep.subr.mxu0 %v216
    %10062 = vmatpush1.msra.mxu0 %v215
    %10063 = vmatprep.subr.mxu0 %v220
    %10064 = vmatpush1.msra.mxu0 %v219
    %10065 = vmatprep.subr.mxu0 %v224
    %10066 = vmatpush1.msra.mxu0 %v223
    %10067 = vmatprep.subr.mxu0 0.0
    %10068 = vmatpush1.msra.mxu0 0.0
    %10069 = vmatprep.subr.mxu0 0.0
    %10070 = vmatpush1.msra.mxu0 0.0
    %10071 = vmatprep.subr.mxu0 0.0
    %10072 = vmatpush1.msra.mxu0 0.0
    %10073 = vmatprep.subr.mxu0 0.0
    %10074 = vmatpush1.msra.mxu0 0.0
    %10075 = vmatprep.subr.mxu0 0.0
    %10076 = vmatpush1.msra.mxu0 0.0
    %10077 = vmatprep.subr.mxu0 0.0
    %10078 = vmatpush1.msra.mxu0 0.0
    %10079 = vmatprep.subr.mxu0 0.0
    %10080 = vmatpush1.msra.mxu0 0.0
    %10081 = vmatprep.subr.mxu0 0.0
    %10082 = vmatpush1.msra.mxu0 0.0
    %10083 = vmatprep.subr.mxu0 0.0
    %10084 = vmatpush1.msra.mxu0 0.0
    %10085 = vmatprep.subr.mxu0 0.0
    %10086 = vmatpush1.msra.mxu0 0.0
    %10087 = vmatprep.subr.mxu0 0.0
    %10088 = vmatpush1.msra.mxu0 0.0
    %10089 = vmatprep.subr.mxu0 0.0
    %10090 = vmatpush1.msra.mxu0 0.0
    %10091 = vmatprep.subr.mxu0 0.0
    %10092 = vmatpush1.msra.mxu0 0.0
    %10093 = vmatprep.subr.mxu0 0.0
    %10094 = vmatpush1.msra.mxu0 0.0
    %10095 = vmatprep.subr.mxu0 0.0
    %10096 = vmatpush1.msra.mxu0 0.0
    %10097 = vmatprep.subr.mxu0 0.0
    %10098 = vmatpush1.msra.mxu0 0.0
    %10099 = vmatprep.mubr.f32.mxu0 0.0
    %10100 = vmatmul.mubr.f32.gmra.mrb[0].mxu0 %v10027
    %v10101 = vpop.f32.mrb[0].mxu0
    %v10102 = vadd.f32 0.0, %v10101
    %v10103 = vpop.f32.mrb[0].mxu0
    %v10104 = vadd.f32 0.0, %v10103
    %10105 = vdwg.mxu0
    %10106 = vmatprep.subr.mxu0 %v166
    %10107 = vmatpush1.msra.mxu0 %v165
    %10108 = vmatprep.subr.mxu0 %v170
    %10109 = vmatpush1.msra.mxu0 %v169
    %10110 = vmatprep.subr.mxu0 %v174
    %10111 = vmatpush1.msra.mxu0 %v173
    %10112 = vmatprep.subr.mxu0 %v178
    %10113 = vmatpush1.msra.mxu0 %v177
    %10114 = vmatprep.subr.mxu0 %v182
    %10115 = vmatpush1.msra.mxu0 %v181
    %10116 = vmatprep.subr.mxu0 %v186
    %10117 = vmatpush1.msra.mxu0 %v185
    %10118 = vmatprep.subr.mxu0 %v190
    %10119 = vmatpush1.msra.mxu0 %v189
    %10120 = vmatprep.subr.mxu0 %v194
    %10121 = vmatpush1.msra.mxu0 %v193
    %10122 = vmatprep.subr.mxu0 %v198
    %10123 = vmatpush1.msra.mxu0 %v197
    %10124 = vmatprep.subr.mxu0 %v202
    %10125 = vmatpush1.msra.mxu0 %v201
    %10126 = vmatprep.subr.mxu0 %v206
    %10127 = vmatpush1.msra.mxu0 %v205
    %10128 = vmatprep.subr.mxu0 %v210
    %10129 = vmatpush1.msra.mxu0 %v209
    %10130 = vmatprep.subr.mxu0 %v214
    %10131 = vmatpush1.msra.mxu0 %v213
    %10132 = vmatprep.subr.mxu0 %v218
    %10133 = vmatpush1.msra.mxu0 %v217
    %10134 = vmatprep.subr.mxu0 %v222
    %10135 = vmatpush1.msra.mxu0 %v221
    %10136 = vmatprep.subr.mxu0 %v226
    %10137 = vmatpush1.msra.mxu0 %v225
    %10138 = vmatprep.subr.mxu0 0.0
    %10139 = vmatpush1.msra.mxu0 0.0
    %10140 = vmatprep.subr.mxu0 0.0
    %10141 = vmatpush1.msra.mxu0 0.0
    %10142 = vmatprep.subr.mxu0 0.0
    %10143 = vmatpush1.msra.mxu0 0.0
    %10144 = vmatprep.subr.mxu0 0.0
    %10145 = vmatpush1.msra.mxu0 0.0
    %10146 = vmatprep.subr.mxu0 0.0
    %10147 = vmatpush1.msra.mxu0 0.0
    %10148 = vmatprep.subr.mxu0 0.0
    %10149 = vmatpush1.msra.mxu0 0.0
    %10150 = vmatprep.subr.mxu0 0.0
    %10151 = vmatpush1.msra.mxu0 0.0
    %10152 = vmatprep.subr.mxu0 0.0
    %10153 = vmatpush1.msra.mxu0 0.0
    %10154 = vmatprep.subr.mxu0 0.0
    %10155 = vmatpush1.msra.mxu0 0.0
    %10156 = vmatprep.subr.mxu0 0.0
    %10157 = vmatpush1.msra.mxu0 0.0
    %10158 = vmatprep.subr.mxu0 0.0
    %10159 = vmatpush1.msra.mxu0 0.0
    %10160 = vmatprep.subr.mxu0 0.0
    %10161 = vmatpush1.msra.mxu0 0.0
    %10162 = vmatprep.subr.mxu0 0.0
    %10163 = vmatpush1.msra.mxu0 0.0
    %10164 = vmatprep.subr.mxu0 0.0
    %10165 = vmatpush1.msra.mxu0 0.0
    %10166 = vmatprep.subr.mxu0 0.0
    %10167 = vmatpush1.msra.mxu0 0.0
    %10168 = vmatprep.subr.mxu0 0.0
    %10169 = vmatpush1.msra.mxu0 0.0
    %10170 = vmatprep.mubr.f32.mxu0 0.0
    %10171 = vmatmul.mubr.f32.gmra.mrb[0].mxu0 %v10027
    %v10172 = vpop.f32.mrb[0].mxu0
    %v10173 = vadd.f32 0.0, %v10172
    %v10174 = vpop.f32.mrb[0].mxu0
    %v10175 = vadd.f32 0.0, %v10174
    %10176 = vdwg.mxu0
    %v10177 = vadd.f32 %v10031, %v10102
    %v10178 = vadd.f32 %v10032, %v10104
    %v10179 = vadd.f32 %v10033, %v10173
    %v10180 = vadd.f32 %v10034, %v10175
    %v10181 = vxor.u32 %v10177, 2147483648
    %v10182 = vmul.f32 %v10181, 1.442695
    %v10183 = vpow.pop %v10182
    %v10184 = vadd.f32 %v10183, 1.0
    %v10185 = vrcp.pop %v10184
    %v10186 = vmul.f32 1.0, %v10185
    %v10187 = vxor.u32 %v10178, 2147483648
    %v10188 = vmul.f32 %v10187, 1.442695
    %v10189 = vpow.pop %v10188
    %v10190 = vadd.f32 %v10189, 1.0
    %v10191 = vrcp.pop %v10190
    %v10192 = vmul.f32 1.0, %v10191
    %v10193 = vtanh.pop %v10179
    %v10194 = vxor.u32 %v10180, 2147483648
    %v10195 = vmul.f32 %v10194, 1.442695
    %v10196 = vpow.pop %v10195
    %v10197 = vadd.f32 %v10196, 1.0
    %v10198 = vrcp.pop %v10197
    %v10199 = vmul.f32 1.0, %v10198
    %v10200 = vmul.f32 %v10192, %v10028
    %v10201 = vmul.f32 %v10186, %v10193
    %v10202 = vadd.f32 %v10200, %v10201
    %v10203 = vtanh.pop %v10202
    %v10204 = vmul.f32 %v10199, %v10203
    %10205 = vmatprep.subr.mxu0 0.0
    %10206 = vmatpush1.msra.mxu0 %v227
    %10207 = vmatprep.subr.mxu0 0.0
    %10208 = vmatpush1.msra.mxu0 %v228
    %10209 = vmatprep.subr.mxu0 0.0
    %10210 = vmatpush1.msra.mxu0 %v229
    %10211 = vmatprep.subr.mxu0 0.0
    %10212 = vmatpush1.msra.mxu0 %v230
    %10213 = vmatprep.subr.mxu0 0.0
    %10214 = vmatpush1.msra.mxu0 %v231
    %10215 = vmatprep.subr.mxu0 0.0
    %10216 = vmatpush1.msra.mxu0 %v232
    %10217 = vmatprep.subr.mxu0 0.0
    %10218 = vmatpush1.msra.mxu0 %v233
    %10219 = vmatprep.subr.mxu0 0.0
    %10220 = vmatpush1.msra.mxu0 %v234
    %10221 = vmatprep.subr.mxu0 0.0
    %10222 = vmatpush1.msra.mxu0 %v235
    %10223 = vmatprep.subr.mxu0 0.0
    %10224 = vmatpush1.msra.mxu0 %v236
    %10225 = vmatprep.subr.mxu0 0.0
    %10226 = vmatpush1.msra.mxu0 %v237
    %10227 = vmatprep.subr.mxu0 0.0
    %10228 = vmatpush1.msra.mxu0 %v238
    %10229 = vmatprep.subr.mxu0 0.0
    %10230 = vmatpush1.msra.mxu0 %v239
    %10231 = vmatprep.subr.mxu0 0.0
    %10232 = vmatpush1.msra.mxu0 %v240
    %10233 = vmatprep.subr.mxu0 0.0
    %10234 = vmatpush1.msra.mxu0 %v241
    %10235 = vmatprep.subr.mxu0 0.0
    %10236 = vmatpush1.msra.mxu0 %v242
    %10237 = vmatprep.subr.mxu0 0.0
    %10238 = vmatpush1.msra.mxu0 0.0
    %10239 = vmatprep.subr.mxu0 0.0
    %10240 = vmatpush1.msra.mxu0 0.0
    %10241 = vmatprep.subr.mxu0 0.0
    %10242 = vmatpush1.msra.mxu0 0.0
    %10243 = vmatprep.subr.mxu0 0.0
    %10244 = vmatpush1.msra.mxu0 0.0
    %10245 = vmatprep.subr.mxu0 0.0
    %10246 = vmatpush1.msra.mxu0 0.0
    %10247 = vmatprep.subr.mxu0 0.0
    %10248 = vmatpush1.msra.mxu0 0.0
    %10249 = vmatprep.subr.mxu0 0.0
    %10250 = vmatpush1.msra.mxu0 0.0
    %10251 = vmatprep.subr.mxu0 0.0
    %10252 = vmatpush1.msra.mxu0 0.0
    %10253 = vmatprep.subr.mxu0 0.0
    %10254 = vmatpush1.msra.mxu0 0.0
    %10255 = vmatprep.subr.mxu0 0.0
    %10256 = vmatpush1.msra.mxu0 0.0
    %10257 = vmatprep.subr.mxu0 0.0
    %10258 = vmatpush1.msra.mxu0 0.0
    %10259 = vmatprep.subr.mxu0 0.0
    %10260 = vmatpush1.msra.mxu0 0.0
    %10261 = vmatprep.subr.mxu0 0.0
    %10262 = vmatpush1.msra.mxu0 0.0
    %10263 = vmatprep.subr.mxu0 0.0
    %10264 = vmatpush1.msra.mxu0 0.0
    %10265 = vmatprep.subr.mxu0 0.0
    %10266 = vmatpush1.msra.mxu0 0.0
    %10267 = vmatprep.subr.mxu0 0.0
    %10268 = vmatpush1.msra.mxu0 0.0
    %10269 = vmatprep.mubr.f32.mxu0 0.0
    %10270 = vmatmul.mubr.f32.gmra.mrb[0].mxu0 %v10204
    %v10271 = vpop.f32.mrb[0].mxu0
    %v10272 = vadd.f32 0.0, %v10271
    %v10273 = vpop.f32.mrb[0].mxu0
    %10274 = vdwg.mxu0
    %v10276 = vcombine.high %v10272, %v10272
    %v10278 = vunpack.c.l.s4 1966171168
    %v10279 = vunpack.c.0.s8 %v10278
    %v10280 = vlaneseq
    %v10281 = vshrl.u32 %v10280, 7
    %v10282 = vsub.s32 %v10279, %v10281
    %v10283 = vrot.slane %v10272, %v10282
    %v10285 = vunpack.c.l.s4 1966171168
    %v10286 = vunpack.c.0.s8 %v10285
    %v10287 = vlaneseq
    %v10288 = vshrl.u32 %v10287, 7
    %v10289 = vsub.s32 %v10286, %v10288
    %v10290 = vrot.slane %v10276, %v10289
    %v10291 = vcombine.high %v10283, %v10283
    %v10292 = vcombine.high %v10290, %v10290
    %v10294 = vunpack.c.l.s4 1966171168
    %v10295 = vunpack.c.0.s8 %v10294
    %v10296 = vlaneseq
    %v10297 = vshrl.u32 %v10296, 7
    %v10298 = vsub.s32 %v10295, %v10297
    %v10299 = vrot.slane %v10283, %v10298
    %v10301 = vunpack.c.l.s4 1966171168
    %v10302 = vunpack.c.0.s8 %v10301
    %v10303 = vlaneseq
    %v10304 = vshrl.u32 %v10303, 7
    %v10305 = vsub.s32 %v10302, %v10304
    %v10306 = vrot.slane %v10290, %v10305
    %v10308 = vunpack.c.l.s4 1966171168
    %v10309 = vunpack.c.0.s8 %v10308
    %v10310 = vlaneseq
    %v10311 = vshrl.u32 %v10310, 7
    %v10312 = vsub.s32 %v10309, %v10311
    %v10313 = vrot.slane %v10291, %v10312
    %v10315 = vunpack.c.l.s4 1966171168
    %v10316 = vunpack.c.0.s8 %v10315
    %v10317 = vlaneseq
    %v10318 = vshrl.u32 %v10317, 7
    %v10319 = vsub.s32 %v10316, %v10318
    %v10320 = vrot.slane %v10292, %v10319
    %v10321 = vcombine.high %v10299, %v10299
    %v10322 = vcombine.high %v10306, %v10306
    %v10323 = vcombine.high %v10313, %v10313
    %v10324 = vcombine.high %v10320, %v10320
    %v10325 = vlaneseq
    %v10326 = vshrl.u32 %v10325, 7
    %v10327 = vsub.s32 0, %v10326
    %v10328 = vrot.slane %v10299, %v10327
    %v10329 = vlaneseq
    %v10330 = vshrl.u32 %v10329, 7
    %v10331 = vsub.s32 0, %v10330
    %v10332 = vrot.slane %v10313, %v10331
    %v10333 = vlaneseq
    %v10334 = vshrl.u32 %v10333, 7
    %v10335 = vsub.s32 0, %v10334
    %v10336 = vrot.slane %v10321, %v10335
    %v10337 = vlaneseq
    %v10338 = vshrl.u32 %v10337, 7
    %v10339 = vsub.s32 0, %v10338
    %v10340 = vrot.slane %v10323, %v10339
    %v10341 = vlaneseq
    %v10342 = vshrl.u32 %v10341, 7
    %v10343 = vsub.s32 0, %v10342
    %v10344 = vrot.slane %v10306, %v10343
    %v10345 = vlaneseq
    %v10346 = vshrl.u32 %v10345, 7
    %v10347 = vsub.s32 0, %v10346
    %v10348 = vrot.slane %v10320, %v10347
    %v10349 = vlaneseq
    %v10350 = vshrl.u32 %v10349, 7
    %v10351 = vsub.s32 0, %v10350
    %v10352 = vrot.slane %v10322, %v10351
    %v10353 = vlaneseq
    %v10354 = vshrl.u32 %v10353, 7
    %v10355 = vsub.s32 0, %v10354
    %v10356 = vrot.slane %v10324, %v10355
    %v10365 = vmul.f32 %v154, %v10328
    %v10366 = vmul.f32 %v155, %v10332
    %v10367 = vmul.f32 %v156, %v10336
    %v10368 = vmul.f32 %v157, %v10340
    %v10369 = vmul.f32 %v158, %v10344
    %v10370 = vmul.f32 %v159, %v10348
    %v10371 = vmul.f32 %v160, %v10352
    %v10372 = vmul.f32 %v161, %v10356
    %v10373 = vsel %vm653, %v10365, 0.0
    %10374 = vadd.xlane.f32.xlu0 %v10373
    %v10375 = vpop.xlane.xlu0 %10374
    %v10376 = vsel %vm653, %v10366, 0.0
    %10377 = vadd.xlane.f32.xlu0 %v10376
    %v10378 = vpop.xlane.xlu0 %10377
    %v10379 = vsel %vm653, %v10367, 0.0
    %10380 = vadd.xlane.f32.xlu0 %v10379
    %v10381 = vpop.xlane.xlu0 %10380
    %v10382 = vsel %vm653, %v10368, 0.0
    %10383 = vadd.xlane.f32.xlu0 %v10382
    %v10384 = vpop.xlane.xlu0 %10383
    %v10385 = vsel %vm653, %v10369, 0.0
    %10386 = vadd.xlane.f32.xlu0 %v10385
    %v10387 = vpop.xlane.xlu0 %10386
    %v10388 = vsel %vm653, %v10370, 0.0
    %10389 = vadd.xlane.f32.xlu0 %v10388
    %v10390 = vpop.xlane.xlu0 %10389
    %v10391 = vsel %vm653, %v10371, 0.0
    %10392 = vadd.xlane.f32.xlu0 %v10391
    %v10393 = vpop.xlane.xlu0 %10392
    %v10394 = vsel %vm653, %v10372, 0.0
    %10395 = vadd.xlane.f32.xlu0 %v10394
    %v10396 = vpop.xlane.xlu0 %10395
    %v10397 = vadd.f32 %v10375, %v685
    %v10398 = vadd.f32 %v10378, %v692
    %v10399 = vadd.f32 %v10381, %v699
    %v10400 = vadd.f32 %v10384, %v706
    %v10401 = vadd.f32 %v10387, %v713
    %v10402 = vadd.f32 %v10390, %v720
    %v10403 = vadd.f32 %v10393, %v727
    %v10404 = vadd.f32 %v10396, %v734
    %10413 = vset.pattern.permute.xlu0 0
    %10414 = vperm.xlu0 %10413, %v10397
    %v10415 = vpop.permute.xlu0 %10414
    %10416 = vset.pattern.permute.xlu0 0
    %10417 = vperm.xlu0 %10416, %v10398
    %v10418 = vpop.permute.xlu0 %10417
    %10419 = vset.pattern.permute.xlu0 0
    %10420 = vperm.xlu0 %10419, %v10399
    %v10421 = vpop.permute.xlu0 %10420
    %10422 = vset.pattern.permute.xlu0 0
    %10423 = vperm.xlu0 %10422, %v10400
    %v10424 = vpop.permute.xlu0 %10423
    %10425 = vset.pattern.permute.xlu0 0
    %10426 = vperm.xlu0 %10425, %v10401
    %v10427 = vpop.permute.xlu0 %10426
    %10428 = vset.pattern.permute.xlu0 0
    %10429 = vperm.xlu0 %10428, %v10402
    %v10430 = vpop.permute.xlu0 %10429
    %10431 = vset.pattern.permute.xlu0 0
    %10432 = vperm.xlu0 %10431, %v10403
    %v10433 = vpop.permute.xlu0 %10432
    %10434 = vset.pattern.permute.xlu0 0
    %10435 = vperm.xlu0 %10434, %v10404
    %v10436 = vpop.permute.xlu0 %10435
    %v10437 = vlaneseq
    %v10438 = vshrl.u32 %v10437, 7
    %v10439 = vsub.s32 %v784, %v10438
    %v10440 = vrot.slane %v10415, %v10439
    %v10441 = vlaneseq
    %v10442 = vshrl.u32 %v10441, 7
    %v10443 = vsub.s32 %v784, %v10442
    %v10444 = vrot.slane %v10418, %v10443
    %v10445 = vlaneseq
    %v10446 = vshrl.u32 %v10445, 7
    %v10447 = vsub.s32 %v784, %v10446
    %v10448 = vrot.slane %v10421, %v10447
    %v10449 = vlaneseq
    %v10450 = vshrl.u32 %v10449, 7
    %v10451 = vsub.s32 %v784, %v10450
    %v10452 = vrot.slane %v10424, %v10451
    %v10453 = vlaneseq
    %v10454 = vshrl.u32 %v10453, 7
    %v10455 = vsub.s32 %v784, %v10454
    %v10456 = vrot.slane %v10427, %v10455
    %v10457 = vlaneseq
    %v10458 = vshrl.u32 %v10457, 7
    %v10459 = vsub.s32 %v784, %v10458
    %v10460 = vrot.slane %v10430, %v10459
    %v10461 = vlaneseq
    %v10462 = vshrl.u32 %v10461, 7
    %v10463 = vsub.s32 %v784, %v10462
    %v10464 = vrot.slane %v10433, %v10463
    %v10465 = vlaneseq
    %v10466 = vshrl.u32 %v10465, 7
    %v10467 = vsub.s32 %v784, %v10466
    %v10468 = vrot.slane %v10436, %v10467
    %v10469 = vsel %vm817, %v10444, %v10440
    %v10470 = vsel %vm819, %v10448, %v10469
    %v10471 = vsel %vm821, %v10452, %v10470
    %v10472 = vsel %vm823, %v10456, %v10471
    %v10473 = vsel %vm825, %v10460, %v10472
    %v10474 = vsel %vm827, %v10464, %v10473
    %v10475 = vsel %vm829, %v10468, %v10474
    %v10477 = vsel %vm832, %v10475, -inf
    %10478 = vmax.xlane.f32.xlu0 %v10477
    %v10479 = vpop.xlane.xlu0 %10478
    %v10481 = vlaneseq
    %v10482 = vshrl.u32 %v10481, 7
    %v10483 = vsub.s32 0, %v10482
    %v10484 = vrot.slane %v10479, %v10483
    %v10485 = vlaneseq
    %v10486 = vshrl.u32 %v10485, 7
    %v10487 = vsub.s32 1, %v10486
    %v10488 = vrot.slane %v10479, %v10487
    %v10489 = vlaneseq
    %v10490 = vshrl.u32 %v10489, 7
    %v10491 = vsub.s32 2, %v10490
    %v10492 = vrot.slane %v10479, %v10491
    %v10493 = vlaneseq
    %v10494 = vshrl.u32 %v10493, 7
    %v10495 = vsub.s32 3, %v10494
    %v10496 = vrot.slane %v10479, %v10495
    %v10497 = vlaneseq
    %v10498 = vshrl.u32 %v10497, 7
    %v10499 = vsub.s32 4, %v10498
    %v10500 = vrot.slane %v10479, %v10499
    %v10501 = vlaneseq
    %v10502 = vshrl.u32 %v10501, 7
    %v10503 = vsub.s32 5, %v10502
    %v10504 = vrot.slane %v10479, %v10503
    %v10505 = vlaneseq
    %v10506 = vshrl.u32 %v10505, 7
    %v10507 = vsub.s32 6, %v10506
    %v10508 = vrot.slane %v10479, %v10507
    %v10509 = vlaneseq
    %v10510 = vshrl.u32 %v10509, 7
    %v10511 = vsub.s32 7, %v10510
    %v10512 = vrot.slane %v10479, %v10511
    %v10521 = vsub.f32 %v10397, %v10484
    %v10522 = vsub.f32 %v10398, %v10488
    %v10523 = vsub.f32 %v10399, %v10492
    %v10524 = vsub.f32 %v10400, %v10496
    %v10525 = vsub.f32 %v10401, %v10500
    %v10526 = vsub.f32 %v10402, %v10504
    %v10527 = vsub.f32 %v10403, %v10508
    %v10528 = vsub.f32 %v10404, %v10512
    %v10529 = vmul.f32 %v10521, 1.442695
    %v10530 = vpow.pop %v10529
    %v10531 = vmul.f32 %v10522, 1.442695
    %v10532 = vpow.pop %v10531
    %v10533 = vmul.f32 %v10523, 1.442695
    %v10534 = vpow.pop %v10533
    %v10535 = vmul.f32 %v10524, 1.442695
    %v10536 = vpow.pop %v10535
    %v10537 = vmul.f32 %v10525, 1.442695
    %v10538 = vpow.pop %v10537
    %v10539 = vmul.f32 %v10526, 1.442695
    %v10540 = vpow.pop %v10539
    %v10541 = vmul.f32 %v10527, 1.442695
    %v10542 = vpow.pop %v10541
    %v10543 = vmul.f32 %v10528, 1.442695
    %v10544 = vpow.pop %v10543
    %10553 = vset.pattern.permute.xlu0 0
    %10554 = vperm.xlu0 %10553, %v10530
    %v10555 = vpop.permute.xlu0 %10554
    %10556 = vset.pattern.permute.xlu0 0
    %10557 = vperm.xlu0 %10556, %v10532
    %v10558 = vpop.permute.xlu0 %10557
    %10559 = vset.pattern.permute.xlu0 0
    %10560 = vperm.xlu0 %10559, %v10534
    %v10561 = vpop.permute.xlu0 %10560
    %10562 = vset.pattern.permute.xlu0 0
    %10563 = vperm.xlu0 %10562, %v10536
    %v10564 = vpop.permute.xlu0 %10563
    %10565 = vset.pattern.permute.xlu0 0
    %10566 = vperm.xlu0 %10565, %v10538
    %v10567 = vpop.permute.xlu0 %10566
    %10568 = vset.pattern.permute.xlu0 0
    %10569 = vperm.xlu0 %10568, %v10540
    %v10570 = vpop.permute.xlu0 %10569
    %10571 = vset.pattern.permute.xlu0 0
    %10572 = vperm.xlu0 %10571, %v10542
    %v10573 = vpop.permute.xlu0 %10572
    %10574 = vset.pattern.permute.xlu0 0
    %10575 = vperm.xlu0 %10574, %v10544
    %v10576 = vpop.permute.xlu0 %10575
    %v10577 = vlaneseq
    %v10578 = vshrl.u32 %v10577, 7
    %v10579 = vsub.s32 %v784, %v10578
    %v10580 = vrot.slane %v10555, %v10579
    %v10581 = vlaneseq
    %v10582 = vshrl.u32 %v10581, 7
    %v10583 = vsub.s32 %v784, %v10582
    %v10584 = vrot.slane %v10558, %v10583
    %v10585 = vlaneseq
    %v10586 = vshrl.u32 %v10585, 7
    %v10587 = vsub.s32 %v784, %v10586
    %v10588 = vrot.slane %v10561, %v10587
    %v10589 = vlaneseq
    %v10590 = vshrl.u32 %v10589, 7
    %v10591 = vsub.s32 %v784, %v10590
    %v10592 = vrot.slane %v10564, %v10591
    %v10593 = vlaneseq
    %v10594 = vshrl.u32 %v10593, 7
    %v10595 = vsub.s32 %v784, %v10594
    %v10596 = vrot.slane %v10567, %v10595
    %v10597 = vlaneseq
    %v10598 = vshrl.u32 %v10597, 7
    %v10599 = vsub.s32 %v784, %v10598
    %v10600 = vrot.slane %v10570, %v10599
    %v10601 = vlaneseq
    %v10602 = vshrl.u32 %v10601, 7
    %v10603 = vsub.s32 %v784, %v10602
    %v10604 = vrot.slane %v10573, %v10603
    %v10605 = vlaneseq
    %v10606 = vshrl.u32 %v10605, 7
    %v10607 = vsub.s32 %v784, %v10606
    %v10608 = vrot.slane %v10576, %v10607
    %v10609 = vsel %vm817, %v10584, %v10580
    %v10610 = vsel %vm819, %v10588, %v10609
    %v10611 = vsel %vm821, %v10592, %v10610
    %v10612 = vsel %vm823, %v10596, %v10611
    %v10613 = vsel %vm825, %v10600, %v10612
    %v10614 = vsel %vm827, %v10604, %v10613
    %v10615 = vsel %vm829, %v10608, %v10614
    %v10617 = vsel %vm832, %v10615, 0.0
    %10618 = vadd.xlane.f32.xlu0 %v10617
    %v10619 = vpop.xlane.xlu0 %10618
    %v10621 = vlaneseq
    %v10622 = vshrl.u32 %v10621, 7
    %v10623 = vsub.s32 0, %v10622
    %v10624 = vrot.slane %v10619, %v10623
    %v10625 = vlaneseq
    %v10626 = vshrl.u32 %v10625, 7
    %v10627 = vsub.s32 1, %v10626
    %v10628 = vrot.slane %v10619, %v10627
    %v10629 = vlaneseq
    %v10630 = vshrl.u32 %v10629, 7
    %v10631 = vsub.s32 2, %v10630
    %v10632 = vrot.slane %v10619, %v10631
    %v10633 = vlaneseq
    %v10634 = vshrl.u32 %v10633, 7
    %v10635 = vsub.s32 3, %v10634
    %v10636 = vrot.slane %v10619, %v10635
    %v10637 = vlaneseq
    %v10638 = vshrl.u32 %v10637, 7
    %v10639 = vsub.s32 4, %v10638
    %v10640 = vrot.slane %v10619, %v10639
    %v10641 = vlaneseq
    %v10642 = vshrl.u32 %v10641, 7
    %v10643 = vsub.s32 5, %v10642
    %v10644 = vrot.slane %v10619, %v10643
    %v10645 = vlaneseq
    %v10646 = vshrl.u32 %v10645, 7
    %v10647 = vsub.s32 6, %v10646
    %v10648 = vrot.slane %v10619, %v10647
    %v10649 = vlaneseq
    %v10650 = vshrl.u32 %v10649, 7
    %v10651 = vsub.s32 7, %v10650
    %v10652 = vrot.slane %v10619, %v10651
    %v10661 = vrcp.pop %v10624
    %v10662 = vmul.f32 %v10530, %v10661
    %v10663 = vrcp.pop %v10628
    %v10664 = vmul.f32 %v10532, %v10663
    %v10665 = vrcp.pop %v10632
    %v10666 = vmul.f32 %v10534, %v10665
    %v10667 = vrcp.pop %v10636
    %v10668 = vmul.f32 %v10536, %v10667
    %v10669 = vrcp.pop %v10640
    %v10670 = vmul.f32 %v10538, %v10669
    %v10671 = vrcp.pop %v10644
    %v10672 = vmul.f32 %v10540, %v10671
    %v10673 = vrcp.pop %v10648
    %v10674 = vmul.f32 %v10542, %v10673
    %v10675 = vrcp.pop %v10652
    %v10676 = vmul.f32 %v10544, %v10675
    %10678 = vset.pattern.permute.xlu0 0
    %10679 = vperm.xlu0 %10678, %v10662
    %v10680 = vpop.permute.xlu0 %10679
    %10683 = vset.pattern.permute.xlu0 0
    %10684 = vperm.xlu0 %10683, %v10664
    %v10685 = vpop.permute.xlu0 %10684
    %10688 = vset.pattern.permute.xlu0 0
    %10689 = vperm.xlu0 %10688, %v10666
    %v10690 = vpop.permute.xlu0 %10689
    %10693 = vset.pattern.permute.xlu0 0
    %10694 = vperm.xlu0 %10693, %v10668
    %v10695 = vpop.permute.xlu0 %10694
    %10698 = vset.pattern.permute.xlu0 0
    %10699 = vperm.xlu0 %10698, %v10670
    %v10700 = vpop.permute.xlu0 %10699
    %10703 = vset.pattern.permute.xlu0 0
    %10704 = vperm.xlu0 %10703, %v10672
    %v10705 = vpop.permute.xlu0 %10704
    %10708 = vset.pattern.permute.xlu0 0
    %10709 = vperm.xlu0 %10708, %v10674
    %v10710 = vpop.permute.xlu0 %10709
    %10713 = vset.pattern.permute.xlu0 0
    %10714 = vperm.xlu0 %10713, %v10676
    %v10715 = vpop.permute.xlu0 %10714
    %v10717 = vmul.f32 %v10680, %v154
    %v10718 = vmul.f32 %v10685, %v155
    %v10719 = vmul.f32 %v10690, %v156
    %v10720 = vmul.f32 %v10695, %v157
    %v10721 = vmul.f32 %v10700, %v158
    %v10722 = vmul.f32 %v10705, %v159
    %v10723 = vmul.f32 %v10710, %v160
    %v10724 = vmul.f32 %v10715, %v161
    %v10725 = vsel %vm653, %v10717, 0.0
    %v10726 = vrot.slane %v10725, 4
    %v10727 = vadd.f32 %v10725, %v10726
    %v10728 = vrot.slane %v10727, 2
    %v10729 = vadd.f32 %v10727, %v10728
    %v10730 = vrot.slane %v10729, 1
    %v10731 = vadd.f32 %v10729, %v10730
    %v10732 = vsel %vm653, %v10718, 0.0
    %v10733 = vrot.slane %v10732, 4
    %v10734 = vadd.f32 %v10732, %v10733
    %v10735 = vrot.slane %v10734, 2
    %v10736 = vadd.f32 %v10734, %v10735
    %v10737 = vrot.slane %v10736, 1
    %v10738 = vadd.f32 %v10736, %v10737
    %v10739 = vsel %vm653, %v10719, 0.0
    %v10740 = vrot.slane %v10739, 4
    %v10741 = vadd.f32 %v10739, %v10740
    %v10742 = vrot.slane %v10741, 2
    %v10743 = vadd.f32 %v10741, %v10742
    %v10744 = vrot.slane %v10743, 1
    %v10745 = vadd.f32 %v10743, %v10744
    %v10746 = vsel %vm653, %v10720, 0.0
    %v10747 = vrot.slane %v10746, 4
    %v10748 = vadd.f32 %v10746, %v10747
    %v10749 = vrot.slane %v10748, 2
    %v10750 = vadd.f32 %v10748, %v10749
    %v10751 = vrot.slane %v10750, 1
    %v10752 = vadd.f32 %v10750, %v10751
    %v10753 = vsel %vm653, %v10721, 0.0
    %v10754 = vrot.slane %v10753, 4
    %v10755 = vadd.f32 %v10753, %v10754
    %v10756 = vrot.slane %v10755, 2
    %v10757 = vadd.f32 %v10755, %v10756
    %v10758 = vrot.slane %v10757, 1
    %v10759 = vadd.f32 %v10757, %v10758
    %v10760 = vsel %vm653, %v10722, 0.0
    %v10761 = vrot.slane %v10760, 4
    %v10762 = vadd.f32 %v10760, %v10761
    %v10763 = vrot.slane %v10762, 2
    %v10764 = vadd.f32 %v10762, %v10763
    %v10765 = vrot.slane %v10764, 1
    %v10766 = vadd.f32 %v10764, %v10765
    %v10767 = vsel %vm653, %v10723, 0.0
    %v10768 = vrot.slane %v10767, 4
    %v10769 = vadd.f32 %v10767, %v10768
    %v10770 = vrot.slane %v10769, 2
    %v10771 = vadd.f32 %v10769, %v10770
    %v10772 = vrot.slane %v10771, 1
    %v10773 = vadd.f32 %v10771, %v10772
    %v10774 = vsel %vm653, %v10724, 0.0
    %v10775 = vrot.slane %v10774, 4
    %v10776 = vadd.f32 %v10774, %v10775
    %v10777 = vrot.slane %v10776, 2
    %v10778 = vadd.f32 %v10776, %v10777
    %v10779 = vrot.slane %v10778, 1
    %v10780 = vadd.f32 %v10778, %v10779
    %10781 = vmatprep.subr.mxu0 0.0
    %10782 = vmatpush1.msra.mxu0 %v259
    %10783 = vmatprep.subr.mxu0 0.0
    %10784 = vmatpush1.msra.mxu0 %v260
    %10785 = vmatprep.subr.mxu0 0.0
    %10786 = vmatpush1.msra.mxu0 %v261
    %10787 = vmatprep.subr.mxu0 0.0
    %10788 = vmatpush1.msra.mxu0 %v262
    %10789 = vmatprep.subr.mxu0 0.0
    %10790 = vmatpush1.msra.mxu0 %v263
    %10791 = vmatprep.subr.mxu0 0.0
    %10792 = vmatpush1.msra.mxu0 %v264
    %10793 = vmatprep.subr.mxu0 0.0
    %10794 = vmatpush1.msra.mxu0 %v265
    %10795 = vmatprep.subr.mxu0 0.0
    %10796 = vmatpush1.msra.mxu0 %v266
    %10797 = vmatprep.subr.mxu0 0.0
    %10798 = vmatpush1.msra.mxu0 %v267
    %10799 = vmatprep.subr.mxu0 0.0
    %10800 = vmatpush1.msra.mxu0 %v268
    %10801 = vmatprep.subr.mxu0 0.0
    %10802 = vmatpush1.msra.mxu0 %v269
    %10803 = vmatprep.subr.mxu0 0.0
    %10804 = vmatpush1.msra.mxu0 %v270
    %10805 = vmatprep.subr.mxu0 0.0
    %10806 = vmatpush1.msra.mxu0 %v271
    %10807 = vmatprep.subr.mxu0 0.0
    %10808 = vmatpush1.msra.mxu0 %v272
    %10809 = vmatprep.subr.mxu0 0.0
    %10810 = vmatpush1.msra.mxu0 %v273
    %10811 = vmatprep.subr.mxu0 0.0
    %10812 = vmatpush1.msra.mxu0 %v274
    %10813 = vmatprep.subr.mxu0 0.0
    %10814 = vmatpush1.msra.mxu0 0.0
    %10815 = vmatprep.subr.mxu0 0.0
    %10816 = vmatpush1.msra.mxu0 0.0
    %10817 = vmatprep.subr.mxu0 0.0
    %10818 = vmatpush1.msra.mxu0 0.0
    %10819 = vmatprep.subr.mxu0 0.0
    %10820 = vmatpush1.msra.mxu0 0.0
    %10821 = vmatprep.subr.mxu0 0.0
    %10822 = vmatpush1.msra.mxu0 0.0
    %10823 = vmatprep.subr.mxu0 0.0
    %10824 = vmatpush1.msra.mxu0 0.0
    %10825 = vmatprep.subr.mxu0 0.0
    %10826 = vmatpush1.msra.mxu0 0.0
    %10827 = vmatprep.subr.mxu0 0.0
    %10828 = vmatpush1.msra.mxu0 0.0
    %10829 = vmatprep.subr.mxu0 0.0
    %10830 = vmatpush1.msra.mxu0 0.0
    %10831 = vmatprep.subr.mxu0 0.0
    %10832 = vmatpush1.msra.mxu0 0.0
    %10833 = vmatprep.subr.mxu0 0.0
    %10834 = vmatpush1.msra.mxu0 0.0
    %10835 = vmatprep.subr.mxu0 0.0
    %10836 = vmatpush1.msra.mxu0 0.0
    %10837 = vmatprep.subr.mxu0 0.0
    %10838 = vmatpush1.msra.mxu0 0.0
    %10839 = vmatprep.subr.mxu0 0.0
    %10840 = vmatpush1.msra.mxu0 0.0
    %10841 = vmatprep.subr.mxu0 0.0
    %10842 = vmatpush1.msra.mxu0 0.0
    %10843 = vmatprep.subr.mxu0 0.0
    %10844 = vmatpush1.msra.mxu0 0.0
    %10845 = vmatprep.mubr.f32.mxu0 0.0
    %10846 = vmatmul.mubr.f32.gmra.mrb[0].mxu0 %v10204
    %v10847 = vpop.f32.mrb[0].mxu0
    %v10848 = vadd.f32 0.0, %v10847
    %v10849 = vpop.f32.mrb[0].mxu0
    %10850 = vdwg.mxu0
    %v10859 = vsel %vm817, %v10738, %v10731
    %v10860 = vsel %vm819, %v10745, %v10859
    %v10861 = vsel %vm821, %v10752, %v10860
    %v10862 = vsel %vm823, %v10759, %v10861
    %v10863 = vsel %vm825, %v10766, %v10862
    %v10864 = vsel %vm827, %v10773, %v10863
    %v10865 = vsel %vm829, %v10780, %v10864
    %10867 = vmatprep.subr.mxu0 0.0
    %10868 = vmatpush1.msra.mxu0 %v243
    %10869 = vmatprep.subr.mxu0 0.0
    %10870 = vmatpush1.msra.mxu0 %v244
    %10871 = vmatprep.subr.mxu0 0.0
    %10872 = vmatpush1.msra.mxu0 %v245
    %10873 = vmatprep.subr.mxu0 0.0
    %10874 = vmatpush1.msra.mxu0 %v246
    %10875 = vmatprep.subr.mxu0 0.0
    %10876 = vmatpush1.msra.mxu0 %v247
    %10877 = vmatprep.subr.mxu0 0.0
    %10878 = vmatpush1.msra.mxu0 %v248
    %10879 = vmatprep.subr.mxu0 0.0
    %10880 = vmatpush1.msra.mxu0 %v249
    %10881 = vmatprep.subr.mxu0 0.0
    %10882 = vmatpush1.msra.mxu0 %v250
    %10883 = vmatprep.subr.mxu0 0.0
    %10884 = vmatpush1.msra.mxu0 %v251
    %10885 = vmatprep.subr.mxu0 0.0
    %10886 = vmatpush1.msra.mxu0 %v252
    %10887 = vmatprep.subr.mxu0 0.0
    %10888 = vmatpush1.msra.mxu0 %v253
    %10889 = vmatprep.subr.mxu0 0.0
    %10890 = vmatpush1.msra.mxu0 %v254
    %10891 = vmatprep.subr.mxu0 0.0
    %10892 = vmatpush1.msra.mxu0 %v255
    %10893 = vmatprep.subr.mxu0 0.0
    %10894 = vmatpush1.msra.mxu0 %v256
    %10895 = vmatprep.subr.mxu0 0.0
    %10896 = vmatpush1.msra.mxu0 %v257
    %10897 = vmatprep.subr.mxu0 0.0
    %10898 = vmatpush1.msra.mxu0 %v258
    %10899 = vmatprep.subr.mxu0 0.0
    %10900 = vmatpush1.msra.mxu0 0.0
    %10901 = vmatprep.subr.mxu0 0.0
    %10902 = vmatpush1.msra.mxu0 0.0
    %10903 = vmatprep.subr.mxu0 0.0
    %10904 = vmatpush1.msra.mxu0 0.0
    %10905 = vmatprep.subr.mxu0 0.0
    %10906 = vmatpush1.msra.mxu0 0.0
    %10907 = vmatprep.subr.mxu0 0.0
    %10908 = vmatpush1.msra.mxu0 0.0
    %10909 = vmatprep.subr.mxu0 0.0
    %10910 = vmatpush1.msra.mxu0 0.0
    %10911 = vmatprep.subr.mxu0 0.0
    %10912 = vmatpush1.msra.mxu0 0.0
    %10913 = vmatprep.subr.mxu0 0.0
    %10914 = vmatpush1.msra.mxu0 0.0
    %10915 = vmatprep.subr.mxu0 0.0
    %10916 = vmatpush1.msra.mxu0 0.0
    %10917 = vmatprep.subr.mxu0 0.0
    %10918 = vmatpush1.msra.mxu0 0.0
    %10919 = vmatprep.subr.mxu0 0.0
    %10920 = vmatpush1.msra.mxu0 0.0
    %10921 = vmatprep.subr.mxu0 0.0
    %10922 = vmatpush1.msra.mxu0 0.0
    %10923 = vmatprep.subr.mxu0 0.0
    %10924 = vmatpush1.msra.mxu0 0.0
    %10925 = vmatprep.subr.mxu0 0.0
    %10926 = vmatpush1.msra.mxu0 0.0
    %10927 = vmatprep.subr.mxu0 0.0
    %10928 = vmatpush1.msra.mxu0 0.0
    %10929 = vmatprep.subr.mxu0 0.0
    %10930 = vmatpush1.msra.mxu0 0.0
    %10931 = vmatprep.mubr.f32.mxu0 0.0
    %10932 = vmatmul.mubr.f32.gmra.mrb[0].mxu0 %v10865
    %v10933 = vpop.f32.mrb[0].mxu0
    %v10934 = vadd.f32 %v10848, %v10933
    %v10935 = vpop.f32.mrb[0].mxu0
    %10936 = vdwg.mxu0
    %v10937 = vtanh.pop %v10934
    %10938 = vmatprep.subr.mxu0 %v276
    %10939 = vmatpush1.msra.mxu0 %v275
    %10940 = vmatprep.subr.mxu0 %v278
    %10941 = vmatpush1.msra.mxu0 %v277
    %10942 = vmatprep.subr.mxu0 %v280
    %10943 = vmatpush1.msra.mxu0 %v279
    %10944 = vmatprep.subr.mxu0 %v282
    %10945 = vmatpush1.msra.mxu0 %v281
    %10946 = vmatprep.subr.mxu0 %v284
    %10947 = vmatpush1.msra.mxu0 %v283
    %10948 = vmatprep.subr.mxu0 %v286
    %10949 = vmatpush1.msra.mxu0 %v285
    %10950 = vmatprep.subr.mxu0 %v288
    %10951 = vmatpush1.msra.mxu0 %v287
    %10952 = vmatprep.subr.mxu0 %v290
    %10953 = vmatpush1.msra.mxu0 %v289
    %10954 = vmatprep.subr.mxu0 %v292
    %10955 = vmatpush1.msra.mxu0 %v291
    %10956 = vmatprep.subr.mxu0 %v294
    %10957 = vmatpush1.msra.mxu0 %v293
    %10958 = vmatprep.subr.mxu0 %v296
    %10959 = vmatpush1.msra.mxu0 %v295
    %10960 = vmatprep.subr.mxu0 %v298
    %10961 = vmatpush1.msra.mxu0 %v297
    %10962 = vmatprep.subr.mxu0 %v300
    %10963 = vmatpush1.msra.mxu0 %v299
    %10964 = vmatprep.subr.mxu0 %v302
    %10965 = vmatpush1.msra.mxu0 %v301
    %10966 = vmatprep.subr.mxu0 %v304
    %10967 = vmatpush1.msra.mxu0 %v303
    %10968 = vmatprep.subr.mxu0 %v306
    %10969 = vmatpush1.msra.mxu0 %v305
    %10970 = vmatprep.subr.mxu0 0.0
    %10971 = vmatpush1.msra.mxu0 0.0
    %10972 = vmatprep.subr.mxu0 0.0
    %10973 = vmatpush1.msra.mxu0 0.0
    %10974 = vmatprep.subr.mxu0 0.0
    %10975 = vmatpush1.msra.mxu0 0.0
    %10976 = vmatprep.subr.mxu0 0.0
    %10977 = vmatpush1.msra.mxu0 0.0
    %10978 = vmatprep.subr.mxu0 0.0
    %10979 = vmatpush1.msra.mxu0 0.0
    %10980 = vmatprep.subr.mxu0 0.0
    %10981 = vmatpush1.msra.mxu0 0.0
    %10982 = vmatprep.subr.mxu0 0.0
    %10983 = vmatpush1.msra.mxu0 0.0
    %10984 = vmatprep.subr.mxu0 0.0
    %10985 = vmatpush1.msra.mxu0 0.0
    %10986 = vmatprep.subr.mxu0 0.0
    %10987 = vmatpush1.msra.mxu0 0.0
    %10988 = vmatprep.subr.mxu0 0.0
    %10989 = vmatpush1.msra.mxu0 0.0
    %10990 = vmatprep.subr.mxu0 0.0
    %10991 = vmatpush1.msra.mxu0 0.0
    %10992 = vmatprep.subr.mxu0 0.0
    %10993 = vmatpush1.msra.mxu0 0.0
    %10994 = vmatprep.subr.mxu0 0.0
    %10995 = vmatpush1.msra.mxu0 0.0
    %10996 = vmatprep.subr.mxu0 0.0
    %10997 = vmatpush1.msra.mxu0 0.0
    %10998 = vmatprep.subr.mxu0 0.0
    %10999 = vmatpush1.msra.mxu0 0.0
    %11000 = vmatprep.subr.mxu0 0.0
    %11001 = vmatpush1.msra.mxu0 0.0
    %11002 = vmatprep.mubr.f32.mxu0 0.0
    %11003 = vmatmul.mubr.f32.gmra.mrb[0].mxu0 %v10937
    %v11004 = vpop.f32.mrb[0].mxu0
    %v11005 = vadd.f32 %v1298, %v11004
    %v11006 = vpop.f32.mrb[0].mxu0
    %v11007 = vadd.f32 %v1302, %v11006
    %11008 = vdwg.mxu0
    %v11011 = vcombine.low %v11005, %v11007
    %v11012 = vcombine.high %v11005, %v11007
    %v11014 = vunpack.c.l.s4 1966171168
    %v11015 = vunpack.c.0.s8 %v11014
    %v11016 = vlaneseq
    %v11017 = vshrl.u32 %v11016, 7
    %v11018 = vsub.s32 %v11015, %v11017
    %v11019 = vrot.slane %v11011, %v11018
    %v11021 = vunpack.c.l.s4 1966171168
    %v11022 = vunpack.c.0.s8 %v11021
    %v11023 = vlaneseq
    %v11024 = vshrl.u32 %v11023, 7
    %v11025 = vsub.s32 %v11022, %v11024
    %v11026 = vrot.slane %v11012, %v11025
    %v11027 = vcombine.high %v11019, %v11019
    %v11028 = vcombine.high %v11026, %v11026
    %v11030 = vunpack.c.l.s4 1966171168
    %v11031 = vunpack.c.0.s8 %v11030
    %v11032 = vlaneseq
    %v11033 = vshrl.u32 %v11032, 7
    %v11034 = vsub.s32 %v11031, %v11033
    %v11035 = vrot.slane %v11019, %v11034
    %v11037 = vunpack.c.l.s4 1966171168
    %v11038 = vunpack.c.0.s8 %v11037
    %v11039 = vlaneseq
    %v11040 = vshrl.u32 %v11039, 7
    %v11041 = vsub.s32 %v11038, %v11040
    %v11042 = vrot.slane %v11026, %v11041
    %v11044 = vunpack.c.l.s4 1966171168
    %v11045 = vunpack.c.0.s8 %v11044
    %v11046 = vlaneseq
    %v11047 = vshrl.u32 %v11046, 7
    %v11048 = vsub.s32 %v11045, %v11047
    %v11049 = vrot.slane %v11027, %v11048
    %v11051 = vunpack.c.l.s4 1966171168
    %v11052 = vunpack.c.0.s8 %v11051
    %v11053 = vlaneseq
    %v11054 = vshrl.u32 %v11053, 7
    %v11055 = vsub.s32 %v11052, %v11054
    %v11056 = vrot.slane %v11028, %v11055
    %v11057 = vcombine.high %v11035, %v11035
    %v11058 = vcombine.high %v11042, %v11042
    %v11059 = vcombine.high %v11049, %v11049
    %v11060 = vcombine.high %v11056, %v11056
    %s11069 = scalar_lea.vmem %s11, 17
    %11070 = vst.msk [vmem:[%s11069] ss:$8 sm:$0x3] %vm1439, %v11035
    %11071 = vst.msk [vmem:[%s11069] ss:$8 sm:$0x0] %vm1439, %v11035
    %s11072 = scalar_lea.vmem %s11, 49
    %11073 = vst.msk [vmem:[%s11072] ss:$8 sm:$0x3] %vm1439, %v11049
    %11074 = vst.msk [vmem:[%s11072] ss:$8 sm:$0x0] %vm1439, %v11049
    %s11075 = scalar_lea.vmem %s11, 81
    %11076 = vst.msk [vmem:[%s11075] ss:$8 sm:$0x3] %vm1439, %v11057
    %11077 = vst.msk [vmem:[%s11075] ss:$8 sm:$0x0] %vm1439, %v11057
    %s11078 = scalar_lea.vmem %s11, 113
    %11079 = vst.msk [vmem:[%s11078] ss:$8 sm:$0x3] %vm1439, %v11059
    %11080 = vst.msk [vmem:[%s11078] ss:$8 sm:$0x0] %vm1439, %v11059
    %s11081 = scalar_lea.vmem %s11, 145
    %11082 = vst.msk [vmem:[%s11081] ss:$8 sm:$0x3] %vm1439, %v11042
    %11083 = vst.msk [vmem:[%s11081] ss:$8 sm:$0x0] %vm1439, %v11042
    %s11084 = scalar_lea.vmem %s11, 177
    %11085 = vst.msk [vmem:[%s11084] ss:$8 sm:$0x3] %vm1439, %v11056
    %11086 = vst.msk [vmem:[%s11084] ss:$8 sm:$0x0] %vm1439, %v11056
    %s11087 = scalar_lea.vmem %s11, 209
    %11088 = vst.msk [vmem:[%s11087] ss:$8 sm:$0x3] %vm1439, %v11058
    %11089 = vst.msk [vmem:[%s11087] ss:$8 sm:$0x0] %vm1439, %v11058
    %s11090 = scalar_lea.vmem %s11, 241
    %11091 = vst.msk [vmem:[%s11090] ss:$8 sm:$0x3] %vm1439, %v11060
    %11092 = vst.msk [vmem:[%s11090] ss:$8 sm:$0x0] %vm1439, %v11060
    %p11093 = scmp.lt.s32.totalorder %s10029, 10
    %s11094 = scalar_select %p11093, 1, 0
    %v11095 = vstv %s11094
    %vm11096 = vcmp.eq.s32.totalorder %v11095, 1
    %v11097 = vsel %vm11096, %v10937, %v10027
    %v11098 = vsel %vm11096, %v10202, %v10028
    %11099 = vst [vmem:[#allocation2] sm:$0xff] %v11097
    %11100 = vst [vmem:[#allocation3] sm:$0xff] %v11098
    // Predicated region
    $region82: #{tpu_custom_call.1} parent=1 // pred_check
      %p11101 = pneg %p146
    $region83: #{tpu_custom_call.1} parent=1 // pred_check_branch
      %11103 = sbr.rel (%p11101) target = $region85
    $region84: #{tpu_custom_call.1} parent=1 // pred_region
      %11104 = vst [vmem:[#allocation18] sm:$0xff] %v11097
      %11105 = vst [vmem:[#allocation19] sm:$0xff] %v11098
    $region85: #{tpu_custom_call.1} parent=1 // pred_fallthru
      _
    // Predicated region
    $region86: #{tpu_custom_call.1} parent=1 // pred_check
      _
    $region87: #{tpu_custom_call.1} parent=1 // pred_check_branch
      %11107 = sbr.rel (0) target = $region89
    $region88: #{tpu_custom_call.1} parent=1 // pred_region
      _
    $region89: #{tpu_custom_call.1} parent=1 // pred_fallthru
      _
    // Predicated region
    $region90: #{tpu_custom_call.1} parent=1 // pred_check
      _
    $region91: #{tpu_custom_call.1} parent=1 // pred_check_branch
      %11109 = sbr.rel (0) target = $region93
    $region92: #{tpu_custom_call.1} parent=1 // pred_region
      %s11111 = ssub.s32 128, 128
      %11112 = vsyncadd [#allocation6], %s11111
      %s11114 = sshll.u32 [#allocation18], 4
      %s11115 = int_to_ptr.vmem [resolvable:$true] %s11114
      %11117 = dma.vmem_to_hbm [thread:$0]  %s11115, 128, %s12, [#allocation6]
    $region93: #{tpu_custom_call.1} parent=1 // pred_fallthru
      _
    // Predicated region
    $region94: #{tpu_custom_call.1} parent=1 // pred_check
      _
    $region95: #{tpu_custom_call.1} parent=1 // pred_check_branch
      %11119 = sbr.rel (0) target = $region97
    $region96: #{tpu_custom_call.1} parent=1 // pred_region
      %s11121 = ssub.s32 128, 128
      %11122 = vsyncadd [#allocation20], %s11121
      %s11124 = sshll.u32 [#allocation19], 4
      %s11125 = int_to_ptr.vmem [resolvable:$true] %s11124
      %11127 = dma.vmem_to_hbm [thread:$0]  %s11125, 128, %s13, [#allocation20]
    $region97: #{tpu_custom_call.1} parent=1 // pred_fallthru
      _
    // Predicated region
    $region98: #{tpu_custom_call.1} parent=1 // pred_check
      _
    $region99: #{tpu_custom_call.1} parent=1 // pred_check_branch
      %11129 = sbr.rel (0) target = $region101
    $region100: #{tpu_custom_call.1} parent=1 // pred_region
      _
    $region101: #{tpu_custom_call.1} parent=1 // pred_fallthru
      _
    // Predicated region
    $region102: #{tpu_custom_call.1} parent=1 // pred_check
      _
    $region103: #{tpu_custom_call.1} parent=1 // pred_check_branch
      %11131 = sbr.rel (0) target = $region105
    $region104: #{tpu_custom_call.1} parent=1 // pred_region
      %11132 = dma.done [#allocation6], 128
    $region105: #{tpu_custom_call.1} parent=1 // pred_fallthru
      _
    // Predicated region
    $region106: #{tpu_custom_call.1} parent=1 // pred_check
      _
    $region107: #{tpu_custom_call.1} parent=1 // pred_check_branch
      %11134 = sbr.rel (0) target = $region109
    $region108: #{tpu_custom_call.1} parent=1 // pred_region
      %11135 = dma.done [#allocation20], 128
    $region109: #{tpu_custom_call.1} parent=1 // pred_fallthru
      _
    %11136 = vsyncpa [#allocation5], 1
    %11137 = vsyncpa [#allocation8], 1
    %11138 = vsyncpa [#allocation11], 1
    %11139 = vsyncpa [#allocation14], 1
    %11140 = vsyncpa [#allocation17], 1
    %11141 = vsyncpa [#allocation6], 1
    %11142 = vsyncpa [#allocation20], 1

</llo_original>
